<compile_context>
chip_gen: v7x
topology: tpu7x:2x2x1
jax: 0.10.0
libtpu: 0.0.40
codegen_flags: <defaults>
</compile_context>

<pallas_src>
import numpy as np

import jax
import jax.numpy as jnp
from jax.experimental import pallas as pl
from jax.experimental.pallas import tpu as pltpu


IMG = 28            # input spatial size (fixed by fc1 = 16*4*4 in the module)
BLK1 = 896          # pool1 lane-block width (864 valid lanes, padded to 7*128)
VALID1 = 864        # 12*12 pooled positions * 6 channels
BLK2 = 256          # pool2 lane-block width (4*4 positions * 16 channels)


# ----------------------------------------------------------------------------
# Fused kernel: conv1 -> pool1 -> conv2 -> pool2 -> fc1 -> fc2 -> fc3.
# Six matmuls + elementwise max/ReLU; zero data-rearrangement ops.
# ----------------------------------------------------------------------------
def _lenet5_kernel(x_ref, w1_ref, b1_ref, w2_ref, b2_ref,
                   wf1_ref, bf1_ref, wf2_ref, bf2_ref, wf3_ref, bf3_ref,
                   out_ref, z1_ref, z2_ref):
    f32 = jnp.float32

    # conv1 (1->6, 5x5, valid) + bias + ReLU: one (TB,784)x(784,4*BLK1) matmul.
    z1_ref[...] = jnp.maximum(
        jnp.dot(x_ref[...], w1_ref[...], preferred_element_type=f32)
        + b1_ref[...], 0.0)

    # pool1 (2x2 / 2): the 4 window elements sit in 4 contiguous lane blocks.
    p1 = jnp.maximum(
        jnp.maximum(z1_ref[:, 0 * BLK1:1 * BLK1], z1_ref[:, 1 * BLK1:2 * BLK1]),
        jnp.maximum(z1_ref[:, 2 * BLK1:3 * BLK1], z1_ref[:, 3 * BLK1:4 * BLK1]))

    # conv2 (6->16, 5x5, valid) + bias + ReLU: one (TB,BLK1)x(BLK1,4*BLK2).
    z2_ref[...] = jnp.maximum(
        jnp.dot(p1, w2_ref[...], preferred_element_type=f32)
        + b2_ref[...], 0.0)

    # pool2 (2x2 / 2): again four contiguous lane blocks -> compact (TB,256).
    p2 = jnp.maximum(
        jnp.maximum(z2_ref[:, 0 * BLK2:1 * BLK2], z2_ref[:, 1 * BLK2:2 * BLK2]),
        jnp.maximum(z2_ref[:, 2 * BLK2:3 * BLK2], z2_ref[:, 3 * BLK2:4 * BLK2]))

    # fc1 -> fc2 -> fc3, batched over the whole tile (M = TB).
    h1 = jnp.maximum(
        jnp.dot(p2, wf1_ref[...], preferred_element_type=f32) + bf1_ref[...],
        0.0)
    h2 = jnp.maximum(
        jnp.dot(h1, wf2_ref[...], preferred_element_type=f32) + bf2_ref[...],
        0.0)
    out_ref[...] = (jnp.dot(h2, wf3_ref[...], preferred_element_type=f32)
                    + bf3_ref[...]).astype(out_ref.dtype)


# ----------------------------------------------------------------------------
# Parameters (PyTorch layout) + one-time host-side re-layout for the kernel.
# ----------------------------------------------------------------------------
def init_params(key, num_classes=10):
    def uniform(k, shape, fan_in):
        bound = 1.0 / jnp.sqrt(jnp.float32(fan_in))
        return jax.random.uniform(k, shape, jnp.float32, -bound, bound)

    ks = jax.random.split(key, 10)
    return {
        "conv1_w": uniform(ks[0], (6, 1, 5, 5), 1 * 5 * 5),
        "conv1_b": uniform(ks[1], (6,), 1 * 5 * 5),
        "conv2_w": uniform(ks[2], (16, 6, 5, 5), 6 * 5 * 5),
        "conv2_b": uniform(ks[3], (16,), 6 * 5 * 5),
        "fc1_w": uniform(ks[4], (120, 16 * 4 * 4), 16 * 4 * 4),
        "fc1_b": uniform(ks[5], (120,), 16 * 4 * 4),
        "fc2_w": uniform(ks[6], (84, 120), 120),
        "fc2_b": uniform(ks[7], (84,), 120),
        "fc3_w": uniform(ks[8], (num_classes, 84), 84),
        "fc3_b": uniform(ks[9], (num_classes,), 84),
    }


def prepare_params(p):
    """One-time (outside jit) re-layout into the kernel's matmul matrices.

    Conv weights become sparse Toeplitz matrices whose output columns are
    ordered as (pool_window_element, pooled_position, channel) so in-kernel
    max-pooling is a max over 4 contiguous, 128-aligned lane blocks.
    """
    w1 = np.asarray(p["conv1_w"], np.float32)   # (6, 1, 5, 5)
    b1 = np.asarray(p["conv1_b"], np.float32)
    w2 = np.asarray(p["conv2_w"], np.float32)   # (16, 6, 5, 5)
    b2 = np.asarray(p["conv2_b"], np.float32)

    # conv1: input index h*28+w  ->  lane (dh*2+dw)*BLK1 + (ph*12+pw)*6 + c,
    # where (oh, ow) = (2ph+dh, 2pw+dw) is the conv-output position.
    W1 = np.zeros((IMG * IMG, 4 * BLK1), np.float32)
    for dh in range(2):
        for dw in range(2):
            blk = (dh * 2 + dw) * BLK1
            for ph in range(12):
                for pw in range(12):
                    oh, ow = 2 * ph + dh, 2 * pw + dw
                    col = blk + (ph * 12 + pw) * 6
                    for i in range(5):
                        for j in range(5):
                            row = (oh + i) * IMG + (ow + j)
                            W1[row, col:col + 6] = w1[:, 0, i, j]
    b1row = np.zeros((1, 4 * BLK1), np.float32)
    pat1 = np.tile(b1, 12 * 12)                          # (864,)
    for blk in range(4):
        b1row[0, blk * BLK1: blk * BLK1 + VALID1] = pat1

    # conv2: input lane (ph*12+pw)*6+ci  ->  lane (dh*2+dw)*BLK2
    #        + (ph2*4+pw2)*16 + co,   (oh2, ow2) = (2ph2+dh, 2pw2+dw).
    W2 = np.zeros((BLK1, 4 * BLK2), np.float32)          # rows >= 864 stay 0
    for dh in range(2):
        for dw in range(2):
            blk = (dh * 2 + dw) * BLK2
            for ph2 in range(4):
                for pw2 in range(4):
                    oh2, ow2 = 2 * ph2 + dh, 2 * pw2 + dw
                    col = blk + (ph2 * 4 + pw2) * 16
                    for i in range(5):
                        for j in range(5):
                            row = ((oh2 + i) * 12 + (ow2 + j)) * 6
                            W2[row:row + 6, col:col + 16] = w2[:, :, i, j].T
    b2row = np.tile(np.tile(b2, 16), 4).reshape(1, 4 * BLK2)

    # fc1: fold the PyTorch (C,H,W) flatten permutation into the weight:
    # kernel lane (ph2*4+pw2)*16+co  <->  torch input index co*16+ph2*4+pw2.
    fc1_w = np.asarray(p["fc1_w"], np.float32).reshape(120, 16, 4, 4)
    Wf1 = fc1_w.transpose(2, 3, 1, 0).reshape(256, 120)

    kp = {
        "w1": W1, "b1": b1row,
        "w2": W2, "b2": b2row,
        "wf1": Wf1, "bf1": np.asarray(p["fc1_b"], np.float32).reshape(1, -1),
        "wf2": np.asarray(p["fc2_w"], np.float32).T,
        "bf2": np.asarray(p["fc2_b"], np.float32).reshape(1, -1),
        "wf3": np.asarray(p["fc3_w"], np.float32).T,
        "bf3": np.asarray(p["fc3_b"], np.float32).reshape(1, -1),
    }
    return {k: jnp.asarray(v) for k, v in kp.items()}


# ----------------------------------------------------------------------------
# Forward pass: one fused pallas_call over a parallel batch grid.
# ----------------------------------------------------------------------------
def _round_up(a, m):
    return (a + m - 1) // m * m


@jax.jit
def lenet5_forward(kp, x):
    batch = x.shape[0]
    assert x.shape[1:] == (1, IMG, IMG), "LeNet-5 expects (B, 1, 28, 28)"
    nc = kp["wf3"].shape[1]

    tb = min(64, _round_up(batch, 8))            # batch tile (MXU M dim)
    b_pad = _round_up(batch, tb)

    x2 = x.astype(jnp.float32).reshape(batch, IMG * IMG)
    if b_pad != batch:
        x2 = jnp.concatenate(
            [x2, jnp.zeros((b_pad - batch, IMG * IMG), jnp.float32)], axis=0)

    weights = (kp["w1"], kp["b1"], kp["w2"], kp["b2"],
               kp["wf1"], kp["bf1"], kp["wf2"], kp["bf2"],
               kp["wf3"], kp["bf3"])

    # VMEM budget computed from actual sizes (headroom for v7x's 64 MiB).
    weight_bytes = sum(int(w.size) * 4 for w in weights)
    scratch_bytes = tb * (4 * BLK1 + 4 * BLK2) * 4
    io_bytes = 2 * tb * (IMG * IMG + nc) * 4
    vmem_limit = min(50 * 1024 * 1024,
                     2 * weight_bytes + scratch_bytes + io_bytes + (8 << 20))

    full_vmem = pl.BlockSpec(memory_space=pltpu.MemorySpace.VMEM)
    out = pl.pallas_call(
        _lenet5_kernel,
        grid=(b_pad // tb,),
        out_shape=jax.ShapeDtypeStruct((b_pad, nc), jnp.float32),
        in_specs=[pl.BlockSpec((tb, IMG * IMG), lambda i: (i, 0))]
                 + [full_vmem] * 10,
        out_specs=pl.BlockSpec((tb, nc), lambda i: (i, 0)),
        scratch_shapes=[pltpu.VMEM((tb, 4 * BLK1), jnp.float32),   # conv1+ReLU
                        pltpu.VMEM((tb, 4 * BLK2), jnp.float32)],  # conv2+ReLU
        compiler_params=pltpu.CompilerParams(
            dimension_semantics=("parallel",),
            vmem_limit_bytes=int(vmem_limit)),
    )(x2, *weights)
    return out[:batch]


# ----------------------------------------------------------------------------
# Pure-JAX reference (PyTorch-layout params) for the correctness check.
# ----------------------------------------------------------------------------
def lenet5_reference(params, x):
    hi = jax.lax.Precision.HIGHEST
    y = jax.lax.conv_general_dilated(
        x, params["conv1_w"], (1, 1), "VALID",
        dimension_numbers=("NCHW", "OIHW", "NCHW"), precision=hi)
    y = jax.nn.relu(y + params["conv1_b"].reshape(1, -1, 1, 1))
    y = jax.lax.reduce_window(y, -jnp.inf, jax.lax.max,
                              (1, 1, 2, 2), (1, 1, 2, 2), "VALID")
    y = jax.lax.conv_general_dilated(
        y, params["conv2_w"], (1, 1), "VALID",
        dimension_numbers=("NCHW", "OIHW", "NCHW"), precision=hi)
    y = jax.nn.relu(y + params["conv2_b"].reshape(1, -1, 1, 1))
    y = jax.lax.reduce_window(y, -jnp.inf, jax.lax.max,
                              (1, 1, 2, 2), (1, 1, 2, 2), "VALID")
    y = y.reshape(x.shape[0], -1)
    y = jax.nn.relu(jnp.dot(y, params["fc1_w"].T, precision=hi) + params["fc1_b"])
    y = jax.nn.relu(jnp.dot(y, params["fc2_w"].T, precision=hi) + params["fc2_b"])
    return jnp.dot(y, params["fc3_w"].T, precision=hi) + params["fc3_b"]


if __name__ == "__main__":
    key = jax.random.PRNGKey(0)
    k_params, k_x = jax.random.split(key)
    params = init_params(k_params, num_classes=10)
    kparams = prepare_params(params)             # one-time weight re-layout
    x = jax.random.normal(k_x, (2, 1, 28, 28), dtype=jnp.float32)

    logits = lenet5_forward(kparams, x)
    jax.block_until_ready(logits)
    assert logits.shape == (2, 10) and logits.dtype == jnp.float32

    ref = lenet5_reference(params, x)
    err = float(jnp.max(jnp.abs(logits - ref)))
    # Tolerance leaves room for MXU bf16-pass rounding; typically err ~1e-4.
    assert err < 2e-2, f"mismatch vs reference: max abs err {err}"
    print("KERNEL_OK")
</pallas_src>

<mosaic_0001>
module attributes {stable_mosaic.version = 11 : i64} {
  func.func @_lenet5_kernel(%arg0: i32, %arg1: memref<8x784xf32, #tpu.memory_space<vmem>>, %arg2: memref<784x3584xf32, #tpu.memory_space<vmem>>, %arg3: memref<1x3584xf32, #tpu.memory_space<vmem>>, %arg4: memref<896x1024xf32, #tpu.memory_space<vmem>>, %arg5: memref<1x1024xf32, #tpu.memory_space<vmem>>, %arg6: memref<256x120xf32, #tpu.memory_space<vmem>>, %arg7: memref<1x120xf32, #tpu.memory_space<vmem>>, %arg8: memref<120x84xf32, #tpu.memory_space<vmem>>, %arg9: memref<1x84xf32, #tpu.memory_space<vmem>>, %arg10: memref<84x10xf32, #tpu.memory_space<vmem>>, %arg11: memref<1x10xf32, #tpu.memory_space<vmem>>, %arg12: memref<8x10xf32, #tpu.memory_space<vmem>>, %arg13: memref<8x3584xf32, #tpu.memory_space<vmem>>, %arg14: memref<8x1024xf32, #tpu.memory_space<vmem>>) attributes {dimension_semantics = [#tpu.dimension_semantics<parallel>], iteration_bounds = array<i64: 1>, scalar_prefetch = 0 : i64, scratch_operands = 2 : i64, tpu.core_type = #tpu.core_type<tc>, window_params = [{transform_indices = @transform_0, window_bounds = array<i64: 8, 784>}, {pipeline_mode = #tpu.pipeline_mode<synchronous>, transform_indices = @transform_1, window_bounds = array<i64: 784, 3584>}, {pipeline_mode = #tpu.pipeline_mode<synchronous>, transform_indices = @transform_2, window_bounds = array<i64: 1, 3584>}, {pipeline_mode = #tpu.pipeline_mode<synchronous>, transform_indices = @transform_3, window_bounds = array<i64: 896, 1024>}, {pipeline_mode = #tpu.pipeline_mode<synchronous>, transform_indices = @transform_4, window_bounds = array<i64: 1, 1024>}, {pipeline_mode = #tpu.pipeline_mode<synchronous>, transform_indices = @transform_5, window_bounds = array<i64: 256, 120>}, {pipeline_mode = #tpu.pipeline_mode<synchronous>, transform_indices = @transform_6, window_bounds = array<i64: 1, 120>}, {pipeline_mode = #tpu.pipeline_mode<synchronous>, transform_indices = @transform_7, window_bounds = array<i64: 120, 84>}, {pipeline_mode = #tpu.pipeline_mode<synchronous>, transform_indices = @transform_8, window_bounds = array<i64: 1, 84>}, {pipeline_mode = #tpu.pipeline_mode<synchronous>, transform_indices = @transform_9, window_bounds = array<i64: 84, 10>}, {pipeline_mode = #tpu.pipeline_mode<synchronous>, transform_indices = @transform_10, window_bounds = array<i64: 1, 10>}, {transform_indices = @transform_11, window_bounds = array<i64: 8, 10>}]} {
    %c0 = arith.constant 0 : index
    %c0_0 = arith.constant 0 : index
    %0 = vector.load %arg1[%c0, %c0_0] : memref<8x784xf32, #tpu.memory_space<vmem>>, vector<8x784xf32>
    %c0_1 = arith.constant 0 : index
    %c0_2 = arith.constant 0 : index
    %1 = vector.load %arg2[%c0_1, %c0_2] : memref<784x3584xf32, #tpu.memory_space<vmem>>, vector<784x3584xf32>
    %cst = arith.constant dense<0.000000e+00> : vector<8x3584xf32>
    %2 = tpu.matmul %0, %1, %cst {dimension_numbers = #tpu.dot_dimension_numbers<[1], [0], [0], [1], [0, 0, 1, 1], [], []>} : vector<8x784xf32>, vector<784x3584xf32>, vector<8x3584xf32> -> vector<8x3584xf32>
    %c0_3 = arith.constant 0 : index
    %c0_4 = arith.constant 0 : index
    %3 = vector.load %arg3[%c0_3, %c0_4] : memref<1x3584xf32, #tpu.memory_space<vmem>>, vector<1x3584xf32>
    %4 = vector.broadcast %3 : vector<1x3584xf32> to vector<8x3584xf32>
    %5 = arith.addf %2, %4 : vector<8x3584xf32>
    %cst_5 = arith.constant 0.000000e+00 : f32
    %6 = vector.broadcast %cst_5 : f32 to vector<8x3584xf32>
    %7 = arith.maximumf %5, %6 : vector<8x3584xf32>
    %c0_6 = arith.constant 0 : index
    %c0_7 = arith.constant 0 : index
    %8 = vector.load %arg13[%c0_6, %c0_7] : memref<8x3584xf32, #tpu.memory_space<vmem>>, vector<8x3584xf32>
    tpu.vector_store %arg13[%c0_6, %c0_7], %7 {strides = array<i32>} : memref<8x3584xf32, #tpu.memory_space<vmem>>, vector<8x3584xf32>,
    %c0_8 = arith.constant 0 : index
    %c0_9 = arith.constant 0 : index
    %9 = vector.load %arg13[%c0_8, %c0_9] : memref<8x3584xf32, #tpu.memory_space<vmem>>, vector<8x896xf32>
    %c0_10 = arith.constant 0 : index
    %c896 = arith.constant 896 : index
    %10 = vector.load %arg13[%c0_10, %c896] : memref<8x3584xf32, #tpu.memory_space<vmem>>, vector<8x896xf32>
    %11 = arith.maximumf %9, %10 : vector<8x896xf32>
    %c0_11 = arith.constant 0 : index
    %c1792 = arith.constant 1792 : index
    %12 = vector.load %arg13[%c0_11, %c1792] : memref<8x3584xf32, #tpu.memory_space<vmem>>, vector<8x896xf32>
    %c0_12 = arith.constant 0 : index
    %c2688 = arith.constant 2688 : index
    %13 = vector.load %arg13[%c0_12, %c2688] : memref<8x3584xf32, #tpu.memory_space<vmem>>, vector<8x896xf32>
    %14 = arith.maximumf %12, %13 : vector<8x896xf32>
    %15 = arith.maximumf %11, %14 : vector<8x896xf32>
    %c0_13 = arith.constant 0 : index
    %c0_14 = arith.constant 0 : index
    %16 = vector.load %arg4[%c0_13, %c0_14] : memref<896x1024xf32, #tpu.memory_space<vmem>>, vector<896x1024xf32>
    %cst_15 = arith.constant dense<0.000000e+00> : vector<8x1024xf32>
    %17 = tpu.matmul %15, %16, %cst_15 {dimension_numbers = #tpu.dot_dimension_numbers<[1], [0], [0], [1], [0, 0, 1, 1], [], []>} : vector<8x896xf32>, vector<896x1024xf32>, vector<8x1024xf32> -> vector<8x1024xf32>
    %c0_16 = arith.constant 0 : index
    %c0_17 = arith.constant 0 : index
    %18 = vector.load %arg5[%c0_16, %c0_17] : memref<1x1024xf32, #tpu.memory_space<vmem>>, vector<1x1024xf32>
    %19 = vector.broadcast %18 : vector<1x1024xf32> to vector<8x1024xf32>
    %20 = arith.addf %17, %19 : vector<8x1024xf32>
    %cst_18 = arith.constant 0.000000e+00 : f32
    %21 = vector.broadcast %cst_18 : f32 to vector<8x1024xf32>
    %22 = arith.maximumf %20, %21 : vector<8x1024xf32>
    %c0_19 = arith.constant 0 : index
    %c0_20 = arith.constant 0 : index
    %23 = vector.load %arg14[%c0_19, %c0_20] : memref<8x1024xf32, #tpu.memory_space<vmem>>, vector<8x1024xf32>
    tpu.vector_store %arg14[%c0_19, %c0_20], %22 {strides = array<i32>} : memref<8x1024xf32, #tpu.memory_space<vmem>>, vector<8x1024xf32>,
    %c0_21 = arith.constant 0 : index
    %c0_22 = arith.constant 0 : index
    %24 = vector.load %arg14[%c0_21, %c0_22] : memref<8x1024xf32, #tpu.memory_space<vmem>>, vector<8x256xf32>
    %c0_23 = arith.constant 0 : index
    %c256 = arith.constant 256 : index
    %25 = vector.load %arg14[%c0_23, %c256] : memref<8x1024xf32, #tpu.memory_space<vmem>>, vector<8x256xf32>
    %26 = arith.maximumf %24, %25 : vector<8x256xf32>
    %c0_24 = arith.constant 0 : index
    %c512 = arith.constant 512 : index
    %27 = vector.load %arg14[%c0_24, %c512] : memref<8x1024xf32, #tpu.memory_space<vmem>>, vector<8x256xf32>
    %c0_25 = arith.constant 0 : index
    %c768 = arith.constant 768 : index
    %28 = vector.load %arg14[%c0_25, %c768] : memref<8x1024xf32, #tpu.memory_space<vmem>>, vector<8x256xf32>
    %29 = arith.maximumf %27, %28 : vector<8x256xf32>
    %30 = arith.maximumf %26, %29 : vector<8x256xf32>
    %c0_26 = arith.constant 0 : index
    %c0_27 = arith.constant 0 : index
    %31 = vector.load %arg6[%c0_26, %c0_27] : memref<256x120xf32, #tpu.memory_space<vmem>>, vector<256x120xf32>
    %cst_28 = arith.constant dense<0.000000e+00> : vector<8x120xf32>
    %32 = tpu.matmul %30, %31, %cst_28 {dimension_numbers = #tpu.dot_dimension_numbers<[1], [0], [0], [1], [0, 0, 1, 1], [], []>} : vector<8x256xf32>, vector<256x120xf32>, vector<8x120xf32> -> vector<8x120xf32>
    %c0_29 = arith.constant 0 : index
    %c0_30 = arith.constant 0 : index
    %33 = vector.load %arg7[%c0_29, %c0_30] : memref<1x120xf32, #tpu.memory_space<vmem>>, vector<1x120xf32>
    %34 = vector.broadcast %33 : vector<1x120xf32> to vector<8x120xf32>
    %35 = arith.addf %32, %34 : vector<8x120xf32>
    %cst_31 = arith.constant 0.000000e+00 : f32
    %36 = vector.broadcast %cst_31 : f32 to vector<8x120xf32>
    %37 = arith.maximumf %35, %36 : vector<8x120xf32>
    %c0_32 = arith.constant 0 : index
    %c0_33 = arith.constant 0 : index
    %38 = vector.load %arg8[%c0_32, %c0_33] : memref<120x84xf32, #tpu.memory_space<vmem>>, vector<120x84xf32>
    %cst_34 = arith.constant dense<0.000000e+00> : vector<8x84xf32>
    %39 = tpu.matmul %37, %38, %cst_34 {dimension_numbers = #tpu.dot_dimension_numbers<[1], [0], [0], [1], [0, 0, 1, 1], [], []>} : vector<8x120xf32>, vector<120x84xf32>, vector<8x84xf32> -> vector<8x84xf32>
    %c0_35 = arith.constant 0 : index
    %c0_36 = arith.constant 0 : index
    %40 = vector.load %arg9[%c0_35, %c0_36] : memref<1x84xf32, #tpu.memory_space<vmem>>, vector<1x84xf32>
    %41 = vector.broadcast %40 : vector<1x84xf32> to vector<8x84xf32>
    %42 = arith.addf %39, %41 : vector<8x84xf32>
    %cst_37 = arith.constant 0.000000e+00 : f32
    %43 = vector.broadcast %cst_37 : f32 to vector<8x84xf32>
    %44 = arith.maximumf %42, %43 : vector<8x84xf32>
    %c0_38 = arith.constant 0 : index
    %c0_39 = arith.constant 0 : index
    %45 = vector.load %arg10[%c0_38, %c0_39] : memref<84x10xf32, #tpu.memory_space<vmem>>, vector<84x10xf32>
    %cst_40 = arith.constant dense<0.000000e+00> : vector<8x10xf32>
    %46 = tpu.matmul %44, %45, %cst_40 {dimension_numbers = #tpu.dot_dimension_numbers<[1], [0], [0], [1], [0, 0, 1, 1], [], []>} : vector<8x84xf32>, vector<84x10xf32>, vector<8x10xf32> -> vector<8x10xf32>
    %c0_41 = arith.constant 0 : index
    %c0_42 = arith.constant 0 : index
    %47 = vector.load %arg11[%c0_41, %c0_42] : memref<1x10xf32, #tpu.memory_space<vmem>>, vector<1x10xf32>
    %48 = vector.broadcast %47 : vector<1x10xf32> to vector<8x10xf32>
    %49 = arith.addf %46, %48 : vector<8x10xf32>
    %c0_43 = arith.constant 0 : index
    %c0_44 = arith.constant 0 : index
    %50 = vector.load %arg12[%c0_43, %c0_44] : memref<8x10xf32, #tpu.memory_space<vmem>>, vector<8x10xf32>
    tpu.vector_store %arg12[%c0_43, %c0_44], %49 {strides = array<i32>} : memref<8x10xf32, #tpu.memory_space<vmem>>, vector<8x10xf32>,
    return
  }
  func.func @transform_0(%arg0: i32) -> (i32, i32) {
    %c0_i32 = arith.constant 0 : i32
    %c0_i32_0 = arith.constant 0 : i32
    return %arg0, %c0_i32 : i32, i32
  }
  func.func @transform_1(%arg0: i32) -> (i32, i32) {
    %c0_i32 = arith.constant 0 : i32
    %c0_i32_0 = arith.constant 0 : i32
    %c0_i32_1 = arith.constant 0 : i32
    return %c0_i32, %c0_i32_0 : i32, i32
  }
  func.func @transform_2(%arg0: i32) -> (i32, i32) {
    %c0_i32 = arith.constant 0 : i32
    %c0_i32_0 = arith.constant 0 : i32
    %c0_i32_1 = arith.constant 0 : i32
    return %c0_i32, %c0_i32_0 : i32, i32
  }
  func.func @transform_3(%arg0: i32) -> (i32, i32) {
    %c0_i32 = arith.constant 0 : i32
    %c0_i32_0 = arith.constant 0 : i32
    %c0_i32_1 = arith.constant 0 : i32
    return %c0_i32, %c0_i32_0 : i32, i32
  }
  func.func @transform_4(%arg0: i32) -> (i32, i32) {
    %c0_i32 = arith.constant 0 : i32
    %c0_i32_0 = arith.constant 0 : i32
    %c0_i32_1 = arith.constant 0 : i32
    return %c0_i32, %c0_i32_0 : i32, i32
  }
  func.func @transform_5(%arg0: i32) -> (i32, i32) {
    %c0_i32 = arith.constant 0 : i32
    %c0_i32_0 = arith.constant 0 : i32
    %c0_i32_1 = arith.constant 0 : i32
    return %c0_i32, %c0_i32_0 : i32, i32
  }
  func.func @transform_6(%arg0: i32) -> (i32, i32) {
    %c0_i32 = arith.constant 0 : i32
    %c0_i32_0 = arith.constant 0 : i32
    %c0_i32_1 = arith.constant 0 : i32
    return %c0_i32, %c0_i32_0 : i32, i32
  }
  func.func @transform_7(%arg0: i32) -> (i32, i32) {
    %c0_i32 = arith.constant 0 : i32
    %c0_i32_0 = arith.constant 0 : i32
    %c0_i32_1 = arith.constant 0 : i32
    return %c0_i32, %c0_i32_0 : i32, i32
  }
  func.func @transform_8(%arg0: i32) -> (i32, i32) {
    %c0_i32 = arith.constant 0 : i32
    %c0_i32_0 = arith.constant 0 : i32
    %c0_i32_1 = arith.constant 0 : i32
    return %c0_i32, %c0_i32_0 : i32, i32
  }
  func.func @transform_9(%arg0: i32) -> (i32, i32) {
    %c0_i32 = arith.constant 0 : i32
    %c0_i32_0 = arith.constant 0 : i32
    %c0_i32_1 = arith.constant 0 : i32
    return %c0_i32, %c0_i32_0 : i32, i32
  }
  func.func @transform_10(%arg0: i32) -> (i32, i32) {
    %c0_i32 = arith.constant 0 : i32
    %c0_i32_0 = arith.constant 0 : i32
    %c0_i32_1 = arith.constant 0 : i32
    return %c0_i32, %c0_i32_0 : i32, i32
  }
  func.func @transform_11(%arg0: i32) -> (i32, i32) {
    %c0_i32 = arith.constant 0 : i32
    %c0_i32_0 = arith.constant 0 : i32
    return %arg0, %c0_i32 : i32, i32
  }
}

</mosaic_0001>

<llo_original>
// kernel: lenet5_forward.1
$region0: #{lenet5_forward.1}
  #allocation0 [shape = 'u32[]', space=smem, size = 0x4, offset = 0x4, fixed_abs, tag = 'smem constant byte address 0x4 - core index']
  #allocation1 [shape = 'u32[144,128]{1,0:T(1,128)}', space=vmem, size = 0x12000, scoped, tag = 'internal scratch']
  #allocation2 [shape = 'f32[8,3584]{1,0:T(8,128)}', space=vmem, size = 0x1c000, scoped, tag = 'scratch operand']
  #allocation3 [shape = 'f32[8,1024]{1,0:T(8,128)}', space=vmem, size = 0x8000, scoped, tag = 'scratch operand']
  %s0 = inlined_call_operand.vmem [shape: f32[8,784], index: 0, kind: input, shape index: {}]
  %s1 = inlined_call_operand.hbm [shape: f32[784,3584], index: 1, kind: input, shape index: {}]
  %s2 = inlined_call_operand.hbm [shape: f32[1,3584], index: 2, kind: input, shape index: {}]
  %s3 = inlined_call_operand.hbm [shape: f32[896,1024], index: 3, kind: input, shape index: {}]
  %s4 = inlined_call_operand.hbm [shape: f32[1,1024], index: 4, kind: input, shape index: {}]
  %s5 = inlined_call_operand.vmem [shape: f32[256,120], index: 5, kind: input, shape index: {}]
  %s6 = inlined_call_operand.hbm [shape: f32[1,120], index: 6, kind: input, shape index: {}]
  %s7 = inlined_call_operand.vmem [shape: f32[120,84], index: 7, kind: input, shape index: {}]
  %s8 = inlined_call_operand.hbm [shape: f32[1,84], index: 8, kind: input, shape index: {}]
  %s9 = inlined_call_operand.vmem [shape: f32[84,10], index: 9, kind: input, shape index: {}]
  %s10 = inlined_call_operand.hbm [shape: f32[1,10], index: 10, kind: input, shape index: {}]
  %s11 = inlined_call_operand.vmem [shape: f32[8,10], index: 11, kind: output, shape index: {}]
  %s12 = sld [smem:[#allocation0]]
  $region82: #{lenet5_forward.1} parent=0
    _
  %s14 = ssub.s32 1, %s12
  %s15 = scalar_select 0, %s14, %s12
  $region1: #{lenet5_forward.1} parent=0
    #allocation4 [shape = 'u8[11239424]{0}', space=vmem, size = 0xab8000, scoped, tag = 'input window, operand 1, single buffered']
    #allocation5 [shape = 's32[1]{0}', space=sflag, size = 0x4, scoped, tag = 'scoped memory for lenet5_forward.1']
    #allocation6 [shape = 'u8[14336]{0}', space=vmem, size = 0x3800, scoped, tag = 'input window, operand 2, single buffered']
    #allocation7 [shape = 's32[1]{0}', space=sflag, size = 0x4, scoped, tag = 'scoped memory for lenet5_forward.1']
    #allocation8 [shape = 'u8[3670016]{0}', space=vmem, size = 0x380000, scoped, tag = 'input window, operand 3, single buffered']
    #allocation9 [shape = 'u8[4096]{0}', space=vmem, size = 0x1000, scoped, tag = 'input window, operand 4, single buffered']
    #allocation10 [shape = 's32[1]{0}', space=sflag, size = 0x4, scoped, tag = 'scoped memory for lenet5_forward.1']
    #allocation11 [shape = 'u8[512]{0}', space=vmem, size = 0x400, scoped, tag = 'input window, operand 6, single buffered']
    #allocation12 [shape = 'u8[512]{0}', space=vmem, size = 0x400, scoped, tag = 'input window, operand 8, single buffered']
    #allocation13 [shape = 's32[1]{0}', space=sflag, size = 0x4, scoped, tag = 'scoped memory for lenet5_forward.1']
    #allocation14 [shape = 'u8[512]{0}', space=vmem, size = 0x400, scoped, tag = 'input window, operand 10, single buffered']
    %16 = vsyncpa [#allocation5], 0
    %17 = vsyncpa [#allocation7], 0
    %18 = vsyncpa [#allocation10], 0
    %19 = vsyncpa [#allocation13], 0
    // Predicated region
    $region2: #{lenet5_forward.1} parent=1 // pred_check
      _
    $region3: #{lenet5_forward.1} parent=1 // pred_check_branch
      %21 = sbr.rel (0) target = $region5
    $region4: #{lenet5_forward.1} parent=1 // pred_region
      _
    $region5: #{lenet5_forward.1} parent=1 // pred_fallthru
      _
    // Predicated region
    $region6: #{lenet5_forward.1} parent=1 // pred_check
      _
    $region7: #{lenet5_forward.1} parent=1 // pred_check_branch
      %23 = sbr.rel (0) target = $region9
    $region8: #{lenet5_forward.1} parent=1 // pred_region
      %s25 = ssub.s32 351232, 351232
      %26 = vsyncadd [#allocation5], %s25
      %s27 = sshll.u32 [#allocation4], 4
      %s28 = int_to_ptr.vmem [resolvable:$true] %s27
      %33 = dma.hbm_to_vmem [thread:$0]  %s1, 351232, %s28, [#allocation5], 3584, 3584, 224
    $region9: #{lenet5_forward.1} parent=1 // pred_fallthru
      _
    // Predicated region
    $region10: #{lenet5_forward.1} parent=1 // pred_check
      _
    $region11: #{lenet5_forward.1} parent=1 // pred_check_branch
      %35 = sbr.rel (0) target = $region13
    $region12: #{lenet5_forward.1} parent=1 // pred_region
      %s37 = ssub.s32 448, 448
      %38 = vsyncadd [#allocation7], %s37
      %s40 = sshll.u32 [#allocation6], 4
      %s41 = int_to_ptr.vmem [resolvable:$true] %s40
      %43 = dma.hbm_to_vmem [thread:$0]  %s2, 448, %s41, [#allocation7]
    $region13: #{lenet5_forward.1} parent=1 // pred_fallthru
      _
    // Predicated region
    $region14: #{lenet5_forward.1} parent=1 // pred_check
      _
    $region15: #{lenet5_forward.1} parent=1 // pred_check_branch
      %45 = sbr.rel (0) target = $region17
    $region16: #{lenet5_forward.1} parent=1 // pred_region
      %s47 = ssub.s32 114688, 114688
      %48 = vsyncadd [#allocation7], %s47
      %s49 = sshll.u32 [#allocation8], 4
      %s50 = int_to_ptr.vmem [resolvable:$true] %s49
      %55 = dma.hbm_to_vmem [thread:$0]  %s3, 114688, %s50, [#allocation7], 1024, 1024, 64
    $region17: #{lenet5_forward.1} parent=1 // pred_fallthru
      _
    // Predicated region
    $region18: #{lenet5_forward.1} parent=1 // pred_check
      _
    $region19: #{lenet5_forward.1} parent=1 // pred_check_branch
      %57 = sbr.rel (0) target = $region21
    $region20: #{lenet5_forward.1} parent=1 // pred_region
      %s59 = ssub.s32 128, 128
      %60 = vsyncadd [#allocation10], %s59
      %s62 = sshll.u32 [#allocation9], 4
      %s63 = int_to_ptr.vmem [resolvable:$true] %s62
      %65 = dma.hbm_to_vmem [thread:$0]  %s4, 128, %s63, [#allocation10]
    $region21: #{lenet5_forward.1} parent=1 // pred_fallthru
      _
    // Predicated region
    $region22: #{lenet5_forward.1} parent=1 // pred_check
      _
    $region23: #{lenet5_forward.1} parent=1 // pred_check_branch
      %67 = sbr.rel (0) target = $region25
    $region24: #{lenet5_forward.1} parent=1 // pred_region
      _
    $region25: #{lenet5_forward.1} parent=1 // pred_fallthru
      _
    // Predicated region
    $region26: #{lenet5_forward.1} parent=1 // pred_check
      _
    $region27: #{lenet5_forward.1} parent=1 // pred_check_branch
      %69 = sbr.rel (0) target = $region29
    $region28: #{lenet5_forward.1} parent=1 // pred_region
      %s71 = ssub.s32 16, 16
      %72 = vsyncadd [#allocation10], %s71
      %s74 = sshll.u32 [#allocation11], 4
      %s75 = int_to_ptr.vmem [resolvable:$true] %s74
      %77 = dma.hbm_to_vmem [thread:$0]  %s6, 16, %s75, [#allocation10]
    $region29: #{lenet5_forward.1} parent=1 // pred_fallthru
      _
    // Predicated region
    $region30: #{lenet5_forward.1} parent=1 // pred_check
      _
    $region31: #{lenet5_forward.1} parent=1 // pred_check_branch
      %79 = sbr.rel (0) target = $region33
    $region32: #{lenet5_forward.1} parent=1 // pred_region
      _
    $region33: #{lenet5_forward.1} parent=1 // pred_fallthru
      _
    // Predicated region
    $region34: #{lenet5_forward.1} parent=1 // pred_check
      _
    $region35: #{lenet5_forward.1} parent=1 // pred_check_branch
      %81 = sbr.rel (0) target = $region37
    $region36: #{lenet5_forward.1} parent=1 // pred_region
      %s83 = ssub.s32 16, 16
      %84 = vsyncadd [#allocation13], %s83
      %s86 = sshll.u32 [#allocation12], 4
      %s87 = int_to_ptr.vmem [resolvable:$true] %s86
      %89 = dma.hbm_to_vmem [thread:$0]  %s8, 16, %s87, [#allocation13]
    $region37: #{lenet5_forward.1} parent=1 // pred_fallthru
      _
    // Predicated region
    $region38: #{lenet5_forward.1} parent=1 // pred_check
      _
    $region39: #{lenet5_forward.1} parent=1 // pred_check_branch
      %91 = sbr.rel (0) target = $region41
    $region40: #{lenet5_forward.1} parent=1 // pred_region
      _
    $region41: #{lenet5_forward.1} parent=1 // pred_fallthru
      _
    // Predicated region
    $region42: #{lenet5_forward.1} parent=1 // pred_check
      _
    $region43: #{lenet5_forward.1} parent=1 // pred_check_branch
      %93 = sbr.rel (0) target = $region45
    $region44: #{lenet5_forward.1} parent=1 // pred_region
      %s95 = ssub.s32 16, 16
      %96 = vsyncadd [#allocation13], %s95
      %s98 = sshll.u32 [#allocation14], 4
      %s99 = int_to_ptr.vmem [resolvable:$true] %s98
      %101 = dma.hbm_to_vmem [thread:$0]  %s10, 16, %s99, [#allocation13]
    $region45: #{lenet5_forward.1} parent=1 // pred_fallthru
      _
    // Predicated region
    $region46: #{lenet5_forward.1} parent=1 // pred_check
      _
    $region47: #{lenet5_forward.1} parent=1 // pred_check_branch
      %103 = sbr.rel (0) target = $region49
    $region48: #{lenet5_forward.1} parent=1 // pred_region
      %104 = dma.done [#allocation5], 351232
    $region49: #{lenet5_forward.1} parent=1 // pred_fallthru
      _
    // Predicated region
    $region50: #{lenet5_forward.1} parent=1 // pred_check
      _
    $region51: #{lenet5_forward.1} parent=1 // pred_check_branch
      %106 = sbr.rel (0) target = $region53
    $region52: #{lenet5_forward.1} parent=1 // pred_region
      %107 = dma.done [#allocation7], 448
    $region53: #{lenet5_forward.1} parent=1 // pred_fallthru
      _
    // Predicated region
    $region54: #{lenet5_forward.1} parent=1 // pred_check
      _
    $region55: #{lenet5_forward.1} parent=1 // pred_check_branch
      %109 = sbr.rel (0) target = $region57
    $region56: #{lenet5_forward.1} parent=1 // pred_region
      %110 = dma.done [#allocation7], 114688
    $region57: #{lenet5_forward.1} parent=1 // pred_fallthru
      _
    // Predicated region
    $region58: #{lenet5_forward.1} parent=1 // pred_check
      _
    $region59: #{lenet5_forward.1} parent=1 // pred_check_branch
      %112 = sbr.rel (0) target = $region61
    $region60: #{lenet5_forward.1} parent=1 // pred_region
      %113 = dma.done [#allocation10], 128
    $region61: #{lenet5_forward.1} parent=1 // pred_fallthru
      _
    // Predicated region
    $region62: #{lenet5_forward.1} parent=1 // pred_check
      _
    $region63: #{lenet5_forward.1} parent=1 // pred_check_branch
      %115 = sbr.rel (0) target = $region65
    $region64: #{lenet5_forward.1} parent=1 // pred_region
      %116 = dma.done [#allocation10], 16
    $region65: #{lenet5_forward.1} parent=1 // pred_fallthru
      _
    // Predicated region
    $region66: #{lenet5_forward.1} parent=1 // pred_check
      _
    $region67: #{lenet5_forward.1} parent=1 // pred_check_branch
      %118 = sbr.rel (0) target = $region69
    $region68: #{lenet5_forward.1} parent=1 // pred_region
      %119 = dma.done [#allocation13], 16
    $region69: #{lenet5_forward.1} parent=1 // pred_fallthru
      _
    // Predicated region
    $region70: #{lenet5_forward.1} parent=1 // pred_check
      _
    $region71: #{lenet5_forward.1} parent=1 // pred_check_branch
      %121 = sbr.rel (0) target = $region73
    $region72: #{lenet5_forward.1} parent=1 // pred_region
      %122 = dma.done [#allocation13], 16
    $region73: #{lenet5_forward.1} parent=1 // pred_fallthru
      _
    %v123 = vld [vmem:[%s0] sm:$0xff]
    %v124 = vld [vmem:[%s0 + $0x8] sm:$0xff]
    %v125 = vld [vmem:[%s0 + $0x10] sm:$0xff]
    %v126 = vld [vmem:[%s0 + $0x18] sm:$0xff]
    %v127 = vld [vmem:[%s0 + $0x20] sm:$0xff]
    %v128 = vld [vmem:[%s0 + $0x28] sm:$0xff]
    %v129 = vld [vmem:[%s0 + $0x30] sm:$0xff]
    %v130 = vld [vmem:[#allocation4] sm:$0xff]
    %v131 = vld [vmem:[#allocation4 + $0x8] sm:$0xff]
    %v132 = vld [vmem:[#allocation4 + $0x10] sm:$0xff]
    %v133 = vld [vmem:[#allocation4 + $0x18] sm:$0xff]
    %v134 = vld [vmem:[#allocation4 + $0x20] sm:$0xff]
    %v135 = vld [vmem:[#allocation4 + $0x28] sm:$0xff]
    %v136 = vld [vmem:[#allocation4 + $0x30] sm:$0xff]
    %v137 = vld [vmem:[#allocation4 + $0x38] sm:$0xff]
    %v138 = vld [vmem:[#allocation4 + $0x40] sm:$0xff]
    %v139 = vld [vmem:[#allocation4 + $0x48] sm:$0xff]
    %v140 = vld [vmem:[#allocation4 + $0x50] sm:$0xff]
    %v141 = vld [vmem:[#allocation4 + $0x58] sm:$0xff]
    %v142 = vld [vmem:[#allocation4 + $0x60] sm:$0xff]
    %v143 = vld [vmem:[#allocation4 + $0x68] sm:$0xff]
    %v144 = vld [vmem:[#allocation4 + $0x70] sm:$0xff]
    %v145 = vld [vmem:[#allocation4 + $0x78] sm:$0xff]
    %v146 = vld [vmem:[#allocation4 + $0x80] sm:$0xff]
    %v147 = vld [vmem:[#allocation4 + $0x88] sm:$0xff]
    %v148 = vld [vmem:[#allocation4 + $0x90] sm:$0xff]
    %v149 = vld [vmem:[#allocation4 + $0x98] sm:$0xff]
    %v150 = vld [vmem:[#allocation4 + $0xa0] sm:$0xff]
    %v151 = vld [vmem:[#allocation4 + $0xa8] sm:$0xff]
    %v152 = vld [vmem:[#allocation4 + $0xb0] sm:$0xff]
    %v153 = vld [vmem:[#allocation4 + $0xb8] sm:$0xff]
    %v154 = vld [vmem:[#allocation4 + $0xc0] sm:$0xff]
    %v155 = vld [vmem:[#allocation4 + $0xc8] sm:$0xff]
    %v156 = vld [vmem:[#allocation4 + $0xd0] sm:$0xff]
    %v157 = vld [vmem:[#allocation4 + $0xd8] sm:$0xff]
    %v158 = vld [vmem:[#allocation4 + $0xe0] sm:$0xff]
    %v159 = vld [vmem:[#allocation4 + $0xe8] sm:$0xff]
    %v160 = vld [vmem:[#allocation4 + $0xf0] sm:$0xff]
    %v161 = vld [vmem:[#allocation4 + $0xf8] sm:$0xff]
    %v162 = vld [vmem:[#allocation4 + $0x100] sm:$0xff]
    %v163 = vld [vmem:[#allocation4 + $0x108] sm:$0xff]
    %v164 = vld [vmem:[#allocation4 + $0x110] sm:$0xff]
    %v165 = vld [vmem:[#allocation4 + $0x118] sm:$0xff]
    %v166 = vld [vmem:[#allocation4 + $0x120] sm:$0xff]
    %v167 = vld [vmem:[#allocation4 + $0x128] sm:$0xff]
    %v168 = vld [vmem:[#allocation4 + $0x130] sm:$0xff]
    %v169 = vld [vmem:[#allocation4 + $0x138] sm:$0xff]
    %v170 = vld [vmem:[#allocation4 + $0x140] sm:$0xff]
    %v171 = vld [vmem:[#allocation4 + $0x148] sm:$0xff]
    %v172 = vld [vmem:[#allocation4 + $0x150] sm:$0xff]
    %v173 = vld [vmem:[#allocation4 + $0x158] sm:$0xff]
    %v174 = vld [vmem:[#allocation4 + $0x160] sm:$0xff]
    %v175 = vld [vmem:[#allocation4 + $0x168] sm:$0xff]
    %v176 = vld [vmem:[#allocation4 + $0x170] sm:$0xff]
    %v177 = vld [vmem:[#allocation4 + $0x178] sm:$0xff]
    %v178 = vld [vmem:[#allocation4 + $0x180] sm:$0xff]
    %v179 = vld [vmem:[#allocation4 + $0x188] sm:$0xff]
    %v180 = vld [vmem:[#allocation4 + $0x190] sm:$0xff]
    %v181 = vld [vmem:[#allocation4 + $0x198] sm:$0xff]
    %v182 = vld [vmem:[#allocation4 + $0x1a0] sm:$0xff]
    %v183 = vld [vmem:[#allocation4 + $0x1a8] sm:$0xff]
    %v184 = vld [vmem:[#allocation4 + $0x1b0] sm:$0xff]
    %v185 = vld [vmem:[#allocation4 + $0x1b8] sm:$0xff]
    %v186 = vld [vmem:[#allocation4 + $0x1c0] sm:$0xff]
    %v187 = vld [vmem:[#allocation4 + $0x1c8] sm:$0xff]
    %v188 = vld [vmem:[#allocation4 + $0x1d0] sm:$0xff]
    %v189 = vld [vmem:[#allocation4 + $0x1d8] sm:$0xff]
    %v190 = vld [vmem:[#allocation4 + $0x1e0] sm:$0xff]
    %v191 = vld [vmem:[#allocation4 + $0x1e8] sm:$0xff]
    %v192 = vld [vmem:[#allocation4 + $0x1f0] sm:$0xff]
    %v193 = vld [vmem:[#allocation4 + $0x1f8] sm:$0xff]
    %v194 = vld [vmem:[#allocation4 + $0x200] sm:$0xff]
    %v195 = vld [vmem:[#allocation4 + $0x208] sm:$0xff]
    %v196 = vld [vmem:[#allocation4 + $0x210] sm:$0xff]
    %v197 = vld [vmem:[#allocation4 + $0x218] sm:$0xff]
    %v198 = vld [vmem:[#allocation4 + $0x220] sm:$0xff]
    %v199 = vld [vmem:[#allocation4 + $0x228] sm:$0xff]
    %v200 = vld [vmem:[#allocation4 + $0x230] sm:$0xff]
    %v201 = vld [vmem:[#allocation4 + $0x238] sm:$0xff]
    %v202 = vld [vmem:[#allocation4 + $0x240] sm:$0xff]
    %v203 = vld [vmem:[#allocation4 + $0x248] sm:$0xff]
    %v204 = vld [vmem:[#allocation4 + $0x250] sm:$0xff]
    %v205 = vld [vmem:[#allocation4 + $0x258] sm:$0xff]
    %v206 = vld [vmem:[#allocation4 + $0x260] sm:$0xff]
    %v207 = vld [vmem:[#allocation4 + $0x268] sm:$0xff]
    %v208 = vld [vmem:[#allocation4 + $0x270] sm:$0xff]
    %v209 = vld [vmem:[#allocation4 + $0x278] sm:$0xff]
    %v210 = vld [vmem:[#allocation4 + $0x280] sm:$0xff]
    %v211 = vld [vmem:[#allocation4 + $0x288] sm:$0xff]
    %v212 = vld [vmem:[#allocation4 + $0x290] sm:$0xff]
    %v213 = vld [vmem:[#allocation4 + $0x298] sm:$0xff]
    %v214 = vld [vmem:[#allocation4 + $0x2a0] sm:$0xff]
    %v215 = vld [vmem:[#allocation4 + $0x2a8] sm:$0xff]
    %v216 = vld [vmem:[#allocation4 + $0x2b0] sm:$0xff]
    %v217 = vld [vmem:[#allocation4 + $0x2b8] sm:$0xff]
    %v218 = vld [vmem:[#allocation4 + $0x2c0] sm:$0xff]
    %v219 = vld [vmem:[#allocation4 + $0x2c8] sm:$0xff]
    %v220 = vld [vmem:[#allocation4 + $0x2d0] sm:$0xff]
    %v221 = vld [vmem:[#allocation4 + $0x2d8] sm:$0xff]
    %v222 = vld [vmem:[#allocation4 + $0x2e0] sm:$0xff]
    %v223 = vld [vmem:[#allocation4 + $0x2e8] sm:$0xff]
    %v224 = vld [vmem:[#allocation4 + $0x2f0] sm:$0xff]
    %v225 = vld [vmem:[#allocation4 + $0x2f8] sm:$0xff]
    %v226 = vld [vmem:[#allocation4 + $0x300] sm:$0xff]
    %v227 = vld [vmem:[#allocation4 + $0x308] sm:$0xff]
    %v228 = vld [vmem:[#allocation4 + $0x310] sm:$0xff]
    %v229 = vld [vmem:[#allocation4 + $0x318] sm:$0xff]
    %v230 = vld [vmem:[#allocation4 + $0x320] sm:$0xff]
    %v231 = vld [vmem:[#allocation4 + $0x328] sm:$0xff]
    %v232 = vld [vmem:[#allocation4 + $0x330] sm:$0xff]
    %v233 = vld [vmem:[#allocation4 + $0x338] sm:$0xff]
    %v234 = vld [vmem:[#allocation4 + $0x340] sm:$0xff]
    %v235 = vld [vmem:[#allocation4 + $0x348] sm:$0xff]
    %v236 = vld [vmem:[#allocation4 + $0x350] sm:$0xff]
    %v237 = vld [vmem:[#allocation4 + $0x358] sm:$0xff]
    %v238 = vld [vmem:[#allocation4 + $0x360] sm:$0xff]
    %v239 = vld [vmem:[#allocation4 + $0x368] sm:$0xff]
    %v240 = vld [vmem:[#allocation4 + $0x370] sm:$0xff]
    %v241 = vld [vmem:[#allocation4 + $0x378] sm:$0xff]
    %v242 = vld [vmem:[#allocation4 + $0x380] sm:$0xff]
    %v243 = vld [vmem:[#allocation4 + $0x388] sm:$0xff]
    %v244 = vld [vmem:[#allocation4 + $0x390] sm:$0xff]
    %v245 = vld [vmem:[#allocation4 + $0x398] sm:$0xff]
    %v246 = vld [vmem:[#allocation4 + $0x3a0] sm:$0xff]
    %v247 = vld [vmem:[#allocation4 + $0x3a8] sm:$0xff]
    %v248 = vld [vmem:[#allocation4 + $0x3b0] sm:$0xff]
    %v249 = vld [vmem:[#allocation4 + $0x3b8] sm:$0xff]
    %v250 = vld [vmem:[#allocation4 + $0x3c0] sm:$0xff]
    %v251 = vld [vmem:[#allocation4 + $0x3c8] sm:$0xff]
    %v252 = vld [vmem:[#allocation4 + $0x3d0] sm:$0xff]
    %v253 = vld [vmem:[#allocation4 + $0x3d8] sm:$0xff]
    %v254 = vld [vmem:[#allocation4 + $0x3e0] sm:$0xff]
    %v255 = vld [vmem:[#allocation4 + $0x3e8] sm:$0xff]
    %v256 = vld [vmem:[#allocation4 + $0x3f0] sm:$0xff]
    %v257 = vld [vmem:[#allocation4 + $0x3f8] sm:$0xff]
    %v258 = vld [vmem:[#allocation4 + $0x400] sm:$0xff]
    %v259 = vld [vmem:[#allocation4 + $0x408] sm:$0xff]
    %v260 = vld [vmem:[#allocation4 + $0x410] sm:$0xff]
    %v261 = vld [vmem:[#allocation4 + $0x418] sm:$0xff]
    %v262 = vld [vmem:[#allocation4 + $0x420] sm:$0xff]
    %v263 = vld [vmem:[#allocation4 + $0x428] sm:$0xff]
    %v264 = vld [vmem:[#allocation4 + $0x430] sm:$0xff]
    %v265 = vld [vmem:[#allocation4 + $0x438] sm:$0xff]
    %v266 = vld [vmem:[#allocation4 + $0x440] sm:$0xff]
    %v267 = vld [vmem:[#allocation4 + $0x448] sm:$0xff]
    %v268 = vld [vmem:[#allocation4 + $0x450] sm:$0xff]
    %v269 = vld [vmem:[#allocation4 + $0x458] sm:$0xff]
    %v270 = vld [vmem:[#allocation4 + $0x460] sm:$0xff]
    %v271 = vld [vmem:[#allocation4 + $0x468] sm:$0xff]
    %v272 = vld [vmem:[#allocation4 + $0x470] sm:$0xff]
    %v273 = vld [vmem:[#allocation4 + $0x478] sm:$0xff]
    %v274 = vld [vmem:[#allocation4 + $0x480] sm:$0xff]
    %v275 = vld [vmem:[#allocation4 + $0x488] sm:$0xff]
    %v276 = vld [vmem:[#allocation4 + $0x490] sm:$0xff]
    %v277 = vld [vmem:[#allocation4 + $0x498] sm:$0xff]
    %v278 = vld [vmem:[#allocation4 + $0x4a0] sm:$0xff]
    %v279 = vld [vmem:[#allocation4 + $0x4a8] sm:$0xff]
    %v280 = vld [vmem:[#allocation4 + $0x4b0] sm:$0xff]
    %v281 = vld [vmem:[#allocation4 + $0x4b8] sm:$0xff]
    %v282 = vld [vmem:[#allocation4 + $0x4c0] sm:$0xff]
    %v283 = vld [vmem:[#allocation4 + $0x4c8] sm:$0xff]
    %v284 = vld [vmem:[#allocation4 + $0x4d0] sm:$0xff]
    %v285 = vld [vmem:[#allocation4 + $0x4d8] sm:$0xff]
    %v286 = vld [vmem:[#allocation4 + $0x4e0] sm:$0xff]
    %v287 = vld [vmem:[#allocation4 + $0x4e8] sm:$0xff]
    %v288 = vld [vmem:[#allocation4 + $0x4f0] sm:$0xff]
    %v289 = vld [vmem:[#allocation4 + $0x4f8] sm:$0xff]
    %v290 = vld [vmem:[#allocation4 + $0x500] sm:$0xff]
    %v291 = vld [vmem:[#allocation4 + $0x508] sm:$0xff]
    %v292 = vld [vmem:[#allocation4 + $0x510] sm:$0xff]
    %v293 = vld [vmem:[#allocation4 + $0x518] sm:$0xff]
    %v294 = vld [vmem:[#allocation4 + $0x520] sm:$0xff]
    %v295 = vld [vmem:[#allocation4 + $0x528] sm:$0xff]
    %v296 = vld [vmem:[#allocation4 + $0x530] sm:$0xff]
    %v297 = vld [vmem:[#allocation4 + $0x538] sm:$0xff]
    %v298 = vld [vmem:[#allocation4 + $0x540] sm:$0xff]
    %v299 = vld [vmem:[#allocation4 + $0x548] sm:$0xff]
    %v300 = vld [vmem:[#allocation4 + $0x550] sm:$0xff]
    %v301 = vld [vmem:[#allocation4 + $0x558] sm:$0xff]
    %v302 = vld [vmem:[#allocation4 + $0x560] sm:$0xff]
    %v303 = vld [vmem:[#allocation4 + $0x568] sm:$0xff]
    %v304 = vld [vmem:[#allocation4 + $0x570] sm:$0xff]
    %v305 = vld [vmem:[#allocation4 + $0x578] sm:$0xff]
    %v306 = vld [vmem:[#allocation4 + $0x580] sm:$0xff]
    %v307 = vld [vmem:[#allocation4 + $0x588] sm:$0xff]
    %v308 = vld [vmem:[#allocation4 + $0x590] sm:$0xff]
    %v309 = vld [vmem:[#allocation4 + $0x598] sm:$0xff]
    %v310 = vld [vmem:[#allocation4 + $0x5a0] sm:$0xff]
    %v311 = vld [vmem:[#allocation4 + $0x5a8] sm:$0xff]
    %v312 = vld [vmem:[#allocation4 + $0x5b0] sm:$0xff]
    %v313 = vld [vmem:[#allocation4 + $0x5b8] sm:$0xff]
    %v314 = vld [vmem:[#allocation4 + $0x5c0] sm:$0xff]
    %v315 = vld [vmem:[#allocation4 + $0x5c8] sm:$0xff]
    %v316 = vld [vmem:[#allocation4 + $0x5d0] sm:$0xff]
    %v317 = vld [vmem:[#allocation4 + $0x5d8] sm:$0xff]
    %v318 = vld [vmem:[#allocation4 + $0x5e0] sm:$0xff]
    %v319 = vld [vmem:[#allocation4 + $0x5e8] sm:$0xff]
    %v320 = vld [vmem:[#allocation4 + $0x5f0] sm:$0xff]
    %v321 = vld [vmem:[#allocation4 + $0x5f8] sm:$0xff]
    %v322 = vld [vmem:[#allocation4 + $0x600] sm:$0xff]
    %v323 = vld [vmem:[#allocation4 + $0x608] sm:$0xff]
    %v324 = vld [vmem:[#allocation4 + $0x610] sm:$0xff]
    %v325 = vld [vmem:[#allocation4 + $0x618] sm:$0xff]
    %v326 = vld [vmem:[#allocation4 + $0x620] sm:$0xff]
    %v327 = vld [vmem:[#allocation4 + $0x628] sm:$0xff]
    %v328 = vld [vmem:[#allocation4 + $0x630] sm:$0xff]
    %v329 = vld [vmem:[#allocation4 + $0x638] sm:$0xff]
    %v330 = vld [vmem:[#allocation4 + $0x640] sm:$0xff]
    %v331 = vld [vmem:[#allocation4 + $0x648] sm:$0xff]
    %v332 = vld [vmem:[#allocation4 + $0x650] sm:$0xff]
    %v333 = vld [vmem:[#allocation4 + $0x658] sm:$0xff]
    %v334 = vld [vmem:[#allocation4 + $0x660] sm:$0xff]
    %v335 = vld [vmem:[#allocation4 + $0x668] sm:$0xff]
    %v336 = vld [vmem:[#allocation4 + $0x670] sm:$0xff]
    %v337 = vld [vmem:[#allocation4 + $0x678] sm:$0xff]
    %v338 = vld [vmem:[#allocation4 + $0x680] sm:$0xff]
    %v339 = vld [vmem:[#allocation4 + $0x688] sm:$0xff]
    %v340 = vld [vmem:[#allocation4 + $0x690] sm:$0xff]
    %v341 = vld [vmem:[#allocation4 + $0x698] sm:$0xff]
    %v342 = vld [vmem:[#allocation4 + $0x6a0] sm:$0xff]
    %v343 = vld [vmem:[#allocation4 + $0x6a8] sm:$0xff]
    %v344 = vld [vmem:[#allocation4 + $0x6b0] sm:$0xff]
    %v345 = vld [vmem:[#allocation4 + $0x6b8] sm:$0xff]
    %v346 = vld [vmem:[#allocation4 + $0x6c0] sm:$0xff]
    %v347 = vld [vmem:[#allocation4 + $0x6c8] sm:$0xff]
    %v348 = vld [vmem:[#allocation4 + $0x6d0] sm:$0xff]
    %v349 = vld [vmem:[#allocation4 + $0x6d8] sm:$0xff]
    %v350 = vld [vmem:[#allocation4 + $0x6e0] sm:$0xff]
    %v351 = vld [vmem:[#allocation4 + $0x6e8] sm:$0xff]
    %v352 = vld [vmem:[#allocation4 + $0x6f0] sm:$0xff]
    %v353 = vld [vmem:[#allocation4 + $0x6f8] sm:$0xff]
    %v354 = vld [vmem:[#allocation4 + $0x700] sm:$0xff]
    %v355 = vld [vmem:[#allocation4 + $0x708] sm:$0xff]
    %v356 = vld [vmem:[#allocation4 + $0x710] sm:$0xff]
    %v357 = vld [vmem:[#allocation4 + $0x718] sm:$0xff]
    %v358 = vld [vmem:[#allocation4 + $0x720] sm:$0xff]
    %v359 = vld [vmem:[#allocation4 + $0x728] sm:$0xff]
    %v360 = vld [vmem:[#allocation4 + $0x730] sm:$0xff]
    %v361 = vld [vmem:[#allocation4 + $0x738] sm:$0xff]
    %v362 = vld [vmem:[#allocation4 + $0x740] sm:$0xff]
    %v363 = vld [vmem:[#allocation4 + $0x748] sm:$0xff]
    %v364 = vld [vmem:[#allocation4 + $0x750] sm:$0xff]
    %v365 = vld [vmem:[#allocation4 + $0x758] sm:$0xff]
    %v366 = vld [vmem:[#allocation4 + $0x760] sm:$0xff]
    %v367 = vld [vmem:[#allocation4 + $0x768] sm:$0xff]
    %v368 = vld [vmem:[#allocation4 + $0x770] sm:$0xff]
    %v369 = vld [vmem:[#allocation4 + $0x778] sm:$0xff]
    %v370 = vld [vmem:[#allocation4 + $0x780] sm:$0xff]
    %v371 = vld [vmem:[#allocation4 + $0x788] sm:$0xff]
    %v372 = vld [vmem:[#allocation4 + $0x790] sm:$0xff]
    %v373 = vld [vmem:[#allocation4 + $0x798] sm:$0xff]
    %v374 = vld [vmem:[#allocation4 + $0x7a0] sm:$0xff]
    %v375 = vld [vmem:[#allocation4 + $0x7a8] sm:$0xff]
    %v376 = vld [vmem:[#allocation4 + $0x7b0] sm:$0xff]
    %v377 = vld [vmem:[#allocation4 + $0x7b8] sm:$0xff]
    %v378 = vld [vmem:[#allocation4 + $0x7c0] sm:$0xff]
    %v379 = vld [vmem:[#allocation4 + $0x7c8] sm:$0xff]
    %v380 = vld [vmem:[#allocation4 + $0x7d0] sm:$0xff]
    %v381 = vld [vmem:[#allocation4 + $0x7d8] sm:$0xff]
    %v382 = vld [vmem:[#allocation4 + $0x7e0] sm:$0xff]
    %v383 = vld [vmem:[#allocation4 + $0x7e8] sm:$0xff]
    %v384 = vld [vmem:[#allocation4 + $0x7f0] sm:$0xff]
    %v385 = vld [vmem:[#allocation4 + $0x7f8] sm:$0xff]
    %v386 = vld [vmem:[#allocation4 + $0x800] sm:$0xff]
    %v387 = vld [vmem:[#allocation4 + $0x808] sm:$0xff]
    %v388 = vld [vmem:[#allocation4 + $0x810] sm:$0xff]
    %v389 = vld [vmem:[#allocation4 + $0x818] sm:$0xff]
    %v390 = vld [vmem:[#allocation4 + $0x820] sm:$0xff]
    %v391 = vld [vmem:[#allocation4 + $0x828] sm:$0xff]
    %v392 = vld [vmem:[#allocation4 + $0x830] sm:$0xff]
    %v393 = vld [vmem:[#allocation4 + $0x838] sm:$0xff]
    %v394 = vld [vmem:[#allocation4 + $0x840] sm:$0xff]
    %v395 = vld [vmem:[#allocation4 + $0x848] sm:$0xff]
    %v396 = vld [vmem:[#allocation4 + $0x850] sm:$0xff]
    %v397 = vld [vmem:[#allocation4 + $0x858] sm:$0xff]
    %v398 = vld [vmem:[#allocation4 + $0x860] sm:$0xff]
    %v399 = vld [vmem:[#allocation4 + $0x868] sm:$0xff]
    %v400 = vld [vmem:[#allocation4 + $0x870] sm:$0xff]
    %v401 = vld [vmem:[#allocation4 + $0x878] sm:$0xff]
    %v402 = vld [vmem:[#allocation4 + $0x880] sm:$0xff]
    %v403 = vld [vmem:[#allocation4 + $0x888] sm:$0xff]
    %v404 = vld [vmem:[#allocation4 + $0x890] sm:$0xff]
    %v405 = vld [vmem:[#allocation4 + $0x898] sm:$0xff]
    %v406 = vld [vmem:[#allocation4 + $0x8a0] sm:$0xff]
    %v407 = vld [vmem:[#allocation4 + $0x8a8] sm:$0xff]
    %v408 = vld [vmem:[#allocation4 + $0x8b0] sm:$0xff]
    %v409 = vld [vmem:[#allocation4 + $0x8b8] sm:$0xff]
    %v410 = vld [vmem:[#allocation4 + $0x8c0] sm:$0xff]
    %v411 = vld [vmem:[#allocation4 + $0x8c8] sm:$0xff]
    %v412 = vld [vmem:[#allocation4 + $0x8d0] sm:$0xff]
    %v413 = vld [vmem:[#allocation4 + $0x8d8] sm:$0xff]
    %v414 = vld [vmem:[#allocation4 + $0x8e0] sm:$0xff]
    %v415 = vld [vmem:[#allocation4 + $0x8e8] sm:$0xff]
    %v416 = vld [vmem:[#allocation4 + $0x8f0] sm:$0xff]
    %v417 = vld [vmem:[#allocation4 + $0x8f8] sm:$0xff]
    %v418 = vld [vmem:[#allocation4 + $0x900] sm:$0xff]
    %v419 = vld [vmem:[#allocation4 + $0x908] sm:$0xff]
    %v420 = vld [vmem:[#allocation4 + $0x910] sm:$0xff]
    %v421 = vld [vmem:[#allocation4 + $0x918] sm:$0xff]
    %v422 = vld [vmem:[#allocation4 + $0x920] sm:$0xff]
    %v423 = vld [vmem:[#allocation4 + $0x928] sm:$0xff]
    %v424 = vld [vmem:[#allocation4 + $0x930] sm:$0xff]
    %v425 = vld [vmem:[#allocation4 + $0x938] sm:$0xff]
    %v426 = vld [vmem:[#allocation4 + $0x940] sm:$0xff]
    %v427 = vld [vmem:[#allocation4 + $0x948] sm:$0xff]
    %v428 = vld [vmem:[#allocation4 + $0x950] sm:$0xff]
    %v429 = vld [vmem:[#allocation4 + $0x958] sm:$0xff]
    %v430 = vld [vmem:[#allocation4 + $0x960] sm:$0xff]
    %v431 = vld [vmem:[#allocation4 + $0x968] sm:$0xff]
    %v432 = vld [vmem:[#allocation4 + $0x970] sm:$0xff]
    %v433 = vld [vmem:[#allocation4 + $0x978] sm:$0xff]
    %v434 = vld [vmem:[#allocation4 + $0x980] sm:$0xff]
    %v435 = vld [vmem:[#allocation4 + $0x988] sm:$0xff]
    %v436 = vld [vmem:[#allocation4 + $0x990] sm:$0xff]
    %v437 = vld [vmem:[#allocation4 + $0x998] sm:$0xff]
    %v438 = vld [vmem:[#allocation4 + $0x9a0] sm:$0xff]
    %v439 = vld [vmem:[#allocation4 + $0x9a8] sm:$0xff]
    %v440 = vld [vmem:[#allocation4 + $0x9b0] sm:$0xff]
    %v441 = vld [vmem:[#allocation4 + $0x9b8] sm:$0xff]
    %v442 = vld [vmem:[#allocation4 + $0x9c0] sm:$0xff]
    %v443 = vld [vmem:[#allocation4 + $0x9c8] sm:$0xff]
    %v444 = vld [vmem:[#allocation4 + $0x9d0] sm:$0xff]
    %v445 = vld [vmem:[#allocation4 + $0x9d8] sm:$0xff]
    %v446 = vld [vmem:[#allocation4 + $0x9e0] sm:$0xff]
    %v447 = vld [vmem:[#allocation4 + $0x9e8] sm:$0xff]
    %v448 = vld [vmem:[#allocation4 + $0x9f0] sm:$0xff]
    %v449 = vld [vmem:[#allocation4 + $0x9f8] sm:$0xff]
    %v450 = vld [vmem:[#allocation4 + $0xa00] sm:$0xff]
    %v451 = vld [vmem:[#allocation4 + $0xa08] sm:$0xff]
    %v452 = vld [vmem:[#allocation4 + $0xa10] sm:$0xff]
    %v453 = vld [vmem:[#allocation4 + $0xa18] sm:$0xff]
    %v454 = vld [vmem:[#allocation4 + $0xa20] sm:$0xff]
    %v455 = vld [vmem:[#allocation4 + $0xa28] sm:$0xff]
    %v456 = vld [vmem:[#allocation4 + $0xa30] sm:$0xff]
    %v457 = vld [vmem:[#allocation4 + $0xa38] sm:$0xff]
    %v458 = vld [vmem:[#allocation4 + $0xa40] sm:$0xff]
    %v459 = vld [vmem:[#allocation4 + $0xa48] sm:$0xff]
    %v460 = vld [vmem:[#allocation4 + $0xa50] sm:$0xff]
    %v461 = vld [vmem:[#allocation4 + $0xa58] sm:$0xff]
    %v462 = vld [vmem:[#allocation4 + $0xa60] sm:$0xff]
    %v463 = vld [vmem:[#allocation4 + $0xa68] sm:$0xff]
    %v464 = vld [vmem:[#allocation4 + $0xa70] sm:$0xff]
    %v465 = vld [vmem:[#allocation4 + $0xa78] sm:$0xff]
    %v466 = vld [vmem:[#allocation4 + $0xa80] sm:$0xff]
    %v467 = vld [vmem:[#allocation4 + $0xa88] sm:$0xff]
    %v468 = vld [vmem:[#allocation4 + $0xa90] sm:$0xff]
    %v469 = vld [vmem:[#allocation4 + $0xa98] sm:$0xff]
    %v470 = vld [vmem:[#allocation4 + $0xaa0] sm:$0xff]
    %v471 = vld [vmem:[#allocation4 + $0xaa8] sm:$0xff]
    %v472 = vld [vmem:[#allocation4 + $0xab0] sm:$0xff]
    %v473 = vld [vmem:[#allocation4 + $0xab8] sm:$0xff]
    %v474 = vld [vmem:[#allocation4 + $0xac0] sm:$0xff]
    %v475 = vld [vmem:[#allocation4 + $0xac8] sm:$0xff]
    %v476 = vld [vmem:[#allocation4 + $0xad0] sm:$0xff]
    %v477 = vld [vmem:[#allocation4 + $0xad8] sm:$0xff]
    %v478 = vld [vmem:[#allocation4 + $0xae0] sm:$0xff]
    %v479 = vld [vmem:[#allocation4 + $0xae8] sm:$0xff]
    %v480 = vld [vmem:[#allocation4 + $0xaf0] sm:$0xff]
    %v481 = vld [vmem:[#allocation4 + $0xaf8] sm:$0xff]
    %v482 = vld [vmem:[#allocation4 + $0xb00] sm:$0xff]
    %v483 = vld [vmem:[#allocation4 + $0xb08] sm:$0xff]
    %v484 = vld [vmem:[#allocation4 + $0xb10] sm:$0xff]
    %v485 = vld [vmem:[#allocation4 + $0xb18] sm:$0xff]
    %v486 = vld [vmem:[#allocation4 + $0xb20] sm:$0xff]
    %v487 = vld [vmem:[#allocation4 + $0xb28] sm:$0xff]
    %v488 = vld [vmem:[#allocation4 + $0xb30] sm:$0xff]
    %v489 = vld [vmem:[#allocation4 + $0xb38] sm:$0xff]
    %v490 = vld [vmem:[#allocation4 + $0xb40] sm:$0xff]
    %v491 = vld [vmem:[#allocation4 + $0xb48] sm:$0xff]
    %v492 = vld [vmem:[#allocation4 + $0xb50] sm:$0xff]
    %v493 = vld [vmem:[#allocation4 + $0xb58] sm:$0xff]
    %v494 = vld [vmem:[#allocation4 + $0xb60] sm:$0xff]
    %v495 = vld [vmem:[#allocation4 + $0xb68] sm:$0xff]
    %v496 = vld [vmem:[#allocation4 + $0xb70] sm:$0xff]
    %v497 = vld [vmem:[#allocation4 + $0xb78] sm:$0xff]
    %v498 = vld [vmem:[#allocation4 + $0xb80] sm:$0xff]
    %v499 = vld [vmem:[#allocation4 + $0xb88] sm:$0xff]
    %v500 = vld [vmem:[#allocation4 + $0xb90] sm:$0xff]
    %v501 = vld [vmem:[#allocation4 + $0xb98] sm:$0xff]
    %v502 = vld [vmem:[#allocation4 + $0xba0] sm:$0xff]
    %v503 = vld [vmem:[#allocation4 + $0xba8] sm:$0xff]
    %v504 = vld [vmem:[#allocation4 + $0xbb0] sm:$0xff]
    %v505 = vld [vmem:[#allocation4 + $0xbb8] sm:$0xff]
    %v506 = vld [vmem:[#allocation4 + $0xbc0] sm:$0xff]
    %v507 = vld [vmem:[#allocation4 + $0xbc8] sm:$0xff]
    %v508 = vld [vmem:[#allocation4 + $0xbd0] sm:$0xff]
    %v509 = vld [vmem:[#allocation4 + $0xbd8] sm:$0xff]
    %v510 = vld [vmem:[#allocation4 + $0xbe0] sm:$0xff]
    %v511 = vld [vmem:[#allocation4 + $0xbe8] sm:$0xff]
    %v512 = vld [vmem:[#allocation4 + $0xbf0] sm:$0xff]
    %v513 = vld [vmem:[#allocation4 + $0xbf8] sm:$0xff]
    %v514 = vld [vmem:[#allocation4 + $0xc00] sm:$0xff]
    %v515 = vld [vmem:[#allocation4 + $0xc08] sm:$0xff]
    %v516 = vld [vmem:[#allocation4 + $0xc10] sm:$0xff]
    %v517 = vld [vmem:[#allocation4 + $0xc18] sm:$0xff]
    %v518 = vld [vmem:[#allocation4 + $0xc20] sm:$0xff]
    %v519 = vld [vmem:[#allocation4 + $0xc28] sm:$0xff]
    %v520 = vld [vmem:[#allocation4 + $0xc30] sm:$0xff]
    %v521 = vld [vmem:[#allocation4 + $0xc38] sm:$0xff]
    %v522 = vld [vmem:[#allocation4 + $0xc40] sm:$0xff]
    %v523 = vld [vmem:[#allocation4 + $0xc48] sm:$0xff]
    %v524 = vld [vmem:[#allocation4 + $0xc50] sm:$0xff]
    %v525 = vld [vmem:[#allocation4 + $0xc58] sm:$0xff]
    %v526 = vld [vmem:[#allocation4 + $0xc60] sm:$0xff]
    %v527 = vld [vmem:[#allocation4 + $0xc68] sm:$0xff]
    %v528 = vld [vmem:[#allocation4 + $0xc70] sm:$0xff]
    %v529 = vld [vmem:[#allocation4 + $0xc78] sm:$0xff]
    %v530 = vld [vmem:[#allocation4 + $0xc80] sm:$0xff]
    %v531 = vld [vmem:[#allocation4 + $0xc88] sm:$0xff]
    %v532 = vld [vmem:[#allocation4 + $0xc90] sm:$0xff]
    %v533 = vld [vmem:[#allocation4 + $0xc98] sm:$0xff]
    %v534 = vld [vmem:[#allocation4 + $0xca0] sm:$0xff]
    %v535 = vld [vmem:[#allocation4 + $0xca8] sm:$0xff]
    %v536 = vld [vmem:[#allocation4 + $0xcb0] sm:$0xff]
    %v537 = vld [vmem:[#allocation4 + $0xcb8] sm:$0xff]
    %v538 = vld [vmem:[#allocation4 + $0xcc0] sm:$0xff]
    %v539 = vld [vmem:[#allocation4 + $0xcc8] sm:$0xff]
    %v540 = vld [vmem:[#allocation4 + $0xcd0] sm:$0xff]
    %v541 = vld [vmem:[#allocation4 + $0xcd8] sm:$0xff]
    %v542 = vld [vmem:[#allocation4 + $0xce0] sm:$0xff]
    %v543 = vld [vmem:[#allocation4 + $0xce8] sm:$0xff]
    %v544 = vld [vmem:[#allocation4 + $0xcf0] sm:$0xff]
    %v545 = vld [vmem:[#allocation4 + $0xcf8] sm:$0xff]
    %v546 = vld [vmem:[#allocation4 + $0xd00] sm:$0xff]
    %v547 = vld [vmem:[#allocation4 + $0xd08] sm:$0xff]
    %v548 = vld [vmem:[#allocation4 + $0xd10] sm:$0xff]
    %v549 = vld [vmem:[#allocation4 + $0xd18] sm:$0xff]
    %v550 = vld [vmem:[#allocation4 + $0xd20] sm:$0xff]
    %v551 = vld [vmem:[#allocation4 + $0xd28] sm:$0xff]
    %v552 = vld [vmem:[#allocation4 + $0xd30] sm:$0xff]
    %v553 = vld [vmem:[#allocation4 + $0xd38] sm:$0xff]
    %v554 = vld [vmem:[#allocation4 + $0xd40] sm:$0xff]
    %v555 = vld [vmem:[#allocation4 + $0xd48] sm:$0xff]
    %v556 = vld [vmem:[#allocation4 + $0xd50] sm:$0xff]
    %v557 = vld [vmem:[#allocation4 + $0xd58] sm:$0xff]
    %v558 = vld [vmem:[#allocation4 + $0xd60] sm:$0xff]
    %v559 = vld [vmem:[#allocation4 + $0xd68] sm:$0xff]
    %v560 = vld [vmem:[#allocation4 + $0xd70] sm:$0xff]
    %v561 = vld [vmem:[#allocation4 + $0xd78] sm:$0xff]
    %v562 = vld [vmem:[#allocation4 + $0xd80] sm:$0xff]
    %v563 = vld [vmem:[#allocation4 + $0xd88] sm:$0xff]
    %v564 = vld [vmem:[#allocation4 + $0xd90] sm:$0xff]
    %v565 = vld [vmem:[#allocation4 + $0xd98] sm:$0xff]
    %v566 = vld [vmem:[#allocation4 + $0xda0] sm:$0xff]
    %v567 = vld [vmem:[#allocation4 + $0xda8] sm:$0xff]
    %v568 = vld [vmem:[#allocation4 + $0xdb0] sm:$0xff]
    %v569 = vld [vmem:[#allocation4 + $0xdb8] sm:$0xff]
    %v570 = vld [vmem:[#allocation4 + $0xdc0] sm:$0xff]
    %v571 = vld [vmem:[#allocation4 + $0xdc8] sm:$0xff]
    %v572 = vld [vmem:[#allocation4 + $0xdd0] sm:$0xff]
    %v573 = vld [vmem:[#allocation4 + $0xdd8] sm:$0xff]
    %v574 = vld [vmem:[#allocation4 + $0xde0] sm:$0xff]
    %v575 = vld [vmem:[#allocation4 + $0xde8] sm:$0xff]
    %v576 = vld [vmem:[#allocation4 + $0xdf0] sm:$0xff]
    %v577 = vld [vmem:[#allocation4 + $0xdf8] sm:$0xff]
    %v578 = vld [vmem:[#allocation4 + $0xe00] sm:$0xff]
    %v579 = vld [vmem:[#allocation4 + $0xe08] sm:$0xff]
    %v580 = vld [vmem:[#allocation4 + $0xe10] sm:$0xff]
    %v581 = vld [vmem:[#allocation4 + $0xe18] sm:$0xff]
    %v582 = vld [vmem:[#allocation4 + $0xe20] sm:$0xff]
    %v583 = vld [vmem:[#allocation4 + $0xe28] sm:$0xff]
    %v584 = vld [vmem:[#allocation4 + $0xe30] sm:$0xff]
    %v585 = vld [vmem:[#allocation4 + $0xe38] sm:$0xff]
    %v586 = vld [vmem:[#allocation4 + $0xe40] sm:$0xff]
    %v587 = vld [vmem:[#allocation4 + $0xe48] sm:$0xff]
    %v588 = vld [vmem:[#allocation4 + $0xe50] sm:$0xff]
    %v589 = vld [vmem:[#allocation4 + $0xe58] sm:$0xff]
    %v590 = vld [vmem:[#allocation4 + $0xe60] sm:$0xff]
    %v591 = vld [vmem:[#allocation4 + $0xe68] sm:$0xff]
    %v592 = vld [vmem:[#allocation4 + $0xe70] sm:$0xff]
    %v593 = vld [vmem:[#allocation4 + $0xe78] sm:$0xff]
    %v594 = vld [vmem:[#allocation4 + $0xe80] sm:$0xff]
    %v595 = vld [vmem:[#allocation4 + $0xe88] sm:$0xff]
    %v596 = vld [vmem:[#allocation4 + $0xe90] sm:$0xff]
    %v597 = vld [vmem:[#allocation4 + $0xe98] sm:$0xff]
    %v598 = vld [vmem:[#allocation4 + $0xea0] sm:$0xff]
    %v599 = vld [vmem:[#allocation4 + $0xea8] sm:$0xff]
    %v600 = vld [vmem:[#allocation4 + $0xeb0] sm:$0xff]
    %v601 = vld [vmem:[#allocation4 + $0xeb8] sm:$0xff]
    %v602 = vld [vmem:[#allocation4 + $0xec0] sm:$0xff]
    %v603 = vld [vmem:[#allocation4 + $0xec8] sm:$0xff]
    %v604 = vld [vmem:[#allocation4 + $0xed0] sm:$0xff]
    %v605 = vld [vmem:[#allocation4 + $0xed8] sm:$0xff]
    %v606 = vld [vmem:[#allocation4 + $0xee0] sm:$0xff]
    %v607 = vld [vmem:[#allocation4 + $0xee8] sm:$0xff]
    %v608 = vld [vmem:[#allocation4 + $0xef0] sm:$0xff]
    %v609 = vld [vmem:[#allocation4 + $0xef8] sm:$0xff]
    %v610 = vld [vmem:[#allocation4 + $0xf00] sm:$0xff]
    %v611 = vld [vmem:[#allocation4 + $0xf08] sm:$0xff]
    %v612 = vld [vmem:[#allocation4 + $0xf10] sm:$0xff]
    %v613 = vld [vmem:[#allocation4 + $0xf18] sm:$0xff]
    %v614 = vld [vmem:[#allocation4 + $0xf20] sm:$0xff]
    %v615 = vld [vmem:[#allocation4 + $0xf28] sm:$0xff]
    %v616 = vld [vmem:[#allocation4 + $0xf30] sm:$0xff]
    %v617 = vld [vmem:[#allocation4 + $0xf38] sm:$0xff]
    %v618 = vld [vmem:[#allocation4 + $0xf40] sm:$0xff]
    %v619 = vld [vmem:[#allocation4 + $0xf48] sm:$0xff]
    %v620 = vld [vmem:[#allocation4 + $0xf50] sm:$0xff]
    %v621 = vld [vmem:[#allocation4 + $0xf58] sm:$0xff]
    %v622 = vld [vmem:[#allocation4 + $0xf60] sm:$0xff]
    %v623 = vld [vmem:[#allocation4 + $0xf68] sm:$0xff]
    %v624 = vld [vmem:[#allocation4 + $0xf70] sm:$0xff]
    %v625 = vld [vmem:[#allocation4 + $0xf78] sm:$0xff]
    %v626 = vld [vmem:[#allocation4 + $0xf80] sm:$0xff]
    %v627 = vld [vmem:[#allocation4 + $0xf88] sm:$0xff]
    %v628 = vld [vmem:[#allocation4 + $0xf90] sm:$0xff]
    %v629 = vld [vmem:[#allocation4 + $0xf98] sm:$0xff]
    %v630 = vld [vmem:[#allocation4 + $0xfa0] sm:$0xff]
    %v631 = vld [vmem:[#allocation4 + $0xfa8] sm:$0xff]
    %v632 = vld [vmem:[#allocation4 + $0xfb0] sm:$0xff]
    %v633 = vld [vmem:[#allocation4 + $0xfb8] sm:$0xff]
    %v634 = vld [vmem:[#allocation4 + $0xfc0] sm:$0xff]
    %v635 = vld [vmem:[#allocation4 + $0xfc8] sm:$0xff]
    %v636 = vld [vmem:[#allocation4 + $0xfd0] sm:$0xff]
    %v637 = vld [vmem:[#allocation4 + $0xfd8] sm:$0xff]
    %v638 = vld [vmem:[#allocation4 + $0xfe0] sm:$0xff]
    %v639 = vld [vmem:[#allocation4 + $0xfe8] sm:$0xff]
    %v640 = vld [vmem:[#allocation4 + $0xff0] sm:$0xff]
    %v641 = vld [vmem:[#allocation4 + $0xff8] sm:$0xff]
    %v642 = vld [vmem:[#allocation4 + $0x1000] sm:$0xff]
    %v643 = vld [vmem:[#allocation4 + $0x1008] sm:$0xff]
    %v644 = vld [vmem:[#allocation4 + $0x1010] sm:$0xff]
    %v645 = vld [vmem:[#allocation4 + $0x1018] sm:$0xff]
    %v646 = vld [vmem:[#allocation4 + $0x1020] sm:$0xff]
    %v647 = vld [vmem:[#allocation4 + $0x1028] sm:$0xff]
    %v648 = vld [vmem:[#allocation4 + $0x1030] sm:$0xff]
    %v649 = vld [vmem:[#allocation4 + $0x1038] sm:$0xff]
    %v650 = vld [vmem:[#allocation4 + $0x1040] sm:$0xff]
    %v651 = vld [vmem:[#allocation4 + $0x1048] sm:$0xff]
    %v652 = vld [vmem:[#allocation4 + $0x1050] sm:$0xff]
    %v653 = vld [vmem:[#allocation4 + $0x1058] sm:$0xff]
    %v654 = vld [vmem:[#allocation4 + $0x1060] sm:$0xff]
    %v655 = vld [vmem:[#allocation4 + $0x1068] sm:$0xff]
    %v656 = vld [vmem:[#allocation4 + $0x1070] sm:$0xff]
    %v657 = vld [vmem:[#allocation4 + $0x1078] sm:$0xff]
    %v658 = vld [vmem:[#allocation4 + $0x1080] sm:$0xff]
    %v659 = vld [vmem:[#allocation4 + $0x1088] sm:$0xff]
    %v660 = vld [vmem:[#allocation4 + $0x1090] sm:$0xff]
    %v661 = vld [vmem:[#allocation4 + $0x1098] sm:$0xff]
    %v662 = vld [vmem:[#allocation4 + $0x10a0] sm:$0xff]
    %v663 = vld [vmem:[#allocation4 + $0x10a8] sm:$0xff]
    %v664 = vld [vmem:[#allocation4 + $0x10b0] sm:$0xff]
    %v665 = vld [vmem:[#allocation4 + $0x10b8] sm:$0xff]
    %v666 = vld [vmem:[#allocation4 + $0x10c0] sm:$0xff]
    %v667 = vld [vmem:[#allocation4 + $0x10c8] sm:$0xff]
    %v668 = vld [vmem:[#allocation4 + $0x10d0] sm:$0xff]
    %v669 = vld [vmem:[#allocation4 + $0x10d8] sm:$0xff]
    %v670 = vld [vmem:[#allocation4 + $0x10e0] sm:$0xff]
    %v671 = vld [vmem:[#allocation4 + $0x10e8] sm:$0xff]
    %v672 = vld [vmem:[#allocation4 + $0x10f0] sm:$0xff]
    %v673 = vld [vmem:[#allocation4 + $0x10f8] sm:$0xff]
    %v674 = vld [vmem:[#allocation4 + $0x1100] sm:$0xff]
    %v675 = vld [vmem:[#allocation4 + $0x1108] sm:$0xff]
    %v676 = vld [vmem:[#allocation4 + $0x1110] sm:$0xff]
    %v677 = vld [vmem:[#allocation4 + $0x1118] sm:$0xff]
    %v678 = vld [vmem:[#allocation4 + $0x1120] sm:$0xff]
    %v679 = vld [vmem:[#allocation4 + $0x1128] sm:$0xff]
    %v680 = vld [vmem:[#allocation4 + $0x1130] sm:$0xff]
    %v681 = vld [vmem:[#allocation4 + $0x1138] sm:$0xff]
    %v682 = vld [vmem:[#allocation4 + $0x1140] sm:$0xff]
    %v683 = vld [vmem:[#allocation4 + $0x1148] sm:$0xff]
    %v684 = vld [vmem:[#allocation4 + $0x1150] sm:$0xff]
    %v685 = vld [vmem:[#allocation4 + $0x1158] sm:$0xff]
    %v686 = vld [vmem:[#allocation4 + $0x1160] sm:$0xff]
    %v687 = vld [vmem:[#allocation4 + $0x1168] sm:$0xff]
    %v688 = vld [vmem:[#allocation4 + $0x1170] sm:$0xff]
    %v689 = vld [vmem:[#allocation4 + $0x1178] sm:$0xff]
    %v690 = vld [vmem:[#allocation4 + $0x1180] sm:$0xff]
    %v691 = vld [vmem:[#allocation4 + $0x1188] sm:$0xff]
    %v692 = vld [vmem:[#allocation4 + $0x1190] sm:$0xff]
    %v693 = vld [vmem:[#allocation4 + $0x1198] sm:$0xff]
    %v694 = vld [vmem:[#allocation4 + $0x11a0] sm:$0xff]
    %v695 = vld [vmem:[#allocation4 + $0x11a8] sm:$0xff]
    %v696 = vld [vmem:[#allocation4 + $0x11b0] sm:$0xff]
    %v697 = vld [vmem:[#allocation4 + $0x11b8] sm:$0xff]
    %v698 = vld [vmem:[#allocation4 + $0x11c0] sm:$0xff]
    %v699 = vld [vmem:[#allocation4 + $0x11c8] sm:$0xff]
    %v700 = vld [vmem:[#allocation4 + $0x11d0] sm:$0xff]
    %v701 = vld [vmem:[#allocation4 + $0x11d8] sm:$0xff]
    %v702 = vld [vmem:[#allocation4 + $0x11e0] sm:$0xff]
    %v703 = vld [vmem:[#allocation4 + $0x11e8] sm:$0xff]
    %v704 = vld [vmem:[#allocation4 + $0x11f0] sm:$0xff]
    %v705 = vld [vmem:[#allocation4 + $0x11f8] sm:$0xff]
    %v706 = vld [vmem:[#allocation4 + $0x1200] sm:$0xff]
    %v707 = vld [vmem:[#allocation4 + $0x1208] sm:$0xff]
    %v708 = vld [vmem:[#allocation4 + $0x1210] sm:$0xff]
    %v709 = vld [vmem:[#allocation4 + $0x1218] sm:$0xff]
    %v710 = vld [vmem:[#allocation4 + $0x1220] sm:$0xff]
    %v711 = vld [vmem:[#allocation4 + $0x1228] sm:$0xff]
    %v712 = vld [vmem:[#allocation4 + $0x1230] sm:$0xff]
    %v713 = vld [vmem:[#allocation4 + $0x1238] sm:$0xff]
    %v714 = vld [vmem:[#allocation4 + $0x1240] sm:$0xff]
    %v715 = vld [vmem:[#allocation4 + $0x1248] sm:$0xff]
    %v716 = vld [vmem:[#allocation4 + $0x1250] sm:$0xff]
    %v717 = vld [vmem:[#allocation4 + $0x1258] sm:$0xff]
    %v718 = vld [vmem:[#allocation4 + $0x1260] sm:$0xff]
    %v719 = vld [vmem:[#allocation4 + $0x1268] sm:$0xff]
    %v720 = vld [vmem:[#allocation4 + $0x1270] sm:$0xff]
    %v721 = vld [vmem:[#allocation4 + $0x1278] sm:$0xff]
    %v722 = vld [vmem:[#allocation4 + $0x1280] sm:$0xff]
    %v723 = vld [vmem:[#allocation4 + $0x1288] sm:$0xff]
    %v724 = vld [vmem:[#allocation4 + $0x1290] sm:$0xff]
    %v725 = vld [vmem:[#allocation4 + $0x1298] sm:$0xff]
    %v726 = vld [vmem:[#allocation4 + $0x12a0] sm:$0xff]
    %v727 = vld [vmem:[#allocation4 + $0x12a8] sm:$0xff]
    %v728 = vld [vmem:[#allocation4 + $0x12b0] sm:$0xff]
    %v729 = vld [vmem:[#allocation4 + $0x12b8] sm:$0xff]
    %v730 = vld [vmem:[#allocation4 + $0x12c0] sm:$0xff]
    %v731 = vld [vmem:[#allocation4 + $0x12c8] sm:$0xff]
    %v732 = vld [vmem:[#allocation4 + $0x12d0] sm:$0xff]
    %v733 = vld [vmem:[#allocation4 + $0x12d8] sm:$0xff]
    %v734 = vld [vmem:[#allocation4 + $0x12e0] sm:$0xff]
    %v735 = vld [vmem:[#allocation4 + $0x12e8] sm:$0xff]
    %v736 = vld [vmem:[#allocation4 + $0x12f0] sm:$0xff]
    %v737 = vld [vmem:[#allocation4 + $0x12f8] sm:$0xff]
    %v738 = vld [vmem:[#allocation4 + $0x1300] sm:$0xff]
    %v739 = vld [vmem:[#allocation4 + $0x1308] sm:$0xff]
    %v740 = vld [vmem:[#allocation4 + $0x1310] sm:$0xff]
    %v741 = vld [vmem:[#allocation4 + $0x1318] sm:$0xff]
    %v742 = vld [vmem:[#allocation4 + $0x1320] sm:$0xff]
    %v743 = vld [vmem:[#allocation4 + $0x1328] sm:$0xff]
    %v744 = vld [vmem:[#allocation4 + $0x1330] sm:$0xff]
    %v745 = vld [vmem:[#allocation4 + $0x1338] sm:$0xff]
    %v746 = vld [vmem:[#allocation4 + $0x1340] sm:$0xff]
    %v747 = vld [vmem:[#allocation4 + $0x1348] sm:$0xff]
    %v748 = vld [vmem:[#allocation4 + $0x1350] sm:$0xff]
    %v749 = vld [vmem:[#allocation4 + $0x1358] sm:$0xff]
    %v750 = vld [vmem:[#allocation4 + $0x1360] sm:$0xff]
    %v751 = vld [vmem:[#allocation4 + $0x1368] sm:$0xff]
    %v752 = vld [vmem:[#allocation4 + $0x1370] sm:$0xff]
    %v753 = vld [vmem:[#allocation4 + $0x1378] sm:$0xff]
    %v754 = vld [vmem:[#allocation4 + $0x1380] sm:$0xff]
    %v755 = vld [vmem:[#allocation4 + $0x1388] sm:$0xff]
    %v756 = vld [vmem:[#allocation4 + $0x1390] sm:$0xff]
    %v757 = vld [vmem:[#allocation4 + $0x1398] sm:$0xff]
    %v758 = vld [vmem:[#allocation4 + $0x13a0] sm:$0xff]
    %v759 = vld [vmem:[#allocation4 + $0x13a8] sm:$0xff]
    %v760 = vld [vmem:[#allocation4 + $0x13b0] sm:$0xff]
    %v761 = vld [vmem:[#allocation4 + $0x13b8] sm:$0xff]
    %v762 = vld [vmem:[#allocation4 + $0x13c0] sm:$0xff]
    %v763 = vld [vmem:[#allocation4 + $0x13c8] sm:$0xff]
    %v764 = vld [vmem:[#allocation4 + $0x13d0] sm:$0xff]
    %v765 = vld [vmem:[#allocation4 + $0x13d8] sm:$0xff]
    %v766 = vld [vmem:[#allocation4 + $0x13e0] sm:$0xff]
    %v767 = vld [vmem:[#allocation4 + $0x13e8] sm:$0xff]
    %v768 = vld [vmem:[#allocation4 + $0x13f0] sm:$0xff]
    %v769 = vld [vmem:[#allocation4 + $0x13f8] sm:$0xff]
    %v770 = vld [vmem:[#allocation4 + $0x1400] sm:$0xff]
    %v771 = vld [vmem:[#allocation4 + $0x1408] sm:$0xff]
    %v772 = vld [vmem:[#allocation4 + $0x1410] sm:$0xff]
    %v773 = vld [vmem:[#allocation4 + $0x1418] sm:$0xff]
    %v774 = vld [vmem:[#allocation4 + $0x1420] sm:$0xff]
    %v775 = vld [vmem:[#allocation4 + $0x1428] sm:$0xff]
    %v776 = vld [vmem:[#allocation4 + $0x1430] sm:$0xff]
    %v777 = vld [vmem:[#allocation4 + $0x1438] sm:$0xff]
    %v778 = vld [vmem:[#allocation4 + $0x1440] sm:$0xff]
    %v779 = vld [vmem:[#allocation4 + $0x1448] sm:$0xff]
    %v780 = vld [vmem:[#allocation4 + $0x1450] sm:$0xff]
    %v781 = vld [vmem:[#allocation4 + $0x1458] sm:$0xff]
    %v782 = vld [vmem:[#allocation4 + $0x1460] sm:$0xff]
    %v783 = vld [vmem:[#allocation4 + $0x1468] sm:$0xff]
    %v784 = vld [vmem:[#allocation4 + $0x1470] sm:$0xff]
    %v785 = vld [vmem:[#allocation4 + $0x1478] sm:$0xff]
    %v786 = vld [vmem:[#allocation4 + $0x1480] sm:$0xff]
    %v787 = vld [vmem:[#allocation4 + $0x1488] sm:$0xff]
    %v788 = vld [vmem:[#allocation4 + $0x1490] sm:$0xff]
    %v789 = vld [vmem:[#allocation4 + $0x1498] sm:$0xff]
    %v790 = vld [vmem:[#allocation4 + $0x14a0] sm:$0xff]
    %v791 = vld [vmem:[#allocation4 + $0x14a8] sm:$0xff]
    %v792 = vld [vmem:[#allocation4 + $0x14b0] sm:$0xff]
    %v793 = vld [vmem:[#allocation4 + $0x14b8] sm:$0xff]
    %v794 = vld [vmem:[#allocation4 + $0x14c0] sm:$0xff]
    %v795 = vld [vmem:[#allocation4 + $0x14c8] sm:$0xff]
    %v796 = vld [vmem:[#allocation4 + $0x14d0] sm:$0xff]
    %v797 = vld [vmem:[#allocation4 + $0x14d8] sm:$0xff]
    %v798 = vld [vmem:[#allocation4 + $0x14e0] sm:$0xff]
    %v799 = vld [vmem:[#allocation4 + $0x14e8] sm:$0xff]
    %v800 = vld [vmem:[#allocation4 + $0x14f0] sm:$0xff]
    %v801 = vld [vmem:[#allocation4 + $0x14f8] sm:$0xff]
    %v802 = vld [vmem:[#allocation4 + $0x1500] sm:$0xff]
    %v803 = vld [vmem:[#allocation4 + $0x1508] sm:$0xff]
    %v804 = vld [vmem:[#allocation4 + $0x1510] sm:$0xff]
    %v805 = vld [vmem:[#allocation4 + $0x1518] sm:$0xff]
    %v806 = vld [vmem:[#allocation4 + $0x1520] sm:$0xff]
    %v807 = vld [vmem:[#allocation4 + $0x1528] sm:$0xff]
    %v808 = vld [vmem:[#allocation4 + $0x1530] sm:$0xff]
    %v809 = vld [vmem:[#allocation4 + $0x1538] sm:$0xff]
    %v810 = vld [vmem:[#allocation4 + $0x1540] sm:$0xff]
    %v811 = vld [vmem:[#allocation4 + $0x1548] sm:$0xff]
    %v812 = vld [vmem:[#allocation4 + $0x1550] sm:$0xff]
    %v813 = vld [vmem:[#allocation4 + $0x1558] sm:$0xff]
    %v814 = vld [vmem:[#allocation4 + $0x1560] sm:$0xff]
    %v815 = vld [vmem:[#allocation4 + $0x1568] sm:$0xff]
    %v816 = vld [vmem:[#allocation4 + $0x1570] sm:$0xff]
    %v817 = vld [vmem:[#allocation4 + $0x1578] sm:$0xff]
    %v818 = vld [vmem:[#allocation4 + $0x1580] sm:$0xff]
    %v819 = vld [vmem:[#allocation4 + $0x1588] sm:$0xff]
    %v820 = vld [vmem:[#allocation4 + $0x1590] sm:$0xff]
    %v821 = vld [vmem:[#allocation4 + $0x1598] sm:$0xff]
    %v822 = vld [vmem:[#allocation4 + $0x15a0] sm:$0xff]
    %v823 = vld [vmem:[#allocation4 + $0x15a8] sm:$0xff]
    %v824 = vld [vmem:[#allocation4 + $0x15b0] sm:$0xff]
    %v825 = vld [vmem:[#allocation4 + $0x15b8] sm:$0xff]
    %v826 = vld [vmem:[#allocation4 + $0x15c0] sm:$0xff]
    %v827 = vld [vmem:[#allocation4 + $0x15c8] sm:$0xff]
    %v828 = vld [vmem:[#allocation4 + $0x15d0] sm:$0xff]
    %v829 = vld [vmem:[#allocation4 + $0x15d8] sm:$0xff]
    %v830 = vld [vmem:[#allocation4 + $0x15e0] sm:$0xff]
    %v831 = vld [vmem:[#allocation4 + $0x15e8] sm:$0xff]
    %v832 = vld [vmem:[#allocation4 + $0x15f0] sm:$0xff]
    %v833 = vld [vmem:[#allocation4 + $0x15f8] sm:$0xff]
    %v834 = vld [vmem:[#allocation4 + $0x1600] sm:$0xff]
    %v835 = vld [vmem:[#allocation4 + $0x1608] sm:$0xff]
    %v836 = vld [vmem:[#allocation4 + $0x1610] sm:$0xff]
    %v837 = vld [vmem:[#allocation4 + $0x1618] sm:$0xff]
    %v838 = vld [vmem:[#allocation4 + $0x1620] sm:$0xff]
    %v839 = vld [vmem:[#allocation4 + $0x1628] sm:$0xff]
    %v840 = vld [vmem:[#allocation4 + $0x1630] sm:$0xff]
    %v841 = vld [vmem:[#allocation4 + $0x1638] sm:$0xff]
    %v842 = vld [vmem:[#allocation4 + $0x1640] sm:$0xff]
    %v843 = vld [vmem:[#allocation4 + $0x1648] sm:$0xff]
    %v844 = vld [vmem:[#allocation4 + $0x1650] sm:$0xff]
    %v845 = vld [vmem:[#allocation4 + $0x1658] sm:$0xff]
    %v846 = vld [vmem:[#allocation4 + $0x1660] sm:$0xff]
    %v847 = vld [vmem:[#allocation4 + $0x1668] sm:$0xff]
    %v848 = vld [vmem:[#allocation4 + $0x1670] sm:$0xff]
    %v849 = vld [vmem:[#allocation4 + $0x1678] sm:$0xff]
    %v850 = vld [vmem:[#allocation4 + $0x1680] sm:$0xff]
    %v851 = vld [vmem:[#allocation4 + $0x1688] sm:$0xff]
    %v852 = vld [vmem:[#allocation4 + $0x1690] sm:$0xff]
    %v853 = vld [vmem:[#allocation4 + $0x1698] sm:$0xff]
    %v854 = vld [vmem:[#allocation4 + $0x16a0] sm:$0xff]
    %v855 = vld [vmem:[#allocation4 + $0x16a8] sm:$0xff]
    %v856 = vld [vmem:[#allocation4 + $0x16b0] sm:$0xff]
    %v857 = vld [vmem:[#allocation4 + $0x16b8] sm:$0xff]
    %v858 = vld [vmem:[#allocation4 + $0x16c0] sm:$0xff]
    %v859 = vld [vmem:[#allocation4 + $0x16c8] sm:$0xff]
    %v860 = vld [vmem:[#allocation4 + $0x16d0] sm:$0xff]
    %v861 = vld [vmem:[#allocation4 + $0x16d8] sm:$0xff]
    %v862 = vld [vmem:[#allocation4 + $0x16e0] sm:$0xff]
    %v863 = vld [vmem:[#allocation4 + $0x16e8] sm:$0xff]
    %v864 = vld [vmem:[#allocation4 + $0x16f0] sm:$0xff]
    %v865 = vld [vmem:[#allocation4 + $0x16f8] sm:$0xff]
    %v866 = vld [vmem:[#allocation4 + $0x1700] sm:$0xff]
    %v867 = vld [vmem:[#allocation4 + $0x1708] sm:$0xff]
    %v868 = vld [vmem:[#allocation4 + $0x1710] sm:$0xff]
    %v869 = vld [vmem:[#allocation4 + $0x1718] sm:$0xff]
    %v870 = vld [vmem:[#allocation4 + $0x1720] sm:$0xff]
    %v871 = vld [vmem:[#allocation4 + $0x1728] sm:$0xff]
    %v872 = vld [vmem:[#allocation4 + $0x1730] sm:$0xff]
    %v873 = vld [vmem:[#allocation4 + $0x1738] sm:$0xff]
    %v874 = vld [vmem:[#allocation4 + $0x1740] sm:$0xff]
    %v875 = vld [vmem:[#allocation4 + $0x1748] sm:$0xff]
    %v876 = vld [vmem:[#allocation4 + $0x1750] sm:$0xff]
    %v877 = vld [vmem:[#allocation4 + $0x1758] sm:$0xff]
    %v878 = vld [vmem:[#allocation4 + $0x1760] sm:$0xff]
    %v879 = vld [vmem:[#allocation4 + $0x1768] sm:$0xff]
    %v880 = vld [vmem:[#allocation4 + $0x1770] sm:$0xff]
    %v881 = vld [vmem:[#allocation4 + $0x1778] sm:$0xff]
    %v882 = vld [vmem:[#allocation4 + $0x1780] sm:$0xff]
    %v883 = vld [vmem:[#allocation4 + $0x1788] sm:$0xff]
    %v884 = vld [vmem:[#allocation4 + $0x1790] sm:$0xff]
    %v885 = vld [vmem:[#allocation4 + $0x1798] sm:$0xff]
    %v886 = vld [vmem:[#allocation4 + $0x17a0] sm:$0xff]
    %v887 = vld [vmem:[#allocation4 + $0x17a8] sm:$0xff]
    %v888 = vld [vmem:[#allocation4 + $0x17b0] sm:$0xff]
    %v889 = vld [vmem:[#allocation4 + $0x17b8] sm:$0xff]
    %v890 = vld [vmem:[#allocation4 + $0x17c0] sm:$0xff]
    %v891 = vld [vmem:[#allocation4 + $0x17c8] sm:$0xff]
    %v892 = vld [vmem:[#allocation4 + $0x17d0] sm:$0xff]
    %v893 = vld [vmem:[#allocation4 + $0x17d8] sm:$0xff]
    %v894 = vld [vmem:[#allocation4 + $0x17e0] sm:$0xff]
    %v895 = vld [vmem:[#allocation4 + $0x17e8] sm:$0xff]
    %v896 = vld [vmem:[#allocation4 + $0x17f0] sm:$0xff]
    %v897 = vld [vmem:[#allocation4 + $0x17f8] sm:$0xff]
    %v898 = vld [vmem:[#allocation4 + $0x1800] sm:$0xff]
    %v899 = vld [vmem:[#allocation4 + $0x1808] sm:$0xff]
    %v900 = vld [vmem:[#allocation4 + $0x1810] sm:$0xff]
    %v901 = vld [vmem:[#allocation4 + $0x1818] sm:$0xff]
    %v902 = vld [vmem:[#allocation4 + $0x1820] sm:$0xff]
    %v903 = vld [vmem:[#allocation4 + $0x1828] sm:$0xff]
    %v904 = vld [vmem:[#allocation4 + $0x1830] sm:$0xff]
    %v905 = vld [vmem:[#allocation4 + $0x1838] sm:$0xff]
    %v906 = vld [vmem:[#allocation4 + $0x1840] sm:$0xff]
    %v907 = vld [vmem:[#allocation4 + $0x1848] sm:$0xff]
    %v908 = vld [vmem:[#allocation4 + $0x1850] sm:$0xff]
    %v909 = vld [vmem:[#allocation4 + $0x1858] sm:$0xff]
    %v910 = vld [vmem:[#allocation4 + $0x1860] sm:$0xff]
    %v911 = vld [vmem:[#allocation4 + $0x1868] sm:$0xff]
    %v912 = vld [vmem:[#allocation4 + $0x1870] sm:$0xff]
    %v913 = vld [vmem:[#allocation4 + $0x1878] sm:$0xff]
    %v914 = vld [vmem:[#allocation4 + $0x1880] sm:$0xff]
    %v915 = vld [vmem:[#allocation4 + $0x1888] sm:$0xff]
    %v916 = vld [vmem:[#allocation4 + $0x1890] sm:$0xff]
    %v917 = vld [vmem:[#allocation4 + $0x1898] sm:$0xff]
    %v918 = vld [vmem:[#allocation4 + $0x18a0] sm:$0xff]
    %v919 = vld [vmem:[#allocation4 + $0x18a8] sm:$0xff]
    %v920 = vld [vmem:[#allocation4 + $0x18b0] sm:$0xff]
    %v921 = vld [vmem:[#allocation4 + $0x18b8] sm:$0xff]
    %v922 = vld [vmem:[#allocation4 + $0x18c0] sm:$0xff]
    %v923 = vld [vmem:[#allocation4 + $0x18c8] sm:$0xff]
    %v924 = vld [vmem:[#allocation4 + $0x18d0] sm:$0xff]
    %v925 = vld [vmem:[#allocation4 + $0x18d8] sm:$0xff]
    %v926 = vld [vmem:[#allocation4 + $0x18e0] sm:$0xff]
    %v927 = vld [vmem:[#allocation4 + $0x18e8] sm:$0xff]
    %v928 = vld [vmem:[#allocation4 + $0x18f0] sm:$0xff]
    %v929 = vld [vmem:[#allocation4 + $0x18f8] sm:$0xff]
    %v930 = vld [vmem:[#allocation4 + $0x1900] sm:$0xff]
    %v931 = vld [vmem:[#allocation4 + $0x1908] sm:$0xff]
    %v932 = vld [vmem:[#allocation4 + $0x1910] sm:$0xff]
    %v933 = vld [vmem:[#allocation4 + $0x1918] sm:$0xff]
    %v934 = vld [vmem:[#allocation4 + $0x1920] sm:$0xff]
    %v935 = vld [vmem:[#allocation4 + $0x1928] sm:$0xff]
    %v936 = vld [vmem:[#allocation4 + $0x1930] sm:$0xff]
    %v937 = vld [vmem:[#allocation4 + $0x1938] sm:$0xff]
    %v938 = vld [vmem:[#allocation4 + $0x1940] sm:$0xff]
    %v939 = vld [vmem:[#allocation4 + $0x1948] sm:$0xff]
    %v940 = vld [vmem:[#allocation4 + $0x1950] sm:$0xff]
    %v941 = vld [vmem:[#allocation4 + $0x1958] sm:$0xff]
    %v942 = vld [vmem:[#allocation4 + $0x1960] sm:$0xff]
    %v943 = vld [vmem:[#allocation4 + $0x1968] sm:$0xff]
    %v944 = vld [vmem:[#allocation4 + $0x1970] sm:$0xff]
    %v945 = vld [vmem:[#allocation4 + $0x1978] sm:$0xff]
    %v946 = vld [vmem:[#allocation4 + $0x1980] sm:$0xff]
    %v947 = vld [vmem:[#allocation4 + $0x1988] sm:$0xff]
    %v948 = vld [vmem:[#allocation4 + $0x1990] sm:$0xff]
    %v949 = vld [vmem:[#allocation4 + $0x1998] sm:$0xff]
    %v950 = vld [vmem:[#allocation4 + $0x19a0] sm:$0xff]
    %v951 = vld [vmem:[#allocation4 + $0x19a8] sm:$0xff]
    %v952 = vld [vmem:[#allocation4 + $0x19b0] sm:$0xff]
    %v953 = vld [vmem:[#allocation4 + $0x19b8] sm:$0xff]
    %v954 = vld [vmem:[#allocation4 + $0x19c0] sm:$0xff]
    %v955 = vld [vmem:[#allocation4 + $0x19c8] sm:$0xff]
    %v956 = vld [vmem:[#allocation4 + $0x19d0] sm:$0xff]
    %v957 = vld [vmem:[#allocation4 + $0x19d8] sm:$0xff]
    %v958 = vld [vmem:[#allocation4 + $0x19e0] sm:$0xff]
    %v959 = vld [vmem:[#allocation4 + $0x19e8] sm:$0xff]
    %v960 = vld [vmem:[#allocation4 + $0x19f0] sm:$0xff]
    %v961 = vld [vmem:[#allocation4 + $0x19f8] sm:$0xff]
    %v962 = vld [vmem:[#allocation4 + $0x1a00] sm:$0xff]
    %v963 = vld [vmem:[#allocation4 + $0x1a08] sm:$0xff]
    %v964 = vld [vmem:[#allocation4 + $0x1a10] sm:$0xff]
    %v965 = vld [vmem:[#allocation4 + $0x1a18] sm:$0xff]
    %v966 = vld [vmem:[#allocation4 + $0x1a20] sm:$0xff]
    %v967 = vld [vmem:[#allocation4 + $0x1a28] sm:$0xff]
    %v968 = vld [vmem:[#allocation4 + $0x1a30] sm:$0xff]
    %v969 = vld [vmem:[#allocation4 + $0x1a38] sm:$0xff]
    %v970 = vld [vmem:[#allocation4 + $0x1a40] sm:$0xff]
    %v971 = vld [vmem:[#allocation4 + $0x1a48] sm:$0xff]
    %v972 = vld [vmem:[#allocation4 + $0x1a50] sm:$0xff]
    %v973 = vld [vmem:[#allocation4 + $0x1a58] sm:$0xff]
    %v974 = vld [vmem:[#allocation4 + $0x1a60] sm:$0xff]
    %v975 = vld [vmem:[#allocation4 + $0x1a68] sm:$0xff]
    %v976 = vld [vmem:[#allocation4 + $0x1a70] sm:$0xff]
    %v977 = vld [vmem:[#allocation4 + $0x1a78] sm:$0xff]
    %v978 = vld [vmem:[#allocation4 + $0x1a80] sm:$0xff]
    %v979 = vld [vmem:[#allocation4 + $0x1a88] sm:$0xff]
    %v980 = vld [vmem:[#allocation4 + $0x1a90] sm:$0xff]
    %v981 = vld [vmem:[#allocation4 + $0x1a98] sm:$0xff]
    %v982 = vld [vmem:[#allocation4 + $0x1aa0] sm:$0xff]
    %v983 = vld [vmem:[#allocation4 + $0x1aa8] sm:$0xff]
    %v984 = vld [vmem:[#allocation4 + $0x1ab0] sm:$0xff]
    %v985 = vld [vmem:[#allocation4 + $0x1ab8] sm:$0xff]
    %v986 = vld [vmem:[#allocation4 + $0x1ac0] sm:$0xff]
    %v987 = vld [vmem:[#allocation4 + $0x1ac8] sm:$0xff]
    %v988 = vld [vmem:[#allocation4 + $0x1ad0] sm:$0xff]
    %v989 = vld [vmem:[#allocation4 + $0x1ad8] sm:$0xff]
    %v990 = vld [vmem:[#allocation4 + $0x1ae0] sm:$0xff]
    %v991 = vld [vmem:[#allocation4 + $0x1ae8] sm:$0xff]
    %v992 = vld [vmem:[#allocation4 + $0x1af0] sm:$0xff]
    %v993 = vld [vmem:[#allocation4 + $0x1af8] sm:$0xff]
    %v994 = vld [vmem:[#allocation4 + $0x1b00] sm:$0xff]
    %v995 = vld [vmem:[#allocation4 + $0x1b08] sm:$0xff]
    %v996 = vld [vmem:[#allocation4 + $0x1b10] sm:$0xff]
    %v997 = vld [vmem:[#allocation4 + $0x1b18] sm:$0xff]
    %v998 = vld [vmem:[#allocation4 + $0x1b20] sm:$0xff]
    %v999 = vld [vmem:[#allocation4 + $0x1b28] sm:$0xff]
    %v1000 = vld [vmem:[#allocation4 + $0x1b30] sm:$0xff]
    %v1001 = vld [vmem:[#allocation4 + $0x1b38] sm:$0xff]
    %v1002 = vld [vmem:[#allocation4 + $0x1b40] sm:$0xff]
    %v1003 = vld [vmem:[#allocation4 + $0x1b48] sm:$0xff]
    %v1004 = vld [vmem:[#allocation4 + $0x1b50] sm:$0xff]
    %v1005 = vld [vmem:[#allocation4 + $0x1b58] sm:$0xff]
    %v1006 = vld [vmem:[#allocation4 + $0x1b60] sm:$0xff]
    %v1007 = vld [vmem:[#allocation4 + $0x1b68] sm:$0xff]
    %v1008 = vld [vmem:[#allocation4 + $0x1b70] sm:$0xff]
    %v1009 = vld [vmem:[#allocation4 + $0x1b78] sm:$0xff]
    %v1010 = vld [vmem:[#allocation4 + $0x1b80] sm:$0xff]
    %v1011 = vld [vmem:[#allocation4 + $0x1b88] sm:$0xff]
    %v1012 = vld [vmem:[#allocation4 + $0x1b90] sm:$0xff]
    %v1013 = vld [vmem:[#allocation4 + $0x1b98] sm:$0xff]
    %v1014 = vld [vmem:[#allocation4 + $0x1ba0] sm:$0xff]
    %v1015 = vld [vmem:[#allocation4 + $0x1ba8] sm:$0xff]
    %v1016 = vld [vmem:[#allocation4 + $0x1bb0] sm:$0xff]
    %v1017 = vld [vmem:[#allocation4 + $0x1bb8] sm:$0xff]
    %v1018 = vld [vmem:[#allocation4 + $0x1bc0] sm:$0xff]
    %v1019 = vld [vmem:[#allocation4 + $0x1bc8] sm:$0xff]
    %v1020 = vld [vmem:[#allocation4 + $0x1bd0] sm:$0xff]
    %v1021 = vld [vmem:[#allocation4 + $0x1bd8] sm:$0xff]
    %v1022 = vld [vmem:[#allocation4 + $0x1be0] sm:$0xff]
    %v1023 = vld [vmem:[#allocation4 + $0x1be8] sm:$0xff]
    %v1024 = vld [vmem:[#allocation4 + $0x1bf0] sm:$0xff]
    %v1025 = vld [vmem:[#allocation4 + $0x1bf8] sm:$0xff]
    %v1026 = vld [vmem:[#allocation4 + $0x1c00] sm:$0xff]
    %v1027 = vld [vmem:[#allocation4 + $0x1c08] sm:$0xff]
    %v1028 = vld [vmem:[#allocation4 + $0x1c10] sm:$0xff]
    %v1029 = vld [vmem:[#allocation4 + $0x1c18] sm:$0xff]
    %v1030 = vld [vmem:[#allocation4 + $0x1c20] sm:$0xff]
    %v1031 = vld [vmem:[#allocation4 + $0x1c28] sm:$0xff]
    %v1032 = vld [vmem:[#allocation4 + $0x1c30] sm:$0xff]
    %v1033 = vld [vmem:[#allocation4 + $0x1c38] sm:$0xff]
    %v1034 = vld [vmem:[#allocation4 + $0x1c40] sm:$0xff]
    %v1035 = vld [vmem:[#allocation4 + $0x1c48] sm:$0xff]
    %v1036 = vld [vmem:[#allocation4 + $0x1c50] sm:$0xff]
    %v1037 = vld [vmem:[#allocation4 + $0x1c58] sm:$0xff]
    %v1038 = vld [vmem:[#allocation4 + $0x1c60] sm:$0xff]
    %v1039 = vld [vmem:[#allocation4 + $0x1c68] sm:$0xff]
    %v1040 = vld [vmem:[#allocation4 + $0x1c70] sm:$0xff]
    %v1041 = vld [vmem:[#allocation4 + $0x1c78] sm:$0xff]
    %v1042 = vld [vmem:[#allocation4 + $0x1c80] sm:$0xff]
    %v1043 = vld [vmem:[#allocation4 + $0x1c88] sm:$0xff]
    %v1044 = vld [vmem:[#allocation4 + $0x1c90] sm:$0xff]
    %v1045 = vld [vmem:[#allocation4 + $0x1c98] sm:$0xff]
    %v1046 = vld [vmem:[#allocation4 + $0x1ca0] sm:$0xff]
    %v1047 = vld [vmem:[#allocation4 + $0x1ca8] sm:$0xff]
    %v1048 = vld [vmem:[#allocation4 + $0x1cb0] sm:$0xff]
    %v1049 = vld [vmem:[#allocation4 + $0x1cb8] sm:$0xff]
    %v1050 = vld [vmem:[#allocation4 + $0x1cc0] sm:$0xff]
    %v1051 = vld [vmem:[#allocation4 + $0x1cc8] sm:$0xff]
    %v1052 = vld [vmem:[#allocation4 + $0x1cd0] sm:$0xff]
    %v1053 = vld [vmem:[#allocation4 + $0x1cd8] sm:$0xff]
    %v1054 = vld [vmem:[#allocation4 + $0x1ce0] sm:$0xff]
    %v1055 = vld [vmem:[#allocation4 + $0x1ce8] sm:$0xff]
    %v1056 = vld [vmem:[#allocation4 + $0x1cf0] sm:$0xff]
    %v1057 = vld [vmem:[#allocation4 + $0x1cf8] sm:$0xff]
    %v1058 = vld [vmem:[#allocation4 + $0x1d00] sm:$0xff]
    %v1059 = vld [vmem:[#allocation4 + $0x1d08] sm:$0xff]
    %v1060 = vld [vmem:[#allocation4 + $0x1d10] sm:$0xff]
    %v1061 = vld [vmem:[#allocation4 + $0x1d18] sm:$0xff]
    %v1062 = vld [vmem:[#allocation4 + $0x1d20] sm:$0xff]
    %v1063 = vld [vmem:[#allocation4 + $0x1d28] sm:$0xff]
    %v1064 = vld [vmem:[#allocation4 + $0x1d30] sm:$0xff]
    %v1065 = vld [vmem:[#allocation4 + $0x1d38] sm:$0xff]
    %v1066 = vld [vmem:[#allocation4 + $0x1d40] sm:$0xff]
    %v1067 = vld [vmem:[#allocation4 + $0x1d48] sm:$0xff]
    %v1068 = vld [vmem:[#allocation4 + $0x1d50] sm:$0xff]
    %v1069 = vld [vmem:[#allocation4 + $0x1d58] sm:$0xff]
    %v1070 = vld [vmem:[#allocation4 + $0x1d60] sm:$0xff]
    %v1071 = vld [vmem:[#allocation4 + $0x1d68] sm:$0xff]
    %v1072 = vld [vmem:[#allocation4 + $0x1d70] sm:$0xff]
    %v1073 = vld [vmem:[#allocation4 + $0x1d78] sm:$0xff]
    %v1074 = vld [vmem:[#allocation4 + $0x1d80] sm:$0xff]
    %v1075 = vld [vmem:[#allocation4 + $0x1d88] sm:$0xff]
    %v1076 = vld [vmem:[#allocation4 + $0x1d90] sm:$0xff]
    %v1077 = vld [vmem:[#allocation4 + $0x1d98] sm:$0xff]
    %v1078 = vld [vmem:[#allocation4 + $0x1da0] sm:$0xff]
    %v1079 = vld [vmem:[#allocation4 + $0x1da8] sm:$0xff]
    %v1080 = vld [vmem:[#allocation4 + $0x1db0] sm:$0xff]
    %v1081 = vld [vmem:[#allocation4 + $0x1db8] sm:$0xff]
    %v1082 = vld [vmem:[#allocation4 + $0x1dc0] sm:$0xff]
    %v1083 = vld [vmem:[#allocation4 + $0x1dc8] sm:$0xff]
    %v1084 = vld [vmem:[#allocation4 + $0x1dd0] sm:$0xff]
    %v1085 = vld [vmem:[#allocation4 + $0x1dd8] sm:$0xff]
    %v1086 = vld [vmem:[#allocation4 + $0x1de0] sm:$0xff]
    %v1087 = vld [vmem:[#allocation4 + $0x1de8] sm:$0xff]
    %v1088 = vld [vmem:[#allocation4 + $0x1df0] sm:$0xff]
    %v1089 = vld [vmem:[#allocation4 + $0x1df8] sm:$0xff]
    %v1090 = vld [vmem:[#allocation4 + $0x1e00] sm:$0xff]
    %v1091 = vld [vmem:[#allocation4 + $0x1e08] sm:$0xff]
    %v1092 = vld [vmem:[#allocation4 + $0x1e10] sm:$0xff]
    %v1093 = vld [vmem:[#allocation4 + $0x1e18] sm:$0xff]
    %v1094 = vld [vmem:[#allocation4 + $0x1e20] sm:$0xff]
    %v1095 = vld [vmem:[#allocation4 + $0x1e28] sm:$0xff]
    %v1096 = vld [vmem:[#allocation4 + $0x1e30] sm:$0xff]
    %v1097 = vld [vmem:[#allocation4 + $0x1e38] sm:$0xff]
    %v1098 = vld [vmem:[#allocation4 + $0x1e40] sm:$0xff]
    %v1099 = vld [vmem:[#allocation4 + $0x1e48] sm:$0xff]
    %v1100 = vld [vmem:[#allocation4 + $0x1e50] sm:$0xff]
    %v1101 = vld [vmem:[#allocation4 + $0x1e58] sm:$0xff]
    %v1102 = vld [vmem:[#allocation4 + $0x1e60] sm:$0xff]
    %v1103 = vld [vmem:[#allocation4 + $0x1e68] sm:$0xff]
    %v1104 = vld [vmem:[#allocation4 + $0x1e70] sm:$0xff]
    %v1105 = vld [vmem:[#allocation4 + $0x1e78] sm:$0xff]
    %v1106 = vld [vmem:[#allocation4 + $0x1e80] sm:$0xff]
    %v1107 = vld [vmem:[#allocation4 + $0x1e88] sm:$0xff]
    %v1108 = vld [vmem:[#allocation4 + $0x1e90] sm:$0xff]
    %v1109 = vld [vmem:[#allocation4 + $0x1e98] sm:$0xff]
    %v1110 = vld [vmem:[#allocation4 + $0x1ea0] sm:$0xff]
    %v1111 = vld [vmem:[#allocation4 + $0x1ea8] sm:$0xff]
    %v1112 = vld [vmem:[#allocation4 + $0x1eb0] sm:$0xff]
    %v1113 = vld [vmem:[#allocation4 + $0x1eb8] sm:$0xff]
    %v1114 = vld [vmem:[#allocation4 + $0x1ec0] sm:$0xff]
    %v1115 = vld [vmem:[#allocation4 + $0x1ec8] sm:$0xff]
    %v1116 = vld [vmem:[#allocation4 + $0x1ed0] sm:$0xff]
    %v1117 = vld [vmem:[#allocation4 + $0x1ed8] sm:$0xff]
    %v1118 = vld [vmem:[#allocation4 + $0x1ee0] sm:$0xff]
    %v1119 = vld [vmem:[#allocation4 + $0x1ee8] sm:$0xff]
    %v1120 = vld [vmem:[#allocation4 + $0x1ef0] sm:$0xff]
    %v1121 = vld [vmem:[#allocation4 + $0x1ef8] sm:$0xff]
    %v1122 = vld [vmem:[#allocation4 + $0x1f00] sm:$0xff]
    %v1123 = vld [vmem:[#allocation4 + $0x1f08] sm:$0xff]
    %v1124 = vld [vmem:[#allocation4 + $0x1f10] sm:$0xff]
    %v1125 = vld [vmem:[#allocation4 + $0x1f18] sm:$0xff]
    %v1126 = vld [vmem:[#allocation4 + $0x1f20] sm:$0xff]
    %v1127 = vld [vmem:[#allocation4 + $0x1f28] sm:$0xff]
    %v1128 = vld [vmem:[#allocation4 + $0x1f30] sm:$0xff]
    %v1129 = vld [vmem:[#allocation4 + $0x1f38] sm:$0xff]
    %v1130 = vld [vmem:[#allocation4 + $0x1f40] sm:$0xff]
    %v1131 = vld [vmem:[#allocation4 + $0x1f48] sm:$0xff]
    %v1132 = vld [vmem:[#allocation4 + $0x1f50] sm:$0xff]
    %v1133 = vld [vmem:[#allocation4 + $0x1f58] sm:$0xff]
    %v1134 = vld [vmem:[#allocation4 + $0x1f60] sm:$0xff]
    %v1135 = vld [vmem:[#allocation4 + $0x1f68] sm:$0xff]
    %v1136 = vld [vmem:[#allocation4 + $0x1f70] sm:$0xff]
    %v1137 = vld [vmem:[#allocation4 + $0x1f78] sm:$0xff]
    %v1138 = vld [vmem:[#allocation4 + $0x1f80] sm:$0xff]
    %v1139 = vld [vmem:[#allocation4 + $0x1f88] sm:$0xff]
    %v1140 = vld [vmem:[#allocation4 + $0x1f90] sm:$0xff]
    %v1141 = vld [vmem:[#allocation4 + $0x1f98] sm:$0xff]
    %v1142 = vld [vmem:[#allocation4 + $0x1fa0] sm:$0xff]
    %v1143 = vld [vmem:[#allocation4 + $0x1fa8] sm:$0xff]
    %v1144 = vld [vmem:[#allocation4 + $0x1fb0] sm:$0xff]
    %v1145 = vld [vmem:[#allocation4 + $0x1fb8] sm:$0xff]
    %v1146 = vld [vmem:[#allocation4 + $0x1fc0] sm:$0xff]
    %v1147 = vld [vmem:[#allocation4 + $0x1fc8] sm:$0xff]
    %v1148 = vld [vmem:[#allocation4 + $0x1fd0] sm:$0xff]
    %v1149 = vld [vmem:[#allocation4 + $0x1fd8] sm:$0xff]
    %v1150 = vld [vmem:[#allocation4 + $0x1fe0] sm:$0xff]
    %v1151 = vld [vmem:[#allocation4 + $0x1fe8] sm:$0xff]
    %v1152 = vld [vmem:[#allocation4 + $0x1ff0] sm:$0xff]
    %v1153 = vld [vmem:[#allocation4 + $0x1ff8] sm:$0xff]
    %v1154 = vld [vmem:[#allocation4 + $0x2000] sm:$0xff]
    %v1155 = vld [vmem:[#allocation4 + $0x2008] sm:$0xff]
    %v1156 = vld [vmem:[#allocation4 + $0x2010] sm:$0xff]
    %v1157 = vld [vmem:[#allocation4 + $0x2018] sm:$0xff]
    %v1158 = vld [vmem:[#allocation4 + $0x2020] sm:$0xff]
    %v1159 = vld [vmem:[#allocation4 + $0x2028] sm:$0xff]
    %v1160 = vld [vmem:[#allocation4 + $0x2030] sm:$0xff]
    %v1161 = vld [vmem:[#allocation4 + $0x2038] sm:$0xff]
    %v1162 = vld [vmem:[#allocation4 + $0x2040] sm:$0xff]
    %v1163 = vld [vmem:[#allocation4 + $0x2048] sm:$0xff]
    %v1164 = vld [vmem:[#allocation4 + $0x2050] sm:$0xff]
    %v1165 = vld [vmem:[#allocation4 + $0x2058] sm:$0xff]
    %v1166 = vld [vmem:[#allocation4 + $0x2060] sm:$0xff]
    %v1167 = vld [vmem:[#allocation4 + $0x2068] sm:$0xff]
    %v1168 = vld [vmem:[#allocation4 + $0x2070] sm:$0xff]
    %v1169 = vld [vmem:[#allocation4 + $0x2078] sm:$0xff]
    %v1170 = vld [vmem:[#allocation4 + $0x2080] sm:$0xff]
    %v1171 = vld [vmem:[#allocation4 + $0x2088] sm:$0xff]
    %v1172 = vld [vmem:[#allocation4 + $0x2090] sm:$0xff]
    %v1173 = vld [vmem:[#allocation4 + $0x2098] sm:$0xff]
    %v1174 = vld [vmem:[#allocation4 + $0x20a0] sm:$0xff]
    %v1175 = vld [vmem:[#allocation4 + $0x20a8] sm:$0xff]
    %v1176 = vld [vmem:[#allocation4 + $0x20b0] sm:$0xff]
    %v1177 = vld [vmem:[#allocation4 + $0x20b8] sm:$0xff]
    %v1178 = vld [vmem:[#allocation4 + $0x20c0] sm:$0xff]
    %v1179 = vld [vmem:[#allocation4 + $0x20c8] sm:$0xff]
    %v1180 = vld [vmem:[#allocation4 + $0x20d0] sm:$0xff]
    %v1181 = vld [vmem:[#allocation4 + $0x20d8] sm:$0xff]
    %v1182 = vld [vmem:[#allocation4 + $0x20e0] sm:$0xff]
    %v1183 = vld [vmem:[#allocation4 + $0x20e8] sm:$0xff]
    %v1184 = vld [vmem:[#allocation4 + $0x20f0] sm:$0xff]
    %v1185 = vld [vmem:[#allocation4 + $0x20f8] sm:$0xff]
    %v1186 = vld [vmem:[#allocation4 + $0x2100] sm:$0xff]
    %v1187 = vld [vmem:[#allocation4 + $0x2108] sm:$0xff]
    %v1188 = vld [vmem:[#allocation4 + $0x2110] sm:$0xff]
    %v1189 = vld [vmem:[#allocation4 + $0x2118] sm:$0xff]
    %v1190 = vld [vmem:[#allocation4 + $0x2120] sm:$0xff]
    %v1191 = vld [vmem:[#allocation4 + $0x2128] sm:$0xff]
    %v1192 = vld [vmem:[#allocation4 + $0x2130] sm:$0xff]
    %v1193 = vld [vmem:[#allocation4 + $0x2138] sm:$0xff]
    %v1194 = vld [vmem:[#allocation4 + $0x2140] sm:$0xff]
    %v1195 = vld [vmem:[#allocation4 + $0x2148] sm:$0xff]
    %v1196 = vld [vmem:[#allocation4 + $0x2150] sm:$0xff]
    %v1197 = vld [vmem:[#allocation4 + $0x2158] sm:$0xff]
    %v1198 = vld [vmem:[#allocation4 + $0x2160] sm:$0xff]
    %v1199 = vld [vmem:[#allocation4 + $0x2168] sm:$0xff]
    %v1200 = vld [vmem:[#allocation4 + $0x2170] sm:$0xff]
    %v1201 = vld [vmem:[#allocation4 + $0x2178] sm:$0xff]
    %v1202 = vld [vmem:[#allocation4 + $0x2180] sm:$0xff]
    %v1203 = vld [vmem:[#allocation4 + $0x2188] sm:$0xff]
    %v1204 = vld [vmem:[#allocation4 + $0x2190] sm:$0xff]
    %v1205 = vld [vmem:[#allocation4 + $0x2198] sm:$0xff]
    %v1206 = vld [vmem:[#allocation4 + $0x21a0] sm:$0xff]
    %v1207 = vld [vmem:[#allocation4 + $0x21a8] sm:$0xff]
    %v1208 = vld [vmem:[#allocation4 + $0x21b0] sm:$0xff]
    %v1209 = vld [vmem:[#allocation4 + $0x21b8] sm:$0xff]
    %v1210 = vld [vmem:[#allocation4 + $0x21c0] sm:$0xff]
    %v1211 = vld [vmem:[#allocation4 + $0x21c8] sm:$0xff]
    %v1212 = vld [vmem:[#allocation4 + $0x21d0] sm:$0xff]
    %v1213 = vld [vmem:[#allocation4 + $0x21d8] sm:$0xff]
    %v1214 = vld [vmem:[#allocation4 + $0x21e0] sm:$0xff]
    %v1215 = vld [vmem:[#allocation4 + $0x21e8] sm:$0xff]
    %v1216 = vld [vmem:[#allocation4 + $0x21f0] sm:$0xff]
    %v1217 = vld [vmem:[#allocation4 + $0x21f8] sm:$0xff]
    %v1218 = vld [vmem:[#allocation4 + $0x2200] sm:$0xff]
    %v1219 = vld [vmem:[#allocation4 + $0x2208] sm:$0xff]
    %v1220 = vld [vmem:[#allocation4 + $0x2210] sm:$0xff]
    %v1221 = vld [vmem:[#allocation4 + $0x2218] sm:$0xff]
    %v1222 = vld [vmem:[#allocation4 + $0x2220] sm:$0xff]
    %v1223 = vld [vmem:[#allocation4 + $0x2228] sm:$0xff]
    %v1224 = vld [vmem:[#allocation4 + $0x2230] sm:$0xff]
    %v1225 = vld [vmem:[#allocation4 + $0x2238] sm:$0xff]
    %v1226 = vld [vmem:[#allocation4 + $0x2240] sm:$0xff]
    %v1227 = vld [vmem:[#allocation4 + $0x2248] sm:$0xff]
    %v1228 = vld [vmem:[#allocation4 + $0x2250] sm:$0xff]
    %v1229 = vld [vmem:[#allocation4 + $0x2258] sm:$0xff]
    %v1230 = vld [vmem:[#allocation4 + $0x2260] sm:$0xff]
    %v1231 = vld [vmem:[#allocation4 + $0x2268] sm:$0xff]
    %v1232 = vld [vmem:[#allocation4 + $0x2270] sm:$0xff]
    %v1233 = vld [vmem:[#allocation4 + $0x2278] sm:$0xff]
    %v1234 = vld [vmem:[#allocation4 + $0x2280] sm:$0xff]
    %v1235 = vld [vmem:[#allocation4 + $0x2288] sm:$0xff]
    %v1236 = vld [vmem:[#allocation4 + $0x2290] sm:$0xff]
    %v1237 = vld [vmem:[#allocation4 + $0x2298] sm:$0xff]
    %v1238 = vld [vmem:[#allocation4 + $0x22a0] sm:$0xff]
    %v1239 = vld [vmem:[#allocation4 + $0x22a8] sm:$0xff]
    %v1240 = vld [vmem:[#allocation4 + $0x22b0] sm:$0xff]
    %v1241 = vld [vmem:[#allocation4 + $0x22b8] sm:$0xff]
    %v1242 = vld [vmem:[#allocation4 + $0x22c0] sm:$0xff]
    %v1243 = vld [vmem:[#allocation4 + $0x22c8] sm:$0xff]
    %v1244 = vld [vmem:[#allocation4 + $0x22d0] sm:$0xff]
    %v1245 = vld [vmem:[#allocation4 + $0x22d8] sm:$0xff]
    %v1246 = vld [vmem:[#allocation4 + $0x22e0] sm:$0xff]
    %v1247 = vld [vmem:[#allocation4 + $0x22e8] sm:$0xff]
    %v1248 = vld [vmem:[#allocation4 + $0x22f0] sm:$0xff]
    %v1249 = vld [vmem:[#allocation4 + $0x22f8] sm:$0xff]
    %v1250 = vld [vmem:[#allocation4 + $0x2300] sm:$0xff]
    %v1251 = vld [vmem:[#allocation4 + $0x2308] sm:$0xff]
    %v1252 = vld [vmem:[#allocation4 + $0x2310] sm:$0xff]
    %v1253 = vld [vmem:[#allocation4 + $0x2318] sm:$0xff]
    %v1254 = vld [vmem:[#allocation4 + $0x2320] sm:$0xff]
    %v1255 = vld [vmem:[#allocation4 + $0x2328] sm:$0xff]
    %v1256 = vld [vmem:[#allocation4 + $0x2330] sm:$0xff]
    %v1257 = vld [vmem:[#allocation4 + $0x2338] sm:$0xff]
    %v1258 = vld [vmem:[#allocation4 + $0x2340] sm:$0xff]
    %v1259 = vld [vmem:[#allocation4 + $0x2348] sm:$0xff]
    %v1260 = vld [vmem:[#allocation4 + $0x2350] sm:$0xff]
    %v1261 = vld [vmem:[#allocation4 + $0x2358] sm:$0xff]
    %v1262 = vld [vmem:[#allocation4 + $0x2360] sm:$0xff]
    %v1263 = vld [vmem:[#allocation4 + $0x2368] sm:$0xff]
    %v1264 = vld [vmem:[#allocation4 + $0x2370] sm:$0xff]
    %v1265 = vld [vmem:[#allocation4 + $0x2378] sm:$0xff]
    %v1266 = vld [vmem:[#allocation4 + $0x2380] sm:$0xff]
    %v1267 = vld [vmem:[#allocation4 + $0x2388] sm:$0xff]
    %v1268 = vld [vmem:[#allocation4 + $0x2390] sm:$0xff]
    %v1269 = vld [vmem:[#allocation4 + $0x2398] sm:$0xff]
    %v1270 = vld [vmem:[#allocation4 + $0x23a0] sm:$0xff]
    %v1271 = vld [vmem:[#allocation4 + $0x23a8] sm:$0xff]
    %v1272 = vld [vmem:[#allocation4 + $0x23b0] sm:$0xff]
    %v1273 = vld [vmem:[#allocation4 + $0x23b8] sm:$0xff]
    %v1274 = vld [vmem:[#allocation4 + $0x23c0] sm:$0xff]
    %v1275 = vld [vmem:[#allocation4 + $0x23c8] sm:$0xff]
    %v1276 = vld [vmem:[#allocation4 + $0x23d0] sm:$0xff]
    %v1277 = vld [vmem:[#allocation4 + $0x23d8] sm:$0xff]
    %v1278 = vld [vmem:[#allocation4 + $0x23e0] sm:$0xff]
    %v1279 = vld [vmem:[#allocation4 + $0x23e8] sm:$0xff]
    %v1280 = vld [vmem:[#allocation4 + $0x23f0] sm:$0xff]
    %v1281 = vld [vmem:[#allocation4 + $0x23f8] sm:$0xff]
    %v1282 = vld [vmem:[#allocation4 + $0x2400] sm:$0xff]
    %v1283 = vld [vmem:[#allocation4 + $0x2408] sm:$0xff]
    %v1284 = vld [vmem:[#allocation4 + $0x2410] sm:$0xff]
    %v1285 = vld [vmem:[#allocation4 + $0x2418] sm:$0xff]
    %v1286 = vld [vmem:[#allocation4 + $0x2420] sm:$0xff]
    %v1287 = vld [vmem:[#allocation4 + $0x2428] sm:$0xff]
    %v1288 = vld [vmem:[#allocation4 + $0x2430] sm:$0xff]
    %v1289 = vld [vmem:[#allocation4 + $0x2438] sm:$0xff]
    %v1290 = vld [vmem:[#allocation4 + $0x2440] sm:$0xff]
    %v1291 = vld [vmem:[#allocation4 + $0x2448] sm:$0xff]
    %v1292 = vld [vmem:[#allocation4 + $0x2450] sm:$0xff]
    %v1293 = vld [vmem:[#allocation4 + $0x2458] sm:$0xff]
    %v1294 = vld [vmem:[#allocation4 + $0x2460] sm:$0xff]
    %v1295 = vld [vmem:[#allocation4 + $0x2468] sm:$0xff]
    %v1296 = vld [vmem:[#allocation4 + $0x2470] sm:$0xff]
    %v1297 = vld [vmem:[#allocation4 + $0x2478] sm:$0xff]
    %v1298 = vld [vmem:[#allocation4 + $0x2480] sm:$0xff]
    %v1299 = vld [vmem:[#allocation4 + $0x2488] sm:$0xff]
    %v1300 = vld [vmem:[#allocation4 + $0x2490] sm:$0xff]
    %v1301 = vld [vmem:[#allocation4 + $0x2498] sm:$0xff]
    %v1302 = vld [vmem:[#allocation4 + $0x24a0] sm:$0xff]
    %v1303 = vld [vmem:[#allocation4 + $0x24a8] sm:$0xff]
    %v1304 = vld [vmem:[#allocation4 + $0x24b0] sm:$0xff]
    %v1305 = vld [vmem:[#allocation4 + $0x24b8] sm:$0xff]
    %v1306 = vld [vmem:[#allocation4 + $0x24c0] sm:$0xff]
    %v1307 = vld [vmem:[#allocation4 + $0x24c8] sm:$0xff]
    %v1308 = vld [vmem:[#allocation4 + $0x24d0] sm:$0xff]
    %v1309 = vld [vmem:[#allocation4 + $0x24d8] sm:$0xff]
    %v1310 = vld [vmem:[#allocation4 + $0x24e0] sm:$0xff]
    %v1311 = vld [vmem:[#allocation4 + $0x24e8] sm:$0xff]
    %v1312 = vld [vmem:[#allocation4 + $0x24f0] sm:$0xff]
    %v1313 = vld [vmem:[#allocation4 + $0x24f8] sm:$0xff]
    %v1314 = vld [vmem:[#allocation4 + $0x2500] sm:$0xff]
    %v1315 = vld [vmem:[#allocation4 + $0x2508] sm:$0xff]
    %v1316 = vld [vmem:[#allocation4 + $0x2510] sm:$0xff]
    %v1317 = vld [vmem:[#allocation4 + $0x2518] sm:$0xff]
    %v1318 = vld [vmem:[#allocation4 + $0x2520] sm:$0xff]
    %v1319 = vld [vmem:[#allocation4 + $0x2528] sm:$0xff]
    %v1320 = vld [vmem:[#allocation4 + $0x2530] sm:$0xff]
    %v1321 = vld [vmem:[#allocation4 + $0x2538] sm:$0xff]
    %v1322 = vld [vmem:[#allocation4 + $0x2540] sm:$0xff]
    %v1323 = vld [vmem:[#allocation4 + $0x2548] sm:$0xff]
    %v1324 = vld [vmem:[#allocation4 + $0x2550] sm:$0xff]
    %v1325 = vld [vmem:[#allocation4 + $0x2558] sm:$0xff]
    %v1326 = vld [vmem:[#allocation4 + $0x2560] sm:$0xff]
    %v1327 = vld [vmem:[#allocation4 + $0x2568] sm:$0xff]
    %v1328 = vld [vmem:[#allocation4 + $0x2570] sm:$0xff]
    %v1329 = vld [vmem:[#allocation4 + $0x2578] sm:$0xff]
    %v1330 = vld [vmem:[#allocation4 + $0x2580] sm:$0xff]
    %v1331 = vld [vmem:[#allocation4 + $0x2588] sm:$0xff]
    %v1332 = vld [vmem:[#allocation4 + $0x2590] sm:$0xff]
    %v1333 = vld [vmem:[#allocation4 + $0x2598] sm:$0xff]
    %v1334 = vld [vmem:[#allocation4 + $0x25a0] sm:$0xff]
    %v1335 = vld [vmem:[#allocation4 + $0x25a8] sm:$0xff]
    %v1336 = vld [vmem:[#allocation4 + $0x25b0] sm:$0xff]
    %v1337 = vld [vmem:[#allocation4 + $0x25b8] sm:$0xff]
    %v1338 = vld [vmem:[#allocation4 + $0x25c0] sm:$0xff]
    %v1339 = vld [vmem:[#allocation4 + $0x25c8] sm:$0xff]
    %v1340 = vld [vmem:[#allocation4 + $0x25d0] sm:$0xff]
    %v1341 = vld [vmem:[#allocation4 + $0x25d8] sm:$0xff]
    %v1342 = vld [vmem:[#allocation4 + $0x25e0] sm:$0xff]
    %v1343 = vld [vmem:[#allocation4 + $0x25e8] sm:$0xff]
    %v1344 = vld [vmem:[#allocation4 + $0x25f0] sm:$0xff]
    %v1345 = vld [vmem:[#allocation4 + $0x25f8] sm:$0xff]
    %v1346 = vld [vmem:[#allocation4 + $0x2600] sm:$0xff]
    %v1347 = vld [vmem:[#allocation4 + $0x2608] sm:$0xff]
    %v1348 = vld [vmem:[#allocation4 + $0x2610] sm:$0xff]
    %v1349 = vld [vmem:[#allocation4 + $0x2618] sm:$0xff]
    %v1350 = vld [vmem:[#allocation4 + $0x2620] sm:$0xff]
    %v1351 = vld [vmem:[#allocation4 + $0x2628] sm:$0xff]
    %v1352 = vld [vmem:[#allocation4 + $0x2630] sm:$0xff]
    %v1353 = vld [vmem:[#allocation4 + $0x2638] sm:$0xff]
    %v1354 = vld [vmem:[#allocation4 + $0x2640] sm:$0xff]
    %v1355 = vld [vmem:[#allocation4 + $0x2648] sm:$0xff]
    %v1356 = vld [vmem:[#allocation4 + $0x2650] sm:$0xff]
    %v1357 = vld [vmem:[#allocation4 + $0x2658] sm:$0xff]
    %v1358 = vld [vmem:[#allocation4 + $0x2660] sm:$0xff]
    %v1359 = vld [vmem:[#allocation4 + $0x2668] sm:$0xff]
    %v1360 = vld [vmem:[#allocation4 + $0x2670] sm:$0xff]
    %v1361 = vld [vmem:[#allocation4 + $0x2678] sm:$0xff]
    %v1362 = vld [vmem:[#allocation4 + $0x2680] sm:$0xff]
    %v1363 = vld [vmem:[#allocation4 + $0x2688] sm:$0xff]
    %v1364 = vld [vmem:[#allocation4 + $0x2690] sm:$0xff]
    %v1365 = vld [vmem:[#allocation4 + $0x2698] sm:$0xff]
    %v1366 = vld [vmem:[#allocation4 + $0x26a0] sm:$0xff]
    %v1367 = vld [vmem:[#allocation4 + $0x26a8] sm:$0xff]
    %v1368 = vld [vmem:[#allocation4 + $0x26b0] sm:$0xff]
    %v1369 = vld [vmem:[#allocation4 + $0x26b8] sm:$0xff]
    %v1370 = vld [vmem:[#allocation4 + $0x26c0] sm:$0xff]
    %v1371 = vld [vmem:[#allocation4 + $0x26c8] sm:$0xff]
    %v1372 = vld [vmem:[#allocation4 + $0x26d0] sm:$0xff]
    %v1373 = vld [vmem:[#allocation4 + $0x26d8] sm:$0xff]
    %v1374 = vld [vmem:[#allocation4 + $0x26e0] sm:$0xff]
    %v1375 = vld [vmem:[#allocation4 + $0x26e8] sm:$0xff]
    %v1376 = vld [vmem:[#allocation4 + $0x26f0] sm:$0xff]
    %v1377 = vld [vmem:[#allocation4 + $0x26f8] sm:$0xff]
    %v1378 = vld [vmem:[#allocation4 + $0x2700] sm:$0xff]
    %v1379 = vld [vmem:[#allocation4 + $0x2708] sm:$0xff]
    %v1380 = vld [vmem:[#allocation4 + $0x2710] sm:$0xff]
    %v1381 = vld [vmem:[#allocation4 + $0x2718] sm:$0xff]
    %v1382 = vld [vmem:[#allocation4 + $0x2720] sm:$0xff]
    %v1383 = vld [vmem:[#allocation4 + $0x2728] sm:$0xff]
    %v1384 = vld [vmem:[#allocation4 + $0x2730] sm:$0xff]
    %v1385 = vld [vmem:[#allocation4 + $0x2738] sm:$0xff]
    %v1386 = vld [vmem:[#allocation4 + $0x2740] sm:$0xff]
    %v1387 = vld [vmem:[#allocation4 + $0x2748] sm:$0xff]
    %v1388 = vld [vmem:[#allocation4 + $0x2750] sm:$0xff]
    %v1389 = vld [vmem:[#allocation4 + $0x2758] sm:$0xff]
    %v1390 = vld [vmem:[#allocation4 + $0x2760] sm:$0xff]
    %v1391 = vld [vmem:[#allocation4 + $0x2768] sm:$0xff]
    %v1392 = vld [vmem:[#allocation4 + $0x2770] sm:$0xff]
    %v1393 = vld [vmem:[#allocation4 + $0x2778] sm:$0xff]
    %v1394 = vld [vmem:[#allocation4 + $0x2780] sm:$0xff]
    %v1395 = vld [vmem:[#allocation4 + $0x2788] sm:$0xff]
    %v1396 = vld [vmem:[#allocation4 + $0x2790] sm:$0xff]
    %v1397 = vld [vmem:[#allocation4 + $0x2798] sm:$0xff]
    %v1398 = vld [vmem:[#allocation4 + $0x27a0] sm:$0xff]
    %v1399 = vld [vmem:[#allocation4 + $0x27a8] sm:$0xff]
    %v1400 = vld [vmem:[#allocation4 + $0x27b0] sm:$0xff]
    %v1401 = vld [vmem:[#allocation4 + $0x27b8] sm:$0xff]
    %v1402 = vld [vmem:[#allocation4 + $0x27c0] sm:$0xff]
    %v1403 = vld [vmem:[#allocation4 + $0x27c8] sm:$0xff]
    %v1404 = vld [vmem:[#allocation4 + $0x27d0] sm:$0xff]
    %v1405 = vld [vmem:[#allocation4 + $0x27d8] sm:$0xff]
    %v1406 = vld [vmem:[#allocation4 + $0x27e0] sm:$0xff]
    %v1407 = vld [vmem:[#allocation4 + $0x27e8] sm:$0xff]
    %v1408 = vld [vmem:[#allocation4 + $0x27f0] sm:$0xff]
    %v1409 = vld [vmem:[#allocation4 + $0x27f8] sm:$0xff]
    %v1410 = vld [vmem:[#allocation4 + $0x2800] sm:$0xff]
    %v1411 = vld [vmem:[#allocation4 + $0x2808] sm:$0xff]
    %v1412 = vld [vmem:[#allocation4 + $0x2810] sm:$0xff]
    %v1413 = vld [vmem:[#allocation4 + $0x2818] sm:$0xff]
    %v1414 = vld [vmem:[#allocation4 + $0x2820] sm:$0xff]
    %v1415 = vld [vmem:[#allocation4 + $0x2828] sm:$0xff]
    %v1416 = vld [vmem:[#allocation4 + $0x2830] sm:$0xff]
    %v1417 = vld [vmem:[#allocation4 + $0x2838] sm:$0xff]
    %v1418 = vld [vmem:[#allocation4 + $0x2840] sm:$0xff]
    %v1419 = vld [vmem:[#allocation4 + $0x2848] sm:$0xff]
    %v1420 = vld [vmem:[#allocation4 + $0x2850] sm:$0xff]
    %v1421 = vld [vmem:[#allocation4 + $0x2858] sm:$0xff]
    %v1422 = vld [vmem:[#allocation4 + $0x2860] sm:$0xff]
    %v1423 = vld [vmem:[#allocation4 + $0x2868] sm:$0xff]
    %v1424 = vld [vmem:[#allocation4 + $0x2870] sm:$0xff]
    %v1425 = vld [vmem:[#allocation4 + $0x2878] sm:$0xff]
    %v1426 = vld [vmem:[#allocation4 + $0x2880] sm:$0xff]
    %v1427 = vld [vmem:[#allocation4 + $0x2888] sm:$0xff]
    %v1428 = vld [vmem:[#allocation4 + $0x2890] sm:$0xff]
    %v1429 = vld [vmem:[#allocation4 + $0x2898] sm:$0xff]
    %v1430 = vld [vmem:[#allocation4 + $0x28a0] sm:$0xff]
    %v1431 = vld [vmem:[#allocation4 + $0x28a8] sm:$0xff]
    %v1432 = vld [vmem:[#allocation4 + $0x28b0] sm:$0xff]
    %v1433 = vld [vmem:[#allocation4 + $0x28b8] sm:$0xff]
    %v1434 = vld [vmem:[#allocation4 + $0x28c0] sm:$0xff]
    %v1435 = vld [vmem:[#allocation4 + $0x28c8] sm:$0xff]
    %v1436 = vld [vmem:[#allocation4 + $0x28d0] sm:$0xff]
    %v1437 = vld [vmem:[#allocation4 + $0x28d8] sm:$0xff]
    %v1438 = vld [vmem:[#allocation4 + $0x28e0] sm:$0xff]
    %v1439 = vld [vmem:[#allocation4 + $0x28e8] sm:$0xff]
    %v1440 = vld [vmem:[#allocation4 + $0x28f0] sm:$0xff]
    %v1441 = vld [vmem:[#allocation4 + $0x28f8] sm:$0xff]
    %v1442 = vld [vmem:[#allocation4 + $0x2900] sm:$0xff]
    %v1443 = vld [vmem:[#allocation4 + $0x2908] sm:$0xff]
    %v1444 = vld [vmem:[#allocation4 + $0x2910] sm:$0xff]
    %v1445 = vld [vmem:[#allocation4 + $0x2918] sm:$0xff]
    %v1446 = vld [vmem:[#allocation4 + $0x2920] sm:$0xff]
    %v1447 = vld [vmem:[#allocation4 + $0x2928] sm:$0xff]
    %v1448 = vld [vmem:[#allocation4 + $0x2930] sm:$0xff]
    %v1449 = vld [vmem:[#allocation4 + $0x2938] sm:$0xff]
    %v1450 = vld [vmem:[#allocation4 + $0x2940] sm:$0xff]
    %v1451 = vld [vmem:[#allocation4 + $0x2948] sm:$0xff]
    %v1452 = vld [vmem:[#allocation4 + $0x2950] sm:$0xff]
    %v1453 = vld [vmem:[#allocation4 + $0x2958] sm:$0xff]
    %v1454 = vld [vmem:[#allocation4 + $0x2960] sm:$0xff]
    %v1455 = vld [vmem:[#allocation4 + $0x2968] sm:$0xff]
    %v1456 = vld [vmem:[#allocation4 + $0x2970] sm:$0xff]
    %v1457 = vld [vmem:[#allocation4 + $0x2978] sm:$0xff]
    %v1458 = vld [vmem:[#allocation4 + $0x2980] sm:$0xff]
    %v1459 = vld [vmem:[#allocation4 + $0x2988] sm:$0xff]
    %v1460 = vld [vmem:[#allocation4 + $0x2990] sm:$0xff]
    %v1461 = vld [vmem:[#allocation4 + $0x2998] sm:$0xff]
    %v1462 = vld [vmem:[#allocation4 + $0x29a0] sm:$0xff]
    %v1463 = vld [vmem:[#allocation4 + $0x29a8] sm:$0xff]
    %v1464 = vld [vmem:[#allocation4 + $0x29b0] sm:$0xff]
    %v1465 = vld [vmem:[#allocation4 + $0x29b8] sm:$0xff]
    %v1466 = vld [vmem:[#allocation4 + $0x29c0] sm:$0xff]
    %v1467 = vld [vmem:[#allocation4 + $0x29c8] sm:$0xff]
    %v1468 = vld [vmem:[#allocation4 + $0x29d0] sm:$0xff]
    %v1469 = vld [vmem:[#allocation4 + $0x29d8] sm:$0xff]
    %v1470 = vld [vmem:[#allocation4 + $0x29e0] sm:$0xff]
    %v1471 = vld [vmem:[#allocation4 + $0x29e8] sm:$0xff]
    %v1472 = vld [vmem:[#allocation4 + $0x29f0] sm:$0xff]
    %v1473 = vld [vmem:[#allocation4 + $0x29f8] sm:$0xff]
    %v1474 = vld [vmem:[#allocation4 + $0x2a00] sm:$0xff]
    %v1475 = vld [vmem:[#allocation4 + $0x2a08] sm:$0xff]
    %v1476 = vld [vmem:[#allocation4 + $0x2a10] sm:$0xff]
    %v1477 = vld [vmem:[#allocation4 + $0x2a18] sm:$0xff]
    %v1478 = vld [vmem:[#allocation4 + $0x2a20] sm:$0xff]
    %v1479 = vld [vmem:[#allocation4 + $0x2a28] sm:$0xff]
    %v1480 = vld [vmem:[#allocation4 + $0x2a30] sm:$0xff]
    %v1481 = vld [vmem:[#allocation4 + $0x2a38] sm:$0xff]
    %v1482 = vld [vmem:[#allocation4 + $0x2a40] sm:$0xff]
    %v1483 = vld [vmem:[#allocation4 + $0x2a48] sm:$0xff]
    %v1484 = vld [vmem:[#allocation4 + $0x2a50] sm:$0xff]
    %v1485 = vld [vmem:[#allocation4 + $0x2a58] sm:$0xff]
    %v1486 = vld [vmem:[#allocation4 + $0x2a60] sm:$0xff]
    %v1487 = vld [vmem:[#allocation4 + $0x2a68] sm:$0xff]
    %v1488 = vld [vmem:[#allocation4 + $0x2a70] sm:$0xff]
    %v1489 = vld [vmem:[#allocation4 + $0x2a78] sm:$0xff]
    %v1490 = vld [vmem:[#allocation4 + $0x2a80] sm:$0xff]
    %v1491 = vld [vmem:[#allocation4 + $0x2a88] sm:$0xff]
    %v1492 = vld [vmem:[#allocation4 + $0x2a90] sm:$0xff]
    %v1493 = vld [vmem:[#allocation4 + $0x2a98] sm:$0xff]
    %v1494 = vld [vmem:[#allocation4 + $0x2aa0] sm:$0xff]
    %v1495 = vld [vmem:[#allocation4 + $0x2aa8] sm:$0xff]
    %v1496 = vld [vmem:[#allocation4 + $0x2ab0] sm:$0xff]
    %v1497 = vld [vmem:[#allocation4 + $0x2ab8] sm:$0xff]
    %v1498 = vld [vmem:[#allocation4 + $0x2ac0] sm:$0xff]
    %v1499 = vld [vmem:[#allocation4 + $0x2ac8] sm:$0xff]
    %v1500 = vld [vmem:[#allocation4 + $0x2ad0] sm:$0xff]
    %v1501 = vld [vmem:[#allocation4 + $0x2ad8] sm:$0xff]
    %v1502 = vld [vmem:[#allocation4 + $0x2ae0] sm:$0xff]
    %v1503 = vld [vmem:[#allocation4 + $0x2ae8] sm:$0xff]
    %v1504 = vld [vmem:[#allocation4 + $0x2af0] sm:$0xff]
    %v1505 = vld [vmem:[#allocation4 + $0x2af8] sm:$0xff]
    %v1506 = vld [vmem:[#allocation4 + $0x2b00] sm:$0xff]
    %v1507 = vld [vmem:[#allocation4 + $0x2b08] sm:$0xff]
    %v1508 = vld [vmem:[#allocation4 + $0x2b10] sm:$0xff]
    %v1509 = vld [vmem:[#allocation4 + $0x2b18] sm:$0xff]
    %v1510 = vld [vmem:[#allocation4 + $0x2b20] sm:$0xff]
    %v1511 = vld [vmem:[#allocation4 + $0x2b28] sm:$0xff]
    %v1512 = vld [vmem:[#allocation4 + $0x2b30] sm:$0xff]
    %v1513 = vld [vmem:[#allocation4 + $0x2b38] sm:$0xff]
    %v1514 = vld [vmem:[#allocation4 + $0x2b40] sm:$0xff]
    %v1515 = vld [vmem:[#allocation4 + $0x2b48] sm:$0xff]
    %v1516 = vld [vmem:[#allocation4 + $0x2b50] sm:$0xff]
    %v1517 = vld [vmem:[#allocation4 + $0x2b58] sm:$0xff]
    %v1518 = vld [vmem:[#allocation4 + $0x2b60] sm:$0xff]
    %v1519 = vld [vmem:[#allocation4 + $0x2b68] sm:$0xff]
    %v1520 = vld [vmem:[#allocation4 + $0x2b70] sm:$0xff]
    %v1521 = vld [vmem:[#allocation4 + $0x2b78] sm:$0xff]
    %v1522 = vld [vmem:[#allocation4 + $0x2b80] sm:$0xff]
    %v1523 = vld [vmem:[#allocation4 + $0x2b88] sm:$0xff]
    %v1524 = vld [vmem:[#allocation4 + $0x2b90] sm:$0xff]
    %v1525 = vld [vmem:[#allocation4 + $0x2b98] sm:$0xff]
    %v1526 = vld [vmem:[#allocation4 + $0x2ba0] sm:$0xff]
    %v1527 = vld [vmem:[#allocation4 + $0x2ba8] sm:$0xff]
    %v1528 = vld [vmem:[#allocation4 + $0x2bb0] sm:$0xff]
    %v1529 = vld [vmem:[#allocation4 + $0x2bb8] sm:$0xff]
    %v1530 = vld [vmem:[#allocation4 + $0x2bc0] sm:$0xff]
    %v1531 = vld [vmem:[#allocation4 + $0x2bc8] sm:$0xff]
    %v1532 = vld [vmem:[#allocation4 + $0x2bd0] sm:$0xff]
    %v1533 = vld [vmem:[#allocation4 + $0x2bd8] sm:$0xff]
    %v1534 = vld [vmem:[#allocation4 + $0x2be0] sm:$0xff]
    %v1535 = vld [vmem:[#allocation4 + $0x2be8] sm:$0xff]
    %v1536 = vld [vmem:[#allocation4 + $0x2bf0] sm:$0xff]
    %v1537 = vld [vmem:[#allocation4 + $0x2bf8] sm:$0xff]
    %v1538 = vld [vmem:[#allocation4 + $0x2c00] sm:$0xff]
    %v1539 = vld [vmem:[#allocation4 + $0x2c08] sm:$0xff]
    %v1540 = vld [vmem:[#allocation4 + $0x2c10] sm:$0xff]
    %v1541 = vld [vmem:[#allocation4 + $0x2c18] sm:$0xff]
    %v1542 = vld [vmem:[#allocation4 + $0x2c20] sm:$0xff]
    %v1543 = vld [vmem:[#allocation4 + $0x2c28] sm:$0xff]
    %v1544 = vld [vmem:[#allocation4 + $0x2c30] sm:$0xff]
    %v1545 = vld [vmem:[#allocation4 + $0x2c38] sm:$0xff]
    %v1546 = vld [vmem:[#allocation4 + $0x2c40] sm:$0xff]
    %v1547 = vld [vmem:[#allocation4 + $0x2c48] sm:$0xff]
    %v1548 = vld [vmem:[#allocation4 + $0x2c50] sm:$0xff]
    %v1549 = vld [vmem:[#allocation4 + $0x2c58] sm:$0xff]
    %v1550 = vld [vmem:[#allocation4 + $0x2c60] sm:$0xff]
    %v1551 = vld [vmem:[#allocation4 + $0x2c68] sm:$0xff]
    %v1552 = vld [vmem:[#allocation4 + $0x2c70] sm:$0xff]
    %v1553 = vld [vmem:[#allocation4 + $0x2c78] sm:$0xff]
    %v1554 = vld [vmem:[#allocation4 + $0x2c80] sm:$0xff]
    %v1555 = vld [vmem:[#allocation4 + $0x2c88] sm:$0xff]
    %v1556 = vld [vmem:[#allocation4 + $0x2c90] sm:$0xff]
    %v1557 = vld [vmem:[#allocation4 + $0x2c98] sm:$0xff]
    %v1558 = vld [vmem:[#allocation4 + $0x2ca0] sm:$0xff]
    %v1559 = vld [vmem:[#allocation4 + $0x2ca8] sm:$0xff]
    %v1560 = vld [vmem:[#allocation4 + $0x2cb0] sm:$0xff]
    %v1561 = vld [vmem:[#allocation4 + $0x2cb8] sm:$0xff]
    %v1562 = vld [vmem:[#allocation4 + $0x2cc0] sm:$0xff]
    %v1563 = vld [vmem:[#allocation4 + $0x2cc8] sm:$0xff]
    %v1564 = vld [vmem:[#allocation4 + $0x2cd0] sm:$0xff]
    %v1565 = vld [vmem:[#allocation4 + $0x2cd8] sm:$0xff]
    %v1566 = vld [vmem:[#allocation4 + $0x2ce0] sm:$0xff]
    %v1567 = vld [vmem:[#allocation4 + $0x2ce8] sm:$0xff]
    %v1568 = vld [vmem:[#allocation4 + $0x2cf0] sm:$0xff]
    %v1569 = vld [vmem:[#allocation4 + $0x2cf8] sm:$0xff]
    %v1570 = vld [vmem:[#allocation4 + $0x2d00] sm:$0xff]
    %v1571 = vld [vmem:[#allocation4 + $0x2d08] sm:$0xff]
    %v1572 = vld [vmem:[#allocation4 + $0x2d10] sm:$0xff]
    %v1573 = vld [vmem:[#allocation4 + $0x2d18] sm:$0xff]
    %v1574 = vld [vmem:[#allocation4 + $0x2d20] sm:$0xff]
    %v1575 = vld [vmem:[#allocation4 + $0x2d28] sm:$0xff]
    %v1576 = vld [vmem:[#allocation4 + $0x2d30] sm:$0xff]
    %v1577 = vld [vmem:[#allocation4 + $0x2d38] sm:$0xff]
    %v1578 = vld [vmem:[#allocation4 + $0x2d40] sm:$0xff]
    %v1579 = vld [vmem:[#allocation4 + $0x2d48] sm:$0xff]
    %v1580 = vld [vmem:[#allocation4 + $0x2d50] sm:$0xff]
    %v1581 = vld [vmem:[#allocation4 + $0x2d58] sm:$0xff]
    %v1582 = vld [vmem:[#allocation4 + $0x2d60] sm:$0xff]
    %v1583 = vld [vmem:[#allocation4 + $0x2d68] sm:$0xff]
    %v1584 = vld [vmem:[#allocation4 + $0x2d70] sm:$0xff]
    %v1585 = vld [vmem:[#allocation4 + $0x2d78] sm:$0xff]
    %v1586 = vld [vmem:[#allocation4 + $0x2d80] sm:$0xff]
    %v1587 = vld [vmem:[#allocation4 + $0x2d88] sm:$0xff]
    %v1588 = vld [vmem:[#allocation4 + $0x2d90] sm:$0xff]
    %v1589 = vld [vmem:[#allocation4 + $0x2d98] sm:$0xff]
    %v1590 = vld [vmem:[#allocation4 + $0x2da0] sm:$0xff]
    %v1591 = vld [vmem:[#allocation4 + $0x2da8] sm:$0xff]
    %v1592 = vld [vmem:[#allocation4 + $0x2db0] sm:$0xff]
    %v1593 = vld [vmem:[#allocation4 + $0x2db8] sm:$0xff]
    %v1594 = vld [vmem:[#allocation4 + $0x2dc0] sm:$0xff]
    %v1595 = vld [vmem:[#allocation4 + $0x2dc8] sm:$0xff]
    %v1596 = vld [vmem:[#allocation4 + $0x2dd0] sm:$0xff]
    %v1597 = vld [vmem:[#allocation4 + $0x2dd8] sm:$0xff]
    %v1598 = vld [vmem:[#allocation4 + $0x2de0] sm:$0xff]
    %v1599 = vld [vmem:[#allocation4 + $0x2de8] sm:$0xff]
    %v1600 = vld [vmem:[#allocation4 + $0x2df0] sm:$0xff]
    %v1601 = vld [vmem:[#allocation4 + $0x2df8] sm:$0xff]
    %v1602 = vld [vmem:[#allocation4 + $0x2e00] sm:$0xff]
    %v1603 = vld [vmem:[#allocation4 + $0x2e08] sm:$0xff]
    %v1604 = vld [vmem:[#allocation4 + $0x2e10] sm:$0xff]
    %v1605 = vld [vmem:[#allocation4 + $0x2e18] sm:$0xff]
    %v1606 = vld [vmem:[#allocation4 + $0x2e20] sm:$0xff]
    %v1607 = vld [vmem:[#allocation4 + $0x2e28] sm:$0xff]
    %v1608 = vld [vmem:[#allocation4 + $0x2e30] sm:$0xff]
    %v1609 = vld [vmem:[#allocation4 + $0x2e38] sm:$0xff]
    %v1610 = vld [vmem:[#allocation4 + $0x2e40] sm:$0xff]
    %v1611 = vld [vmem:[#allocation4 + $0x2e48] sm:$0xff]
    %v1612 = vld [vmem:[#allocation4 + $0x2e50] sm:$0xff]
    %v1613 = vld [vmem:[#allocation4 + $0x2e58] sm:$0xff]
    %v1614 = vld [vmem:[#allocation4 + $0x2e60] sm:$0xff]
    %v1615 = vld [vmem:[#allocation4 + $0x2e68] sm:$0xff]
    %v1616 = vld [vmem:[#allocation4 + $0x2e70] sm:$0xff]
    %v1617 = vld [vmem:[#allocation4 + $0x2e78] sm:$0xff]
    %v1618 = vld [vmem:[#allocation4 + $0x2e80] sm:$0xff]
    %v1619 = vld [vmem:[#allocation4 + $0x2e88] sm:$0xff]
    %v1620 = vld [vmem:[#allocation4 + $0x2e90] sm:$0xff]
    %v1621 = vld [vmem:[#allocation4 + $0x2e98] sm:$0xff]
    %v1622 = vld [vmem:[#allocation4 + $0x2ea0] sm:$0xff]
    %v1623 = vld [vmem:[#allocation4 + $0x2ea8] sm:$0xff]
    %v1624 = vld [vmem:[#allocation4 + $0x2eb0] sm:$0xff]
    %v1625 = vld [vmem:[#allocation4 + $0x2eb8] sm:$0xff]
    %v1626 = vld [vmem:[#allocation4 + $0x2ec0] sm:$0xff]
    %v1627 = vld [vmem:[#allocation4 + $0x2ec8] sm:$0xff]
    %v1628 = vld [vmem:[#allocation4 + $0x2ed0] sm:$0xff]
    %v1629 = vld [vmem:[#allocation4 + $0x2ed8] sm:$0xff]
    %v1630 = vld [vmem:[#allocation4 + $0x2ee0] sm:$0xff]
    %v1631 = vld [vmem:[#allocation4 + $0x2ee8] sm:$0xff]
    %v1632 = vld [vmem:[#allocation4 + $0x2ef0] sm:$0xff]
    %v1633 = vld [vmem:[#allocation4 + $0x2ef8] sm:$0xff]
    %v1634 = vld [vmem:[#allocation4 + $0x2f00] sm:$0xff]
    %v1635 = vld [vmem:[#allocation4 + $0x2f08] sm:$0xff]
    %v1636 = vld [vmem:[#allocation4 + $0x2f10] sm:$0xff]
    %v1637 = vld [vmem:[#allocation4 + $0x2f18] sm:$0xff]
    %v1638 = vld [vmem:[#allocation4 + $0x2f20] sm:$0xff]
    %v1639 = vld [vmem:[#allocation4 + $0x2f28] sm:$0xff]
    %v1640 = vld [vmem:[#allocation4 + $0x2f30] sm:$0xff]
    %v1641 = vld [vmem:[#allocation4 + $0x2f38] sm:$0xff]
    %v1642 = vld [vmem:[#allocation4 + $0x2f40] sm:$0xff]
    %v1643 = vld [vmem:[#allocation4 + $0x2f48] sm:$0xff]
    %v1644 = vld [vmem:[#allocation4 + $0x2f50] sm:$0xff]
    %v1645 = vld [vmem:[#allocation4 + $0x2f58] sm:$0xff]
    %v1646 = vld [vmem:[#allocation4 + $0x2f60] sm:$0xff]
    %v1647 = vld [vmem:[#allocation4 + $0x2f68] sm:$0xff]
    %v1648 = vld [vmem:[#allocation4 + $0x2f70] sm:$0xff]
    %v1649 = vld [vmem:[#allocation4 + $0x2f78] sm:$0xff]
    %v1650 = vld [vmem:[#allocation4 + $0x2f80] sm:$0xff]
    %v1651 = vld [vmem:[#allocation4 + $0x2f88] sm:$0xff]
    %v1652 = vld [vmem:[#allocation4 + $0x2f90] sm:$0xff]
    %v1653 = vld [vmem:[#allocation4 + $0x2f98] sm:$0xff]
    %v1654 = vld [vmem:[#allocation4 + $0x2fa0] sm:$0xff]
    %v1655 = vld [vmem:[#allocation4 + $0x2fa8] sm:$0xff]
    %v1656 = vld [vmem:[#allocation4 + $0x2fb0] sm:$0xff]
    %v1657 = vld [vmem:[#allocation4 + $0x2fb8] sm:$0xff]
    %v1658 = vld [vmem:[#allocation4 + $0x2fc0] sm:$0xff]
    %v1659 = vld [vmem:[#allocation4 + $0x2fc8] sm:$0xff]
    %v1660 = vld [vmem:[#allocation4 + $0x2fd0] sm:$0xff]
    %v1661 = vld [vmem:[#allocation4 + $0x2fd8] sm:$0xff]
    %v1662 = vld [vmem:[#allocation4 + $0x2fe0] sm:$0xff]
    %v1663 = vld [vmem:[#allocation4 + $0x2fe8] sm:$0xff]
    %v1664 = vld [vmem:[#allocation4 + $0x2ff0] sm:$0xff]
    %v1665 = vld [vmem:[#allocation4 + $0x2ff8] sm:$0xff]
    %v1666 = vld [vmem:[#allocation4 + $0x3000] sm:$0xff]
    %v1667 = vld [vmem:[#allocation4 + $0x3008] sm:$0xff]
    %v1668 = vld [vmem:[#allocation4 + $0x3010] sm:$0xff]
    %v1669 = vld [vmem:[#allocation4 + $0x3018] sm:$0xff]
    %v1670 = vld [vmem:[#allocation4 + $0x3020] sm:$0xff]
    %v1671 = vld [vmem:[#allocation4 + $0x3028] sm:$0xff]
    %v1672 = vld [vmem:[#allocation4 + $0x3030] sm:$0xff]
    %v1673 = vld [vmem:[#allocation4 + $0x3038] sm:$0xff]
    %v1674 = vld [vmem:[#allocation4 + $0x3040] sm:$0xff]
    %v1675 = vld [vmem:[#allocation4 + $0x3048] sm:$0xff]
    %v1676 = vld [vmem:[#allocation4 + $0x3050] sm:$0xff]
    %v1677 = vld [vmem:[#allocation4 + $0x3058] sm:$0xff]
    %v1678 = vld [vmem:[#allocation4 + $0x3060] sm:$0xff]
    %v1679 = vld [vmem:[#allocation4 + $0x3068] sm:$0xff]
    %v1680 = vld [vmem:[#allocation4 + $0x3070] sm:$0xff]
    %v1681 = vld [vmem:[#allocation4 + $0x3078] sm:$0xff]
    %v1682 = vld [vmem:[#allocation4 + $0x3080] sm:$0xff]
    %v1683 = vld [vmem:[#allocation4 + $0x3088] sm:$0xff]
    %v1684 = vld [vmem:[#allocation4 + $0x3090] sm:$0xff]
    %v1685 = vld [vmem:[#allocation4 + $0x3098] sm:$0xff]
    %v1686 = vld [vmem:[#allocation4 + $0x30a0] sm:$0xff]
    %v1687 = vld [vmem:[#allocation4 + $0x30a8] sm:$0xff]
    %v1688 = vld [vmem:[#allocation4 + $0x30b0] sm:$0xff]
    %v1689 = vld [vmem:[#allocation4 + $0x30b8] sm:$0xff]
    %v1690 = vld [vmem:[#allocation4 + $0x30c0] sm:$0xff]
    %v1691 = vld [vmem:[#allocation4 + $0x30c8] sm:$0xff]
    %v1692 = vld [vmem:[#allocation4 + $0x30d0] sm:$0xff]
    %v1693 = vld [vmem:[#allocation4 + $0x30d8] sm:$0xff]
    %v1694 = vld [vmem:[#allocation4 + $0x30e0] sm:$0xff]
    %v1695 = vld [vmem:[#allocation4 + $0x30e8] sm:$0xff]
    %v1696 = vld [vmem:[#allocation4 + $0x30f0] sm:$0xff]
    %v1697 = vld [vmem:[#allocation4 + $0x30f8] sm:$0xff]
    %v1698 = vld [vmem:[#allocation4 + $0x3100] sm:$0xff]
    %v1699 = vld [vmem:[#allocation4 + $0x3108] sm:$0xff]
    %v1700 = vld [vmem:[#allocation4 + $0x3110] sm:$0xff]
    %v1701 = vld [vmem:[#allocation4 + $0x3118] sm:$0xff]
    %v1702 = vld [vmem:[#allocation4 + $0x3120] sm:$0xff]
    %v1703 = vld [vmem:[#allocation4 + $0x3128] sm:$0xff]
    %v1704 = vld [vmem:[#allocation4 + $0x3130] sm:$0xff]
    %v1705 = vld [vmem:[#allocation4 + $0x3138] sm:$0xff]
    %v1706 = vld [vmem:[#allocation4 + $0x3140] sm:$0xff]
    %v1707 = vld [vmem:[#allocation4 + $0x3148] sm:$0xff]
    %v1708 = vld [vmem:[#allocation4 + $0x3150] sm:$0xff]
    %v1709 = vld [vmem:[#allocation4 + $0x3158] sm:$0xff]
    %v1710 = vld [vmem:[#allocation4 + $0x3160] sm:$0xff]
    %v1711 = vld [vmem:[#allocation4 + $0x3168] sm:$0xff]
    %v1712 = vld [vmem:[#allocation4 + $0x3170] sm:$0xff]
    %v1713 = vld [vmem:[#allocation4 + $0x3178] sm:$0xff]
    %v1714 = vld [vmem:[#allocation4 + $0x3180] sm:$0xff]
    %v1715 = vld [vmem:[#allocation4 + $0x3188] sm:$0xff]
    %v1716 = vld [vmem:[#allocation4 + $0x3190] sm:$0xff]
    %v1717 = vld [vmem:[#allocation4 + $0x3198] sm:$0xff]
    %v1718 = vld [vmem:[#allocation4 + $0x31a0] sm:$0xff]
    %v1719 = vld [vmem:[#allocation4 + $0x31a8] sm:$0xff]
    %v1720 = vld [vmem:[#allocation4 + $0x31b0] sm:$0xff]
    %v1721 = vld [vmem:[#allocation4 + $0x31b8] sm:$0xff]
    %v1722 = vld [vmem:[#allocation4 + $0x31c0] sm:$0xff]
    %v1723 = vld [vmem:[#allocation4 + $0x31c8] sm:$0xff]
    %v1724 = vld [vmem:[#allocation4 + $0x31d0] sm:$0xff]
    %v1725 = vld [vmem:[#allocation4 + $0x31d8] sm:$0xff]
    %v1726 = vld [vmem:[#allocation4 + $0x31e0] sm:$0xff]
    %v1727 = vld [vmem:[#allocation4 + $0x31e8] sm:$0xff]
    %v1728 = vld [vmem:[#allocation4 + $0x31f0] sm:$0xff]
    %v1729 = vld [vmem:[#allocation4 + $0x31f8] sm:$0xff]
    %v1730 = vld [vmem:[#allocation4 + $0x3200] sm:$0xff]
    %v1731 = vld [vmem:[#allocation4 + $0x3208] sm:$0xff]
    %v1732 = vld [vmem:[#allocation4 + $0x3210] sm:$0xff]
    %v1733 = vld [vmem:[#allocation4 + $0x3218] sm:$0xff]
    %v1734 = vld [vmem:[#allocation4 + $0x3220] sm:$0xff]
    %v1735 = vld [vmem:[#allocation4 + $0x3228] sm:$0xff]
    %v1736 = vld [vmem:[#allocation4 + $0x3230] sm:$0xff]
    %v1737 = vld [vmem:[#allocation4 + $0x3238] sm:$0xff]
    %v1738 = vld [vmem:[#allocation4 + $0x3240] sm:$0xff]
    %v1739 = vld [vmem:[#allocation4 + $0x3248] sm:$0xff]
    %v1740 = vld [vmem:[#allocation4 + $0x3250] sm:$0xff]
    %v1741 = vld [vmem:[#allocation4 + $0x3258] sm:$0xff]
    %v1742 = vld [vmem:[#allocation4 + $0x3260] sm:$0xff]
    %v1743 = vld [vmem:[#allocation4 + $0x3268] sm:$0xff]
    %v1744 = vld [vmem:[#allocation4 + $0x3270] sm:$0xff]
    %v1745 = vld [vmem:[#allocation4 + $0x3278] sm:$0xff]
    %v1746 = vld [vmem:[#allocation4 + $0x3280] sm:$0xff]
    %v1747 = vld [vmem:[#allocation4 + $0x3288] sm:$0xff]
    %v1748 = vld [vmem:[#allocation4 + $0x3290] sm:$0xff]
    %v1749 = vld [vmem:[#allocation4 + $0x3298] sm:$0xff]
    %v1750 = vld [vmem:[#allocation4 + $0x32a0] sm:$0xff]
    %v1751 = vld [vmem:[#allocation4 + $0x32a8] sm:$0xff]
    %v1752 = vld [vmem:[#allocation4 + $0x32b0] sm:$0xff]
    %v1753 = vld [vmem:[#allocation4 + $0x32b8] sm:$0xff]
    %v1754 = vld [vmem:[#allocation4 + $0x32c0] sm:$0xff]
    %v1755 = vld [vmem:[#allocation4 + $0x32c8] sm:$0xff]
    %v1756 = vld [vmem:[#allocation4 + $0x32d0] sm:$0xff]
    %v1757 = vld [vmem:[#allocation4 + $0x32d8] sm:$0xff]
    %v1758 = vld [vmem:[#allocation4 + $0x32e0] sm:$0xff]
    %v1759 = vld [vmem:[#allocation4 + $0x32e8] sm:$0xff]
    %v1760 = vld [vmem:[#allocation4 + $0x32f0] sm:$0xff]
    %v1761 = vld [vmem:[#allocation4 + $0x32f8] sm:$0xff]
    %v1762 = vld [vmem:[#allocation4 + $0x3300] sm:$0xff]
    %v1763 = vld [vmem:[#allocation4 + $0x3308] sm:$0xff]
    %v1764 = vld [vmem:[#allocation4 + $0x3310] sm:$0xff]
    %v1765 = vld [vmem:[#allocation4 + $0x3318] sm:$0xff]
    %v1766 = vld [vmem:[#allocation4 + $0x3320] sm:$0xff]
    %v1767 = vld [vmem:[#allocation4 + $0x3328] sm:$0xff]
    %v1768 = vld [vmem:[#allocation4 + $0x3330] sm:$0xff]
    %v1769 = vld [vmem:[#allocation4 + $0x3338] sm:$0xff]
    %v1770 = vld [vmem:[#allocation4 + $0x3340] sm:$0xff]
    %v1771 = vld [vmem:[#allocation4 + $0x3348] sm:$0xff]
    %v1772 = vld [vmem:[#allocation4 + $0x3350] sm:$0xff]
    %v1773 = vld [vmem:[#allocation4 + $0x3358] sm:$0xff]
    %v1774 = vld [vmem:[#allocation4 + $0x3360] sm:$0xff]
    %v1775 = vld [vmem:[#allocation4 + $0x3368] sm:$0xff]
    %v1776 = vld [vmem:[#allocation4 + $0x3370] sm:$0xff]
    %v1777 = vld [vmem:[#allocation4 + $0x3378] sm:$0xff]
    %v1778 = vld [vmem:[#allocation4 + $0x3380] sm:$0xff]
    %v1779 = vld [vmem:[#allocation4 + $0x3388] sm:$0xff]
    %v1780 = vld [vmem:[#allocation4 + $0x3390] sm:$0xff]
    %v1781 = vld [vmem:[#allocation4 + $0x3398] sm:$0xff]
    %v1782 = vld [vmem:[#allocation4 + $0x33a0] sm:$0xff]
    %v1783 = vld [vmem:[#allocation4 + $0x33a8] sm:$0xff]
    %v1784 = vld [vmem:[#allocation4 + $0x33b0] sm:$0xff]
    %v1785 = vld [vmem:[#allocation4 + $0x33b8] sm:$0xff]
    %v1786 = vld [vmem:[#allocation4 + $0x33c0] sm:$0xff]
    %v1787 = vld [vmem:[#allocation4 + $0x33c8] sm:$0xff]
    %v1788 = vld [vmem:[#allocation4 + $0x33d0] sm:$0xff]
    %v1789 = vld [vmem:[#allocation4 + $0x33d8] sm:$0xff]
    %v1790 = vld [vmem:[#allocation4 + $0x33e0] sm:$0xff]
    %v1791 = vld [vmem:[#allocation4 + $0x33e8] sm:$0xff]
    %v1792 = vld [vmem:[#allocation4 + $0x33f0] sm:$0xff]
    %v1793 = vld [vmem:[#allocation4 + $0x33f8] sm:$0xff]
    %v1794 = vld [vmem:[#allocation4 + $0x3400] sm:$0xff]
    %v1795 = vld [vmem:[#allocation4 + $0x3408] sm:$0xff]
    %v1796 = vld [vmem:[#allocation4 + $0x3410] sm:$0xff]
    %v1797 = vld [vmem:[#allocation4 + $0x3418] sm:$0xff]
    %v1798 = vld [vmem:[#allocation4 + $0x3420] sm:$0xff]
    %v1799 = vld [vmem:[#allocation4 + $0x3428] sm:$0xff]
    %v1800 = vld [vmem:[#allocation4 + $0x3430] sm:$0xff]
    %v1801 = vld [vmem:[#allocation4 + $0x3438] sm:$0xff]
    %v1802 = vld [vmem:[#allocation4 + $0x3440] sm:$0xff]
    %v1803 = vld [vmem:[#allocation4 + $0x3448] sm:$0xff]
    %v1804 = vld [vmem:[#allocation4 + $0x3450] sm:$0xff]
    %v1805 = vld [vmem:[#allocation4 + $0x3458] sm:$0xff]
    %v1806 = vld [vmem:[#allocation4 + $0x3460] sm:$0xff]
    %v1807 = vld [vmem:[#allocation4 + $0x3468] sm:$0xff]
    %v1808 = vld [vmem:[#allocation4 + $0x3470] sm:$0xff]
    %v1809 = vld [vmem:[#allocation4 + $0x3478] sm:$0xff]
    %v1810 = vld [vmem:[#allocation4 + $0x3480] sm:$0xff]
    %v1811 = vld [vmem:[#allocation4 + $0x3488] sm:$0xff]
    %v1812 = vld [vmem:[#allocation4 + $0x3490] sm:$0xff]
    %v1813 = vld [vmem:[#allocation4 + $0x3498] sm:$0xff]
    %v1814 = vld [vmem:[#allocation4 + $0x34a0] sm:$0xff]
    %v1815 = vld [vmem:[#allocation4 + $0x34a8] sm:$0xff]
    %v1816 = vld [vmem:[#allocation4 + $0x34b0] sm:$0xff]
    %v1817 = vld [vmem:[#allocation4 + $0x34b8] sm:$0xff]
    %v1818 = vld [vmem:[#allocation4 + $0x34c0] sm:$0xff]
    %v1819 = vld [vmem:[#allocation4 + $0x34c8] sm:$0xff]
    %v1820 = vld [vmem:[#allocation4 + $0x34d0] sm:$0xff]
    %v1821 = vld [vmem:[#allocation4 + $0x34d8] sm:$0xff]
    %v1822 = vld [vmem:[#allocation4 + $0x34e0] sm:$0xff]
    %v1823 = vld [vmem:[#allocation4 + $0x34e8] sm:$0xff]
    %v1824 = vld [vmem:[#allocation4 + $0x34f0] sm:$0xff]
    %v1825 = vld [vmem:[#allocation4 + $0x34f8] sm:$0xff]
    %v1826 = vld [vmem:[#allocation4 + $0x3500] sm:$0xff]
    %v1827 = vld [vmem:[#allocation4 + $0x3508] sm:$0xff]
    %v1828 = vld [vmem:[#allocation4 + $0x3510] sm:$0xff]
    %v1829 = vld [vmem:[#allocation4 + $0x3518] sm:$0xff]
    %v1830 = vld [vmem:[#allocation4 + $0x3520] sm:$0xff]
    %v1831 = vld [vmem:[#allocation4 + $0x3528] sm:$0xff]
    %v1832 = vld [vmem:[#allocation4 + $0x3530] sm:$0xff]
    %v1833 = vld [vmem:[#allocation4 + $0x3538] sm:$0xff]
    %v1834 = vld [vmem:[#allocation4 + $0x3540] sm:$0xff]
    %v1835 = vld [vmem:[#allocation4 + $0x3548] sm:$0xff]
    %v1836 = vld [vmem:[#allocation4 + $0x3550] sm:$0xff]
    %v1837 = vld [vmem:[#allocation4 + $0x3558] sm:$0xff]
    %v1838 = vld [vmem:[#allocation4 + $0x3560] sm:$0xff]
    %v1839 = vld [vmem:[#allocation4 + $0x3568] sm:$0xff]
    %v1840 = vld [vmem:[#allocation4 + $0x3570] sm:$0xff]
    %v1841 = vld [vmem:[#allocation4 + $0x3578] sm:$0xff]
    %v1842 = vld [vmem:[#allocation4 + $0x3580] sm:$0xff]
    %v1843 = vld [vmem:[#allocation4 + $0x3588] sm:$0xff]
    %v1844 = vld [vmem:[#allocation4 + $0x3590] sm:$0xff]
    %v1845 = vld [vmem:[#allocation4 + $0x3598] sm:$0xff]
    %v1846 = vld [vmem:[#allocation4 + $0x35a0] sm:$0xff]
    %v1847 = vld [vmem:[#allocation4 + $0x35a8] sm:$0xff]
    %v1848 = vld [vmem:[#allocation4 + $0x35b0] sm:$0xff]
    %v1849 = vld [vmem:[#allocation4 + $0x35b8] sm:$0xff]
    %v1850 = vld [vmem:[#allocation4 + $0x35c0] sm:$0xff]
    %v1851 = vld [vmem:[#allocation4 + $0x35c8] sm:$0xff]
    %v1852 = vld [vmem:[#allocation4 + $0x35d0] sm:$0xff]
    %v1853 = vld [vmem:[#allocation4 + $0x35d8] sm:$0xff]
    %v1854 = vld [vmem:[#allocation4 + $0x35e0] sm:$0xff]
    %v1855 = vld [vmem:[#allocation4 + $0x35e8] sm:$0xff]
    %v1856 = vld [vmem:[#allocation4 + $0x35f0] sm:$0xff]
    %v1857 = vld [vmem:[#allocation4 + $0x35f8] sm:$0xff]
    %v1858 = vld [vmem:[#allocation4 + $0x3600] sm:$0xff]
    %v1859 = vld [vmem:[#allocation4 + $0x3608] sm:$0xff]
    %v1860 = vld [vmem:[#allocation4 + $0x3610] sm:$0xff]
    %v1861 = vld [vmem:[#allocation4 + $0x3618] sm:$0xff]
    %v1862 = vld [vmem:[#allocation4 + $0x3620] sm:$0xff]
    %v1863 = vld [vmem:[#allocation4 + $0x3628] sm:$0xff]
    %v1864 = vld [vmem:[#allocation4 + $0x3630] sm:$0xff]
    %v1865 = vld [vmem:[#allocation4 + $0x3638] sm:$0xff]
    %v1866 = vld [vmem:[#allocation4 + $0x3640] sm:$0xff]
    %v1867 = vld [vmem:[#allocation4 + $0x3648] sm:$0xff]
    %v1868 = vld [vmem:[#allocation4 + $0x3650] sm:$0xff]
    %v1869 = vld [vmem:[#allocation4 + $0x3658] sm:$0xff]
    %v1870 = vld [vmem:[#allocation4 + $0x3660] sm:$0xff]
    %v1871 = vld [vmem:[#allocation4 + $0x3668] sm:$0xff]
    %v1872 = vld [vmem:[#allocation4 + $0x3670] sm:$0xff]
    %v1873 = vld [vmem:[#allocation4 + $0x3678] sm:$0xff]
    %v1874 = vld [vmem:[#allocation4 + $0x3680] sm:$0xff]
    %v1875 = vld [vmem:[#allocation4 + $0x3688] sm:$0xff]
    %v1876 = vld [vmem:[#allocation4 + $0x3690] sm:$0xff]
    %v1877 = vld [vmem:[#allocation4 + $0x3698] sm:$0xff]
    %v1878 = vld [vmem:[#allocation4 + $0x36a0] sm:$0xff]
    %v1879 = vld [vmem:[#allocation4 + $0x36a8] sm:$0xff]
    %v1880 = vld [vmem:[#allocation4 + $0x36b0] sm:$0xff]
    %v1881 = vld [vmem:[#allocation4 + $0x36b8] sm:$0xff]
    %v1882 = vld [vmem:[#allocation4 + $0x36c0] sm:$0xff]
    %v1883 = vld [vmem:[#allocation4 + $0x36c8] sm:$0xff]
    %v1884 = vld [vmem:[#allocation4 + $0x36d0] sm:$0xff]
    %v1885 = vld [vmem:[#allocation4 + $0x36d8] sm:$0xff]
    %v1886 = vld [vmem:[#allocation4 + $0x36e0] sm:$0xff]
    %v1887 = vld [vmem:[#allocation4 + $0x36e8] sm:$0xff]
    %v1888 = vld [vmem:[#allocation4 + $0x36f0] sm:$0xff]
    %v1889 = vld [vmem:[#allocation4 + $0x36f8] sm:$0xff]
    %v1890 = vld [vmem:[#allocation4 + $0x3700] sm:$0xff]
    %v1891 = vld [vmem:[#allocation4 + $0x3708] sm:$0xff]
    %v1892 = vld [vmem:[#allocation4 + $0x3710] sm:$0xff]
    %v1893 = vld [vmem:[#allocation4 + $0x3718] sm:$0xff]
    %v1894 = vld [vmem:[#allocation4 + $0x3720] sm:$0xff]
    %v1895 = vld [vmem:[#allocation4 + $0x3728] sm:$0xff]
    %v1896 = vld [vmem:[#allocation4 + $0x3730] sm:$0xff]
    %v1897 = vld [vmem:[#allocation4 + $0x3738] sm:$0xff]
    %v1898 = vld [vmem:[#allocation4 + $0x3740] sm:$0xff]
    %v1899 = vld [vmem:[#allocation4 + $0x3748] sm:$0xff]
    %v1900 = vld [vmem:[#allocation4 + $0x3750] sm:$0xff]
    %v1901 = vld [vmem:[#allocation4 + $0x3758] sm:$0xff]
    %v1902 = vld [vmem:[#allocation4 + $0x3760] sm:$0xff]
    %v1903 = vld [vmem:[#allocation4 + $0x3768] sm:$0xff]
    %v1904 = vld [vmem:[#allocation4 + $0x3770] sm:$0xff]
    %v1905 = vld [vmem:[#allocation4 + $0x3778] sm:$0xff]
    %v1906 = vld [vmem:[#allocation4 + $0x3780] sm:$0xff]
    %v1907 = vld [vmem:[#allocation4 + $0x3788] sm:$0xff]
    %v1908 = vld [vmem:[#allocation4 + $0x3790] sm:$0xff]
    %v1909 = vld [vmem:[#allocation4 + $0x3798] sm:$0xff]
    %v1910 = vld [vmem:[#allocation4 + $0x37a0] sm:$0xff]
    %v1911 = vld [vmem:[#allocation4 + $0x37a8] sm:$0xff]
    %v1912 = vld [vmem:[#allocation4 + $0x37b0] sm:$0xff]
    %v1913 = vld [vmem:[#allocation4 + $0x37b8] sm:$0xff]
    %v1914 = vld [vmem:[#allocation4 + $0x37c0] sm:$0xff]
    %v1915 = vld [vmem:[#allocation4 + $0x37c8] sm:$0xff]
    %v1916 = vld [vmem:[#allocation4 + $0x37d0] sm:$0xff]
    %v1917 = vld [vmem:[#allocation4 + $0x37d8] sm:$0xff]
    %v1918 = vld [vmem:[#allocation4 + $0x37e0] sm:$0xff]
    %v1919 = vld [vmem:[#allocation4 + $0x37e8] sm:$0xff]
    %v1920 = vld [vmem:[#allocation4 + $0x37f0] sm:$0xff]
    %v1921 = vld [vmem:[#allocation4 + $0x37f8] sm:$0xff]
    %v1922 = vld [vmem:[#allocation4 + $0x3800] sm:$0xff]
    %v1923 = vld [vmem:[#allocation4 + $0x3808] sm:$0xff]
    %v1924 = vld [vmem:[#allocation4 + $0x3810] sm:$0xff]
    %v1925 = vld [vmem:[#allocation4 + $0x3818] sm:$0xff]
    %v1926 = vld [vmem:[#allocation4 + $0x3820] sm:$0xff]
    %v1927 = vld [vmem:[#allocation4 + $0x3828] sm:$0xff]
    %v1928 = vld [vmem:[#allocation4 + $0x3830] sm:$0xff]
    %v1929 = vld [vmem:[#allocation4 + $0x3838] sm:$0xff]
    %v1930 = vld [vmem:[#allocation4 + $0x3840] sm:$0xff]
    %v1931 = vld [vmem:[#allocation4 + $0x3848] sm:$0xff]
    %v1932 = vld [vmem:[#allocation4 + $0x3850] sm:$0xff]
    %v1933 = vld [vmem:[#allocation4 + $0x3858] sm:$0xff]
    %v1934 = vld [vmem:[#allocation4 + $0x3860] sm:$0xff]
    %v1935 = vld [vmem:[#allocation4 + $0x3868] sm:$0xff]
    %v1936 = vld [vmem:[#allocation4 + $0x3870] sm:$0xff]
    %v1937 = vld [vmem:[#allocation4 + $0x3878] sm:$0xff]
    %v1938 = vld [vmem:[#allocation4 + $0x3880] sm:$0xff]
    %v1939 = vld [vmem:[#allocation4 + $0x3888] sm:$0xff]
    %v1940 = vld [vmem:[#allocation4 + $0x3890] sm:$0xff]
    %v1941 = vld [vmem:[#allocation4 + $0x3898] sm:$0xff]
    %v1942 = vld [vmem:[#allocation4 + $0x38a0] sm:$0xff]
    %v1943 = vld [vmem:[#allocation4 + $0x38a8] sm:$0xff]
    %v1944 = vld [vmem:[#allocation4 + $0x38b0] sm:$0xff]
    %v1945 = vld [vmem:[#allocation4 + $0x38b8] sm:$0xff]
    %v1946 = vld [vmem:[#allocation4 + $0x38c0] sm:$0xff]
    %v1947 = vld [vmem:[#allocation4 + $0x38c8] sm:$0xff]
    %v1948 = vld [vmem:[#allocation4 + $0x38d0] sm:$0xff]
    %v1949 = vld [vmem:[#allocation4 + $0x38d8] sm:$0xff]
    %v1950 = vld [vmem:[#allocation4 + $0x38e0] sm:$0xff]
    %v1951 = vld [vmem:[#allocation4 + $0x38e8] sm:$0xff]
    %v1952 = vld [vmem:[#allocation4 + $0x38f0] sm:$0xff]
    %v1953 = vld [vmem:[#allocation4 + $0x38f8] sm:$0xff]
    %v1954 = vld [vmem:[#allocation4 + $0x3900] sm:$0xff]
    %v1955 = vld [vmem:[#allocation4 + $0x3908] sm:$0xff]
    %v1956 = vld [vmem:[#allocation4 + $0x3910] sm:$0xff]
    %v1957 = vld [vmem:[#allocation4 + $0x3918] sm:$0xff]
    %v1958 = vld [vmem:[#allocation4 + $0x3920] sm:$0xff]
    %v1959 = vld [vmem:[#allocation4 + $0x3928] sm:$0xff]
    %v1960 = vld [vmem:[#allocation4 + $0x3930] sm:$0xff]
    %v1961 = vld [vmem:[#allocation4 + $0x3938] sm:$0xff]
    %v1962 = vld [vmem:[#allocation4 + $0x3940] sm:$0xff]
    %v1963 = vld [vmem:[#allocation4 + $0x3948] sm:$0xff]
    %v1964 = vld [vmem:[#allocation4 + $0x3950] sm:$0xff]
    %v1965 = vld [vmem:[#allocation4 + $0x3958] sm:$0xff]
    %v1966 = vld [vmem:[#allocation4 + $0x3960] sm:$0xff]
    %v1967 = vld [vmem:[#allocation4 + $0x3968] sm:$0xff]
    %v1968 = vld [vmem:[#allocation4 + $0x3970] sm:$0xff]
    %v1969 = vld [vmem:[#allocation4 + $0x3978] sm:$0xff]
    %v1970 = vld [vmem:[#allocation4 + $0x3980] sm:$0xff]
    %v1971 = vld [vmem:[#allocation4 + $0x3988] sm:$0xff]
    %v1972 = vld [vmem:[#allocation4 + $0x3990] sm:$0xff]
    %v1973 = vld [vmem:[#allocation4 + $0x3998] sm:$0xff]
    %v1974 = vld [vmem:[#allocation4 + $0x39a0] sm:$0xff]
    %v1975 = vld [vmem:[#allocation4 + $0x39a8] sm:$0xff]
    %v1976 = vld [vmem:[#allocation4 + $0x39b0] sm:$0xff]
    %v1977 = vld [vmem:[#allocation4 + $0x39b8] sm:$0xff]
    %v1978 = vld [vmem:[#allocation4 + $0x39c0] sm:$0xff]
    %v1979 = vld [vmem:[#allocation4 + $0x39c8] sm:$0xff]
    %v1980 = vld [vmem:[#allocation4 + $0x39d0] sm:$0xff]
    %v1981 = vld [vmem:[#allocation4 + $0x39d8] sm:$0xff]
    %v1982 = vld [vmem:[#allocation4 + $0x39e0] sm:$0xff]
    %v1983 = vld [vmem:[#allocation4 + $0x39e8] sm:$0xff]
    %v1984 = vld [vmem:[#allocation4 + $0x39f0] sm:$0xff]
    %v1985 = vld [vmem:[#allocation4 + $0x39f8] sm:$0xff]
    %v1986 = vld [vmem:[#allocation4 + $0x3a00] sm:$0xff]
    %v1987 = vld [vmem:[#allocation4 + $0x3a08] sm:$0xff]
    %v1988 = vld [vmem:[#allocation4 + $0x3a10] sm:$0xff]
    %v1989 = vld [vmem:[#allocation4 + $0x3a18] sm:$0xff]
    %v1990 = vld [vmem:[#allocation4 + $0x3a20] sm:$0xff]
    %v1991 = vld [vmem:[#allocation4 + $0x3a28] sm:$0xff]
    %v1992 = vld [vmem:[#allocation4 + $0x3a30] sm:$0xff]
    %v1993 = vld [vmem:[#allocation4 + $0x3a38] sm:$0xff]
    %v1994 = vld [vmem:[#allocation4 + $0x3a40] sm:$0xff]
    %v1995 = vld [vmem:[#allocation4 + $0x3a48] sm:$0xff]
    %v1996 = vld [vmem:[#allocation4 + $0x3a50] sm:$0xff]
    %v1997 = vld [vmem:[#allocation4 + $0x3a58] sm:$0xff]
    %v1998 = vld [vmem:[#allocation4 + $0x3a60] sm:$0xff]
    %v1999 = vld [vmem:[#allocation4 + $0x3a68] sm:$0xff]
    %v2000 = vld [vmem:[#allocation4 + $0x3a70] sm:$0xff]
    %v2001 = vld [vmem:[#allocation4 + $0x3a78] sm:$0xff]
    %v2002 = vld [vmem:[#allocation4 + $0x3a80] sm:$0xff]
    %v2003 = vld [vmem:[#allocation4 + $0x3a88] sm:$0xff]
    %v2004 = vld [vmem:[#allocation4 + $0x3a90] sm:$0xff]
    %v2005 = vld [vmem:[#allocation4 + $0x3a98] sm:$0xff]
    %v2006 = vld [vmem:[#allocation4 + $0x3aa0] sm:$0xff]
    %v2007 = vld [vmem:[#allocation4 + $0x3aa8] sm:$0xff]
    %v2008 = vld [vmem:[#allocation4 + $0x3ab0] sm:$0xff]
    %v2009 = vld [vmem:[#allocation4 + $0x3ab8] sm:$0xff]
    %v2010 = vld [vmem:[#allocation4 + $0x3ac0] sm:$0xff]
    %v2011 = vld [vmem:[#allocation4 + $0x3ac8] sm:$0xff]
    %v2012 = vld [vmem:[#allocation4 + $0x3ad0] sm:$0xff]
    %v2013 = vld [vmem:[#allocation4 + $0x3ad8] sm:$0xff]
    %v2014 = vld [vmem:[#allocation4 + $0x3ae0] sm:$0xff]
    %v2015 = vld [vmem:[#allocation4 + $0x3ae8] sm:$0xff]
    %v2016 = vld [vmem:[#allocation4 + $0x3af0] sm:$0xff]
    %v2017 = vld [vmem:[#allocation4 + $0x3af8] sm:$0xff]
    %v2018 = vld [vmem:[#allocation4 + $0x3b00] sm:$0xff]
    %v2019 = vld [vmem:[#allocation4 + $0x3b08] sm:$0xff]
    %v2020 = vld [vmem:[#allocation4 + $0x3b10] sm:$0xff]
    %v2021 = vld [vmem:[#allocation4 + $0x3b18] sm:$0xff]
    %v2022 = vld [vmem:[#allocation4 + $0x3b20] sm:$0xff]
    %v2023 = vld [vmem:[#allocation4 + $0x3b28] sm:$0xff]
    %v2024 = vld [vmem:[#allocation4 + $0x3b30] sm:$0xff]
    %v2025 = vld [vmem:[#allocation4 + $0x3b38] sm:$0xff]
    %v2026 = vld [vmem:[#allocation4 + $0x3b40] sm:$0xff]
    %v2027 = vld [vmem:[#allocation4 + $0x3b48] sm:$0xff]
    %v2028 = vld [vmem:[#allocation4 + $0x3b50] sm:$0xff]
    %v2029 = vld [vmem:[#allocation4 + $0x3b58] sm:$0xff]
    %v2030 = vld [vmem:[#allocation4 + $0x3b60] sm:$0xff]
    %v2031 = vld [vmem:[#allocation4 + $0x3b68] sm:$0xff]
    %v2032 = vld [vmem:[#allocation4 + $0x3b70] sm:$0xff]
    %v2033 = vld [vmem:[#allocation4 + $0x3b78] sm:$0xff]
    %v2034 = vld [vmem:[#allocation4 + $0x3b80] sm:$0xff]
    %v2035 = vld [vmem:[#allocation4 + $0x3b88] sm:$0xff]
    %v2036 = vld [vmem:[#allocation4 + $0x3b90] sm:$0xff]
    %v2037 = vld [vmem:[#allocation4 + $0x3b98] sm:$0xff]
    %v2038 = vld [vmem:[#allocation4 + $0x3ba0] sm:$0xff]
    %v2039 = vld [vmem:[#allocation4 + $0x3ba8] sm:$0xff]
    %v2040 = vld [vmem:[#allocation4 + $0x3bb0] sm:$0xff]
    %v2041 = vld [vmem:[#allocation4 + $0x3bb8] sm:$0xff]
    %v2042 = vld [vmem:[#allocation4 + $0x3bc0] sm:$0xff]
    %v2043 = vld [vmem:[#allocation4 + $0x3bc8] sm:$0xff]
    %v2044 = vld [vmem:[#allocation4 + $0x3bd0] sm:$0xff]
    %v2045 = vld [vmem:[#allocation4 + $0x3bd8] sm:$0xff]
    %v2046 = vld [vmem:[#allocation4 + $0x3be0] sm:$0xff]
    %v2047 = vld [vmem:[#allocation4 + $0x3be8] sm:$0xff]
    %v2048 = vld [vmem:[#allocation4 + $0x3bf0] sm:$0xff]
    %v2049 = vld [vmem:[#allocation4 + $0x3bf8] sm:$0xff]
    %v2050 = vld [vmem:[#allocation4 + $0x3c00] sm:$0xff]
    %v2051 = vld [vmem:[#allocation4 + $0x3c08] sm:$0xff]
    %v2052 = vld [vmem:[#allocation4 + $0x3c10] sm:$0xff]
    %v2053 = vld [vmem:[#allocation4 + $0x3c18] sm:$0xff]
    %v2054 = vld [vmem:[#allocation4 + $0x3c20] sm:$0xff]
    %v2055 = vld [vmem:[#allocation4 + $0x3c28] sm:$0xff]
    %v2056 = vld [vmem:[#allocation4 + $0x3c30] sm:$0xff]
    %v2057 = vld [vmem:[#allocation4 + $0x3c38] sm:$0xff]
    %v2058 = vld [vmem:[#allocation4 + $0x3c40] sm:$0xff]
    %v2059 = vld [vmem:[#allocation4 + $0x3c48] sm:$0xff]
    %v2060 = vld [vmem:[#allocation4 + $0x3c50] sm:$0xff]
    %v2061 = vld [vmem:[#allocation4 + $0x3c58] sm:$0xff]
    %v2062 = vld [vmem:[#allocation4 + $0x3c60] sm:$0xff]
    %v2063 = vld [vmem:[#allocation4 + $0x3c68] sm:$0xff]
    %v2064 = vld [vmem:[#allocation4 + $0x3c70] sm:$0xff]
    %v2065 = vld [vmem:[#allocation4 + $0x3c78] sm:$0xff]
    %v2066 = vld [vmem:[#allocation4 + $0x3c80] sm:$0xff]
    %v2067 = vld [vmem:[#allocation4 + $0x3c88] sm:$0xff]
    %v2068 = vld [vmem:[#allocation4 + $0x3c90] sm:$0xff]
    %v2069 = vld [vmem:[#allocation4 + $0x3c98] sm:$0xff]
    %v2070 = vld [vmem:[#allocation4 + $0x3ca0] sm:$0xff]
    %v2071 = vld [vmem:[#allocation4 + $0x3ca8] sm:$0xff]
    %v2072 = vld [vmem:[#allocation4 + $0x3cb0] sm:$0xff]
    %v2073 = vld [vmem:[#allocation4 + $0x3cb8] sm:$0xff]
    %v2074 = vld [vmem:[#allocation4 + $0x3cc0] sm:$0xff]
    %v2075 = vld [vmem:[#allocation4 + $0x3cc8] sm:$0xff]
    %v2076 = vld [vmem:[#allocation4 + $0x3cd0] sm:$0xff]
    %v2077 = vld [vmem:[#allocation4 + $0x3cd8] sm:$0xff]
    %v2078 = vld [vmem:[#allocation4 + $0x3ce0] sm:$0xff]
    %v2079 = vld [vmem:[#allocation4 + $0x3ce8] sm:$0xff]
    %v2080 = vld [vmem:[#allocation4 + $0x3cf0] sm:$0xff]
    %v2081 = vld [vmem:[#allocation4 + $0x3cf8] sm:$0xff]
    %v2082 = vld [vmem:[#allocation4 + $0x3d00] sm:$0xff]
    %v2083 = vld [vmem:[#allocation4 + $0x3d08] sm:$0xff]
    %v2084 = vld [vmem:[#allocation4 + $0x3d10] sm:$0xff]
    %v2085 = vld [vmem:[#allocation4 + $0x3d18] sm:$0xff]
    %v2086 = vld [vmem:[#allocation4 + $0x3d20] sm:$0xff]
    %v2087 = vld [vmem:[#allocation4 + $0x3d28] sm:$0xff]
    %v2088 = vld [vmem:[#allocation4 + $0x3d30] sm:$0xff]
    %v2089 = vld [vmem:[#allocation4 + $0x3d38] sm:$0xff]
    %v2090 = vld [vmem:[#allocation4 + $0x3d40] sm:$0xff]
    %v2091 = vld [vmem:[#allocation4 + $0x3d48] sm:$0xff]
    %v2092 = vld [vmem:[#allocation4 + $0x3d50] sm:$0xff]
    %v2093 = vld [vmem:[#allocation4 + $0x3d58] sm:$0xff]
    %v2094 = vld [vmem:[#allocation4 + $0x3d60] sm:$0xff]
    %v2095 = vld [vmem:[#allocation4 + $0x3d68] sm:$0xff]
    %v2096 = vld [vmem:[#allocation4 + $0x3d70] sm:$0xff]
    %v2097 = vld [vmem:[#allocation4 + $0x3d78] sm:$0xff]
    %v2098 = vld [vmem:[#allocation4 + $0x3d80] sm:$0xff]
    %v2099 = vld [vmem:[#allocation4 + $0x3d88] sm:$0xff]
    %v2100 = vld [vmem:[#allocation4 + $0x3d90] sm:$0xff]
    %v2101 = vld [vmem:[#allocation4 + $0x3d98] sm:$0xff]
    %v2102 = vld [vmem:[#allocation4 + $0x3da0] sm:$0xff]
    %v2103 = vld [vmem:[#allocation4 + $0x3da8] sm:$0xff]
    %v2104 = vld [vmem:[#allocation4 + $0x3db0] sm:$0xff]
    %v2105 = vld [vmem:[#allocation4 + $0x3db8] sm:$0xff]
    %v2106 = vld [vmem:[#allocation4 + $0x3dc0] sm:$0xff]
    %v2107 = vld [vmem:[#allocation4 + $0x3dc8] sm:$0xff]
    %v2108 = vld [vmem:[#allocation4 + $0x3dd0] sm:$0xff]
    %v2109 = vld [vmem:[#allocation4 + $0x3dd8] sm:$0xff]
    %v2110 = vld [vmem:[#allocation4 + $0x3de0] sm:$0xff]
    %v2111 = vld [vmem:[#allocation4 + $0x3de8] sm:$0xff]
    %v2112 = vld [vmem:[#allocation4 + $0x3df0] sm:$0xff]
    %v2113 = vld [vmem:[#allocation4 + $0x3df8] sm:$0xff]
    %v2114 = vld [vmem:[#allocation4 + $0x3e00] sm:$0xff]
    %v2115 = vld [vmem:[#allocation4 + $0x3e08] sm:$0xff]
    %v2116 = vld [vmem:[#allocation4 + $0x3e10] sm:$0xff]
    %v2117 = vld [vmem:[#allocation4 + $0x3e18] sm:$0xff]
    %v2118 = vld [vmem:[#allocation4 + $0x3e20] sm:$0xff]
    %v2119 = vld [vmem:[#allocation4 + $0x3e28] sm:$0xff]
    %v2120 = vld [vmem:[#allocation4 + $0x3e30] sm:$0xff]
    %v2121 = vld [vmem:[#allocation4 + $0x3e38] sm:$0xff]
    %v2122 = vld [vmem:[#allocation4 + $0x3e40] sm:$0xff]
    %v2123 = vld [vmem:[#allocation4 + $0x3e48] sm:$0xff]
    %v2124 = vld [vmem:[#allocation4 + $0x3e50] sm:$0xff]
    %v2125 = vld [vmem:[#allocation4 + $0x3e58] sm:$0xff]
    %v2126 = vld [vmem:[#allocation4 + $0x3e60] sm:$0xff]
    %v2127 = vld [vmem:[#allocation4 + $0x3e68] sm:$0xff]
    %v2128 = vld [vmem:[#allocation4 + $0x3e70] sm:$0xff]
    %v2129 = vld [vmem:[#allocation4 + $0x3e78] sm:$0xff]
    %v2130 = vld [vmem:[#allocation4 + $0x3e80] sm:$0xff]
    %v2131 = vld [vmem:[#allocation4 + $0x3e88] sm:$0xff]
    %v2132 = vld [vmem:[#allocation4 + $0x3e90] sm:$0xff]
    %v2133 = vld [vmem:[#allocation4 + $0x3e98] sm:$0xff]
    %v2134 = vld [vmem:[#allocation4 + $0x3ea0] sm:$0xff]
    %v2135 = vld [vmem:[#allocation4 + $0x3ea8] sm:$0xff]
    %v2136 = vld [vmem:[#allocation4 + $0x3eb0] sm:$0xff]
    %v2137 = vld [vmem:[#allocation4 + $0x3eb8] sm:$0xff]
    %v2138 = vld [vmem:[#allocation4 + $0x3ec0] sm:$0xff]
    %v2139 = vld [vmem:[#allocation4 + $0x3ec8] sm:$0xff]
    %v2140 = vld [vmem:[#allocation4 + $0x3ed0] sm:$0xff]
    %v2141 = vld [vmem:[#allocation4 + $0x3ed8] sm:$0xff]
    %v2142 = vld [vmem:[#allocation4 + $0x3ee0] sm:$0xff]
    %v2143 = vld [vmem:[#allocation4 + $0x3ee8] sm:$0xff]
    %v2144 = vld [vmem:[#allocation4 + $0x3ef0] sm:$0xff]
    %v2145 = vld [vmem:[#allocation4 + $0x3ef8] sm:$0xff]
    %v2146 = vld [vmem:[#allocation4 + $0x3f00] sm:$0xff]
    %v2147 = vld [vmem:[#allocation4 + $0x3f08] sm:$0xff]
    %v2148 = vld [vmem:[#allocation4 + $0x3f10] sm:$0xff]
    %v2149 = vld [vmem:[#allocation4 + $0x3f18] sm:$0xff]
    %v2150 = vld [vmem:[#allocation4 + $0x3f20] sm:$0xff]
    %v2151 = vld [vmem:[#allocation4 + $0x3f28] sm:$0xff]
    %v2152 = vld [vmem:[#allocation4 + $0x3f30] sm:$0xff]
    %v2153 = vld [vmem:[#allocation4 + $0x3f38] sm:$0xff]
    %v2154 = vld [vmem:[#allocation4 + $0x3f40] sm:$0xff]
    %v2155 = vld [vmem:[#allocation4 + $0x3f48] sm:$0xff]
    %v2156 = vld [vmem:[#allocation4 + $0x3f50] sm:$0xff]
    %v2157 = vld [vmem:[#allocation4 + $0x3f58] sm:$0xff]
    %v2158 = vld [vmem:[#allocation4 + $0x3f60] sm:$0xff]
    %v2159 = vld [vmem:[#allocation4 + $0x3f68] sm:$0xff]
    %v2160 = vld [vmem:[#allocation4 + $0x3f70] sm:$0xff]
    %v2161 = vld [vmem:[#allocation4 + $0x3f78] sm:$0xff]
    %v2162 = vld [vmem:[#allocation4 + $0x3f80] sm:$0xff]
    %v2163 = vld [vmem:[#allocation4 + $0x3f88] sm:$0xff]
    %v2164 = vld [vmem:[#allocation4 + $0x3f90] sm:$0xff]
    %v2165 = vld [vmem:[#allocation4 + $0x3f98] sm:$0xff]
    %v2166 = vld [vmem:[#allocation4 + $0x3fa0] sm:$0xff]
    %v2167 = vld [vmem:[#allocation4 + $0x3fa8] sm:$0xff]
    %v2168 = vld [vmem:[#allocation4 + $0x3fb0] sm:$0xff]
    %v2169 = vld [vmem:[#allocation4 + $0x3fb8] sm:$0xff]
    %v2170 = vld [vmem:[#allocation4 + $0x3fc0] sm:$0xff]
    %v2171 = vld [vmem:[#allocation4 + $0x3fc8] sm:$0xff]
    %v2172 = vld [vmem:[#allocation4 + $0x3fd0] sm:$0xff]
    %v2173 = vld [vmem:[#allocation4 + $0x3fd8] sm:$0xff]
    %v2174 = vld [vmem:[#allocation4 + $0x3fe0] sm:$0xff]
    %v2175 = vld [vmem:[#allocation4 + $0x3fe8] sm:$0xff]
    %v2176 = vld [vmem:[#allocation4 + $0x3ff0] sm:$0xff]
    %v2177 = vld [vmem:[#allocation4 + $0x3ff8] sm:$0xff]
    %v2178 = vld [vmem:[#allocation4 + $0x4000] sm:$0xff]
    %v2179 = vld [vmem:[#allocation4 + $0x4008] sm:$0xff]
    %v2180 = vld [vmem:[#allocation4 + $0x4010] sm:$0xff]
    %v2181 = vld [vmem:[#allocation4 + $0x4018] sm:$0xff]
    %v2182 = vld [vmem:[#allocation4 + $0x4020] sm:$0xff]
    %v2183 = vld [vmem:[#allocation4 + $0x4028] sm:$0xff]
    %v2184 = vld [vmem:[#allocation4 + $0x4030] sm:$0xff]
    %v2185 = vld [vmem:[#allocation4 + $0x4038] sm:$0xff]
    %v2186 = vld [vmem:[#allocation4 + $0x4040] sm:$0xff]
    %v2187 = vld [vmem:[#allocation4 + $0x4048] sm:$0xff]
    %v2188 = vld [vmem:[#allocation4 + $0x4050] sm:$0xff]
    %v2189 = vld [vmem:[#allocation4 + $0x4058] sm:$0xff]
    %v2190 = vld [vmem:[#allocation4 + $0x4060] sm:$0xff]
    %v2191 = vld [vmem:[#allocation4 + $0x4068] sm:$0xff]
    %v2192 = vld [vmem:[#allocation4 + $0x4070] sm:$0xff]
    %v2193 = vld [vmem:[#allocation4 + $0x4078] sm:$0xff]
    %v2194 = vld [vmem:[#allocation4 + $0x4080] sm:$0xff]
    %v2195 = vld [vmem:[#allocation4 + $0x4088] sm:$0xff]
    %v2196 = vld [vmem:[#allocation4 + $0x4090] sm:$0xff]
    %v2197 = vld [vmem:[#allocation4 + $0x4098] sm:$0xff]
    %v2198 = vld [vmem:[#allocation4 + $0x40a0] sm:$0xff]
    %v2199 = vld [vmem:[#allocation4 + $0x40a8] sm:$0xff]
    %v2200 = vld [vmem:[#allocation4 + $0x40b0] sm:$0xff]
    %v2201 = vld [vmem:[#allocation4 + $0x40b8] sm:$0xff]
    %v2202 = vld [vmem:[#allocation4 + $0x40c0] sm:$0xff]
    %v2203 = vld [vmem:[#allocation4 + $0x40c8] sm:$0xff]
    %v2204 = vld [vmem:[#allocation4 + $0x40d0] sm:$0xff]
    %v2205 = vld [vmem:[#allocation4 + $0x40d8] sm:$0xff]
    %v2206 = vld [vmem:[#allocation4 + $0x40e0] sm:$0xff]
    %v2207 = vld [vmem:[#allocation4 + $0x40e8] sm:$0xff]
    %v2208 = vld [vmem:[#allocation4 + $0x40f0] sm:$0xff]
    %v2209 = vld [vmem:[#allocation4 + $0x40f8] sm:$0xff]
    %v2210 = vld [vmem:[#allocation4 + $0x4100] sm:$0xff]
    %v2211 = vld [vmem:[#allocation4 + $0x4108] sm:$0xff]
    %v2212 = vld [vmem:[#allocation4 + $0x4110] sm:$0xff]
    %v2213 = vld [vmem:[#allocation4 + $0x4118] sm:$0xff]
    %v2214 = vld [vmem:[#allocation4 + $0x4120] sm:$0xff]
    %v2215 = vld [vmem:[#allocation4 + $0x4128] sm:$0xff]
    %v2216 = vld [vmem:[#allocation4 + $0x4130] sm:$0xff]
    %v2217 = vld [vmem:[#allocation4 + $0x4138] sm:$0xff]
    %v2218 = vld [vmem:[#allocation4 + $0x4140] sm:$0xff]
    %v2219 = vld [vmem:[#allocation4 + $0x4148] sm:$0xff]
    %v2220 = vld [vmem:[#allocation4 + $0x4150] sm:$0xff]
    %v2221 = vld [vmem:[#allocation4 + $0x4158] sm:$0xff]
    %v2222 = vld [vmem:[#allocation4 + $0x4160] sm:$0xff]
    %v2223 = vld [vmem:[#allocation4 + $0x4168] sm:$0xff]
    %v2224 = vld [vmem:[#allocation4 + $0x4170] sm:$0xff]
    %v2225 = vld [vmem:[#allocation4 + $0x4178] sm:$0xff]
    %v2226 = vld [vmem:[#allocation4 + $0x4180] sm:$0xff]
    %v2227 = vld [vmem:[#allocation4 + $0x4188] sm:$0xff]
    %v2228 = vld [vmem:[#allocation4 + $0x4190] sm:$0xff]
    %v2229 = vld [vmem:[#allocation4 + $0x4198] sm:$0xff]
    %v2230 = vld [vmem:[#allocation4 + $0x41a0] sm:$0xff]
    %v2231 = vld [vmem:[#allocation4 + $0x41a8] sm:$0xff]
    %v2232 = vld [vmem:[#allocation4 + $0x41b0] sm:$0xff]
    %v2233 = vld [vmem:[#allocation4 + $0x41b8] sm:$0xff]
    %v2234 = vld [vmem:[#allocation4 + $0x41c0] sm:$0xff]
    %v2235 = vld [vmem:[#allocation4 + $0x41c8] sm:$0xff]
    %v2236 = vld [vmem:[#allocation4 + $0x41d0] sm:$0xff]
    %v2237 = vld [vmem:[#allocation4 + $0x41d8] sm:$0xff]
    %v2238 = vld [vmem:[#allocation4 + $0x41e0] sm:$0xff]
    %v2239 = vld [vmem:[#allocation4 + $0x41e8] sm:$0xff]
    %v2240 = vld [vmem:[#allocation4 + $0x41f0] sm:$0xff]
    %v2241 = vld [vmem:[#allocation4 + $0x41f8] sm:$0xff]
    %v2242 = vld [vmem:[#allocation4 + $0x4200] sm:$0xff]
    %v2243 = vld [vmem:[#allocation4 + $0x4208] sm:$0xff]
    %v2244 = vld [vmem:[#allocation4 + $0x4210] sm:$0xff]
    %v2245 = vld [vmem:[#allocation4 + $0x4218] sm:$0xff]
    %v2246 = vld [vmem:[#allocation4 + $0x4220] sm:$0xff]
    %v2247 = vld [vmem:[#allocation4 + $0x4228] sm:$0xff]
    %v2248 = vld [vmem:[#allocation4 + $0x4230] sm:$0xff]
    %v2249 = vld [vmem:[#allocation4 + $0x4238] sm:$0xff]
    %v2250 = vld [vmem:[#allocation4 + $0x4240] sm:$0xff]
    %v2251 = vld [vmem:[#allocation4 + $0x4248] sm:$0xff]
    %v2252 = vld [vmem:[#allocation4 + $0x4250] sm:$0xff]
    %v2253 = vld [vmem:[#allocation4 + $0x4258] sm:$0xff]
    %v2254 = vld [vmem:[#allocation4 + $0x4260] sm:$0xff]
    %v2255 = vld [vmem:[#allocation4 + $0x4268] sm:$0xff]
    %v2256 = vld [vmem:[#allocation4 + $0x4270] sm:$0xff]
    %v2257 = vld [vmem:[#allocation4 + $0x4278] sm:$0xff]
    %v2258 = vld [vmem:[#allocation4 + $0x4280] sm:$0xff]
    %v2259 = vld [vmem:[#allocation4 + $0x4288] sm:$0xff]
    %v2260 = vld [vmem:[#allocation4 + $0x4290] sm:$0xff]
    %v2261 = vld [vmem:[#allocation4 + $0x4298] sm:$0xff]
    %v2262 = vld [vmem:[#allocation4 + $0x42a0] sm:$0xff]
    %v2263 = vld [vmem:[#allocation4 + $0x42a8] sm:$0xff]
    %v2264 = vld [vmem:[#allocation4 + $0x42b0] sm:$0xff]
    %v2265 = vld [vmem:[#allocation4 + $0x42b8] sm:$0xff]
    %v2266 = vld [vmem:[#allocation4 + $0x42c0] sm:$0xff]
    %v2267 = vld [vmem:[#allocation4 + $0x42c8] sm:$0xff]
    %v2268 = vld [vmem:[#allocation4 + $0x42d0] sm:$0xff]
    %v2269 = vld [vmem:[#allocation4 + $0x42d8] sm:$0xff]
    %v2270 = vld [vmem:[#allocation4 + $0x42e0] sm:$0xff]
    %v2271 = vld [vmem:[#allocation4 + $0x42e8] sm:$0xff]
    %v2272 = vld [vmem:[#allocation4 + $0x42f0] sm:$0xff]
    %v2273 = vld [vmem:[#allocation4 + $0x42f8] sm:$0xff]
    %v2274 = vld [vmem:[#allocation4 + $0x4300] sm:$0xff]
    %v2275 = vld [vmem:[#allocation4 + $0x4308] sm:$0xff]
    %v2276 = vld [vmem:[#allocation4 + $0x4310] sm:$0xff]
    %v2277 = vld [vmem:[#allocation4 + $0x4318] sm:$0xff]
    %v2278 = vld [vmem:[#allocation4 + $0x4320] sm:$0xff]
    %v2279 = vld [vmem:[#allocation4 + $0x4328] sm:$0xff]
    %v2280 = vld [vmem:[#allocation4 + $0x4330] sm:$0xff]
    %v2281 = vld [vmem:[#allocation4 + $0x4338] sm:$0xff]
    %v2282 = vld [vmem:[#allocation4 + $0x4340] sm:$0xff]
    %v2283 = vld [vmem:[#allocation4 + $0x4348] sm:$0xff]
    %v2284 = vld [vmem:[#allocation4 + $0x4350] sm:$0xff]
    %v2285 = vld [vmem:[#allocation4 + $0x4358] sm:$0xff]
    %v2286 = vld [vmem:[#allocation4 + $0x4360] sm:$0xff]
    %v2287 = vld [vmem:[#allocation4 + $0x4368] sm:$0xff]
    %v2288 = vld [vmem:[#allocation4 + $0x4370] sm:$0xff]
    %v2289 = vld [vmem:[#allocation4 + $0x4378] sm:$0xff]
    %v2290 = vld [vmem:[#allocation4 + $0x4380] sm:$0xff]
    %v2291 = vld [vmem:[#allocation4 + $0x4388] sm:$0xff]
    %v2292 = vld [vmem:[#allocation4 + $0x4390] sm:$0xff]
    %v2293 = vld [vmem:[#allocation4 + $0x4398] sm:$0xff]
    %v2294 = vld [vmem:[#allocation4 + $0x43a0] sm:$0xff]
    %v2295 = vld [vmem:[#allocation4 + $0x43a8] sm:$0xff]
    %v2296 = vld [vmem:[#allocation4 + $0x43b0] sm:$0xff]
    %v2297 = vld [vmem:[#allocation4 + $0x43b8] sm:$0xff]
    %v2298 = vld [vmem:[#allocation4 + $0x43c0] sm:$0xff]
    %v2299 = vld [vmem:[#allocation4 + $0x43c8] sm:$0xff]
    %v2300 = vld [vmem:[#allocation4 + $0x43d0] sm:$0xff]
    %v2301 = vld [vmem:[#allocation4 + $0x43d8] sm:$0xff]
    %v2302 = vld [vmem:[#allocation4 + $0x43e0] sm:$0xff]
    %v2303 = vld [vmem:[#allocation4 + $0x43e8] sm:$0xff]
    %v2304 = vld [vmem:[#allocation4 + $0x43f0] sm:$0xff]
    %v2305 = vld [vmem:[#allocation4 + $0x43f8] sm:$0xff]
    %v2306 = vld [vmem:[#allocation4 + $0x4400] sm:$0xff]
    %v2307 = vld [vmem:[#allocation4 + $0x4408] sm:$0xff]
    %v2308 = vld [vmem:[#allocation4 + $0x4410] sm:$0xff]
    %v2309 = vld [vmem:[#allocation4 + $0x4418] sm:$0xff]
    %v2310 = vld [vmem:[#allocation4 + $0x4420] sm:$0xff]
    %v2311 = vld [vmem:[#allocation4 + $0x4428] sm:$0xff]
    %v2312 = vld [vmem:[#allocation4 + $0x4430] sm:$0xff]
    %v2313 = vld [vmem:[#allocation4 + $0x4438] sm:$0xff]
    %v2314 = vld [vmem:[#allocation4 + $0x4440] sm:$0xff]
    %v2315 = vld [vmem:[#allocation4 + $0x4448] sm:$0xff]
    %v2316 = vld [vmem:[#allocation4 + $0x4450] sm:$0xff]
    %v2317 = vld [vmem:[#allocation4 + $0x4458] sm:$0xff]
    %v2318 = vld [vmem:[#allocation4 + $0x4460] sm:$0xff]
    %v2319 = vld [vmem:[#allocation4 + $0x4468] sm:$0xff]
    %v2320 = vld [vmem:[#allocation4 + $0x4470] sm:$0xff]
    %v2321 = vld [vmem:[#allocation4 + $0x4478] sm:$0xff]
    %v2322 = vld [vmem:[#allocation4 + $0x4480] sm:$0xff]
    %v2323 = vld [vmem:[#allocation4 + $0x4488] sm:$0xff]
    %v2324 = vld [vmem:[#allocation4 + $0x4490] sm:$0xff]
    %v2325 = vld [vmem:[#allocation4 + $0x4498] sm:$0xff]
    %v2326 = vld [vmem:[#allocation4 + $0x44a0] sm:$0xff]
    %v2327 = vld [vmem:[#allocation4 + $0x44a8] sm:$0xff]
    %v2328 = vld [vmem:[#allocation4 + $0x44b0] sm:$0xff]
    %v2329 = vld [vmem:[#allocation4 + $0x44b8] sm:$0xff]
    %v2330 = vld [vmem:[#allocation4 + $0x44c0] sm:$0xff]
    %v2331 = vld [vmem:[#allocation4 + $0x44c8] sm:$0xff]
    %v2332 = vld [vmem:[#allocation4 + $0x44d0] sm:$0xff]
    %v2333 = vld [vmem:[#allocation4 + $0x44d8] sm:$0xff]
    %v2334 = vld [vmem:[#allocation4 + $0x44e0] sm:$0xff]
    %v2335 = vld [vmem:[#allocation4 + $0x44e8] sm:$0xff]
    %v2336 = vld [vmem:[#allocation4 + $0x44f0] sm:$0xff]
    %v2337 = vld [vmem:[#allocation4 + $0x44f8] sm:$0xff]
    %v2338 = vld [vmem:[#allocation4 + $0x4500] sm:$0xff]
    %v2339 = vld [vmem:[#allocation4 + $0x4508] sm:$0xff]
    %v2340 = vld [vmem:[#allocation4 + $0x4510] sm:$0xff]
    %v2341 = vld [vmem:[#allocation4 + $0x4518] sm:$0xff]
    %v2342 = vld [vmem:[#allocation4 + $0x4520] sm:$0xff]
    %v2343 = vld [vmem:[#allocation4 + $0x4528] sm:$0xff]
    %v2344 = vld [vmem:[#allocation4 + $0x4530] sm:$0xff]
    %v2345 = vld [vmem:[#allocation4 + $0x4538] sm:$0xff]
    %v2346 = vld [vmem:[#allocation4 + $0x4540] sm:$0xff]
    %v2347 = vld [vmem:[#allocation4 + $0x4548] sm:$0xff]
    %v2348 = vld [vmem:[#allocation4 + $0x4550] sm:$0xff]
    %v2349 = vld [vmem:[#allocation4 + $0x4558] sm:$0xff]
    %v2350 = vld [vmem:[#allocation4 + $0x4560] sm:$0xff]
    %v2351 = vld [vmem:[#allocation4 + $0x4568] sm:$0xff]
    %v2352 = vld [vmem:[#allocation4 + $0x4570] sm:$0xff]
    %v2353 = vld [vmem:[#allocation4 + $0x4578] sm:$0xff]
    %v2354 = vld [vmem:[#allocation4 + $0x4580] sm:$0xff]
    %v2355 = vld [vmem:[#allocation4 + $0x4588] sm:$0xff]
    %v2356 = vld [vmem:[#allocation4 + $0x4590] sm:$0xff]
    %v2357 = vld [vmem:[#allocation4 + $0x4598] sm:$0xff]
    %v2358 = vld [vmem:[#allocation4 + $0x45a0] sm:$0xff]
    %v2359 = vld [vmem:[#allocation4 + $0x45a8] sm:$0xff]
    %v2360 = vld [vmem:[#allocation4 + $0x45b0] sm:$0xff]
    %v2361 = vld [vmem:[#allocation4 + $0x45b8] sm:$0xff]
    %v2362 = vld [vmem:[#allocation4 + $0x45c0] sm:$0xff]
    %v2363 = vld [vmem:[#allocation4 + $0x45c8] sm:$0xff]
    %v2364 = vld [vmem:[#allocation4 + $0x45d0] sm:$0xff]
    %v2365 = vld [vmem:[#allocation4 + $0x45d8] sm:$0xff]
    %v2366 = vld [vmem:[#allocation4 + $0x45e0] sm:$0xff]
    %v2367 = vld [vmem:[#allocation4 + $0x45e8] sm:$0xff]
    %v2368 = vld [vmem:[#allocation4 + $0x45f0] sm:$0xff]
    %v2369 = vld [vmem:[#allocation4 + $0x45f8] sm:$0xff]
    %v2370 = vld [vmem:[#allocation4 + $0x4600] sm:$0xff]
    %v2371 = vld [vmem:[#allocation4 + $0x4608] sm:$0xff]
    %v2372 = vld [vmem:[#allocation4 + $0x4610] sm:$0xff]
    %v2373 = vld [vmem:[#allocation4 + $0x4618] sm:$0xff]
    %v2374 = vld [vmem:[#allocation4 + $0x4620] sm:$0xff]
    %v2375 = vld [vmem:[#allocation4 + $0x4628] sm:$0xff]
    %v2376 = vld [vmem:[#allocation4 + $0x4630] sm:$0xff]
    %v2377 = vld [vmem:[#allocation4 + $0x4638] sm:$0xff]
    %v2378 = vld [vmem:[#allocation4 + $0x4640] sm:$0xff]
    %v2379 = vld [vmem:[#allocation4 + $0x4648] sm:$0xff]
    %v2380 = vld [vmem:[#allocation4 + $0x4650] sm:$0xff]
    %v2381 = vld [vmem:[#allocation4 + $0x4658] sm:$0xff]
    %v2382 = vld [vmem:[#allocation4 + $0x4660] sm:$0xff]
    %v2383 = vld [vmem:[#allocation4 + $0x4668] sm:$0xff]
    %v2384 = vld [vmem:[#allocation4 + $0x4670] sm:$0xff]
    %v2385 = vld [vmem:[#allocation4 + $0x4678] sm:$0xff]
    %v2386 = vld [vmem:[#allocation4 + $0x4680] sm:$0xff]
    %v2387 = vld [vmem:[#allocation4 + $0x4688] sm:$0xff]
    %v2388 = vld [vmem:[#allocation4 + $0x4690] sm:$0xff]
    %v2389 = vld [vmem:[#allocation4 + $0x4698] sm:$0xff]
    %v2390 = vld [vmem:[#allocation4 + $0x46a0] sm:$0xff]
    %v2391 = vld [vmem:[#allocation4 + $0x46a8] sm:$0xff]
    %v2392 = vld [vmem:[#allocation4 + $0x46b0] sm:$0xff]
    %v2393 = vld [vmem:[#allocation4 + $0x46b8] sm:$0xff]
    %v2394 = vld [vmem:[#allocation4 + $0x46c0] sm:$0xff]
    %v2395 = vld [vmem:[#allocation4 + $0x46c8] sm:$0xff]
    %v2396 = vld [vmem:[#allocation4 + $0x46d0] sm:$0xff]
    %v2397 = vld [vmem:[#allocation4 + $0x46d8] sm:$0xff]
    %v2398 = vld [vmem:[#allocation4 + $0x46e0] sm:$0xff]
    %v2399 = vld [vmem:[#allocation4 + $0x46e8] sm:$0xff]
    %v2400 = vld [vmem:[#allocation4 + $0x46f0] sm:$0xff]
    %v2401 = vld [vmem:[#allocation4 + $0x46f8] sm:$0xff]
    %v2402 = vld [vmem:[#allocation4 + $0x4700] sm:$0xff]
    %v2403 = vld [vmem:[#allocation4 + $0x4708] sm:$0xff]
    %v2404 = vld [vmem:[#allocation4 + $0x4710] sm:$0xff]
    %v2405 = vld [vmem:[#allocation4 + $0x4718] sm:$0xff]
    %v2406 = vld [vmem:[#allocation4 + $0x4720] sm:$0xff]
    %v2407 = vld [vmem:[#allocation4 + $0x4728] sm:$0xff]
    %v2408 = vld [vmem:[#allocation4 + $0x4730] sm:$0xff]
    %v2409 = vld [vmem:[#allocation4 + $0x4738] sm:$0xff]
    %v2410 = vld [vmem:[#allocation4 + $0x4740] sm:$0xff]
    %v2411 = vld [vmem:[#allocation4 + $0x4748] sm:$0xff]
    %v2412 = vld [vmem:[#allocation4 + $0x4750] sm:$0xff]
    %v2413 = vld [vmem:[#allocation4 + $0x4758] sm:$0xff]
    %v2414 = vld [vmem:[#allocation4 + $0x4760] sm:$0xff]
    %v2415 = vld [vmem:[#allocation4 + $0x4768] sm:$0xff]
    %v2416 = vld [vmem:[#allocation4 + $0x4770] sm:$0xff]
    %v2417 = vld [vmem:[#allocation4 + $0x4778] sm:$0xff]
    %v2418 = vld [vmem:[#allocation4 + $0x4780] sm:$0xff]
    %v2419 = vld [vmem:[#allocation4 + $0x4788] sm:$0xff]
    %v2420 = vld [vmem:[#allocation4 + $0x4790] sm:$0xff]
    %v2421 = vld [vmem:[#allocation4 + $0x4798] sm:$0xff]
    %v2422 = vld [vmem:[#allocation4 + $0x47a0] sm:$0xff]
    %v2423 = vld [vmem:[#allocation4 + $0x47a8] sm:$0xff]
    %v2424 = vld [vmem:[#allocation4 + $0x47b0] sm:$0xff]
    %v2425 = vld [vmem:[#allocation4 + $0x47b8] sm:$0xff]
    %v2426 = vld [vmem:[#allocation4 + $0x47c0] sm:$0xff]
    %v2427 = vld [vmem:[#allocation4 + $0x47c8] sm:$0xff]
    %v2428 = vld [vmem:[#allocation4 + $0x47d0] sm:$0xff]
    %v2429 = vld [vmem:[#allocation4 + $0x47d8] sm:$0xff]
    %v2430 = vld [vmem:[#allocation4 + $0x47e0] sm:$0xff]
    %v2431 = vld [vmem:[#allocation4 + $0x47e8] sm:$0xff]
    %v2432 = vld [vmem:[#allocation4 + $0x47f0] sm:$0xff]
    %v2433 = vld [vmem:[#allocation4 + $0x47f8] sm:$0xff]
    %v2434 = vld [vmem:[#allocation4 + $0x4800] sm:$0xff]
    %v2435 = vld [vmem:[#allocation4 + $0x4808] sm:$0xff]
    %v2436 = vld [vmem:[#allocation4 + $0x4810] sm:$0xff]
    %v2437 = vld [vmem:[#allocation4 + $0x4818] sm:$0xff]
    %v2438 = vld [vmem:[#allocation4 + $0x4820] sm:$0xff]
    %v2439 = vld [vmem:[#allocation4 + $0x4828] sm:$0xff]
    %v2440 = vld [vmem:[#allocation4 + $0x4830] sm:$0xff]
    %v2441 = vld [vmem:[#allocation4 + $0x4838] sm:$0xff]
    %v2442 = vld [vmem:[#allocation4 + $0x4840] sm:$0xff]
    %v2443 = vld [vmem:[#allocation4 + $0x4848] sm:$0xff]
    %v2444 = vld [vmem:[#allocation4 + $0x4850] sm:$0xff]
    %v2445 = vld [vmem:[#allocation4 + $0x4858] sm:$0xff]
    %v2446 = vld [vmem:[#allocation4 + $0x4860] sm:$0xff]
    %v2447 = vld [vmem:[#allocation4 + $0x4868] sm:$0xff]
    %v2448 = vld [vmem:[#allocation4 + $0x4870] sm:$0xff]
    %v2449 = vld [vmem:[#allocation4 + $0x4878] sm:$0xff]
    %v2450 = vld [vmem:[#allocation4 + $0x4880] sm:$0xff]
    %v2451 = vld [vmem:[#allocation4 + $0x4888] sm:$0xff]
    %v2452 = vld [vmem:[#allocation4 + $0x4890] sm:$0xff]
    %v2453 = vld [vmem:[#allocation4 + $0x4898] sm:$0xff]
    %v2454 = vld [vmem:[#allocation4 + $0x48a0] sm:$0xff]
    %v2455 = vld [vmem:[#allocation4 + $0x48a8] sm:$0xff]
    %v2456 = vld [vmem:[#allocation4 + $0x48b0] sm:$0xff]
    %v2457 = vld [vmem:[#allocation4 + $0x48b8] sm:$0xff]
    %v2458 = vld [vmem:[#allocation4 + $0x48c0] sm:$0xff]
    %v2459 = vld [vmem:[#allocation4 + $0x48c8] sm:$0xff]
    %v2460 = vld [vmem:[#allocation4 + $0x48d0] sm:$0xff]
    %v2461 = vld [vmem:[#allocation4 + $0x48d8] sm:$0xff]
    %v2462 = vld [vmem:[#allocation4 + $0x48e0] sm:$0xff]
    %v2463 = vld [vmem:[#allocation4 + $0x48e8] sm:$0xff]
    %v2464 = vld [vmem:[#allocation4 + $0x48f0] sm:$0xff]
    %v2465 = vld [vmem:[#allocation4 + $0x48f8] sm:$0xff]
    %v2466 = vld [vmem:[#allocation4 + $0x4900] sm:$0xff]
    %v2467 = vld [vmem:[#allocation4 + $0x4908] sm:$0xff]
    %v2468 = vld [vmem:[#allocation4 + $0x4910] sm:$0xff]
    %v2469 = vld [vmem:[#allocation4 + $0x4918] sm:$0xff]
    %v2470 = vld [vmem:[#allocation4 + $0x4920] sm:$0xff]
    %v2471 = vld [vmem:[#allocation4 + $0x4928] sm:$0xff]
    %v2472 = vld [vmem:[#allocation4 + $0x4930] sm:$0xff]
    %v2473 = vld [vmem:[#allocation4 + $0x4938] sm:$0xff]
    %v2474 = vld [vmem:[#allocation4 + $0x4940] sm:$0xff]
    %v2475 = vld [vmem:[#allocation4 + $0x4948] sm:$0xff]
    %v2476 = vld [vmem:[#allocation4 + $0x4950] sm:$0xff]
    %v2477 = vld [vmem:[#allocation4 + $0x4958] sm:$0xff]
    %v2478 = vld [vmem:[#allocation4 + $0x4960] sm:$0xff]
    %v2479 = vld [vmem:[#allocation4 + $0x4968] sm:$0xff]
    %v2480 = vld [vmem:[#allocation4 + $0x4970] sm:$0xff]
    %v2481 = vld [vmem:[#allocation4 + $0x4978] sm:$0xff]
    %v2482 = vld [vmem:[#allocation4 + $0x4980] sm:$0xff]
    %v2483 = vld [vmem:[#allocation4 + $0x4988] sm:$0xff]
    %v2484 = vld [vmem:[#allocation4 + $0x4990] sm:$0xff]
    %v2485 = vld [vmem:[#allocation4 + $0x4998] sm:$0xff]
    %v2486 = vld [vmem:[#allocation4 + $0x49a0] sm:$0xff]
    %v2487 = vld [vmem:[#allocation4 + $0x49a8] sm:$0xff]
    %v2488 = vld [vmem:[#allocation4 + $0x49b0] sm:$0xff]
    %v2489 = vld [vmem:[#allocation4 + $0x49b8] sm:$0xff]
    %v2490 = vld [vmem:[#allocation4 + $0x49c0] sm:$0xff]
    %v2491 = vld [vmem:[#allocation4 + $0x49c8] sm:$0xff]
    %v2492 = vld [vmem:[#allocation4 + $0x49d0] sm:$0xff]
    %v2493 = vld [vmem:[#allocation4 + $0x49d8] sm:$0xff]
    %v2494 = vld [vmem:[#allocation4 + $0x49e0] sm:$0xff]
    %v2495 = vld [vmem:[#allocation4 + $0x49e8] sm:$0xff]
    %v2496 = vld [vmem:[#allocation4 + $0x49f0] sm:$0xff]
    %v2497 = vld [vmem:[#allocation4 + $0x49f8] sm:$0xff]
    %v2498 = vld [vmem:[#allocation4 + $0x4a00] sm:$0xff]
    %v2499 = vld [vmem:[#allocation4 + $0x4a08] sm:$0xff]
    %v2500 = vld [vmem:[#allocation4 + $0x4a10] sm:$0xff]
    %v2501 = vld [vmem:[#allocation4 + $0x4a18] sm:$0xff]
    %v2502 = vld [vmem:[#allocation4 + $0x4a20] sm:$0xff]
    %v2503 = vld [vmem:[#allocation4 + $0x4a28] sm:$0xff]
    %v2504 = vld [vmem:[#allocation4 + $0x4a30] sm:$0xff]
    %v2505 = vld [vmem:[#allocation4 + $0x4a38] sm:$0xff]
    %v2506 = vld [vmem:[#allocation4 + $0x4a40] sm:$0xff]
    %v2507 = vld [vmem:[#allocation4 + $0x4a48] sm:$0xff]
    %v2508 = vld [vmem:[#allocation4 + $0x4a50] sm:$0xff]
    %v2509 = vld [vmem:[#allocation4 + $0x4a58] sm:$0xff]
    %v2510 = vld [vmem:[#allocation4 + $0x4a60] sm:$0xff]
    %v2511 = vld [vmem:[#allocation4 + $0x4a68] sm:$0xff]
    %v2512 = vld [vmem:[#allocation4 + $0x4a70] sm:$0xff]
    %v2513 = vld [vmem:[#allocation4 + $0x4a78] sm:$0xff]
    %v2514 = vld [vmem:[#allocation4 + $0x4a80] sm:$0xff]
    %v2515 = vld [vmem:[#allocation4 + $0x4a88] sm:$0xff]
    %v2516 = vld [vmem:[#allocation4 + $0x4a90] sm:$0xff]
    %v2517 = vld [vmem:[#allocation4 + $0x4a98] sm:$0xff]
    %v2518 = vld [vmem:[#allocation4 + $0x4aa0] sm:$0xff]
    %v2519 = vld [vmem:[#allocation4 + $0x4aa8] sm:$0xff]
    %v2520 = vld [vmem:[#allocation4 + $0x4ab0] sm:$0xff]
    %v2521 = vld [vmem:[#allocation4 + $0x4ab8] sm:$0xff]
    %v2522 = vld [vmem:[#allocation4 + $0x4ac0] sm:$0xff]
    %v2523 = vld [vmem:[#allocation4 + $0x4ac8] sm:$0xff]
    %v2524 = vld [vmem:[#allocation4 + $0x4ad0] sm:$0xff]
    %v2525 = vld [vmem:[#allocation4 + $0x4ad8] sm:$0xff]
    %v2526 = vld [vmem:[#allocation4 + $0x4ae0] sm:$0xff]
    %v2527 = vld [vmem:[#allocation4 + $0x4ae8] sm:$0xff]
    %v2528 = vld [vmem:[#allocation4 + $0x4af0] sm:$0xff]
    %v2529 = vld [vmem:[#allocation4 + $0x4af8] sm:$0xff]
    %v2530 = vld [vmem:[#allocation4 + $0x4b00] sm:$0xff]
    %v2531 = vld [vmem:[#allocation4 + $0x4b08] sm:$0xff]
    %v2532 = vld [vmem:[#allocation4 + $0x4b10] sm:$0xff]
    %v2533 = vld [vmem:[#allocation4 + $0x4b18] sm:$0xff]
    %v2534 = vld [vmem:[#allocation4 + $0x4b20] sm:$0xff]
    %v2535 = vld [vmem:[#allocation4 + $0x4b28] sm:$0xff]
    %v2536 = vld [vmem:[#allocation4 + $0x4b30] sm:$0xff]
    %v2537 = vld [vmem:[#allocation4 + $0x4b38] sm:$0xff]
    %v2538 = vld [vmem:[#allocation4 + $0x4b40] sm:$0xff]
    %v2539 = vld [vmem:[#allocation4 + $0x4b48] sm:$0xff]
    %v2540 = vld [vmem:[#allocation4 + $0x4b50] sm:$0xff]
    %v2541 = vld [vmem:[#allocation4 + $0x4b58] sm:$0xff]
    %v2542 = vld [vmem:[#allocation4 + $0x4b60] sm:$0xff]
    %v2543 = vld [vmem:[#allocation4 + $0x4b68] sm:$0xff]
    %v2544 = vld [vmem:[#allocation4 + $0x4b70] sm:$0xff]
    %v2545 = vld [vmem:[#allocation4 + $0x4b78] sm:$0xff]
    %v2546 = vld [vmem:[#allocation4 + $0x4b80] sm:$0xff]
    %v2547 = vld [vmem:[#allocation4 + $0x4b88] sm:$0xff]
    %v2548 = vld [vmem:[#allocation4 + $0x4b90] sm:$0xff]
    %v2549 = vld [vmem:[#allocation4 + $0x4b98] sm:$0xff]
    %v2550 = vld [vmem:[#allocation4 + $0x4ba0] sm:$0xff]
    %v2551 = vld [vmem:[#allocation4 + $0x4ba8] sm:$0xff]
    %v2552 = vld [vmem:[#allocation4 + $0x4bb0] sm:$0xff]
    %v2553 = vld [vmem:[#allocation4 + $0x4bb8] sm:$0xff]
    %v2554 = vld [vmem:[#allocation4 + $0x4bc0] sm:$0xff]
    %v2555 = vld [vmem:[#allocation4 + $0x4bc8] sm:$0xff]
    %v2556 = vld [vmem:[#allocation4 + $0x4bd0] sm:$0xff]
    %v2557 = vld [vmem:[#allocation4 + $0x4bd8] sm:$0xff]
    %v2558 = vld [vmem:[#allocation4 + $0x4be0] sm:$0xff]
    %v2559 = vld [vmem:[#allocation4 + $0x4be8] sm:$0xff]
    %v2560 = vld [vmem:[#allocation4 + $0x4bf0] sm:$0xff]
    %v2561 = vld [vmem:[#allocation4 + $0x4bf8] sm:$0xff]
    %v2562 = vld [vmem:[#allocation4 + $0x4c00] sm:$0xff]
    %v2563 = vld [vmem:[#allocation4 + $0x4c08] sm:$0xff]
    %v2564 = vld [vmem:[#allocation4 + $0x4c10] sm:$0xff]
    %v2565 = vld [vmem:[#allocation4 + $0x4c18] sm:$0xff]
    %v2566 = vld [vmem:[#allocation4 + $0x4c20] sm:$0xff]
    %v2567 = vld [vmem:[#allocation4 + $0x4c28] sm:$0xff]
    %v2568 = vld [vmem:[#allocation4 + $0x4c30] sm:$0xff]
    %v2569 = vld [vmem:[#allocation4 + $0x4c38] sm:$0xff]
    %v2570 = vld [vmem:[#allocation4 + $0x4c40] sm:$0xff]
    %v2571 = vld [vmem:[#allocation4 + $0x4c48] sm:$0xff]
    %v2572 = vld [vmem:[#allocation4 + $0x4c50] sm:$0xff]
    %v2573 = vld [vmem:[#allocation4 + $0x4c58] sm:$0xff]
    %v2574 = vld [vmem:[#allocation4 + $0x4c60] sm:$0xff]
    %v2575 = vld [vmem:[#allocation4 + $0x4c68] sm:$0xff]
    %v2576 = vld [vmem:[#allocation4 + $0x4c70] sm:$0xff]
    %v2577 = vld [vmem:[#allocation4 + $0x4c78] sm:$0xff]
    %v2578 = vld [vmem:[#allocation4 + $0x4c80] sm:$0xff]
    %v2579 = vld [vmem:[#allocation4 + $0x4c88] sm:$0xff]
    %v2580 = vld [vmem:[#allocation4 + $0x4c90] sm:$0xff]
    %v2581 = vld [vmem:[#allocation4 + $0x4c98] sm:$0xff]
    %v2582 = vld [vmem:[#allocation4 + $0x4ca0] sm:$0xff]
    %v2583 = vld [vmem:[#allocation4 + $0x4ca8] sm:$0xff]
    %v2584 = vld [vmem:[#allocation4 + $0x4cb0] sm:$0xff]
    %v2585 = vld [vmem:[#allocation4 + $0x4cb8] sm:$0xff]
    %v2586 = vld [vmem:[#allocation4 + $0x4cc0] sm:$0xff]
    %v2587 = vld [vmem:[#allocation4 + $0x4cc8] sm:$0xff]
    %v2588 = vld [vmem:[#allocation4 + $0x4cd0] sm:$0xff]
    %v2589 = vld [vmem:[#allocation4 + $0x4cd8] sm:$0xff]
    %v2590 = vld [vmem:[#allocation4 + $0x4ce0] sm:$0xff]
    %v2591 = vld [vmem:[#allocation4 + $0x4ce8] sm:$0xff]
    %v2592 = vld [vmem:[#allocation4 + $0x4cf0] sm:$0xff]
    %v2593 = vld [vmem:[#allocation4 + $0x4cf8] sm:$0xff]
    %v2594 = vld [vmem:[#allocation4 + $0x4d00] sm:$0xff]
    %v2595 = vld [vmem:[#allocation4 + $0x4d08] sm:$0xff]
    %v2596 = vld [vmem:[#allocation4 + $0x4d10] sm:$0xff]
    %v2597 = vld [vmem:[#allocation4 + $0x4d18] sm:$0xff]
    %v2598 = vld [vmem:[#allocation4 + $0x4d20] sm:$0xff]
    %v2599 = vld [vmem:[#allocation4 + $0x4d28] sm:$0xff]
    %v2600 = vld [vmem:[#allocation4 + $0x4d30] sm:$0xff]
    %v2601 = vld [vmem:[#allocation4 + $0x4d38] sm:$0xff]
    %v2602 = vld [vmem:[#allocation4 + $0x4d40] sm:$0xff]
    %v2603 = vld [vmem:[#allocation4 + $0x4d48] sm:$0xff]
    %v2604 = vld [vmem:[#allocation4 + $0x4d50] sm:$0xff]
    %v2605 = vld [vmem:[#allocation4 + $0x4d58] sm:$0xff]
    %v2606 = vld [vmem:[#allocation4 + $0x4d60] sm:$0xff]
    %v2607 = vld [vmem:[#allocation4 + $0x4d68] sm:$0xff]
    %v2608 = vld [vmem:[#allocation4 + $0x4d70] sm:$0xff]
    %v2609 = vld [vmem:[#allocation4 + $0x4d78] sm:$0xff]
    %v2610 = vld [vmem:[#allocation4 + $0x4d80] sm:$0xff]
    %v2611 = vld [vmem:[#allocation4 + $0x4d88] sm:$0xff]
    %v2612 = vld [vmem:[#allocation4 + $0x4d90] sm:$0xff]
    %v2613 = vld [vmem:[#allocation4 + $0x4d98] sm:$0xff]
    %v2614 = vld [vmem:[#allocation4 + $0x4da0] sm:$0xff]
    %v2615 = vld [vmem:[#allocation4 + $0x4da8] sm:$0xff]
    %v2616 = vld [vmem:[#allocation4 + $0x4db0] sm:$0xff]
    %v2617 = vld [vmem:[#allocation4 + $0x4db8] sm:$0xff]
    %v2618 = vld [vmem:[#allocation4 + $0x4dc0] sm:$0xff]
    %v2619 = vld [vmem:[#allocation4 + $0x4dc8] sm:$0xff]
    %v2620 = vld [vmem:[#allocation4 + $0x4dd0] sm:$0xff]
    %v2621 = vld [vmem:[#allocation4 + $0x4dd8] sm:$0xff]
    %v2622 = vld [vmem:[#allocation4 + $0x4de0] sm:$0xff]
    %v2623 = vld [vmem:[#allocation4 + $0x4de8] sm:$0xff]
    %v2624 = vld [vmem:[#allocation4 + $0x4df0] sm:$0xff]
    %v2625 = vld [vmem:[#allocation4 + $0x4df8] sm:$0xff]
    %v2626 = vld [vmem:[#allocation4 + $0x4e00] sm:$0xff]
    %v2627 = vld [vmem:[#allocation4 + $0x4e08] sm:$0xff]
    %v2628 = vld [vmem:[#allocation4 + $0x4e10] sm:$0xff]
    %v2629 = vld [vmem:[#allocation4 + $0x4e18] sm:$0xff]
    %v2630 = vld [vmem:[#allocation4 + $0x4e20] sm:$0xff]
    %v2631 = vld [vmem:[#allocation4 + $0x4e28] sm:$0xff]
    %v2632 = vld [vmem:[#allocation4 + $0x4e30] sm:$0xff]
    %v2633 = vld [vmem:[#allocation4 + $0x4e38] sm:$0xff]
    %v2634 = vld [vmem:[#allocation4 + $0x4e40] sm:$0xff]
    %v2635 = vld [vmem:[#allocation4 + $0x4e48] sm:$0xff]
    %v2636 = vld [vmem:[#allocation4 + $0x4e50] sm:$0xff]
    %v2637 = vld [vmem:[#allocation4 + $0x4e58] sm:$0xff]
    %v2638 = vld [vmem:[#allocation4 + $0x4e60] sm:$0xff]
    %v2639 = vld [vmem:[#allocation4 + $0x4e68] sm:$0xff]
    %v2640 = vld [vmem:[#allocation4 + $0x4e70] sm:$0xff]
    %v2641 = vld [vmem:[#allocation4 + $0x4e78] sm:$0xff]
    %v2642 = vld [vmem:[#allocation4 + $0x4e80] sm:$0xff]
    %v2643 = vld [vmem:[#allocation4 + $0x4e88] sm:$0xff]
    %v2644 = vld [vmem:[#allocation4 + $0x4e90] sm:$0xff]
    %v2645 = vld [vmem:[#allocation4 + $0x4e98] sm:$0xff]
    %v2646 = vld [vmem:[#allocation4 + $0x4ea0] sm:$0xff]
    %v2647 = vld [vmem:[#allocation4 + $0x4ea8] sm:$0xff]
    %v2648 = vld [vmem:[#allocation4 + $0x4eb0] sm:$0xff]
    %v2649 = vld [vmem:[#allocation4 + $0x4eb8] sm:$0xff]
    %v2650 = vld [vmem:[#allocation4 + $0x4ec0] sm:$0xff]
    %v2651 = vld [vmem:[#allocation4 + $0x4ec8] sm:$0xff]
    %v2652 = vld [vmem:[#allocation4 + $0x4ed0] sm:$0xff]
    %v2653 = vld [vmem:[#allocation4 + $0x4ed8] sm:$0xff]
    %v2654 = vld [vmem:[#allocation4 + $0x4ee0] sm:$0xff]
    %v2655 = vld [vmem:[#allocation4 + $0x4ee8] sm:$0xff]
    %v2656 = vld [vmem:[#allocation4 + $0x4ef0] sm:$0xff]
    %v2657 = vld [vmem:[#allocation4 + $0x4ef8] sm:$0xff]
    %v2658 = vld [vmem:[#allocation4 + $0x4f00] sm:$0xff]
    %v2659 = vld [vmem:[#allocation4 + $0x4f08] sm:$0xff]
    %v2660 = vld [vmem:[#allocation4 + $0x4f10] sm:$0xff]
    %v2661 = vld [vmem:[#allocation4 + $0x4f18] sm:$0xff]
    %v2662 = vld [vmem:[#allocation4 + $0x4f20] sm:$0xff]
    %v2663 = vld [vmem:[#allocation4 + $0x4f28] sm:$0xff]
    %v2664 = vld [vmem:[#allocation4 + $0x4f30] sm:$0xff]
    %v2665 = vld [vmem:[#allocation4 + $0x4f38] sm:$0xff]
    %v2666 = vld [vmem:[#allocation4 + $0x4f40] sm:$0xff]
    %v2667 = vld [vmem:[#allocation4 + $0x4f48] sm:$0xff]
    %v2668 = vld [vmem:[#allocation4 + $0x4f50] sm:$0xff]
    %v2669 = vld [vmem:[#allocation4 + $0x4f58] sm:$0xff]
    %v2670 = vld [vmem:[#allocation4 + $0x4f60] sm:$0xff]
    %v2671 = vld [vmem:[#allocation4 + $0x4f68] sm:$0xff]
    %v2672 = vld [vmem:[#allocation4 + $0x4f70] sm:$0xff]
    %v2673 = vld [vmem:[#allocation4 + $0x4f78] sm:$0xff]
    %v2674 = vld [vmem:[#allocation4 + $0x4f80] sm:$0xff]
    %v2675 = vld [vmem:[#allocation4 + $0x4f88] sm:$0xff]
    %v2676 = vld [vmem:[#allocation4 + $0x4f90] sm:$0xff]
    %v2677 = vld [vmem:[#allocation4 + $0x4f98] sm:$0xff]
    %v2678 = vld [vmem:[#allocation4 + $0x4fa0] sm:$0xff]
    %v2679 = vld [vmem:[#allocation4 + $0x4fa8] sm:$0xff]
    %v2680 = vld [vmem:[#allocation4 + $0x4fb0] sm:$0xff]
    %v2681 = vld [vmem:[#allocation4 + $0x4fb8] sm:$0xff]
    %v2682 = vld [vmem:[#allocation4 + $0x4fc0] sm:$0xff]
    %v2683 = vld [vmem:[#allocation4 + $0x4fc8] sm:$0xff]
    %v2684 = vld [vmem:[#allocation4 + $0x4fd0] sm:$0xff]
    %v2685 = vld [vmem:[#allocation4 + $0x4fd8] sm:$0xff]
    %v2686 = vld [vmem:[#allocation4 + $0x4fe0] sm:$0xff]
    %v2687 = vld [vmem:[#allocation4 + $0x4fe8] sm:$0xff]
    %v2688 = vld [vmem:[#allocation4 + $0x4ff0] sm:$0xff]
    %v2689 = vld [vmem:[#allocation4 + $0x4ff8] sm:$0xff]
    %v2690 = vld [vmem:[#allocation4 + $0x5000] sm:$0xff]
    %v2691 = vld [vmem:[#allocation4 + $0x5008] sm:$0xff]
    %v2692 = vld [vmem:[#allocation4 + $0x5010] sm:$0xff]
    %v2693 = vld [vmem:[#allocation4 + $0x5018] sm:$0xff]
    %v2694 = vld [vmem:[#allocation4 + $0x5020] sm:$0xff]
    %v2695 = vld [vmem:[#allocation4 + $0x5028] sm:$0xff]
    %v2696 = vld [vmem:[#allocation4 + $0x5030] sm:$0xff]
    %v2697 = vld [vmem:[#allocation4 + $0x5038] sm:$0xff]
    %v2698 = vld [vmem:[#allocation4 + $0x5040] sm:$0xff]
    %v2699 = vld [vmem:[#allocation4 + $0x5048] sm:$0xff]
    %v2700 = vld [vmem:[#allocation4 + $0x5050] sm:$0xff]
    %v2701 = vld [vmem:[#allocation4 + $0x5058] sm:$0xff]
    %v2702 = vld [vmem:[#allocation4 + $0x5060] sm:$0xff]
    %v2703 = vld [vmem:[#allocation4 + $0x5068] sm:$0xff]
    %v2704 = vld [vmem:[#allocation4 + $0x5070] sm:$0xff]
    %v2705 = vld [vmem:[#allocation4 + $0x5078] sm:$0xff]
    %v2706 = vld [vmem:[#allocation4 + $0x5080] sm:$0xff]
    %v2707 = vld [vmem:[#allocation4 + $0x5088] sm:$0xff]
    %v2708 = vld [vmem:[#allocation4 + $0x5090] sm:$0xff]
    %v2709 = vld [vmem:[#allocation4 + $0x5098] sm:$0xff]
    %v2710 = vld [vmem:[#allocation4 + $0x50a0] sm:$0xff]
    %v2711 = vld [vmem:[#allocation4 + $0x50a8] sm:$0xff]
    %v2712 = vld [vmem:[#allocation4 + $0x50b0] sm:$0xff]
    %v2713 = vld [vmem:[#allocation4 + $0x50b8] sm:$0xff]
    %v2714 = vld [vmem:[#allocation4 + $0x50c0] sm:$0xff]
    %v2715 = vld [vmem:[#allocation4 + $0x50c8] sm:$0xff]
    %v2716 = vld [vmem:[#allocation4 + $0x50d0] sm:$0xff]
    %v2717 = vld [vmem:[#allocation4 + $0x50d8] sm:$0xff]
    %v2718 = vld [vmem:[#allocation4 + $0x50e0] sm:$0xff]
    %v2719 = vld [vmem:[#allocation4 + $0x50e8] sm:$0xff]
    %v2720 = vld [vmem:[#allocation4 + $0x50f0] sm:$0xff]
    %v2721 = vld [vmem:[#allocation4 + $0x50f8] sm:$0xff]
    %v2722 = vld [vmem:[#allocation4 + $0x5100] sm:$0xff]
    %v2723 = vld [vmem:[#allocation4 + $0x5108] sm:$0xff]
    %v2724 = vld [vmem:[#allocation4 + $0x5110] sm:$0xff]
    %v2725 = vld [vmem:[#allocation4 + $0x5118] sm:$0xff]
    %v2726 = vld [vmem:[#allocation4 + $0x5120] sm:$0xff]
    %v2727 = vld [vmem:[#allocation4 + $0x5128] sm:$0xff]
    %v2728 = vld [vmem:[#allocation4 + $0x5130] sm:$0xff]
    %v2729 = vld [vmem:[#allocation4 + $0x5138] sm:$0xff]
    %v2730 = vld [vmem:[#allocation4 + $0x5140] sm:$0xff]
    %v2731 = vld [vmem:[#allocation4 + $0x5148] sm:$0xff]
    %v2732 = vld [vmem:[#allocation4 + $0x5150] sm:$0xff]
    %v2733 = vld [vmem:[#allocation4 + $0x5158] sm:$0xff]
    %v2734 = vld [vmem:[#allocation4 + $0x5160] sm:$0xff]
    %v2735 = vld [vmem:[#allocation4 + $0x5168] sm:$0xff]
    %v2736 = vld [vmem:[#allocation4 + $0x5170] sm:$0xff]
    %v2737 = vld [vmem:[#allocation4 + $0x5178] sm:$0xff]
    %v2738 = vld [vmem:[#allocation4 + $0x5180] sm:$0xff]
    %v2739 = vld [vmem:[#allocation4 + $0x5188] sm:$0xff]
    %v2740 = vld [vmem:[#allocation4 + $0x5190] sm:$0xff]
    %v2741 = vld [vmem:[#allocation4 + $0x5198] sm:$0xff]
    %v2742 = vld [vmem:[#allocation4 + $0x51a0] sm:$0xff]
    %v2743 = vld [vmem:[#allocation4 + $0x51a8] sm:$0xff]
    %v2744 = vld [vmem:[#allocation4 + $0x51b0] sm:$0xff]
    %v2745 = vld [vmem:[#allocation4 + $0x51b8] sm:$0xff]
    %v2746 = vld [vmem:[#allocation4 + $0x51c0] sm:$0xff]
    %v2747 = vld [vmem:[#allocation4 + $0x51c8] sm:$0xff]
    %v2748 = vld [vmem:[#allocation4 + $0x51d0] sm:$0xff]
    %v2749 = vld [vmem:[#allocation4 + $0x51d8] sm:$0xff]
    %v2750 = vld [vmem:[#allocation4 + $0x51e0] sm:$0xff]
    %v2751 = vld [vmem:[#allocation4 + $0x51e8] sm:$0xff]
    %v2752 = vld [vmem:[#allocation4 + $0x51f0] sm:$0xff]
    %v2753 = vld [vmem:[#allocation4 + $0x51f8] sm:$0xff]
    %v2754 = vld [vmem:[#allocation4 + $0x5200] sm:$0xff]
    %v2755 = vld [vmem:[#allocation4 + $0x5208] sm:$0xff]
    %v2756 = vld [vmem:[#allocation4 + $0x5210] sm:$0xff]
    %v2757 = vld [vmem:[#allocation4 + $0x5218] sm:$0xff]
    %v2758 = vld [vmem:[#allocation4 + $0x5220] sm:$0xff]
    %v2759 = vld [vmem:[#allocation4 + $0x5228] sm:$0xff]
    %v2760 = vld [vmem:[#allocation4 + $0x5230] sm:$0xff]
    %v2761 = vld [vmem:[#allocation4 + $0x5238] sm:$0xff]
    %v2762 = vld [vmem:[#allocation4 + $0x5240] sm:$0xff]
    %v2763 = vld [vmem:[#allocation4 + $0x5248] sm:$0xff]
    %v2764 = vld [vmem:[#allocation4 + $0x5250] sm:$0xff]
    %v2765 = vld [vmem:[#allocation4 + $0x5258] sm:$0xff]
    %v2766 = vld [vmem:[#allocation4 + $0x5260] sm:$0xff]
    %v2767 = vld [vmem:[#allocation4 + $0x5268] sm:$0xff]
    %v2768 = vld [vmem:[#allocation4 + $0x5270] sm:$0xff]
    %v2769 = vld [vmem:[#allocation4 + $0x5278] sm:$0xff]
    %v2770 = vld [vmem:[#allocation4 + $0x5280] sm:$0xff]
    %v2771 = vld [vmem:[#allocation4 + $0x5288] sm:$0xff]
    %v2772 = vld [vmem:[#allocation4 + $0x5290] sm:$0xff]
    %v2773 = vld [vmem:[#allocation4 + $0x5298] sm:$0xff]
    %v2774 = vld [vmem:[#allocation4 + $0x52a0] sm:$0xff]
    %v2775 = vld [vmem:[#allocation4 + $0x52a8] sm:$0xff]
    %v2776 = vld [vmem:[#allocation4 + $0x52b0] sm:$0xff]
    %v2777 = vld [vmem:[#allocation4 + $0x52b8] sm:$0xff]
    %v2778 = vld [vmem:[#allocation4 + $0x52c0] sm:$0xff]
    %v2779 = vld [vmem:[#allocation4 + $0x52c8] sm:$0xff]
    %v2780 = vld [vmem:[#allocation4 + $0x52d0] sm:$0xff]
    %v2781 = vld [vmem:[#allocation4 + $0x52d8] sm:$0xff]
    %v2782 = vld [vmem:[#allocation4 + $0x52e0] sm:$0xff]
    %v2783 = vld [vmem:[#allocation4 + $0x52e8] sm:$0xff]
    %v2784 = vld [vmem:[#allocation4 + $0x52f0] sm:$0xff]
    %v2785 = vld [vmem:[#allocation4 + $0x52f8] sm:$0xff]
    %v2786 = vld [vmem:[#allocation4 + $0x5300] sm:$0xff]
    %v2787 = vld [vmem:[#allocation4 + $0x5308] sm:$0xff]
    %v2788 = vld [vmem:[#allocation4 + $0x5310] sm:$0xff]
    %v2789 = vld [vmem:[#allocation4 + $0x5318] sm:$0xff]
    %v2790 = vld [vmem:[#allocation4 + $0x5320] sm:$0xff]
    %v2791 = vld [vmem:[#allocation4 + $0x5328] sm:$0xff]
    %v2792 = vld [vmem:[#allocation4 + $0x5330] sm:$0xff]
    %v2793 = vld [vmem:[#allocation4 + $0x5338] sm:$0xff]
    %v2794 = vld [vmem:[#allocation4 + $0x5340] sm:$0xff]
    %v2795 = vld [vmem:[#allocation4 + $0x5348] sm:$0xff]
    %v2796 = vld [vmem:[#allocation4 + $0x5350] sm:$0xff]
    %v2797 = vld [vmem:[#allocation4 + $0x5358] sm:$0xff]
    %v2798 = vld [vmem:[#allocation4 + $0x5360] sm:$0xff]
    %v2799 = vld [vmem:[#allocation4 + $0x5368] sm:$0xff]
    %v2800 = vld [vmem:[#allocation4 + $0x5370] sm:$0xff]
    %v2801 = vld [vmem:[#allocation4 + $0x5378] sm:$0xff]
    %v2802 = vld [vmem:[#allocation4 + $0x5380] sm:$0xff]
    %v2803 = vld [vmem:[#allocation4 + $0x5388] sm:$0xff]
    %v2804 = vld [vmem:[#allocation4 + $0x5390] sm:$0xff]
    %v2805 = vld [vmem:[#allocation4 + $0x5398] sm:$0xff]
    %v2806 = vld [vmem:[#allocation4 + $0x53a0] sm:$0xff]
    %v2807 = vld [vmem:[#allocation4 + $0x53a8] sm:$0xff]
    %v2808 = vld [vmem:[#allocation4 + $0x53b0] sm:$0xff]
    %v2809 = vld [vmem:[#allocation4 + $0x53b8] sm:$0xff]
    %v2810 = vld [vmem:[#allocation4 + $0x53c0] sm:$0xff]
    %v2811 = vld [vmem:[#allocation4 + $0x53c8] sm:$0xff]
    %v2812 = vld [vmem:[#allocation4 + $0x53d0] sm:$0xff]
    %v2813 = vld [vmem:[#allocation4 + $0x53d8] sm:$0xff]
    %v2814 = vld [vmem:[#allocation4 + $0x53e0] sm:$0xff]
    %v2815 = vld [vmem:[#allocation4 + $0x53e8] sm:$0xff]
    %v2816 = vld [vmem:[#allocation4 + $0x53f0] sm:$0xff]
    %v2817 = vld [vmem:[#allocation4 + $0x53f8] sm:$0xff]
    %v2818 = vld [vmem:[#allocation4 + $0x5400] sm:$0xff]
    %v2819 = vld [vmem:[#allocation4 + $0x5408] sm:$0xff]
    %v2820 = vld [vmem:[#allocation4 + $0x5410] sm:$0xff]
    %v2821 = vld [vmem:[#allocation4 + $0x5418] sm:$0xff]
    %v2822 = vld [vmem:[#allocation4 + $0x5420] sm:$0xff]
    %v2823 = vld [vmem:[#allocation4 + $0x5428] sm:$0xff]
    %v2824 = vld [vmem:[#allocation4 + $0x5430] sm:$0xff]
    %v2825 = vld [vmem:[#allocation4 + $0x5438] sm:$0xff]
    %v2826 = vld [vmem:[#allocation4 + $0x5440] sm:$0xff]
    %v2827 = vld [vmem:[#allocation4 + $0x5448] sm:$0xff]
    %v2828 = vld [vmem:[#allocation4 + $0x5450] sm:$0xff]
    %v2829 = vld [vmem:[#allocation4 + $0x5458] sm:$0xff]
    %v2830 = vld [vmem:[#allocation4 + $0x5460] sm:$0xff]
    %v2831 = vld [vmem:[#allocation4 + $0x5468] sm:$0xff]
    %v2832 = vld [vmem:[#allocation4 + $0x5470] sm:$0xff]
    %v2833 = vld [vmem:[#allocation4 + $0x5478] sm:$0xff]
    %v2834 = vld [vmem:[#allocation4 + $0x5480] sm:$0xff]
    %v2835 = vld [vmem:[#allocation4 + $0x5488] sm:$0xff]
    %v2836 = vld [vmem:[#allocation4 + $0x5490] sm:$0xff]
    %v2837 = vld [vmem:[#allocation4 + $0x5498] sm:$0xff]
    %v2838 = vld [vmem:[#allocation4 + $0x54a0] sm:$0xff]
    %v2839 = vld [vmem:[#allocation4 + $0x54a8] sm:$0xff]
    %v2840 = vld [vmem:[#allocation4 + $0x54b0] sm:$0xff]
    %v2841 = vld [vmem:[#allocation4 + $0x54b8] sm:$0xff]
    %v2842 = vld [vmem:[#allocation4 + $0x54c0] sm:$0xff]
    %v2843 = vld [vmem:[#allocation4 + $0x54c8] sm:$0xff]
    %v2844 = vld [vmem:[#allocation4 + $0x54d0] sm:$0xff]
    %v2845 = vld [vmem:[#allocation4 + $0x54d8] sm:$0xff]
    %v2846 = vld [vmem:[#allocation4 + $0x54e0] sm:$0xff]
    %v2847 = vld [vmem:[#allocation4 + $0x54e8] sm:$0xff]
    %v2848 = vld [vmem:[#allocation4 + $0x54f0] sm:$0xff]
    %v2849 = vld [vmem:[#allocation4 + $0x54f8] sm:$0xff]
    %v2850 = vld [vmem:[#allocation4 + $0x5500] sm:$0xff]
    %v2851 = vld [vmem:[#allocation4 + $0x5508] sm:$0xff]
    %v2852 = vld [vmem:[#allocation4 + $0x5510] sm:$0xff]
    %v2853 = vld [vmem:[#allocation4 + $0x5518] sm:$0xff]
    %v2854 = vld [vmem:[#allocation4 + $0x5520] sm:$0xff]
    %v2855 = vld [vmem:[#allocation4 + $0x5528] sm:$0xff]
    %v2856 = vld [vmem:[#allocation4 + $0x5530] sm:$0xff]
    %v2857 = vld [vmem:[#allocation4 + $0x5538] sm:$0xff]
    %v2858 = vld [vmem:[#allocation4 + $0x5540] sm:$0xff]
    %v2859 = vld [vmem:[#allocation4 + $0x5548] sm:$0xff]
    %v2860 = vld [vmem:[#allocation4 + $0x5550] sm:$0xff]
    %v2861 = vld [vmem:[#allocation4 + $0x5558] sm:$0xff]
    %v2862 = vld [vmem:[#allocation4 + $0x5560] sm:$0xff]
    %v2863 = vld [vmem:[#allocation4 + $0x5568] sm:$0xff]
    %v2864 = vld [vmem:[#allocation4 + $0x5570] sm:$0xff]
    %v2865 = vld [vmem:[#allocation4 + $0x5578] sm:$0xff]
    %v2866 = vld [vmem:[#allocation4 + $0x5580] sm:$0xff]
    %v2867 = vld [vmem:[#allocation4 + $0x5588] sm:$0xff]
    %v2868 = vld [vmem:[#allocation4 + $0x5590] sm:$0xff]
    %v2869 = vld [vmem:[#allocation4 + $0x5598] sm:$0xff]
    %v2870 = vld [vmem:[#allocation4 + $0x55a0] sm:$0xff]
    %v2871 = vld [vmem:[#allocation4 + $0x55a8] sm:$0xff]
    %v2872 = vld [vmem:[#allocation4 + $0x55b0] sm:$0xff]
    %v2873 = vld [vmem:[#allocation4 + $0x55b8] sm:$0xff]
    %v2874 = vld [vmem:[#allocation6] sm:$0xff]
    %v2875 = vld [vmem:[#allocation6 + $0x8] sm:$0xff]
    %v2876 = vld [vmem:[#allocation6 + $0x10] sm:$0xff]
    %v2877 = vld [vmem:[#allocation6 + $0x18] sm:$0xf]
    %v2882 = vlaneseq
    %v2883 = vshrl.u32 %v2882, 7
    %v2884 = vsub.s32 0, %v2883
    %v2885 = vrot.slane %v2874, %v2884
    %v2886 = vlaneseq
    %v2887 = vshrl.u32 %v2886, 7
    %v2888 = vsub.s32 1, %v2887
    %v2889 = vrot.slane %v2874, %v2888
    %v2890 = vlaneseq
    %v2891 = vshrl.u32 %v2890, 7
    %v2892 = vsub.s32 2, %v2891
    %v2893 = vrot.slane %v2874, %v2892
    %v2894 = vlaneseq
    %v2895 = vshrl.u32 %v2894, 7
    %v2896 = vsub.s32 3, %v2895
    %v2897 = vrot.slane %v2874, %v2896
    %v2898 = vlaneseq
    %v2899 = vshrl.u32 %v2898, 7
    %v2900 = vsub.s32 4, %v2899
    %v2901 = vrot.slane %v2874, %v2900
    %v2902 = vlaneseq
    %v2903 = vshrl.u32 %v2902, 7
    %v2904 = vsub.s32 5, %v2903
    %v2905 = vrot.slane %v2874, %v2904
    %v2906 = vlaneseq
    %v2907 = vshrl.u32 %v2906, 7
    %v2908 = vsub.s32 6, %v2907
    %v2909 = vrot.slane %v2874, %v2908
    %v2910 = vlaneseq
    %v2911 = vshrl.u32 %v2910, 7
    %v2912 = vsub.s32 7, %v2911
    %v2913 = vrot.slane %v2874, %v2912
    %v2914 = vlaneseq
    %v2915 = vshrl.u32 %v2914, 7
    %v2916 = vsub.s32 0, %v2915
    %v2917 = vrot.slane %v2875, %v2916
    %v2918 = vlaneseq
    %v2919 = vshrl.u32 %v2918, 7
    %v2920 = vsub.s32 1, %v2919
    %v2921 = vrot.slane %v2875, %v2920
    %v2922 = vlaneseq
    %v2923 = vshrl.u32 %v2922, 7
    %v2924 = vsub.s32 2, %v2923
    %v2925 = vrot.slane %v2875, %v2924
    %v2926 = vlaneseq
    %v2927 = vshrl.u32 %v2926, 7
    %v2928 = vsub.s32 3, %v2927
    %v2929 = vrot.slane %v2875, %v2928
    %v2930 = vlaneseq
    %v2931 = vshrl.u32 %v2930, 7
    %v2932 = vsub.s32 4, %v2931
    %v2933 = vrot.slane %v2875, %v2932
    %v2934 = vlaneseq
    %v2935 = vshrl.u32 %v2934, 7
    %v2936 = vsub.s32 5, %v2935
    %v2937 = vrot.slane %v2875, %v2936
    %v2938 = vlaneseq
    %v2939 = vshrl.u32 %v2938, 7
    %v2940 = vsub.s32 6, %v2939
    %v2941 = vrot.slane %v2875, %v2940
    %v2942 = vlaneseq
    %v2943 = vshrl.u32 %v2942, 7
    %v2944 = vsub.s32 7, %v2943
    %v2945 = vrot.slane %v2875, %v2944
    %v2946 = vlaneseq
    %v2947 = vshrl.u32 %v2946, 7
    %v2948 = vsub.s32 0, %v2947
    %v2949 = vrot.slane %v2876, %v2948
    %v2950 = vlaneseq
    %v2951 = vshrl.u32 %v2950, 7
    %v2952 = vsub.s32 1, %v2951
    %v2953 = vrot.slane %v2876, %v2952
    %v2954 = vlaneseq
    %v2955 = vshrl.u32 %v2954, 7
    %v2956 = vsub.s32 2, %v2955
    %v2957 = vrot.slane %v2876, %v2956
    %v2958 = vlaneseq
    %v2959 = vshrl.u32 %v2958, 7
    %v2960 = vsub.s32 3, %v2959
    %v2961 = vrot.slane %v2876, %v2960
    %v2962 = vlaneseq
    %v2963 = vshrl.u32 %v2962, 7
    %v2964 = vsub.s32 4, %v2963
    %v2965 = vrot.slane %v2876, %v2964
    %v2966 = vlaneseq
    %v2967 = vshrl.u32 %v2966, 7
    %v2968 = vsub.s32 5, %v2967
    %v2969 = vrot.slane %v2876, %v2968
    %v2970 = vlaneseq
    %v2971 = vshrl.u32 %v2970, 7
    %v2972 = vsub.s32 6, %v2971
    %v2973 = vrot.slane %v2876, %v2972
    %v2974 = vlaneseq
    %v2975 = vshrl.u32 %v2974, 7
    %v2976 = vsub.s32 7, %v2975
    %v2977 = vrot.slane %v2876, %v2976
    %v2978 = vlaneseq
    %v2979 = vshrl.u32 %v2978, 7
    %v2980 = vsub.s32 0, %v2979
    %v2981 = vrot.slane %v2877, %v2980
    %v2982 = vlaneseq
    %v2983 = vshrl.u32 %v2982, 7
    %v2984 = vsub.s32 1, %v2983
    %v2985 = vrot.slane %v2877, %v2984
    %v2986 = vlaneseq
    %v2987 = vshrl.u32 %v2986, 7
    %v2988 = vsub.s32 2, %v2987
    %v2989 = vrot.slane %v2877, %v2988
    %v2990 = vlaneseq
    %v2991 = vshrl.u32 %v2990, 7
    %v2992 = vsub.s32 3, %v2991
    %v2993 = vrot.slane %v2877, %v2992
    %vm3022 = vcmask 130048
    %v3024 = vsel %vm3022, %v129, 0
    %3026 = vmatprep.subr.mxu0 %v131
    %3027 = vmatpush1.msra.mxu0 %v130
    %3028 = vmatprep.subr.mxu0 %v159
    %3029 = vmatpush1.msra.mxu0 %v158
    %3030 = vmatprep.subr.mxu0 %v187
    %3031 = vmatpush1.msra.mxu0 %v186
    %3032 = vmatprep.subr.mxu0 %v215
    %3033 = vmatpush1.msra.mxu0 %v214
    %3034 = vmatprep.subr.mxu0 %v243
    %3035 = vmatpush1.msra.mxu0 %v242
    %3036 = vmatprep.subr.mxu0 %v271
    %3037 = vmatpush1.msra.mxu0 %v270
    %3038 = vmatprep.subr.mxu0 %v299
    %3039 = vmatpush1.msra.mxu0 %v298
    %3040 = vmatprep.subr.mxu0 %v327
    %3041 = vmatpush1.msra.mxu0 %v326
    %3042 = vmatprep.subr.mxu0 %v355
    %3043 = vmatpush1.msra.mxu0 %v354
    %3044 = vmatprep.subr.mxu0 %v383
    %3045 = vmatpush1.msra.mxu0 %v382
    %3046 = vmatprep.subr.mxu0 %v411
    %3047 = vmatpush1.msra.mxu0 %v410
    %3048 = vmatprep.subr.mxu0 %v439
    %3049 = vmatpush1.msra.mxu0 %v438
    %3050 = vmatprep.subr.mxu0 %v467
    %3051 = vmatpush1.msra.mxu0 %v466
    %3052 = vmatprep.subr.mxu0 %v495
    %3053 = vmatpush1.msra.mxu0 %v494
    %3054 = vmatprep.subr.mxu0 %v523
    %3055 = vmatpush1.msra.mxu0 %v522
    %3056 = vmatprep.subr.mxu0 %v551
    %3057 = vmatpush1.msra.mxu0 %v550
    %3058 = vmatprep.subr.mxu0 %v579
    %3059 = vmatpush1.msra.mxu0 %v578
    %3060 = vmatprep.subr.mxu0 %v607
    %3061 = vmatpush1.msra.mxu0 %v606
    %3062 = vmatprep.subr.mxu0 %v635
    %3063 = vmatpush1.msra.mxu0 %v634
    %3064 = vmatprep.subr.mxu0 %v663
    %3065 = vmatpush1.msra.mxu0 %v662
    %3066 = vmatprep.subr.mxu0 %v691
    %3067 = vmatpush1.msra.mxu0 %v690
    %3068 = vmatprep.subr.mxu0 %v719
    %3069 = vmatpush1.msra.mxu0 %v718
    %3070 = vmatprep.subr.mxu0 %v747
    %3071 = vmatpush1.msra.mxu0 %v746
    %3072 = vmatprep.subr.mxu0 %v775
    %3073 = vmatpush1.msra.mxu0 %v774
    %3074 = vmatprep.subr.mxu0 %v803
    %3075 = vmatpush1.msra.mxu0 %v802
    %3076 = vmatprep.subr.mxu0 %v831
    %3077 = vmatpush1.msra.mxu0 %v830
    %3078 = vmatprep.subr.mxu0 %v859
    %3079 = vmatpush1.msra.mxu0 %v858
    %3080 = vmatprep.subr.mxu0 %v887
    %3081 = vmatpush1.msra.mxu0 %v886
    %3082 = vmatprep.subr.mxu0 %v915
    %3083 = vmatpush1.msra.mxu0 %v914
    %3084 = vmatprep.subr.mxu0 %v943
    %3085 = vmatpush1.msra.mxu0 %v942
    %3086 = vmatprep.subr.mxu0 %v971
    %3087 = vmatpush1.msra.mxu0 %v970
    %3088 = vmatprep.subr.mxu0 %v999
    %3089 = vmatpush1.msra.mxu0 %v998
    %3090 = vmatprep.mubr.f32.mxu0 %v124
    %3091 = vmatmul.mubr.f32.gmra.mrb[0].mxu0 %v123
    %v3092 = vpop.f32.mrb[0].mxu0
    %v3093 = vadd.f32 %v2885, %v3092
    %v3094 = vpop.f32.mrb[0].mxu0
    %v3095 = vadd.f32 %v2889, %v3094
    %3096 = vdwg.mxu0
    %3097 = vmatprep.subr.mxu0 %v1027
    %3098 = vmatpush1.msra.mxu0 %v1026
    %3099 = vmatprep.subr.mxu0 %v1055
    %3100 = vmatpush1.msra.mxu0 %v1054
    %3101 = vmatprep.subr.mxu0 %v1083
    %3102 = vmatpush1.msra.mxu0 %v1082
    %3103 = vmatprep.subr.mxu0 %v1111
    %3104 = vmatpush1.msra.mxu0 %v1110
    %3105 = vmatprep.subr.mxu0 %v1139
    %3106 = vmatpush1.msra.mxu0 %v1138
    %3107 = vmatprep.subr.mxu0 %v1167
    %3108 = vmatpush1.msra.mxu0 %v1166
    %3109 = vmatprep.subr.mxu0 %v1195
    %3110 = vmatpush1.msra.mxu0 %v1194
    %3111 = vmatprep.subr.mxu0 %v1223
    %3112 = vmatpush1.msra.mxu0 %v1222
    %3113 = vmatprep.subr.mxu0 %v1251
    %3114 = vmatpush1.msra.mxu0 %v1250
    %3115 = vmatprep.subr.mxu0 %v1279
    %3116 = vmatpush1.msra.mxu0 %v1278
    %3117 = vmatprep.subr.mxu0 %v1307
    %3118 = vmatpush1.msra.mxu0 %v1306
    %3119 = vmatprep.subr.mxu0 %v1335
    %3120 = vmatpush1.msra.mxu0 %v1334
    %3121 = vmatprep.subr.mxu0 %v1363
    %3122 = vmatpush1.msra.mxu0 %v1362
    %3123 = vmatprep.subr.mxu0 %v1391
    %3124 = vmatpush1.msra.mxu0 %v1390
    %3125 = vmatprep.subr.mxu0 %v1419
    %3126 = vmatpush1.msra.mxu0 %v1418
    %3127 = vmatprep.subr.mxu0 %v1447
    %3128 = vmatpush1.msra.mxu0 %v1446
    %3129 = vmatprep.subr.mxu0 %v1475
    %3130 = vmatpush1.msra.mxu0 %v1474
    %3131 = vmatprep.subr.mxu0 %v1503
    %3132 = vmatpush1.msra.mxu0 %v1502
    %3133 = vmatprep.subr.mxu0 %v1531
    %3134 = vmatpush1.msra.mxu0 %v1530
    %3135 = vmatprep.subr.mxu0 %v1559
    %3136 = vmatpush1.msra.mxu0 %v1558
    %3137 = vmatprep.subr.mxu0 %v1587
    %3138 = vmatpush1.msra.mxu0 %v1586
    %3139 = vmatprep.subr.mxu0 %v1615
    %3140 = vmatpush1.msra.mxu0 %v1614
    %3141 = vmatprep.subr.mxu0 %v1643
    %3142 = vmatpush1.msra.mxu0 %v1642
    %3143 = vmatprep.subr.mxu0 %v1671
    %3144 = vmatpush1.msra.mxu0 %v1670
    %3145 = vmatprep.subr.mxu0 %v1699
    %3146 = vmatpush1.msra.mxu0 %v1698
    %3147 = vmatprep.subr.mxu0 %v1727
    %3148 = vmatpush1.msra.mxu0 %v1726
    %3149 = vmatprep.subr.mxu0 %v1755
    %3150 = vmatpush1.msra.mxu0 %v1754
    %3151 = vmatprep.subr.mxu0 %v1783
    %3152 = vmatpush1.msra.mxu0 %v1782
    %3153 = vmatprep.subr.mxu0 %v1811
    %3154 = vmatpush1.msra.mxu0 %v1810
    %3155 = vmatprep.subr.mxu0 %v1839
    %3156 = vmatpush1.msra.mxu0 %v1838
    %3157 = vmatprep.subr.mxu0 %v1867
    %3158 = vmatpush1.msra.mxu0 %v1866
    %3159 = vmatprep.subr.mxu0 %v1895
    %3160 = vmatpush1.msra.mxu0 %v1894
    %3161 = vmatprep.mubr.f32.mxu0 %v126
    %3162 = vmatmul.mubr.f32.gmra.mrb[0].mxu0 %v125
    %v3163 = vpop.f32.mrb[0].mxu0
    %v3164 = vadd.f32 %v3093, %v3163
    %v3165 = vpop.f32.mrb[0].mxu0
    %v3166 = vadd.f32 %v3095, %v3165
    %3167 = vdwg.mxu0
    %3168 = vmatprep.subr.mxu0 %v1923
    %3169 = vmatpush1.msra.mxu0 %v1922
    %3170 = vmatprep.subr.mxu0 %v1951
    %3171 = vmatpush1.msra.mxu0 %v1950
    %3172 = vmatprep.subr.mxu0 %v1979
    %3173 = vmatpush1.msra.mxu0 %v1978
    %3174 = vmatprep.subr.mxu0 %v2007
    %3175 = vmatpush1.msra.mxu0 %v2006
    %3176 = vmatprep.subr.mxu0 %v2035
    %3177 = vmatpush1.msra.mxu0 %v2034
    %3178 = vmatprep.subr.mxu0 %v2063
    %3179 = vmatpush1.msra.mxu0 %v2062
    %3180 = vmatprep.subr.mxu0 %v2091
    %3181 = vmatpush1.msra.mxu0 %v2090
    %3182 = vmatprep.subr.mxu0 %v2119
    %3183 = vmatpush1.msra.mxu0 %v2118
    %3184 = vmatprep.subr.mxu0 %v2147
    %3185 = vmatpush1.msra.mxu0 %v2146
    %3186 = vmatprep.subr.mxu0 %v2175
    %3187 = vmatpush1.msra.mxu0 %v2174
    %3188 = vmatprep.subr.mxu0 %v2203
    %3189 = vmatpush1.msra.mxu0 %v2202
    %3190 = vmatprep.subr.mxu0 %v2231
    %3191 = vmatpush1.msra.mxu0 %v2230
    %3192 = vmatprep.subr.mxu0 %v2259
    %3193 = vmatpush1.msra.mxu0 %v2258
    %3194 = vmatprep.subr.mxu0 %v2287
    %3195 = vmatpush1.msra.mxu0 %v2286
    %3196 = vmatprep.subr.mxu0 %v2315
    %3197 = vmatpush1.msra.mxu0 %v2314
    %3198 = vmatprep.subr.mxu0 %v2343
    %3199 = vmatpush1.msra.mxu0 %v2342
    %3200 = vmatprep.subr.mxu0 %v2371
    %3201 = vmatpush1.msra.mxu0 %v2370
    %3202 = vmatprep.subr.mxu0 %v2399
    %3203 = vmatpush1.msra.mxu0 %v2398
    %3204 = vmatprep.subr.mxu0 %v2427
    %3205 = vmatpush1.msra.mxu0 %v2426
    %3206 = vmatprep.subr.mxu0 %v2455
    %3207 = vmatpush1.msra.mxu0 %v2454
    %3208 = vmatprep.subr.mxu0 %v2483
    %3209 = vmatpush1.msra.mxu0 %v2482
    %3210 = vmatprep.subr.mxu0 %v2511
    %3211 = vmatpush1.msra.mxu0 %v2510
    %3212 = vmatprep.subr.mxu0 %v2539
    %3213 = vmatpush1.msra.mxu0 %v2538
    %3214 = vmatprep.subr.mxu0 %v2567
    %3215 = vmatpush1.msra.mxu0 %v2566
    %3216 = vmatprep.subr.mxu0 %v2595
    %3217 = vmatpush1.msra.mxu0 %v2594
    %3218 = vmatprep.subr.mxu0 %v2623
    %3219 = vmatpush1.msra.mxu0 %v2622
    %3220 = vmatprep.subr.mxu0 %v2651
    %3221 = vmatpush1.msra.mxu0 %v2650
    %3222 = vmatprep.subr.mxu0 %v2679
    %3223 = vmatpush1.msra.mxu0 %v2678
    %3224 = vmatprep.subr.mxu0 %v2707
    %3225 = vmatpush1.msra.mxu0 %v2706
    %3226 = vmatprep.subr.mxu0 %v2735
    %3227 = vmatpush1.msra.mxu0 %v2734
    %3228 = vmatprep.subr.mxu0 %v2763
    %3229 = vmatpush1.msra.mxu0 %v2762
    %3230 = vmatprep.subr.mxu0 %v2791
    %3231 = vmatpush1.msra.mxu0 %v2790
    %3232 = vmatprep.mubr.f32.mxu0 %v128
    %3233 = vmatmul.mubr.f32.gmra.mrb[0].mxu0 %v127
    %v3234 = vpop.f32.mrb[0].mxu0
    %v3235 = vadd.f32 %v3164, %v3234
    %v3236 = vpop.f32.mrb[0].mxu0
    %v3237 = vadd.f32 %v3166, %v3236
    %3238 = vdwg.mxu0
    %3239 = vmatprep.subr.mxu0 %v2819
    %3240 = vmatpush1.msra.mxu0 %v2818
    %3241 = vmatprep.subr.mxu0 %v2847
    %3242 = vmatpush1.msra.mxu0 %v2846
    %3243 = vmatprep.subr.mxu0 0.0
    %3244 = vmatpush1.msra.mxu0 0.0
    %3245 = vmatprep.subr.mxu0 0.0
    %3246 = vmatpush1.msra.mxu0 0.0
    %3247 = vmatprep.subr.mxu0 0.0
    %3248 = vmatpush1.msra.mxu0 0.0
    %3249 = vmatprep.subr.mxu0 0.0
    %3250 = vmatpush1.msra.mxu0 0.0
    %3251 = vmatprep.subr.mxu0 0.0
    %3252 = vmatpush1.msra.mxu0 0.0
    %3253 = vmatprep.subr.mxu0 0.0
    %3254 = vmatpush1.msra.mxu0 0.0
    %3255 = vmatprep.subr.mxu0 0.0
    %3256 = vmatpush1.msra.mxu0 0.0
    %3257 = vmatprep.subr.mxu0 0.0
    %3258 = vmatpush1.msra.mxu0 0.0
    %3259 = vmatprep.subr.mxu0 0.0
    %3260 = vmatpush1.msra.mxu0 0.0
    %3261 = vmatprep.subr.mxu0 0.0
    %3262 = vmatpush1.msra.mxu0 0.0
    %3263 = vmatprep.subr.mxu0 0.0
    %3264 = vmatpush1.msra.mxu0 0.0
    %3265 = vmatprep.subr.mxu0 0.0
    %3266 = vmatpush1.msra.mxu0 0.0
    %3267 = vmatprep.subr.mxu0 0.0
    %3268 = vmatpush1.msra.mxu0 0.0
    %3269 = vmatprep.subr.mxu0 0.0
    %3270 = vmatpush1.msra.mxu0 0.0
    %3271 = vmatprep.subr.mxu0 0.0
    %3272 = vmatpush1.msra.mxu0 0.0
    %3273 = vmatprep.subr.mxu0 0.0
    %3274 = vmatpush1.msra.mxu0 0.0
    %3275 = vmatprep.subr.mxu0 0.0
    %3276 = vmatpush1.msra.mxu0 0.0
    %3277 = vmatprep.subr.mxu0 0.0
    %3278 = vmatpush1.msra.mxu0 0.0
    %3279 = vmatprep.subr.mxu0 0.0
    %3280 = vmatpush1.msra.mxu0 0.0
    %3281 = vmatprep.subr.mxu0 0.0
    %3282 = vmatpush1.msra.mxu0 0.0
    %3283 = vmatprep.subr.mxu0 0.0
    %3284 = vmatpush1.msra.mxu0 0.0
    %3285 = vmatprep.subr.mxu0 0.0
    %3286 = vmatpush1.msra.mxu0 0.0
    %3287 = vmatprep.subr.mxu0 0.0
    %3288 = vmatpush1.msra.mxu0 0.0
    %3289 = vmatprep.subr.mxu0 0.0
    %3290 = vmatpush1.msra.mxu0 0.0
    %3291 = vmatprep.subr.mxu0 0.0
    %3292 = vmatpush1.msra.mxu0 0.0
    %3293 = vmatprep.subr.mxu0 0.0
    %3294 = vmatpush1.msra.mxu0 0.0
    %3295 = vmatprep.subr.mxu0 0.0
    %3296 = vmatpush1.msra.mxu0 0.0
    %3297 = vmatprep.subr.mxu0 0.0
    %3298 = vmatpush1.msra.mxu0 0.0
    %3299 = vmatprep.subr.mxu0 0.0
    %3300 = vmatpush1.msra.mxu0 0.0
    %3301 = vmatprep.subr.mxu0 0.0
    %3302 = vmatpush1.msra.mxu0 0.0
    %3303 = vmatprep.mubr.f32.mxu0 0.0
    %3304 = vmatmul.mubr.f32.gmra.mrb[0].mxu0 %v3024
    %v3305 = vpop.f32.mrb[0].mxu0
    %v3306 = vadd.f32 %v3235, %v3305
    %v3307 = vpop.f32.mrb[0].mxu0
    %v3308 = vadd.f32 %v3237, %v3307
    %3309 = vdwg.mxu0
    %3310 = vmatprep.subr.mxu0 %v133
    %3311 = vmatpush1.msra.mxu0 %v132
    %3312 = vmatprep.subr.mxu0 %v161
    %3313 = vmatpush1.msra.mxu0 %v160
    %3314 = vmatprep.subr.mxu0 %v189
    %3315 = vmatpush1.msra.mxu0 %v188
    %3316 = vmatprep.subr.mxu0 %v217
    %3317 = vmatpush1.msra.mxu0 %v216
    %3318 = vmatprep.subr.mxu0 %v245
    %3319 = vmatpush1.msra.mxu0 %v244
    %3320 = vmatprep.subr.mxu0 %v273
    %3321 = vmatpush1.msra.mxu0 %v272
    %3322 = vmatprep.subr.mxu0 %v301
    %3323 = vmatpush1.msra.mxu0 %v300
    %3324 = vmatprep.subr.mxu0 %v329
    %3325 = vmatpush1.msra.mxu0 %v328
    %3326 = vmatprep.subr.mxu0 %v357
    %3327 = vmatpush1.msra.mxu0 %v356
    %3328 = vmatprep.subr.mxu0 %v385
    %3329 = vmatpush1.msra.mxu0 %v384
    %3330 = vmatprep.subr.mxu0 %v413
    %3331 = vmatpush1.msra.mxu0 %v412
    %3332 = vmatprep.subr.mxu0 %v441
    %3333 = vmatpush1.msra.mxu0 %v440
    %3334 = vmatprep.subr.mxu0 %v469
    %3335 = vmatpush1.msra.mxu0 %v468
    %3336 = vmatprep.subr.mxu0 %v497
    %3337 = vmatpush1.msra.mxu0 %v496
    %3338 = vmatprep.subr.mxu0 %v525
    %3339 = vmatpush1.msra.mxu0 %v524
    %3340 = vmatprep.subr.mxu0 %v553
    %3341 = vmatpush1.msra.mxu0 %v552
    %3342 = vmatprep.subr.mxu0 %v581
    %3343 = vmatpush1.msra.mxu0 %v580
    %3344 = vmatprep.subr.mxu0 %v609
    %3345 = vmatpush1.msra.mxu0 %v608
    %3346 = vmatprep.subr.mxu0 %v637
    %3347 = vmatpush1.msra.mxu0 %v636
    %3348 = vmatprep.subr.mxu0 %v665
    %3349 = vmatpush1.msra.mxu0 %v664
    %3350 = vmatprep.subr.mxu0 %v693
    %3351 = vmatpush1.msra.mxu0 %v692
    %3352 = vmatprep.subr.mxu0 %v721
    %3353 = vmatpush1.msra.mxu0 %v720
    %3354 = vmatprep.subr.mxu0 %v749
    %3355 = vmatpush1.msra.mxu0 %v748
    %3356 = vmatprep.subr.mxu0 %v777
    %3357 = vmatpush1.msra.mxu0 %v776
    %3358 = vmatprep.subr.mxu0 %v805
    %3359 = vmatpush1.msra.mxu0 %v804
    %3360 = vmatprep.subr.mxu0 %v833
    %3361 = vmatpush1.msra.mxu0 %v832
    %3362 = vmatprep.subr.mxu0 %v861
    %3363 = vmatpush1.msra.mxu0 %v860
    %3364 = vmatprep.subr.mxu0 %v889
    %3365 = vmatpush1.msra.mxu0 %v888
    %3366 = vmatprep.subr.mxu0 %v917
    %3367 = vmatpush1.msra.mxu0 %v916
    %3368 = vmatprep.subr.mxu0 %v945
    %3369 = vmatpush1.msra.mxu0 %v944
    %3370 = vmatprep.subr.mxu0 %v973
    %3371 = vmatpush1.msra.mxu0 %v972
    %3372 = vmatprep.subr.mxu0 %v1001
    %3373 = vmatpush1.msra.mxu0 %v1000
    %3374 = vmatprep.mubr.f32.mxu0 %v124
    %3375 = vmatmul.mubr.f32.gmra.mrb[0].mxu0 %v123
    %v3376 = vpop.f32.mrb[0].mxu0
    %v3377 = vadd.f32 %v2893, %v3376
    %v3378 = vpop.f32.mrb[0].mxu0
    %v3379 = vadd.f32 %v2897, %v3378
    %3380 = vdwg.mxu0
    %3381 = vmatprep.subr.mxu0 %v1029
    %3382 = vmatpush1.msra.mxu0 %v1028
    %3383 = vmatprep.subr.mxu0 %v1057
    %3384 = vmatpush1.msra.mxu0 %v1056
    %3385 = vmatprep.subr.mxu0 %v1085
    %3386 = vmatpush1.msra.mxu0 %v1084
    %3387 = vmatprep.subr.mxu0 %v1113
    %3388 = vmatpush1.msra.mxu0 %v1112
    %3389 = vmatprep.subr.mxu0 %v1141
    %3390 = vmatpush1.msra.mxu0 %v1140
    %3391 = vmatprep.subr.mxu0 %v1169
    %3392 = vmatpush1.msra.mxu0 %v1168
    %3393 = vmatprep.subr.mxu0 %v1197
    %3394 = vmatpush1.msra.mxu0 %v1196
    %3395 = vmatprep.subr.mxu0 %v1225
    %3396 = vmatpush1.msra.mxu0 %v1224
    %3397 = vmatprep.subr.mxu0 %v1253
    %3398 = vmatpush1.msra.mxu0 %v1252
    %3399 = vmatprep.subr.mxu0 %v1281
    %3400 = vmatpush1.msra.mxu0 %v1280
    %3401 = vmatprep.subr.mxu0 %v1309
    %3402 = vmatpush1.msra.mxu0 %v1308
    %3403 = vmatprep.subr.mxu0 %v1337
    %3404 = vmatpush1.msra.mxu0 %v1336
    %3405 = vmatprep.subr.mxu0 %v1365
    %3406 = vmatpush1.msra.mxu0 %v1364
    %3407 = vmatprep.subr.mxu0 %v1393
    %3408 = vmatpush1.msra.mxu0 %v1392
    %3409 = vmatprep.subr.mxu0 %v1421
    %3410 = vmatpush1.msra.mxu0 %v1420
    %3411 = vmatprep.subr.mxu0 %v1449
    %3412 = vmatpush1.msra.mxu0 %v1448
    %3413 = vmatprep.subr.mxu0 %v1477
    %3414 = vmatpush1.msra.mxu0 %v1476
    %3415 = vmatprep.subr.mxu0 %v1505
    %3416 = vmatpush1.msra.mxu0 %v1504
    %3417 = vmatprep.subr.mxu0 %v1533
    %3418 = vmatpush1.msra.mxu0 %v1532
    %3419 = vmatprep.subr.mxu0 %v1561
    %3420 = vmatpush1.msra.mxu0 %v1560
    %3421 = vmatprep.subr.mxu0 %v1589
    %3422 = vmatpush1.msra.mxu0 %v1588
    %3423 = vmatprep.subr.mxu0 %v1617
    %3424 = vmatpush1.msra.mxu0 %v1616
    %3425 = vmatprep.subr.mxu0 %v1645
    %3426 = vmatpush1.msra.mxu0 %v1644
    %3427 = vmatprep.subr.mxu0 %v1673
    %3428 = vmatpush1.msra.mxu0 %v1672
    %3429 = vmatprep.subr.mxu0 %v1701
    %3430 = vmatpush1.msra.mxu0 %v1700
    %3431 = vmatprep.subr.mxu0 %v1729
    %3432 = vmatpush1.msra.mxu0 %v1728
    %3433 = vmatprep.subr.mxu0 %v1757
    %3434 = vmatpush1.msra.mxu0 %v1756
    %3435 = vmatprep.subr.mxu0 %v1785
    %3436 = vmatpush1.msra.mxu0 %v1784
    %3437 = vmatprep.subr.mxu0 %v1813
    %3438 = vmatpush1.msra.mxu0 %v1812
    %3439 = vmatprep.subr.mxu0 %v1841
    %3440 = vmatpush1.msra.mxu0 %v1840
    %3441 = vmatprep.subr.mxu0 %v1869
    %3442 = vmatpush1.msra.mxu0 %v1868
    %3443 = vmatprep.subr.mxu0 %v1897
    %3444 = vmatpush1.msra.mxu0 %v1896
    %3445 = vmatprep.mubr.f32.mxu0 %v126
    %3446 = vmatmul.mubr.f32.gmra.mrb[0].mxu0 %v125
    %v3447 = vpop.f32.mrb[0].mxu0
    %v3448 = vadd.f32 %v3377, %v3447
    %v3449 = vpop.f32.mrb[0].mxu0
    %v3450 = vadd.f32 %v3379, %v3449
    %3451 = vdwg.mxu0
    %3452 = vmatprep.subr.mxu0 %v1925
    %3453 = vmatpush1.msra.mxu0 %v1924
    %3454 = vmatprep.subr.mxu0 %v1953
    %3455 = vmatpush1.msra.mxu0 %v1952
    %3456 = vmatprep.subr.mxu0 %v1981
    %3457 = vmatpush1.msra.mxu0 %v1980
    %3458 = vmatprep.subr.mxu0 %v2009
    %3459 = vmatpush1.msra.mxu0 %v2008
    %3460 = vmatprep.subr.mxu0 %v2037
    %3461 = vmatpush1.msra.mxu0 %v2036
    %3462 = vmatprep.subr.mxu0 %v2065
    %3463 = vmatpush1.msra.mxu0 %v2064
    %3464 = vmatprep.subr.mxu0 %v2093
    %3465 = vmatpush1.msra.mxu0 %v2092
    %3466 = vmatprep.subr.mxu0 %v2121
    %3467 = vmatpush1.msra.mxu0 %v2120
    %3468 = vmatprep.subr.mxu0 %v2149
    %3469 = vmatpush1.msra.mxu0 %v2148
    %3470 = vmatprep.subr.mxu0 %v2177
    %3471 = vmatpush1.msra.mxu0 %v2176
    %3472 = vmatprep.subr.mxu0 %v2205
    %3473 = vmatpush1.msra.mxu0 %v2204
    %3474 = vmatprep.subr.mxu0 %v2233
    %3475 = vmatpush1.msra.mxu0 %v2232
    %3476 = vmatprep.subr.mxu0 %v2261
    %3477 = vmatpush1.msra.mxu0 %v2260
    %3478 = vmatprep.subr.mxu0 %v2289
    %3479 = vmatpush1.msra.mxu0 %v2288
    %3480 = vmatprep.subr.mxu0 %v2317
    %3481 = vmatpush1.msra.mxu0 %v2316
    %3482 = vmatprep.subr.mxu0 %v2345
    %3483 = vmatpush1.msra.mxu0 %v2344
    %3484 = vmatprep.subr.mxu0 %v2373
    %3485 = vmatpush1.msra.mxu0 %v2372
    %3486 = vmatprep.subr.mxu0 %v2401
    %3487 = vmatpush1.msra.mxu0 %v2400
    %3488 = vmatprep.subr.mxu0 %v2429
    %3489 = vmatpush1.msra.mxu0 %v2428
    %3490 = vmatprep.subr.mxu0 %v2457
    %3491 = vmatpush1.msra.mxu0 %v2456
    %3492 = vmatprep.subr.mxu0 %v2485
    %3493 = vmatpush1.msra.mxu0 %v2484
    %3494 = vmatprep.subr.mxu0 %v2513
    %3495 = vmatpush1.msra.mxu0 %v2512
    %3496 = vmatprep.subr.mxu0 %v2541
    %3497 = vmatpush1.msra.mxu0 %v2540
    %3498 = vmatprep.subr.mxu0 %v2569
    %3499 = vmatpush1.msra.mxu0 %v2568
    %3500 = vmatprep.subr.mxu0 %v2597
    %3501 = vmatpush1.msra.mxu0 %v2596
    %3502 = vmatprep.subr.mxu0 %v2625
    %3503 = vmatpush1.msra.mxu0 %v2624
    %3504 = vmatprep.subr.mxu0 %v2653
    %3505 = vmatpush1.msra.mxu0 %v2652
    %3506 = vmatprep.subr.mxu0 %v2681
    %3507 = vmatpush1.msra.mxu0 %v2680
    %3508 = vmatprep.subr.mxu0 %v2709
    %3509 = vmatpush1.msra.mxu0 %v2708
    %3510 = vmatprep.subr.mxu0 %v2737
    %3511 = vmatpush1.msra.mxu0 %v2736
    %3512 = vmatprep.subr.mxu0 %v2765
    %3513 = vmatpush1.msra.mxu0 %v2764
    %3514 = vmatprep.subr.mxu0 %v2793
    %3515 = vmatpush1.msra.mxu0 %v2792
    %3516 = vmatprep.mubr.f32.mxu0 %v128
    %3517 = vmatmul.mubr.f32.gmra.mrb[0].mxu0 %v127
    %v3518 = vpop.f32.mrb[0].mxu0
    %v3519 = vadd.f32 %v3448, %v3518
    %v3520 = vpop.f32.mrb[0].mxu0
    %v3521 = vadd.f32 %v3450, %v3520
    %3522 = vdwg.mxu0
    %3523 = vmatprep.subr.mxu0 %v2821
    %3524 = vmatpush1.msra.mxu0 %v2820
    %3525 = vmatprep.subr.mxu0 %v2849
    %3526 = vmatpush1.msra.mxu0 %v2848
    %3527 = vmatprep.subr.mxu0 0.0
    %3528 = vmatpush1.msra.mxu0 0.0
    %3529 = vmatprep.subr.mxu0 0.0
    %3530 = vmatpush1.msra.mxu0 0.0
    %3531 = vmatprep.subr.mxu0 0.0
    %3532 = vmatpush1.msra.mxu0 0.0
    %3533 = vmatprep.subr.mxu0 0.0
    %3534 = vmatpush1.msra.mxu0 0.0
    %3535 = vmatprep.subr.mxu0 0.0
    %3536 = vmatpush1.msra.mxu0 0.0
    %3537 = vmatprep.subr.mxu0 0.0
    %3538 = vmatpush1.msra.mxu0 0.0
    %3539 = vmatprep.subr.mxu0 0.0
    %3540 = vmatpush1.msra.mxu0 0.0
    %3541 = vmatprep.subr.mxu0 0.0
    %3542 = vmatpush1.msra.mxu0 0.0
    %3543 = vmatprep.subr.mxu0 0.0
    %3544 = vmatpush1.msra.mxu0 0.0
    %3545 = vmatprep.subr.mxu0 0.0
    %3546 = vmatpush1.msra.mxu0 0.0
    %3547 = vmatprep.subr.mxu0 0.0
    %3548 = vmatpush1.msra.mxu0 0.0
    %3549 = vmatprep.subr.mxu0 0.0
    %3550 = vmatpush1.msra.mxu0 0.0
    %3551 = vmatprep.subr.mxu0 0.0
    %3552 = vmatpush1.msra.mxu0 0.0
    %3553 = vmatprep.subr.mxu0 0.0
    %3554 = vmatpush1.msra.mxu0 0.0
    %3555 = vmatprep.subr.mxu0 0.0
    %3556 = vmatpush1.msra.mxu0 0.0
    %3557 = vmatprep.subr.mxu0 0.0
    %3558 = vmatpush1.msra.mxu0 0.0
    %3559 = vmatprep.subr.mxu0 0.0
    %3560 = vmatpush1.msra.mxu0 0.0
    %3561 = vmatprep.subr.mxu0 0.0
    %3562 = vmatpush1.msra.mxu0 0.0
    %3563 = vmatprep.subr.mxu0 0.0
    %3564 = vmatpush1.msra.mxu0 0.0
    %3565 = vmatprep.subr.mxu0 0.0
    %3566 = vmatpush1.msra.mxu0 0.0
    %3567 = vmatprep.subr.mxu0 0.0
    %3568 = vmatpush1.msra.mxu0 0.0
    %3569 = vmatprep.subr.mxu0 0.0
    %3570 = vmatpush1.msra.mxu0 0.0
    %3571 = vmatprep.subr.mxu0 0.0
    %3572 = vmatpush1.msra.mxu0 0.0
    %3573 = vmatprep.subr.mxu0 0.0
    %3574 = vmatpush1.msra.mxu0 0.0
    %3575 = vmatprep.subr.mxu0 0.0
    %3576 = vmatpush1.msra.mxu0 0.0
    %3577 = vmatprep.subr.mxu0 0.0
    %3578 = vmatpush1.msra.mxu0 0.0
    %3579 = vmatprep.subr.mxu0 0.0
    %3580 = vmatpush1.msra.mxu0 0.0
    %3581 = vmatprep.subr.mxu0 0.0
    %3582 = vmatpush1.msra.mxu0 0.0
    %3583 = vmatprep.subr.mxu0 0.0
    %3584 = vmatpush1.msra.mxu0 0.0
    %3585 = vmatprep.subr.mxu0 0.0
    %3586 = vmatpush1.msra.mxu0 0.0
    %3587 = vmatprep.mubr.f32.mxu0 0.0
    %3588 = vmatmul.mubr.f32.gmra.mrb[0].mxu0 %v3024
    %v3589 = vpop.f32.mrb[0].mxu0
    %v3590 = vadd.f32 %v3519, %v3589
    %v3591 = vpop.f32.mrb[0].mxu0
    %v3592 = vadd.f32 %v3521, %v3591
    %3593 = vdwg.mxu0
    %3594 = vmatprep.subr.mxu0 %v135
    %3595 = vmatpush1.msra.mxu0 %v134
    %3596 = vmatprep.subr.mxu0 %v163
    %3597 = vmatpush1.msra.mxu0 %v162
    %3598 = vmatprep.subr.mxu0 %v191
    %3599 = vmatpush1.msra.mxu0 %v190
    %3600 = vmatprep.subr.mxu0 %v219
    %3601 = vmatpush1.msra.mxu0 %v218
    %3602 = vmatprep.subr.mxu0 %v247
    %3603 = vmatpush1.msra.mxu0 %v246
    %3604 = vmatprep.subr.mxu0 %v275
    %3605 = vmatpush1.msra.mxu0 %v274
    %3606 = vmatprep.subr.mxu0 %v303
    %3607 = vmatpush1.msra.mxu0 %v302
    %3608 = vmatprep.subr.mxu0 %v331
    %3609 = vmatpush1.msra.mxu0 %v330
    %3610 = vmatprep.subr.mxu0 %v359
    %3611 = vmatpush1.msra.mxu0 %v358
    %3612 = vmatprep.subr.mxu0 %v387
    %3613 = vmatpush1.msra.mxu0 %v386
    %3614 = vmatprep.subr.mxu0 %v415
    %3615 = vmatpush1.msra.mxu0 %v414
    %3616 = vmatprep.subr.mxu0 %v443
    %3617 = vmatpush1.msra.mxu0 %v442
    %3618 = vmatprep.subr.mxu0 %v471
    %3619 = vmatpush1.msra.mxu0 %v470
    %3620 = vmatprep.subr.mxu0 %v499
    %3621 = vmatpush1.msra.mxu0 %v498
    %3622 = vmatprep.subr.mxu0 %v527
    %3623 = vmatpush1.msra.mxu0 %v526
    %3624 = vmatprep.subr.mxu0 %v555
    %3625 = vmatpush1.msra.mxu0 %v554
    %3626 = vmatprep.subr.mxu0 %v583
    %3627 = vmatpush1.msra.mxu0 %v582
    %3628 = vmatprep.subr.mxu0 %v611
    %3629 = vmatpush1.msra.mxu0 %v610
    %3630 = vmatprep.subr.mxu0 %v639
    %3631 = vmatpush1.msra.mxu0 %v638
    %3632 = vmatprep.subr.mxu0 %v667
    %3633 = vmatpush1.msra.mxu0 %v666
    %3634 = vmatprep.subr.mxu0 %v695
    %3635 = vmatpush1.msra.mxu0 %v694
    %3636 = vmatprep.subr.mxu0 %v723
    %3637 = vmatpush1.msra.mxu0 %v722
    %3638 = vmatprep.subr.mxu0 %v751
    %3639 = vmatpush1.msra.mxu0 %v750
    %3640 = vmatprep.subr.mxu0 %v779
    %3641 = vmatpush1.msra.mxu0 %v778
    %3642 = vmatprep.subr.mxu0 %v807
    %3643 = vmatpush1.msra.mxu0 %v806
    %3644 = vmatprep.subr.mxu0 %v835
    %3645 = vmatpush1.msra.mxu0 %v834
    %3646 = vmatprep.subr.mxu0 %v863
    %3647 = vmatpush1.msra.mxu0 %v862
    %3648 = vmatprep.subr.mxu0 %v891
    %3649 = vmatpush1.msra.mxu0 %v890
    %3650 = vmatprep.subr.mxu0 %v919
    %3651 = vmatpush1.msra.mxu0 %v918
    %3652 = vmatprep.subr.mxu0 %v947
    %3653 = vmatpush1.msra.mxu0 %v946
    %3654 = vmatprep.subr.mxu0 %v975
    %3655 = vmatpush1.msra.mxu0 %v974
    %3656 = vmatprep.subr.mxu0 %v1003
    %3657 = vmatpush1.msra.mxu0 %v1002
    %3658 = vmatprep.mubr.f32.mxu0 %v124
    %3659 = vmatmul.mubr.f32.gmra.mrb[0].mxu0 %v123
    %v3660 = vpop.f32.mrb[0].mxu0
    %v3661 = vadd.f32 %v2901, %v3660
    %v3662 = vpop.f32.mrb[0].mxu0
    %v3663 = vadd.f32 %v2905, %v3662
    %3664 = vdwg.mxu0
    %3665 = vmatprep.subr.mxu0 %v1031
    %3666 = vmatpush1.msra.mxu0 %v1030
    %3667 = vmatprep.subr.mxu0 %v1059
    %3668 = vmatpush1.msra.mxu0 %v1058
    %3669 = vmatprep.subr.mxu0 %v1087
    %3670 = vmatpush1.msra.mxu0 %v1086
    %3671 = vmatprep.subr.mxu0 %v1115
    %3672 = vmatpush1.msra.mxu0 %v1114
    %3673 = vmatprep.subr.mxu0 %v1143
    %3674 = vmatpush1.msra.mxu0 %v1142
    %3675 = vmatprep.subr.mxu0 %v1171
    %3676 = vmatpush1.msra.mxu0 %v1170
    %3677 = vmatprep.subr.mxu0 %v1199
    %3678 = vmatpush1.msra.mxu0 %v1198
    %3679 = vmatprep.subr.mxu0 %v1227
    %3680 = vmatpush1.msra.mxu0 %v1226
    %3681 = vmatprep.subr.mxu0 %v1255
    %3682 = vmatpush1.msra.mxu0 %v1254
    %3683 = vmatprep.subr.mxu0 %v1283
    %3684 = vmatpush1.msra.mxu0 %v1282
    %3685 = vmatprep.subr.mxu0 %v1311
    %3686 = vmatpush1.msra.mxu0 %v1310
    %3687 = vmatprep.subr.mxu0 %v1339
    %3688 = vmatpush1.msra.mxu0 %v1338
    %3689 = vmatprep.subr.mxu0 %v1367
    %3690 = vmatpush1.msra.mxu0 %v1366
    %3691 = vmatprep.subr.mxu0 %v1395
    %3692 = vmatpush1.msra.mxu0 %v1394
    %3693 = vmatprep.subr.mxu0 %v1423
    %3694 = vmatpush1.msra.mxu0 %v1422
    %3695 = vmatprep.subr.mxu0 %v1451
    %3696 = vmatpush1.msra.mxu0 %v1450
    %3697 = vmatprep.subr.mxu0 %v1479
    %3698 = vmatpush1.msra.mxu0 %v1478
    %3699 = vmatprep.subr.mxu0 %v1507
    %3700 = vmatpush1.msra.mxu0 %v1506
    %3701 = vmatprep.subr.mxu0 %v1535
    %3702 = vmatpush1.msra.mxu0 %v1534
    %3703 = vmatprep.subr.mxu0 %v1563
    %3704 = vmatpush1.msra.mxu0 %v1562
    %3705 = vmatprep.subr.mxu0 %v1591
    %3706 = vmatpush1.msra.mxu0 %v1590
    %3707 = vmatprep.subr.mxu0 %v1619
    %3708 = vmatpush1.msra.mxu0 %v1618
    %3709 = vmatprep.subr.mxu0 %v1647
    %3710 = vmatpush1.msra.mxu0 %v1646
    %3711 = vmatprep.subr.mxu0 %v1675
    %3712 = vmatpush1.msra.mxu0 %v1674
    %3713 = vmatprep.subr.mxu0 %v1703
    %3714 = vmatpush1.msra.mxu0 %v1702
    %3715 = vmatprep.subr.mxu0 %v1731
    %3716 = vmatpush1.msra.mxu0 %v1730
    %3717 = vmatprep.subr.mxu0 %v1759
    %3718 = vmatpush1.msra.mxu0 %v1758
    %3719 = vmatprep.subr.mxu0 %v1787
    %3720 = vmatpush1.msra.mxu0 %v1786
    %3721 = vmatprep.subr.mxu0 %v1815
    %3722 = vmatpush1.msra.mxu0 %v1814
    %3723 = vmatprep.subr.mxu0 %v1843
    %3724 = vmatpush1.msra.mxu0 %v1842
    %3725 = vmatprep.subr.mxu0 %v1871
    %3726 = vmatpush1.msra.mxu0 %v1870
    %3727 = vmatprep.subr.mxu0 %v1899
    %3728 = vmatpush1.msra.mxu0 %v1898
    %3729 = vmatprep.mubr.f32.mxu0 %v126
    %3730 = vmatmul.mubr.f32.gmra.mrb[0].mxu0 %v125
    %v3731 = vpop.f32.mrb[0].mxu0
    %v3732 = vadd.f32 %v3661, %v3731
    %v3733 = vpop.f32.mrb[0].mxu0
    %v3734 = vadd.f32 %v3663, %v3733
    %3735 = vdwg.mxu0
    %3736 = vmatprep.subr.mxu0 %v1927
    %3737 = vmatpush1.msra.mxu0 %v1926
    %3738 = vmatprep.subr.mxu0 %v1955
    %3739 = vmatpush1.msra.mxu0 %v1954
    %3740 = vmatprep.subr.mxu0 %v1983
    %3741 = vmatpush1.msra.mxu0 %v1982
    %3742 = vmatprep.subr.mxu0 %v2011
    %3743 = vmatpush1.msra.mxu0 %v2010
    %3744 = vmatprep.subr.mxu0 %v2039
    %3745 = vmatpush1.msra.mxu0 %v2038
    %3746 = vmatprep.subr.mxu0 %v2067
    %3747 = vmatpush1.msra.mxu0 %v2066
    %3748 = vmatprep.subr.mxu0 %v2095
    %3749 = vmatpush1.msra.mxu0 %v2094
    %3750 = vmatprep.subr.mxu0 %v2123
    %3751 = vmatpush1.msra.mxu0 %v2122
    %3752 = vmatprep.subr.mxu0 %v2151
    %3753 = vmatpush1.msra.mxu0 %v2150
    %3754 = vmatprep.subr.mxu0 %v2179
    %3755 = vmatpush1.msra.mxu0 %v2178
    %3756 = vmatprep.subr.mxu0 %v2207
    %3757 = vmatpush1.msra.mxu0 %v2206
    %3758 = vmatprep.subr.mxu0 %v2235
    %3759 = vmatpush1.msra.mxu0 %v2234
    %3760 = vmatprep.subr.mxu0 %v2263
    %3761 = vmatpush1.msra.mxu0 %v2262
    %3762 = vmatprep.subr.mxu0 %v2291
    %3763 = vmatpush1.msra.mxu0 %v2290
    %3764 = vmatprep.subr.mxu0 %v2319
    %3765 = vmatpush1.msra.mxu0 %v2318
    %3766 = vmatprep.subr.mxu0 %v2347
    %3767 = vmatpush1.msra.mxu0 %v2346
    %3768 = vmatprep.subr.mxu0 %v2375
    %3769 = vmatpush1.msra.mxu0 %v2374
    %3770 = vmatprep.subr.mxu0 %v2403
    %3771 = vmatpush1.msra.mxu0 %v2402
    %3772 = vmatprep.subr.mxu0 %v2431
    %3773 = vmatpush1.msra.mxu0 %v2430
    %3774 = vmatprep.subr.mxu0 %v2459
    %3775 = vmatpush1.msra.mxu0 %v2458
    %3776 = vmatprep.subr.mxu0 %v2487
    %3777 = vmatpush1.msra.mxu0 %v2486
    %3778 = vmatprep.subr.mxu0 %v2515
    %3779 = vmatpush1.msra.mxu0 %v2514
    %3780 = vmatprep.subr.mxu0 %v2543
    %3781 = vmatpush1.msra.mxu0 %v2542
    %3782 = vmatprep.subr.mxu0 %v2571
    %3783 = vmatpush1.msra.mxu0 %v2570
    %3784 = vmatprep.subr.mxu0 %v2599
    %3785 = vmatpush1.msra.mxu0 %v2598
    %3786 = vmatprep.subr.mxu0 %v2627
    %3787 = vmatpush1.msra.mxu0 %v2626
    %3788 = vmatprep.subr.mxu0 %v2655
    %3789 = vmatpush1.msra.mxu0 %v2654
    %3790 = vmatprep.subr.mxu0 %v2683
    %3791 = vmatpush1.msra.mxu0 %v2682
    %3792 = vmatprep.subr.mxu0 %v2711
    %3793 = vmatpush1.msra.mxu0 %v2710
    %3794 = vmatprep.subr.mxu0 %v2739
    %3795 = vmatpush1.msra.mxu0 %v2738
    %3796 = vmatprep.subr.mxu0 %v2767
    %3797 = vmatpush1.msra.mxu0 %v2766
    %3798 = vmatprep.subr.mxu0 %v2795
    %3799 = vmatpush1.msra.mxu0 %v2794
    %3800 = vmatprep.mubr.f32.mxu0 %v128
    %3801 = vmatmul.mubr.f32.gmra.mrb[0].mxu0 %v127
    %v3802 = vpop.f32.mrb[0].mxu0
    %v3803 = vadd.f32 %v3732, %v3802
    %v3804 = vpop.f32.mrb[0].mxu0
    %v3805 = vadd.f32 %v3734, %v3804
    %3806 = vdwg.mxu0
    %3807 = vmatprep.subr.mxu0 %v2823
    %3808 = vmatpush1.msra.mxu0 %v2822
    %3809 = vmatprep.subr.mxu0 %v2851
    %3810 = vmatpush1.msra.mxu0 %v2850
    %3811 = vmatprep.subr.mxu0 0.0
    %3812 = vmatpush1.msra.mxu0 0.0
    %3813 = vmatprep.subr.mxu0 0.0
    %3814 = vmatpush1.msra.mxu0 0.0
    %3815 = vmatprep.subr.mxu0 0.0
    %3816 = vmatpush1.msra.mxu0 0.0
    %3817 = vmatprep.subr.mxu0 0.0
    %3818 = vmatpush1.msra.mxu0 0.0
    %3819 = vmatprep.subr.mxu0 0.0
    %3820 = vmatpush1.msra.mxu0 0.0
    %3821 = vmatprep.subr.mxu0 0.0
    %3822 = vmatpush1.msra.mxu0 0.0
    %3823 = vmatprep.subr.mxu0 0.0
    %3824 = vmatpush1.msra.mxu0 0.0
    %3825 = vmatprep.subr.mxu0 0.0
    %3826 = vmatpush1.msra.mxu0 0.0
    %3827 = vmatprep.subr.mxu0 0.0
    %3828 = vmatpush1.msra.mxu0 0.0
    %3829 = vmatprep.subr.mxu0 0.0
    %3830 = vmatpush1.msra.mxu0 0.0
    %3831 = vmatprep.subr.mxu0 0.0
    %3832 = vmatpush1.msra.mxu0 0.0
    %3833 = vmatprep.subr.mxu0 0.0
    %3834 = vmatpush1.msra.mxu0 0.0
    %3835 = vmatprep.subr.mxu0 0.0
    %3836 = vmatpush1.msra.mxu0 0.0
    %3837 = vmatprep.subr.mxu0 0.0
    %3838 = vmatpush1.msra.mxu0 0.0
    %3839 = vmatprep.subr.mxu0 0.0
    %3840 = vmatpush1.msra.mxu0 0.0
    %3841 = vmatprep.subr.mxu0 0.0
    %3842 = vmatpush1.msra.mxu0 0.0
    %3843 = vmatprep.subr.mxu0 0.0
    %3844 = vmatpush1.msra.mxu0 0.0
    %3845 = vmatprep.subr.mxu0 0.0
    %3846 = vmatpush1.msra.mxu0 0.0
    %3847 = vmatprep.subr.mxu0 0.0
    %3848 = vmatpush1.msra.mxu0 0.0
    %3849 = vmatprep.subr.mxu0 0.0
    %3850 = vmatpush1.msra.mxu0 0.0
    %3851 = vmatprep.subr.mxu0 0.0
    %3852 = vmatpush1.msra.mxu0 0.0
    %3853 = vmatprep.subr.mxu0 0.0
    %3854 = vmatpush1.msra.mxu0 0.0
    %3855 = vmatprep.subr.mxu0 0.0
    %3856 = vmatpush1.msra.mxu0 0.0
    %3857 = vmatprep.subr.mxu0 0.0
    %3858 = vmatpush1.msra.mxu0 0.0
    %3859 = vmatprep.subr.mxu0 0.0
    %3860 = vmatpush1.msra.mxu0 0.0
    %3861 = vmatprep.subr.mxu0 0.0
    %3862 = vmatpush1.msra.mxu0 0.0
    %3863 = vmatprep.subr.mxu0 0.0
    %3864 = vmatpush1.msra.mxu0 0.0
    %3865 = vmatprep.subr.mxu0 0.0
    %3866 = vmatpush1.msra.mxu0 0.0
    %3867 = vmatprep.subr.mxu0 0.0
    %3868 = vmatpush1.msra.mxu0 0.0
    %3869 = vmatprep.subr.mxu0 0.0
    %3870 = vmatpush1.msra.mxu0 0.0
    %3871 = vmatprep.mubr.f32.mxu0 0.0
    %3872 = vmatmul.mubr.f32.gmra.mrb[0].mxu0 %v3024
    %v3873 = vpop.f32.mrb[0].mxu0
    %v3874 = vadd.f32 %v3803, %v3873
    %v3875 = vpop.f32.mrb[0].mxu0
    %v3876 = vadd.f32 %v3805, %v3875
    %3877 = vdwg.mxu0
    %3878 = vmatprep.subr.mxu0 %v137
    %3879 = vmatpush1.msra.mxu0 %v136
    %3880 = vmatprep.subr.mxu0 %v165
    %3881 = vmatpush1.msra.mxu0 %v164
    %3882 = vmatprep.subr.mxu0 %v193
    %3883 = vmatpush1.msra.mxu0 %v192
    %3884 = vmatprep.subr.mxu0 %v221
    %3885 = vmatpush1.msra.mxu0 %v220
    %3886 = vmatprep.subr.mxu0 %v249
    %3887 = vmatpush1.msra.mxu0 %v248
    %3888 = vmatprep.subr.mxu0 %v277
    %3889 = vmatpush1.msra.mxu0 %v276
    %3890 = vmatprep.subr.mxu0 %v305
    %3891 = vmatpush1.msra.mxu0 %v304
    %3892 = vmatprep.subr.mxu0 %v333
    %3893 = vmatpush1.msra.mxu0 %v332
    %3894 = vmatprep.subr.mxu0 %v361
    %3895 = vmatpush1.msra.mxu0 %v360
    %3896 = vmatprep.subr.mxu0 %v389
    %3897 = vmatpush1.msra.mxu0 %v388
    %3898 = vmatprep.subr.mxu0 %v417
    %3899 = vmatpush1.msra.mxu0 %v416
    %3900 = vmatprep.subr.mxu0 %v445
    %3901 = vmatpush1.msra.mxu0 %v444
    %3902 = vmatprep.subr.mxu0 %v473
    %3903 = vmatpush1.msra.mxu0 %v472
    %3904 = vmatprep.subr.mxu0 %v501
    %3905 = vmatpush1.msra.mxu0 %v500
    %3906 = vmatprep.subr.mxu0 %v529
    %3907 = vmatpush1.msra.mxu0 %v528
    %3908 = vmatprep.subr.mxu0 %v557
    %3909 = vmatpush1.msra.mxu0 %v556
    %3910 = vmatprep.subr.mxu0 %v585
    %3911 = vmatpush1.msra.mxu0 %v584
    %3912 = vmatprep.subr.mxu0 %v613
    %3913 = vmatpush1.msra.mxu0 %v612
    %3914 = vmatprep.subr.mxu0 %v641
    %3915 = vmatpush1.msra.mxu0 %v640
    %3916 = vmatprep.subr.mxu0 %v669
    %3917 = vmatpush1.msra.mxu0 %v668
    %3918 = vmatprep.subr.mxu0 %v697
    %3919 = vmatpush1.msra.mxu0 %v696
    %3920 = vmatprep.subr.mxu0 %v725
    %3921 = vmatpush1.msra.mxu0 %v724
    %3922 = vmatprep.subr.mxu0 %v753
    %3923 = vmatpush1.msra.mxu0 %v752
    %3924 = vmatprep.subr.mxu0 %v781
    %3925 = vmatpush1.msra.mxu0 %v780
    %3926 = vmatprep.subr.mxu0 %v809
    %3927 = vmatpush1.msra.mxu0 %v808
    %3928 = vmatprep.subr.mxu0 %v837
    %3929 = vmatpush1.msra.mxu0 %v836
    %3930 = vmatprep.subr.mxu0 %v865
    %3931 = vmatpush1.msra.mxu0 %v864
    %3932 = vmatprep.subr.mxu0 %v893
    %3933 = vmatpush1.msra.mxu0 %v892
    %3934 = vmatprep.subr.mxu0 %v921
    %3935 = vmatpush1.msra.mxu0 %v920
    %3936 = vmatprep.subr.mxu0 %v949
    %3937 = vmatpush1.msra.mxu0 %v948
    %3938 = vmatprep.subr.mxu0 %v977
    %3939 = vmatpush1.msra.mxu0 %v976
    %3940 = vmatprep.subr.mxu0 %v1005
    %3941 = vmatpush1.msra.mxu0 %v1004
    %3942 = vmatprep.mubr.f32.mxu0 %v124
    %3943 = vmatmul.mubr.f32.gmra.mrb[0].mxu0 %v123
    %v3944 = vpop.f32.mrb[0].mxu0
    %v3945 = vadd.f32 %v2909, %v3944
    %v3946 = vpop.f32.mrb[0].mxu0
    %v3947 = vadd.f32 %v2913, %v3946
    %3948 = vdwg.mxu0
    %3949 = vmatprep.subr.mxu0 %v1033
    %3950 = vmatpush1.msra.mxu0 %v1032
    %3951 = vmatprep.subr.mxu0 %v1061
    %3952 = vmatpush1.msra.mxu0 %v1060
    %3953 = vmatprep.subr.mxu0 %v1089
    %3954 = vmatpush1.msra.mxu0 %v1088
    %3955 = vmatprep.subr.mxu0 %v1117
    %3956 = vmatpush1.msra.mxu0 %v1116
    %3957 = vmatprep.subr.mxu0 %v1145
    %3958 = vmatpush1.msra.mxu0 %v1144
    %3959 = vmatprep.subr.mxu0 %v1173
    %3960 = vmatpush1.msra.mxu0 %v1172
    %3961 = vmatprep.subr.mxu0 %v1201
    %3962 = vmatpush1.msra.mxu0 %v1200
    %3963 = vmatprep.subr.mxu0 %v1229
    %3964 = vmatpush1.msra.mxu0 %v1228
    %3965 = vmatprep.subr.mxu0 %v1257
    %3966 = vmatpush1.msra.mxu0 %v1256
    %3967 = vmatprep.subr.mxu0 %v1285
    %3968 = vmatpush1.msra.mxu0 %v1284
    %3969 = vmatprep.subr.mxu0 %v1313
    %3970 = vmatpush1.msra.mxu0 %v1312
    %3971 = vmatprep.subr.mxu0 %v1341
    %3972 = vmatpush1.msra.mxu0 %v1340
    %3973 = vmatprep.subr.mxu0 %v1369
    %3974 = vmatpush1.msra.mxu0 %v1368
    %3975 = vmatprep.subr.mxu0 %v1397
    %3976 = vmatpush1.msra.mxu0 %v1396
    %3977 = vmatprep.subr.mxu0 %v1425
    %3978 = vmatpush1.msra.mxu0 %v1424
    %3979 = vmatprep.subr.mxu0 %v1453
    %3980 = vmatpush1.msra.mxu0 %v1452
    %3981 = vmatprep.subr.mxu0 %v1481
    %3982 = vmatpush1.msra.mxu0 %v1480
    %3983 = vmatprep.subr.mxu0 %v1509
    %3984 = vmatpush1.msra.mxu0 %v1508
    %3985 = vmatprep.subr.mxu0 %v1537
    %3986 = vmatpush1.msra.mxu0 %v1536
    %3987 = vmatprep.subr.mxu0 %v1565
    %3988 = vmatpush1.msra.mxu0 %v1564
    %3989 = vmatprep.subr.mxu0 %v1593
    %3990 = vmatpush1.msra.mxu0 %v1592
    %3991 = vmatprep.subr.mxu0 %v1621
    %3992 = vmatpush1.msra.mxu0 %v1620
    %3993 = vmatprep.subr.mxu0 %v1649
    %3994 = vmatpush1.msra.mxu0 %v1648
    %3995 = vmatprep.subr.mxu0 %v1677
    %3996 = vmatpush1.msra.mxu0 %v1676
    %3997 = vmatprep.subr.mxu0 %v1705
    %3998 = vmatpush1.msra.mxu0 %v1704
    %3999 = vmatprep.subr.mxu0 %v1733
    %4000 = vmatpush1.msra.mxu0 %v1732
    %4001 = vmatprep.subr.mxu0 %v1761
    %4002 = vmatpush1.msra.mxu0 %v1760
    %4003 = vmatprep.subr.mxu0 %v1789
    %4004 = vmatpush1.msra.mxu0 %v1788
    %4005 = vmatprep.subr.mxu0 %v1817
    %4006 = vmatpush1.msra.mxu0 %v1816
    %4007 = vmatprep.subr.mxu0 %v1845
    %4008 = vmatpush1.msra.mxu0 %v1844
    %4009 = vmatprep.subr.mxu0 %v1873
    %4010 = vmatpush1.msra.mxu0 %v1872
    %4011 = vmatprep.subr.mxu0 %v1901
    %4012 = vmatpush1.msra.mxu0 %v1900
    %4013 = vmatprep.mubr.f32.mxu0 %v126
    %4014 = vmatmul.mubr.f32.gmra.mrb[0].mxu0 %v125
    %v4015 = vpop.f32.mrb[0].mxu0
    %v4016 = vadd.f32 %v3945, %v4015
    %v4017 = vpop.f32.mrb[0].mxu0
    %v4018 = vadd.f32 %v3947, %v4017
    %4019 = vdwg.mxu0
    %4020 = vmatprep.subr.mxu0 %v1929
    %4021 = vmatpush1.msra.mxu0 %v1928
    %4022 = vmatprep.subr.mxu0 %v1957
    %4023 = vmatpush1.msra.mxu0 %v1956
    %4024 = vmatprep.subr.mxu0 %v1985
    %4025 = vmatpush1.msra.mxu0 %v1984
    %4026 = vmatprep.subr.mxu0 %v2013
    %4027 = vmatpush1.msra.mxu0 %v2012
    %4028 = vmatprep.subr.mxu0 %v2041
    %4029 = vmatpush1.msra.mxu0 %v2040
    %4030 = vmatprep.subr.mxu0 %v2069
    %4031 = vmatpush1.msra.mxu0 %v2068
    %4032 = vmatprep.subr.mxu0 %v2097
    %4033 = vmatpush1.msra.mxu0 %v2096
    %4034 = vmatprep.subr.mxu0 %v2125
    %4035 = vmatpush1.msra.mxu0 %v2124
    %4036 = vmatprep.subr.mxu0 %v2153
    %4037 = vmatpush1.msra.mxu0 %v2152
    %4038 = vmatprep.subr.mxu0 %v2181
    %4039 = vmatpush1.msra.mxu0 %v2180
    %4040 = vmatprep.subr.mxu0 %v2209
    %4041 = vmatpush1.msra.mxu0 %v2208
    %4042 = vmatprep.subr.mxu0 %v2237
    %4043 = vmatpush1.msra.mxu0 %v2236
    %4044 = vmatprep.subr.mxu0 %v2265
    %4045 = vmatpush1.msra.mxu0 %v2264
    %4046 = vmatprep.subr.mxu0 %v2293
    %4047 = vmatpush1.msra.mxu0 %v2292
    %4048 = vmatprep.subr.mxu0 %v2321
    %4049 = vmatpush1.msra.mxu0 %v2320
    %4050 = vmatprep.subr.mxu0 %v2349
    %4051 = vmatpush1.msra.mxu0 %v2348
    %4052 = vmatprep.subr.mxu0 %v2377
    %4053 = vmatpush1.msra.mxu0 %v2376
    %4054 = vmatprep.subr.mxu0 %v2405
    %4055 = vmatpush1.msra.mxu0 %v2404
    %4056 = vmatprep.subr.mxu0 %v2433
    %4057 = vmatpush1.msra.mxu0 %v2432
    %4058 = vmatprep.subr.mxu0 %v2461
    %4059 = vmatpush1.msra.mxu0 %v2460
    %4060 = vmatprep.subr.mxu0 %v2489
    %4061 = vmatpush1.msra.mxu0 %v2488
    %4062 = vmatprep.subr.mxu0 %v2517
    %4063 = vmatpush1.msra.mxu0 %v2516
    %4064 = vmatprep.subr.mxu0 %v2545
    %4065 = vmatpush1.msra.mxu0 %v2544
    %4066 = vmatprep.subr.mxu0 %v2573
    %4067 = vmatpush1.msra.mxu0 %v2572
    %4068 = vmatprep.subr.mxu0 %v2601
    %4069 = vmatpush1.msra.mxu0 %v2600
    %4070 = vmatprep.subr.mxu0 %v2629
    %4071 = vmatpush1.msra.mxu0 %v2628
    %4072 = vmatprep.subr.mxu0 %v2657
    %4073 = vmatpush1.msra.mxu0 %v2656
    %4074 = vmatprep.subr.mxu0 %v2685
    %4075 = vmatpush1.msra.mxu0 %v2684
    %4076 = vmatprep.subr.mxu0 %v2713
    %4077 = vmatpush1.msra.mxu0 %v2712
    %4078 = vmatprep.subr.mxu0 %v2741
    %4079 = vmatpush1.msra.mxu0 %v2740
    %4080 = vmatprep.subr.mxu0 %v2769
    %4081 = vmatpush1.msra.mxu0 %v2768
    %4082 = vmatprep.subr.mxu0 %v2797
    %4083 = vmatpush1.msra.mxu0 %v2796
    %4084 = vmatprep.mubr.f32.mxu0 %v128
    %4085 = vmatmul.mubr.f32.gmra.mrb[0].mxu0 %v127
    %v4086 = vpop.f32.mrb[0].mxu0
    %v4087 = vadd.f32 %v4016, %v4086
    %v4088 = vpop.f32.mrb[0].mxu0
    %v4089 = vadd.f32 %v4018, %v4088
    %4090 = vdwg.mxu0
    %4091 = vmatprep.subr.mxu0 %v2825
    %4092 = vmatpush1.msra.mxu0 %v2824
    %4093 = vmatprep.subr.mxu0 %v2853
    %4094 = vmatpush1.msra.mxu0 %v2852
    %4095 = vmatprep.subr.mxu0 0.0
    %4096 = vmatpush1.msra.mxu0 0.0
    %4097 = vmatprep.subr.mxu0 0.0
    %4098 = vmatpush1.msra.mxu0 0.0
    %4099 = vmatprep.subr.mxu0 0.0
    %4100 = vmatpush1.msra.mxu0 0.0
    %4101 = vmatprep.subr.mxu0 0.0
    %4102 = vmatpush1.msra.mxu0 0.0
    %4103 = vmatprep.subr.mxu0 0.0
    %4104 = vmatpush1.msra.mxu0 0.0
    %4105 = vmatprep.subr.mxu0 0.0
    %4106 = vmatpush1.msra.mxu0 0.0
    %4107 = vmatprep.subr.mxu0 0.0
    %4108 = vmatpush1.msra.mxu0 0.0
    %4109 = vmatprep.subr.mxu0 0.0
    %4110 = vmatpush1.msra.mxu0 0.0
    %4111 = vmatprep.subr.mxu0 0.0
    %4112 = vmatpush1.msra.mxu0 0.0
    %4113 = vmatprep.subr.mxu0 0.0
    %4114 = vmatpush1.msra.mxu0 0.0
    %4115 = vmatprep.subr.mxu0 0.0
    %4116 = vmatpush1.msra.mxu0 0.0
    %4117 = vmatprep.subr.mxu0 0.0
    %4118 = vmatpush1.msra.mxu0 0.0
    %4119 = vmatprep.subr.mxu0 0.0
    %4120 = vmatpush1.msra.mxu0 0.0
    %4121 = vmatprep.subr.mxu0 0.0
    %4122 = vmatpush1.msra.mxu0 0.0
    %4123 = vmatprep.subr.mxu0 0.0
    %4124 = vmatpush1.msra.mxu0 0.0
    %4125 = vmatprep.subr.mxu0 0.0
    %4126 = vmatpush1.msra.mxu0 0.0
    %4127 = vmatprep.subr.mxu0 0.0
    %4128 = vmatpush1.msra.mxu0 0.0
    %4129 = vmatprep.subr.mxu0 0.0
    %4130 = vmatpush1.msra.mxu0 0.0
    %4131 = vmatprep.subr.mxu0 0.0
    %4132 = vmatpush1.msra.mxu0 0.0
    %4133 = vmatprep.subr.mxu0 0.0
    %4134 = vmatpush1.msra.mxu0 0.0
    %4135 = vmatprep.subr.mxu0 0.0
    %4136 = vmatpush1.msra.mxu0 0.0
    %4137 = vmatprep.subr.mxu0 0.0
    %4138 = vmatpush1.msra.mxu0 0.0
    %4139 = vmatprep.subr.mxu0 0.0
    %4140 = vmatpush1.msra.mxu0 0.0
    %4141 = vmatprep.subr.mxu0 0.0
    %4142 = vmatpush1.msra.mxu0 0.0
    %4143 = vmatprep.subr.mxu0 0.0
    %4144 = vmatpush1.msra.mxu0 0.0
    %4145 = vmatprep.subr.mxu0 0.0
    %4146 = vmatpush1.msra.mxu0 0.0
    %4147 = vmatprep.subr.mxu0 0.0
    %4148 = vmatpush1.msra.mxu0 0.0
    %4149 = vmatprep.subr.mxu0 0.0
    %4150 = vmatpush1.msra.mxu0 0.0
    %4151 = vmatprep.subr.mxu0 0.0
    %4152 = vmatpush1.msra.mxu0 0.0
    %4153 = vmatprep.subr.mxu0 0.0
    %4154 = vmatpush1.msra.mxu0 0.0
    %4155 = vmatprep.mubr.f32.mxu0 0.0
    %4156 = vmatmul.mubr.f32.gmra.mrb[0].mxu0 %v3024
    %v4157 = vpop.f32.mrb[0].mxu0
    %v4158 = vadd.f32 %v4087, %v4157
    %v4159 = vpop.f32.mrb[0].mxu0
    %v4160 = vadd.f32 %v4089, %v4159
    %4161 = vdwg.mxu0
    %4162 = vmatprep.subr.mxu0 %v139
    %4163 = vmatpush1.msra.mxu0 %v138
    %4164 = vmatprep.subr.mxu0 %v167
    %4165 = vmatpush1.msra.mxu0 %v166
    %4166 = vmatprep.subr.mxu0 %v195
    %4167 = vmatpush1.msra.mxu0 %v194
    %4168 = vmatprep.subr.mxu0 %v223
    %4169 = vmatpush1.msra.mxu0 %v222
    %4170 = vmatprep.subr.mxu0 %v251
    %4171 = vmatpush1.msra.mxu0 %v250
    %4172 = vmatprep.subr.mxu0 %v279
    %4173 = vmatpush1.msra.mxu0 %v278
    %4174 = vmatprep.subr.mxu0 %v307
    %4175 = vmatpush1.msra.mxu0 %v306
    %4176 = vmatprep.subr.mxu0 %v335
    %4177 = vmatpush1.msra.mxu0 %v334
    %4178 = vmatprep.subr.mxu0 %v363
    %4179 = vmatpush1.msra.mxu0 %v362
    %4180 = vmatprep.subr.mxu0 %v391
    %4181 = vmatpush1.msra.mxu0 %v390
    %4182 = vmatprep.subr.mxu0 %v419
    %4183 = vmatpush1.msra.mxu0 %v418
    %4184 = vmatprep.subr.mxu0 %v447
    %4185 = vmatpush1.msra.mxu0 %v446
    %4186 = vmatprep.subr.mxu0 %v475
    %4187 = vmatpush1.msra.mxu0 %v474
    %4188 = vmatprep.subr.mxu0 %v503
    %4189 = vmatpush1.msra.mxu0 %v502
    %4190 = vmatprep.subr.mxu0 %v531
    %4191 = vmatpush1.msra.mxu0 %v530
    %4192 = vmatprep.subr.mxu0 %v559
    %4193 = vmatpush1.msra.mxu0 %v558
    %4194 = vmatprep.subr.mxu0 %v587
    %4195 = vmatpush1.msra.mxu0 %v586
    %4196 = vmatprep.subr.mxu0 %v615
    %4197 = vmatpush1.msra.mxu0 %v614
    %4198 = vmatprep.subr.mxu0 %v643
    %4199 = vmatpush1.msra.mxu0 %v642
    %4200 = vmatprep.subr.mxu0 %v671
    %4201 = vmatpush1.msra.mxu0 %v670
    %4202 = vmatprep.subr.mxu0 %v699
    %4203 = vmatpush1.msra.mxu0 %v698
    %4204 = vmatprep.subr.mxu0 %v727
    %4205 = vmatpush1.msra.mxu0 %v726
    %4206 = vmatprep.subr.mxu0 %v755
    %4207 = vmatpush1.msra.mxu0 %v754
    %4208 = vmatprep.subr.mxu0 %v783
    %4209 = vmatpush1.msra.mxu0 %v782
    %4210 = vmatprep.subr.mxu0 %v811
    %4211 = vmatpush1.msra.mxu0 %v810
    %4212 = vmatprep.subr.mxu0 %v839
    %4213 = vmatpush1.msra.mxu0 %v838
    %4214 = vmatprep.subr.mxu0 %v867
    %4215 = vmatpush1.msra.mxu0 %v866
    %4216 = vmatprep.subr.mxu0 %v895
    %4217 = vmatpush1.msra.mxu0 %v894
    %4218 = vmatprep.subr.mxu0 %v923
    %4219 = vmatpush1.msra.mxu0 %v922
    %4220 = vmatprep.subr.mxu0 %v951
    %4221 = vmatpush1.msra.mxu0 %v950
    %4222 = vmatprep.subr.mxu0 %v979
    %4223 = vmatpush1.msra.mxu0 %v978
    %4224 = vmatprep.subr.mxu0 %v1007
    %4225 = vmatpush1.msra.mxu0 %v1006
    %4226 = vmatprep.mubr.f32.mxu0 %v124
    %4227 = vmatmul.mubr.f32.gmra.mrb[0].mxu0 %v123
    %v4228 = vpop.f32.mrb[0].mxu0
    %v4229 = vadd.f32 %v2917, %v4228
    %v4230 = vpop.f32.mrb[0].mxu0
    %v4231 = vadd.f32 %v2921, %v4230
    %4232 = vdwg.mxu0
    %4233 = vmatprep.subr.mxu0 %v1035
    %4234 = vmatpush1.msra.mxu0 %v1034
    %4235 = vmatprep.subr.mxu0 %v1063
    %4236 = vmatpush1.msra.mxu0 %v1062
    %4237 = vmatprep.subr.mxu0 %v1091
    %4238 = vmatpush1.msra.mxu0 %v1090
    %4239 = vmatprep.subr.mxu0 %v1119
    %4240 = vmatpush1.msra.mxu0 %v1118
    %4241 = vmatprep.subr.mxu0 %v1147
    %4242 = vmatpush1.msra.mxu0 %v1146
    %4243 = vmatprep.subr.mxu0 %v1175
    %4244 = vmatpush1.msra.mxu0 %v1174
    %4245 = vmatprep.subr.mxu0 %v1203
    %4246 = vmatpush1.msra.mxu0 %v1202
    %4247 = vmatprep.subr.mxu0 %v1231
    %4248 = vmatpush1.msra.mxu0 %v1230
    %4249 = vmatprep.subr.mxu0 %v1259
    %4250 = vmatpush1.msra.mxu0 %v1258
    %4251 = vmatprep.subr.mxu0 %v1287
    %4252 = vmatpush1.msra.mxu0 %v1286
    %4253 = vmatprep.subr.mxu0 %v1315
    %4254 = vmatpush1.msra.mxu0 %v1314
    %4255 = vmatprep.subr.mxu0 %v1343
    %4256 = vmatpush1.msra.mxu0 %v1342
    %4257 = vmatprep.subr.mxu0 %v1371
    %4258 = vmatpush1.msra.mxu0 %v1370
    %4259 = vmatprep.subr.mxu0 %v1399
    %4260 = vmatpush1.msra.mxu0 %v1398
    %4261 = vmatprep.subr.mxu0 %v1427
    %4262 = vmatpush1.msra.mxu0 %v1426
    %4263 = vmatprep.subr.mxu0 %v1455
    %4264 = vmatpush1.msra.mxu0 %v1454
    %4265 = vmatprep.subr.mxu0 %v1483
    %4266 = vmatpush1.msra.mxu0 %v1482
    %4267 = vmatprep.subr.mxu0 %v1511
    %4268 = vmatpush1.msra.mxu0 %v1510
    %4269 = vmatprep.subr.mxu0 %v1539
    %4270 = vmatpush1.msra.mxu0 %v1538
    %4271 = vmatprep.subr.mxu0 %v1567
    %4272 = vmatpush1.msra.mxu0 %v1566
    %4273 = vmatprep.subr.mxu0 %v1595
    %4274 = vmatpush1.msra.mxu0 %v1594
    %4275 = vmatprep.subr.mxu0 %v1623
    %4276 = vmatpush1.msra.mxu0 %v1622
    %4277 = vmatprep.subr.mxu0 %v1651
    %4278 = vmatpush1.msra.mxu0 %v1650
    %4279 = vmatprep.subr.mxu0 %v1679
    %4280 = vmatpush1.msra.mxu0 %v1678
    %4281 = vmatprep.subr.mxu0 %v1707
    %4282 = vmatpush1.msra.mxu0 %v1706
    %4283 = vmatprep.subr.mxu0 %v1735
    %4284 = vmatpush1.msra.mxu0 %v1734
    %4285 = vmatprep.subr.mxu0 %v1763
    %4286 = vmatpush1.msra.mxu0 %v1762
    %4287 = vmatprep.subr.mxu0 %v1791
    %4288 = vmatpush1.msra.mxu0 %v1790
    %4289 = vmatprep.subr.mxu0 %v1819
    %4290 = vmatpush1.msra.mxu0 %v1818
    %4291 = vmatprep.subr.mxu0 %v1847
    %4292 = vmatpush1.msra.mxu0 %v1846
    %4293 = vmatprep.subr.mxu0 %v1875
    %4294 = vmatpush1.msra.mxu0 %v1874
    %4295 = vmatprep.subr.mxu0 %v1903
    %4296 = vmatpush1.msra.mxu0 %v1902
    %4297 = vmatprep.mubr.f32.mxu0 %v126
    %4298 = vmatmul.mubr.f32.gmra.mrb[0].mxu0 %v125
    %v4299 = vpop.f32.mrb[0].mxu0
    %v4300 = vadd.f32 %v4229, %v4299
    %v4301 = vpop.f32.mrb[0].mxu0
    %v4302 = vadd.f32 %v4231, %v4301
    %4303 = vdwg.mxu0
    %4304 = vmatprep.subr.mxu0 %v1931
    %4305 = vmatpush1.msra.mxu0 %v1930
    %4306 = vmatprep.subr.mxu0 %v1959
    %4307 = vmatpush1.msra.mxu0 %v1958
    %4308 = vmatprep.subr.mxu0 %v1987
    %4309 = vmatpush1.msra.mxu0 %v1986
    %4310 = vmatprep.subr.mxu0 %v2015
    %4311 = vmatpush1.msra.mxu0 %v2014
    %4312 = vmatprep.subr.mxu0 %v2043
    %4313 = vmatpush1.msra.mxu0 %v2042
    %4314 = vmatprep.subr.mxu0 %v2071
    %4315 = vmatpush1.msra.mxu0 %v2070
    %4316 = vmatprep.subr.mxu0 %v2099
    %4317 = vmatpush1.msra.mxu0 %v2098
    %4318 = vmatprep.subr.mxu0 %v2127
    %4319 = vmatpush1.msra.mxu0 %v2126
    %4320 = vmatprep.subr.mxu0 %v2155
    %4321 = vmatpush1.msra.mxu0 %v2154
    %4322 = vmatprep.subr.mxu0 %v2183
    %4323 = vmatpush1.msra.mxu0 %v2182
    %4324 = vmatprep.subr.mxu0 %v2211
    %4325 = vmatpush1.msra.mxu0 %v2210
    %4326 = vmatprep.subr.mxu0 %v2239
    %4327 = vmatpush1.msra.mxu0 %v2238
    %4328 = vmatprep.subr.mxu0 %v2267
    %4329 = vmatpush1.msra.mxu0 %v2266
    %4330 = vmatprep.subr.mxu0 %v2295
    %4331 = vmatpush1.msra.mxu0 %v2294
    %4332 = vmatprep.subr.mxu0 %v2323
    %4333 = vmatpush1.msra.mxu0 %v2322
    %4334 = vmatprep.subr.mxu0 %v2351
    %4335 = vmatpush1.msra.mxu0 %v2350
    %4336 = vmatprep.subr.mxu0 %v2379
    %4337 = vmatpush1.msra.mxu0 %v2378
    %4338 = vmatprep.subr.mxu0 %v2407
    %4339 = vmatpush1.msra.mxu0 %v2406
    %4340 = vmatprep.subr.mxu0 %v2435
    %4341 = vmatpush1.msra.mxu0 %v2434
    %4342 = vmatprep.subr.mxu0 %v2463
    %4343 = vmatpush1.msra.mxu0 %v2462
    %4344 = vmatprep.subr.mxu0 %v2491
    %4345 = vmatpush1.msra.mxu0 %v2490
    %4346 = vmatprep.subr.mxu0 %v2519
    %4347 = vmatpush1.msra.mxu0 %v2518
    %4348 = vmatprep.subr.mxu0 %v2547
    %4349 = vmatpush1.msra.mxu0 %v2546
    %4350 = vmatprep.subr.mxu0 %v2575
    %4351 = vmatpush1.msra.mxu0 %v2574
    %4352 = vmatprep.subr.mxu0 %v2603
    %4353 = vmatpush1.msra.mxu0 %v2602
    %4354 = vmatprep.subr.mxu0 %v2631
    %4355 = vmatpush1.msra.mxu0 %v2630
    %4356 = vmatprep.subr.mxu0 %v2659
    %4357 = vmatpush1.msra.mxu0 %v2658
    %4358 = vmatprep.subr.mxu0 %v2687
    %4359 = vmatpush1.msra.mxu0 %v2686
    %4360 = vmatprep.subr.mxu0 %v2715
    %4361 = vmatpush1.msra.mxu0 %v2714
    %4362 = vmatprep.subr.mxu0 %v2743
    %4363 = vmatpush1.msra.mxu0 %v2742
    %4364 = vmatprep.subr.mxu0 %v2771
    %4365 = vmatpush1.msra.mxu0 %v2770
    %4366 = vmatprep.subr.mxu0 %v2799
    %4367 = vmatpush1.msra.mxu0 %v2798
    %4368 = vmatprep.mubr.f32.mxu0 %v128
    %4369 = vmatmul.mubr.f32.gmra.mrb[0].mxu0 %v127
    %v4370 = vpop.f32.mrb[0].mxu0
    %v4371 = vadd.f32 %v4300, %v4370
    %v4372 = vpop.f32.mrb[0].mxu0
    %v4373 = vadd.f32 %v4302, %v4372
    %4374 = vdwg.mxu0
    %4375 = vmatprep.subr.mxu0 %v2827
    %4376 = vmatpush1.msra.mxu0 %v2826
    %4377 = vmatprep.subr.mxu0 %v2855
    %4378 = vmatpush1.msra.mxu0 %v2854
    %4379 = vmatprep.subr.mxu0 0.0
    %4380 = vmatpush1.msra.mxu0 0.0
    %4381 = vmatprep.subr.mxu0 0.0
    %4382 = vmatpush1.msra.mxu0 0.0
    %4383 = vmatprep.subr.mxu0 0.0
    %4384 = vmatpush1.msra.mxu0 0.0
    %4385 = vmatprep.subr.mxu0 0.0
    %4386 = vmatpush1.msra.mxu0 0.0
    %4387 = vmatprep.subr.mxu0 0.0
    %4388 = vmatpush1.msra.mxu0 0.0
    %4389 = vmatprep.subr.mxu0 0.0
    %4390 = vmatpush1.msra.mxu0 0.0
    %4391 = vmatprep.subr.mxu0 0.0
    %4392 = vmatpush1.msra.mxu0 0.0
    %4393 = vmatprep.subr.mxu0 0.0
    %4394 = vmatpush1.msra.mxu0 0.0
    %4395 = vmatprep.subr.mxu0 0.0
    %4396 = vmatpush1.msra.mxu0 0.0
    %4397 = vmatprep.subr.mxu0 0.0
    %4398 = vmatpush1.msra.mxu0 0.0
    %4399 = vmatprep.subr.mxu0 0.0
    %4400 = vmatpush1.msra.mxu0 0.0
    %4401 = vmatprep.subr.mxu0 0.0
    %4402 = vmatpush1.msra.mxu0 0.0
    %4403 = vmatprep.subr.mxu0 0.0
    %4404 = vmatpush1.msra.mxu0 0.0
    %4405 = vmatprep.subr.mxu0 0.0
    %4406 = vmatpush1.msra.mxu0 0.0
    %4407 = vmatprep.subr.mxu0 0.0
    %4408 = vmatpush1.msra.mxu0 0.0
    %4409 = vmatprep.subr.mxu0 0.0
    %4410 = vmatpush1.msra.mxu0 0.0
    %4411 = vmatprep.subr.mxu0 0.0
    %4412 = vmatpush1.msra.mxu0 0.0
    %4413 = vmatprep.subr.mxu0 0.0
    %4414 = vmatpush1.msra.mxu0 0.0
    %4415 = vmatprep.subr.mxu0 0.0
    %4416 = vmatpush1.msra.mxu0 0.0
    %4417 = vmatprep.subr.mxu0 0.0
    %4418 = vmatpush1.msra.mxu0 0.0
    %4419 = vmatprep.subr.mxu0 0.0
    %4420 = vmatpush1.msra.mxu0 0.0
    %4421 = vmatprep.subr.mxu0 0.0
    %4422 = vmatpush1.msra.mxu0 0.0
    %4423 = vmatprep.subr.mxu0 0.0
    %4424 = vmatpush1.msra.mxu0 0.0
    %4425 = vmatprep.subr.mxu0 0.0
    %4426 = vmatpush1.msra.mxu0 0.0
    %4427 = vmatprep.subr.mxu0 0.0
    %4428 = vmatpush1.msra.mxu0 0.0
    %4429 = vmatprep.subr.mxu0 0.0
    %4430 = vmatpush1.msra.mxu0 0.0
    %4431 = vmatprep.subr.mxu0 0.0
    %4432 = vmatpush1.msra.mxu0 0.0
    %4433 = vmatprep.subr.mxu0 0.0
    %4434 = vmatpush1.msra.mxu0 0.0
    %4435 = vmatprep.subr.mxu0 0.0
    %4436 = vmatpush1.msra.mxu0 0.0
    %4437 = vmatprep.subr.mxu0 0.0
    %4438 = vmatpush1.msra.mxu0 0.0
    %4439 = vmatprep.mubr.f32.mxu0 0.0
    %4440 = vmatmul.mubr.f32.gmra.mrb[0].mxu0 %v3024
    %v4441 = vpop.f32.mrb[0].mxu0
    %v4442 = vadd.f32 %v4371, %v4441
    %v4443 = vpop.f32.mrb[0].mxu0
    %v4444 = vadd.f32 %v4373, %v4443
    %4445 = vdwg.mxu0
    %4446 = vmatprep.subr.mxu0 %v141
    %4447 = vmatpush1.msra.mxu0 %v140
    %4448 = vmatprep.subr.mxu0 %v169
    %4449 = vmatpush1.msra.mxu0 %v168
    %4450 = vmatprep.subr.mxu0 %v197
    %4451 = vmatpush1.msra.mxu0 %v196
    %4452 = vmatprep.subr.mxu0 %v225
    %4453 = vmatpush1.msra.mxu0 %v224
    %4454 = vmatprep.subr.mxu0 %v253
    %4455 = vmatpush1.msra.mxu0 %v252
    %4456 = vmatprep.subr.mxu0 %v281
    %4457 = vmatpush1.msra.mxu0 %v280
    %4458 = vmatprep.subr.mxu0 %v309
    %4459 = vmatpush1.msra.mxu0 %v308
    %4460 = vmatprep.subr.mxu0 %v337
    %4461 = vmatpush1.msra.mxu0 %v336
    %4462 = vmatprep.subr.mxu0 %v365
    %4463 = vmatpush1.msra.mxu0 %v364
    %4464 = vmatprep.subr.mxu0 %v393
    %4465 = vmatpush1.msra.mxu0 %v392
    %4466 = vmatprep.subr.mxu0 %v421
    %4467 = vmatpush1.msra.mxu0 %v420
    %4468 = vmatprep.subr.mxu0 %v449
    %4469 = vmatpush1.msra.mxu0 %v448
    %4470 = vmatprep.subr.mxu0 %v477
    %4471 = vmatpush1.msra.mxu0 %v476
    %4472 = vmatprep.subr.mxu0 %v505
    %4473 = vmatpush1.msra.mxu0 %v504
    %4474 = vmatprep.subr.mxu0 %v533
    %4475 = vmatpush1.msra.mxu0 %v532
    %4476 = vmatprep.subr.mxu0 %v561
    %4477 = vmatpush1.msra.mxu0 %v560
    %4478 = vmatprep.subr.mxu0 %v589
    %4479 = vmatpush1.msra.mxu0 %v588
    %4480 = vmatprep.subr.mxu0 %v617
    %4481 = vmatpush1.msra.mxu0 %v616
    %4482 = vmatprep.subr.mxu0 %v645
    %4483 = vmatpush1.msra.mxu0 %v644
    %4484 = vmatprep.subr.mxu0 %v673
    %4485 = vmatpush1.msra.mxu0 %v672
    %4486 = vmatprep.subr.mxu0 %v701
    %4487 = vmatpush1.msra.mxu0 %v700
    %4488 = vmatprep.subr.mxu0 %v729
    %4489 = vmatpush1.msra.mxu0 %v728
    %4490 = vmatprep.subr.mxu0 %v757
    %4491 = vmatpush1.msra.mxu0 %v756
    %4492 = vmatprep.subr.mxu0 %v785
    %4493 = vmatpush1.msra.mxu0 %v784
    %4494 = vmatprep.subr.mxu0 %v813
    %4495 = vmatpush1.msra.mxu0 %v812
    %4496 = vmatprep.subr.mxu0 %v841
    %4497 = vmatpush1.msra.mxu0 %v840
    %4498 = vmatprep.subr.mxu0 %v869
    %4499 = vmatpush1.msra.mxu0 %v868
    %4500 = vmatprep.subr.mxu0 %v897
    %4501 = vmatpush1.msra.mxu0 %v896
    %4502 = vmatprep.subr.mxu0 %v925
    %4503 = vmatpush1.msra.mxu0 %v924
    %4504 = vmatprep.subr.mxu0 %v953
    %4505 = vmatpush1.msra.mxu0 %v952
    %4506 = vmatprep.subr.mxu0 %v981
    %4507 = vmatpush1.msra.mxu0 %v980
    %4508 = vmatprep.subr.mxu0 %v1009
    %4509 = vmatpush1.msra.mxu0 %v1008
    %4510 = vmatprep.mubr.f32.mxu0 %v124
    %4511 = vmatmul.mubr.f32.gmra.mrb[0].mxu0 %v123
    %v4512 = vpop.f32.mrb[0].mxu0
    %v4513 = vadd.f32 %v2925, %v4512
    %v4514 = vpop.f32.mrb[0].mxu0
    %v4515 = vadd.f32 %v2929, %v4514
    %4516 = vdwg.mxu0
    %4517 = vmatprep.subr.mxu0 %v1037
    %4518 = vmatpush1.msra.mxu0 %v1036
    %4519 = vmatprep.subr.mxu0 %v1065
    %4520 = vmatpush1.msra.mxu0 %v1064
    %4521 = vmatprep.subr.mxu0 %v1093
    %4522 = vmatpush1.msra.mxu0 %v1092
    %4523 = vmatprep.subr.mxu0 %v1121
    %4524 = vmatpush1.msra.mxu0 %v1120
    %4525 = vmatprep.subr.mxu0 %v1149
    %4526 = vmatpush1.msra.mxu0 %v1148
    %4527 = vmatprep.subr.mxu0 %v1177
    %4528 = vmatpush1.msra.mxu0 %v1176
    %4529 = vmatprep.subr.mxu0 %v1205
    %4530 = vmatpush1.msra.mxu0 %v1204
    %4531 = vmatprep.subr.mxu0 %v1233
    %4532 = vmatpush1.msra.mxu0 %v1232
    %4533 = vmatprep.subr.mxu0 %v1261
    %4534 = vmatpush1.msra.mxu0 %v1260
    %4535 = vmatprep.subr.mxu0 %v1289
    %4536 = vmatpush1.msra.mxu0 %v1288
    %4537 = vmatprep.subr.mxu0 %v1317
    %4538 = vmatpush1.msra.mxu0 %v1316
    %4539 = vmatprep.subr.mxu0 %v1345
    %4540 = vmatpush1.msra.mxu0 %v1344
    %4541 = vmatprep.subr.mxu0 %v1373
    %4542 = vmatpush1.msra.mxu0 %v1372
    %4543 = vmatprep.subr.mxu0 %v1401
    %4544 = vmatpush1.msra.mxu0 %v1400
    %4545 = vmatprep.subr.mxu0 %v1429
    %4546 = vmatpush1.msra.mxu0 %v1428
    %4547 = vmatprep.subr.mxu0 %v1457
    %4548 = vmatpush1.msra.mxu0 %v1456
    %4549 = vmatprep.subr.mxu0 %v1485
    %4550 = vmatpush1.msra.mxu0 %v1484
    %4551 = vmatprep.subr.mxu0 %v1513
    %4552 = vmatpush1.msra.mxu0 %v1512
    %4553 = vmatprep.subr.mxu0 %v1541
    %4554 = vmatpush1.msra.mxu0 %v1540
    %4555 = vmatprep.subr.mxu0 %v1569
    %4556 = vmatpush1.msra.mxu0 %v1568
    %4557 = vmatprep.subr.mxu0 %v1597
    %4558 = vmatpush1.msra.mxu0 %v1596
    %4559 = vmatprep.subr.mxu0 %v1625
    %4560 = vmatpush1.msra.mxu0 %v1624
    %4561 = vmatprep.subr.mxu0 %v1653
    %4562 = vmatpush1.msra.mxu0 %v1652
    %4563 = vmatprep.subr.mxu0 %v1681
    %4564 = vmatpush1.msra.mxu0 %v1680
    %4565 = vmatprep.subr.mxu0 %v1709
    %4566 = vmatpush1.msra.mxu0 %v1708
    %4567 = vmatprep.subr.mxu0 %v1737
    %4568 = vmatpush1.msra.mxu0 %v1736
    %4569 = vmatprep.subr.mxu0 %v1765
    %4570 = vmatpush1.msra.mxu0 %v1764
    %4571 = vmatprep.subr.mxu0 %v1793
    %4572 = vmatpush1.msra.mxu0 %v1792
    %4573 = vmatprep.subr.mxu0 %v1821
    %4574 = vmatpush1.msra.mxu0 %v1820
    %4575 = vmatprep.subr.mxu0 %v1849
    %4576 = vmatpush1.msra.mxu0 %v1848
    %4577 = vmatprep.subr.mxu0 %v1877
    %4578 = vmatpush1.msra.mxu0 %v1876
    %4579 = vmatprep.subr.mxu0 %v1905
    %4580 = vmatpush1.msra.mxu0 %v1904
    %4581 = vmatprep.mubr.f32.mxu0 %v126
    %4582 = vmatmul.mubr.f32.gmra.mrb[0].mxu0 %v125
    %v4583 = vpop.f32.mrb[0].mxu0
    %v4584 = vadd.f32 %v4513, %v4583
    %v4585 = vpop.f32.mrb[0].mxu0
    %v4586 = vadd.f32 %v4515, %v4585
    %4587 = vdwg.mxu0
    %4588 = vmatprep.subr.mxu0 %v1933
    %4589 = vmatpush1.msra.mxu0 %v1932
    %4590 = vmatprep.subr.mxu0 %v1961
    %4591 = vmatpush1.msra.mxu0 %v1960
    %4592 = vmatprep.subr.mxu0 %v1989
    %4593 = vmatpush1.msra.mxu0 %v1988
    %4594 = vmatprep.subr.mxu0 %v2017
    %4595 = vmatpush1.msra.mxu0 %v2016
    %4596 = vmatprep.subr.mxu0 %v2045
    %4597 = vmatpush1.msra.mxu0 %v2044
    %4598 = vmatprep.subr.mxu0 %v2073
    %4599 = vmatpush1.msra.mxu0 %v2072
    %4600 = vmatprep.subr.mxu0 %v2101
    %4601 = vmatpush1.msra.mxu0 %v2100
    %4602 = vmatprep.subr.mxu0 %v2129
    %4603 = vmatpush1.msra.mxu0 %v2128
    %4604 = vmatprep.subr.mxu0 %v2157
    %4605 = vmatpush1.msra.mxu0 %v2156
    %4606 = vmatprep.subr.mxu0 %v2185
    %4607 = vmatpush1.msra.mxu0 %v2184
    %4608 = vmatprep.subr.mxu0 %v2213
    %4609 = vmatpush1.msra.mxu0 %v2212
    %4610 = vmatprep.subr.mxu0 %v2241
    %4611 = vmatpush1.msra.mxu0 %v2240
    %4612 = vmatprep.subr.mxu0 %v2269
    %4613 = vmatpush1.msra.mxu0 %v2268
    %4614 = vmatprep.subr.mxu0 %v2297
    %4615 = vmatpush1.msra.mxu0 %v2296
    %4616 = vmatprep.subr.mxu0 %v2325
    %4617 = vmatpush1.msra.mxu0 %v2324
    %4618 = vmatprep.subr.mxu0 %v2353
    %4619 = vmatpush1.msra.mxu0 %v2352
    %4620 = vmatprep.subr.mxu0 %v2381
    %4621 = vmatpush1.msra.mxu0 %v2380
    %4622 = vmatprep.subr.mxu0 %v2409
    %4623 = vmatpush1.msra.mxu0 %v2408
    %4624 = vmatprep.subr.mxu0 %v2437
    %4625 = vmatpush1.msra.mxu0 %v2436
    %4626 = vmatprep.subr.mxu0 %v2465
    %4627 = vmatpush1.msra.mxu0 %v2464
    %4628 = vmatprep.subr.mxu0 %v2493
    %4629 = vmatpush1.msra.mxu0 %v2492
    %4630 = vmatprep.subr.mxu0 %v2521
    %4631 = vmatpush1.msra.mxu0 %v2520
    %4632 = vmatprep.subr.mxu0 %v2549
    %4633 = vmatpush1.msra.mxu0 %v2548
    %4634 = vmatprep.subr.mxu0 %v2577
    %4635 = vmatpush1.msra.mxu0 %v2576
    %4636 = vmatprep.subr.mxu0 %v2605
    %4637 = vmatpush1.msra.mxu0 %v2604
    %4638 = vmatprep.subr.mxu0 %v2633
    %4639 = vmatpush1.msra.mxu0 %v2632
    %4640 = vmatprep.subr.mxu0 %v2661
    %4641 = vmatpush1.msra.mxu0 %v2660
    %4642 = vmatprep.subr.mxu0 %v2689
    %4643 = vmatpush1.msra.mxu0 %v2688
    %4644 = vmatprep.subr.mxu0 %v2717
    %4645 = vmatpush1.msra.mxu0 %v2716
    %4646 = vmatprep.subr.mxu0 %v2745
    %4647 = vmatpush1.msra.mxu0 %v2744
    %4648 = vmatprep.subr.mxu0 %v2773
    %4649 = vmatpush1.msra.mxu0 %v2772
    %4650 = vmatprep.subr.mxu0 %v2801
    %4651 = vmatpush1.msra.mxu0 %v2800
    %4652 = vmatprep.mubr.f32.mxu0 %v128
    %4653 = vmatmul.mubr.f32.gmra.mrb[0].mxu0 %v127
    %v4654 = vpop.f32.mrb[0].mxu0
    %v4655 = vadd.f32 %v4584, %v4654
    %v4656 = vpop.f32.mrb[0].mxu0
    %v4657 = vadd.f32 %v4586, %v4656
    %4658 = vdwg.mxu0
    %4659 = vmatprep.subr.mxu0 %v2829
    %4660 = vmatpush1.msra.mxu0 %v2828
    %4661 = vmatprep.subr.mxu0 %v2857
    %4662 = vmatpush1.msra.mxu0 %v2856
    %4663 = vmatprep.subr.mxu0 0.0
    %4664 = vmatpush1.msra.mxu0 0.0
    %4665 = vmatprep.subr.mxu0 0.0
    %4666 = vmatpush1.msra.mxu0 0.0
    %4667 = vmatprep.subr.mxu0 0.0
    %4668 = vmatpush1.msra.mxu0 0.0
    %4669 = vmatprep.subr.mxu0 0.0
    %4670 = vmatpush1.msra.mxu0 0.0
    %4671 = vmatprep.subr.mxu0 0.0
    %4672 = vmatpush1.msra.mxu0 0.0
    %4673 = vmatprep.subr.mxu0 0.0
    %4674 = vmatpush1.msra.mxu0 0.0
    %4675 = vmatprep.subr.mxu0 0.0
    %4676 = vmatpush1.msra.mxu0 0.0
    %4677 = vmatprep.subr.mxu0 0.0
    %4678 = vmatpush1.msra.mxu0 0.0
    %4679 = vmatprep.subr.mxu0 0.0
    %4680 = vmatpush1.msra.mxu0 0.0
    %4681 = vmatprep.subr.mxu0 0.0
    %4682 = vmatpush1.msra.mxu0 0.0
    %4683 = vmatprep.subr.mxu0 0.0
    %4684 = vmatpush1.msra.mxu0 0.0
    %4685 = vmatprep.subr.mxu0 0.0
    %4686 = vmatpush1.msra.mxu0 0.0
    %4687 = vmatprep.subr.mxu0 0.0
    %4688 = vmatpush1.msra.mxu0 0.0
    %4689 = vmatprep.subr.mxu0 0.0
    %4690 = vmatpush1.msra.mxu0 0.0
    %4691 = vmatprep.subr.mxu0 0.0
    %4692 = vmatpush1.msra.mxu0 0.0
    %4693 = vmatprep.subr.mxu0 0.0
    %4694 = vmatpush1.msra.mxu0 0.0
    %4695 = vmatprep.subr.mxu0 0.0
    %4696 = vmatpush1.msra.mxu0 0.0
    %4697 = vmatprep.subr.mxu0 0.0
    %4698 = vmatpush1.msra.mxu0 0.0
    %4699 = vmatprep.subr.mxu0 0.0
    %4700 = vmatpush1.msra.mxu0 0.0
    %4701 = vmatprep.subr.mxu0 0.0
    %4702 = vmatpush1.msra.mxu0 0.0
    %4703 = vmatprep.subr.mxu0 0.0
    %4704 = vmatpush1.msra.mxu0 0.0
    %4705 = vmatprep.subr.mxu0 0.0
    %4706 = vmatpush1.msra.mxu0 0.0
    %4707 = vmatprep.subr.mxu0 0.0
    %4708 = vmatpush1.msra.mxu0 0.0
    %4709 = vmatprep.subr.mxu0 0.0
    %4710 = vmatpush1.msra.mxu0 0.0
    %4711 = vmatprep.subr.mxu0 0.0
    %4712 = vmatpush1.msra.mxu0 0.0
    %4713 = vmatprep.subr.mxu0 0.0
    %4714 = vmatpush1.msra.mxu0 0.0
    %4715 = vmatprep.subr.mxu0 0.0
    %4716 = vmatpush1.msra.mxu0 0.0
    %4717 = vmatprep.subr.mxu0 0.0
    %4718 = vmatpush1.msra.mxu0 0.0
    %4719 = vmatprep.subr.mxu0 0.0
    %4720 = vmatpush1.msra.mxu0 0.0
    %4721 = vmatprep.subr.mxu0 0.0
    %4722 = vmatpush1.msra.mxu0 0.0
    %4723 = vmatprep.mubr.f32.mxu0 0.0
    %4724 = vmatmul.mubr.f32.gmra.mrb[0].mxu0 %v3024
    %v4725 = vpop.f32.mrb[0].mxu0
    %v4726 = vadd.f32 %v4655, %v4725
    %v4727 = vpop.f32.mrb[0].mxu0
    %v4728 = vadd.f32 %v4657, %v4727
    %4729 = vdwg.mxu0
    %4730 = vmatprep.subr.mxu0 %v143
    %4731 = vmatpush1.msra.mxu0 %v142
    %4732 = vmatprep.subr.mxu0 %v171
    %4733 = vmatpush1.msra.mxu0 %v170
    %4734 = vmatprep.subr.mxu0 %v199
    %4735 = vmatpush1.msra.mxu0 %v198
    %4736 = vmatprep.subr.mxu0 %v227
    %4737 = vmatpush1.msra.mxu0 %v226
    %4738 = vmatprep.subr.mxu0 %v255
    %4739 = vmatpush1.msra.mxu0 %v254
    %4740 = vmatprep.subr.mxu0 %v283
    %4741 = vmatpush1.msra.mxu0 %v282
    %4742 = vmatprep.subr.mxu0 %v311
    %4743 = vmatpush1.msra.mxu0 %v310
    %4744 = vmatprep.subr.mxu0 %v339
    %4745 = vmatpush1.msra.mxu0 %v338
    %4746 = vmatprep.subr.mxu0 %v367
    %4747 = vmatpush1.msra.mxu0 %v366
    %4748 = vmatprep.subr.mxu0 %v395
    %4749 = vmatpush1.msra.mxu0 %v394
    %4750 = vmatprep.subr.mxu0 %v423
    %4751 = vmatpush1.msra.mxu0 %v422
    %4752 = vmatprep.subr.mxu0 %v451
    %4753 = vmatpush1.msra.mxu0 %v450
    %4754 = vmatprep.subr.mxu0 %v479
    %4755 = vmatpush1.msra.mxu0 %v478
    %4756 = vmatprep.subr.mxu0 %v507
    %4757 = vmatpush1.msra.mxu0 %v506
    %4758 = vmatprep.subr.mxu0 %v535
    %4759 = vmatpush1.msra.mxu0 %v534
    %4760 = vmatprep.subr.mxu0 %v563
    %4761 = vmatpush1.msra.mxu0 %v562
    %4762 = vmatprep.subr.mxu0 %v591
    %4763 = vmatpush1.msra.mxu0 %v590
    %4764 = vmatprep.subr.mxu0 %v619
    %4765 = vmatpush1.msra.mxu0 %v618
    %4766 = vmatprep.subr.mxu0 %v647
    %4767 = vmatpush1.msra.mxu0 %v646
    %4768 = vmatprep.subr.mxu0 %v675
    %4769 = vmatpush1.msra.mxu0 %v674
    %4770 = vmatprep.subr.mxu0 %v703
    %4771 = vmatpush1.msra.mxu0 %v702
    %4772 = vmatprep.subr.mxu0 %v731
    %4773 = vmatpush1.msra.mxu0 %v730
    %4774 = vmatprep.subr.mxu0 %v759
    %4775 = vmatpush1.msra.mxu0 %v758
    %4776 = vmatprep.subr.mxu0 %v787
    %4777 = vmatpush1.msra.mxu0 %v786
    %4778 = vmatprep.subr.mxu0 %v815
    %4779 = vmatpush1.msra.mxu0 %v814
    %4780 = vmatprep.subr.mxu0 %v843
    %4781 = vmatpush1.msra.mxu0 %v842
    %4782 = vmatprep.subr.mxu0 %v871
    %4783 = vmatpush1.msra.mxu0 %v870
    %4784 = vmatprep.subr.mxu0 %v899
    %4785 = vmatpush1.msra.mxu0 %v898
    %4786 = vmatprep.subr.mxu0 %v927
    %4787 = vmatpush1.msra.mxu0 %v926
    %4788 = vmatprep.subr.mxu0 %v955
    %4789 = vmatpush1.msra.mxu0 %v954
    %4790 = vmatprep.subr.mxu0 %v983
    %4791 = vmatpush1.msra.mxu0 %v982
    %4792 = vmatprep.subr.mxu0 %v1011
    %4793 = vmatpush1.msra.mxu0 %v1010
    %4794 = vmatprep.mubr.f32.mxu0 %v124
    %4795 = vmatmul.mubr.f32.gmra.mrb[0].mxu0 %v123
    %v4796 = vpop.f32.mrb[0].mxu0
    %v4797 = vadd.f32 %v2933, %v4796
    %v4798 = vpop.f32.mrb[0].mxu0
    %v4799 = vadd.f32 %v2937, %v4798
    %4800 = vdwg.mxu0
    %4801 = vmatprep.subr.mxu0 %v1039
    %4802 = vmatpush1.msra.mxu0 %v1038
    %4803 = vmatprep.subr.mxu0 %v1067
    %4804 = vmatpush1.msra.mxu0 %v1066
    %4805 = vmatprep.subr.mxu0 %v1095
    %4806 = vmatpush1.msra.mxu0 %v1094
    %4807 = vmatprep.subr.mxu0 %v1123
    %4808 = vmatpush1.msra.mxu0 %v1122
    %4809 = vmatprep.subr.mxu0 %v1151
    %4810 = vmatpush1.msra.mxu0 %v1150
    %4811 = vmatprep.subr.mxu0 %v1179
    %4812 = vmatpush1.msra.mxu0 %v1178
    %4813 = vmatprep.subr.mxu0 %v1207
    %4814 = vmatpush1.msra.mxu0 %v1206
    %4815 = vmatprep.subr.mxu0 %v1235
    %4816 = vmatpush1.msra.mxu0 %v1234
    %4817 = vmatprep.subr.mxu0 %v1263
    %4818 = vmatpush1.msra.mxu0 %v1262
    %4819 = vmatprep.subr.mxu0 %v1291
    %4820 = vmatpush1.msra.mxu0 %v1290
    %4821 = vmatprep.subr.mxu0 %v1319
    %4822 = vmatpush1.msra.mxu0 %v1318
    %4823 = vmatprep.subr.mxu0 %v1347
    %4824 = vmatpush1.msra.mxu0 %v1346
    %4825 = vmatprep.subr.mxu0 %v1375
    %4826 = vmatpush1.msra.mxu0 %v1374
    %4827 = vmatprep.subr.mxu0 %v1403
    %4828 = vmatpush1.msra.mxu0 %v1402
    %4829 = vmatprep.subr.mxu0 %v1431
    %4830 = vmatpush1.msra.mxu0 %v1430
    %4831 = vmatprep.subr.mxu0 %v1459
    %4832 = vmatpush1.msra.mxu0 %v1458
    %4833 = vmatprep.subr.mxu0 %v1487
    %4834 = vmatpush1.msra.mxu0 %v1486
    %4835 = vmatprep.subr.mxu0 %v1515
    %4836 = vmatpush1.msra.mxu0 %v1514
    %4837 = vmatprep.subr.mxu0 %v1543
    %4838 = vmatpush1.msra.mxu0 %v1542
    %4839 = vmatprep.subr.mxu0 %v1571
    %4840 = vmatpush1.msra.mxu0 %v1570
    %4841 = vmatprep.subr.mxu0 %v1599
    %4842 = vmatpush1.msra.mxu0 %v1598
    %4843 = vmatprep.subr.mxu0 %v1627
    %4844 = vmatpush1.msra.mxu0 %v1626
    %4845 = vmatprep.subr.mxu0 %v1655
    %4846 = vmatpush1.msra.mxu0 %v1654
    %4847 = vmatprep.subr.mxu0 %v1683
    %4848 = vmatpush1.msra.mxu0 %v1682
    %4849 = vmatprep.subr.mxu0 %v1711
    %4850 = vmatpush1.msra.mxu0 %v1710
    %4851 = vmatprep.subr.mxu0 %v1739
    %4852 = vmatpush1.msra.mxu0 %v1738
    %4853 = vmatprep.subr.mxu0 %v1767
    %4854 = vmatpush1.msra.mxu0 %v1766
    %4855 = vmatprep.subr.mxu0 %v1795
    %4856 = vmatpush1.msra.mxu0 %v1794
    %4857 = vmatprep.subr.mxu0 %v1823
    %4858 = vmatpush1.msra.mxu0 %v1822
    %4859 = vmatprep.subr.mxu0 %v1851
    %4860 = vmatpush1.msra.mxu0 %v1850
    %4861 = vmatprep.subr.mxu0 %v1879
    %4862 = vmatpush1.msra.mxu0 %v1878
    %4863 = vmatprep.subr.mxu0 %v1907
    %4864 = vmatpush1.msra.mxu0 %v1906
    %4865 = vmatprep.mubr.f32.mxu0 %v126
    %4866 = vmatmul.mubr.f32.gmra.mrb[0].mxu0 %v125
    %v4867 = vpop.f32.mrb[0].mxu0
    %v4868 = vadd.f32 %v4797, %v4867
    %v4869 = vpop.f32.mrb[0].mxu0
    %v4870 = vadd.f32 %v4799, %v4869
    %4871 = vdwg.mxu0
    %4872 = vmatprep.subr.mxu0 %v1935
    %4873 = vmatpush1.msra.mxu0 %v1934
    %4874 = vmatprep.subr.mxu0 %v1963
    %4875 = vmatpush1.msra.mxu0 %v1962
    %4876 = vmatprep.subr.mxu0 %v1991
    %4877 = vmatpush1.msra.mxu0 %v1990
    %4878 = vmatprep.subr.mxu0 %v2019
    %4879 = vmatpush1.msra.mxu0 %v2018
    %4880 = vmatprep.subr.mxu0 %v2047
    %4881 = vmatpush1.msra.mxu0 %v2046
    %4882 = vmatprep.subr.mxu0 %v2075
    %4883 = vmatpush1.msra.mxu0 %v2074
    %4884 = vmatprep.subr.mxu0 %v2103
    %4885 = vmatpush1.msra.mxu0 %v2102
    %4886 = vmatprep.subr.mxu0 %v2131
    %4887 = vmatpush1.msra.mxu0 %v2130
    %4888 = vmatprep.subr.mxu0 %v2159
    %4889 = vmatpush1.msra.mxu0 %v2158
    %4890 = vmatprep.subr.mxu0 %v2187
    %4891 = vmatpush1.msra.mxu0 %v2186
    %4892 = vmatprep.subr.mxu0 %v2215
    %4893 = vmatpush1.msra.mxu0 %v2214
    %4894 = vmatprep.subr.mxu0 %v2243
    %4895 = vmatpush1.msra.mxu0 %v2242
    %4896 = vmatprep.subr.mxu0 %v2271
    %4897 = vmatpush1.msra.mxu0 %v2270
    %4898 = vmatprep.subr.mxu0 %v2299
    %4899 = vmatpush1.msra.mxu0 %v2298
    %4900 = vmatprep.subr.mxu0 %v2327
    %4901 = vmatpush1.msra.mxu0 %v2326
    %4902 = vmatprep.subr.mxu0 %v2355
    %4903 = vmatpush1.msra.mxu0 %v2354
    %4904 = vmatprep.subr.mxu0 %v2383
    %4905 = vmatpush1.msra.mxu0 %v2382
    %4906 = vmatprep.subr.mxu0 %v2411
    %4907 = vmatpush1.msra.mxu0 %v2410
    %4908 = vmatprep.subr.mxu0 %v2439
    %4909 = vmatpush1.msra.mxu0 %v2438
    %4910 = vmatprep.subr.mxu0 %v2467
    %4911 = vmatpush1.msra.mxu0 %v2466
    %4912 = vmatprep.subr.mxu0 %v2495
    %4913 = vmatpush1.msra.mxu0 %v2494
    %4914 = vmatprep.subr.mxu0 %v2523
    %4915 = vmatpush1.msra.mxu0 %v2522
    %4916 = vmatprep.subr.mxu0 %v2551
    %4917 = vmatpush1.msra.mxu0 %v2550
    %4918 = vmatprep.subr.mxu0 %v2579
    %4919 = vmatpush1.msra.mxu0 %v2578
    %4920 = vmatprep.subr.mxu0 %v2607
    %4921 = vmatpush1.msra.mxu0 %v2606
    %4922 = vmatprep.subr.mxu0 %v2635
    %4923 = vmatpush1.msra.mxu0 %v2634
    %4924 = vmatprep.subr.mxu0 %v2663
    %4925 = vmatpush1.msra.mxu0 %v2662
    %4926 = vmatprep.subr.mxu0 %v2691
    %4927 = vmatpush1.msra.mxu0 %v2690
    %4928 = vmatprep.subr.mxu0 %v2719
    %4929 = vmatpush1.msra.mxu0 %v2718
    %4930 = vmatprep.subr.mxu0 %v2747
    %4931 = vmatpush1.msra.mxu0 %v2746
    %4932 = vmatprep.subr.mxu0 %v2775
    %4933 = vmatpush1.msra.mxu0 %v2774
    %4934 = vmatprep.subr.mxu0 %v2803
    %4935 = vmatpush1.msra.mxu0 %v2802
    %4936 = vmatprep.mubr.f32.mxu0 %v128
    %4937 = vmatmul.mubr.f32.gmra.mrb[0].mxu0 %v127
    %v4938 = vpop.f32.mrb[0].mxu0
    %v4939 = vadd.f32 %v4868, %v4938
    %v4940 = vpop.f32.mrb[0].mxu0
    %v4941 = vadd.f32 %v4870, %v4940
    %4942 = vdwg.mxu0
    %4943 = vmatprep.subr.mxu0 %v2831
    %4944 = vmatpush1.msra.mxu0 %v2830
    %4945 = vmatprep.subr.mxu0 %v2859
    %4946 = vmatpush1.msra.mxu0 %v2858
    %4947 = vmatprep.subr.mxu0 0.0
    %4948 = vmatpush1.msra.mxu0 0.0
    %4949 = vmatprep.subr.mxu0 0.0
    %4950 = vmatpush1.msra.mxu0 0.0
    %4951 = vmatprep.subr.mxu0 0.0
    %4952 = vmatpush1.msra.mxu0 0.0
    %4953 = vmatprep.subr.mxu0 0.0
    %4954 = vmatpush1.msra.mxu0 0.0
    %4955 = vmatprep.subr.mxu0 0.0
    %4956 = vmatpush1.msra.mxu0 0.0
    %4957 = vmatprep.subr.mxu0 0.0
    %4958 = vmatpush1.msra.mxu0 0.0
    %4959 = vmatprep.subr.mxu0 0.0
    %4960 = vmatpush1.msra.mxu0 0.0
    %4961 = vmatprep.subr.mxu0 0.0
    %4962 = vmatpush1.msra.mxu0 0.0
    %4963 = vmatprep.subr.mxu0 0.0
    %4964 = vmatpush1.msra.mxu0 0.0
    %4965 = vmatprep.subr.mxu0 0.0
    %4966 = vmatpush1.msra.mxu0 0.0
    %4967 = vmatprep.subr.mxu0 0.0
    %4968 = vmatpush1.msra.mxu0 0.0
    %4969 = vmatprep.subr.mxu0 0.0
    %4970 = vmatpush1.msra.mxu0 0.0
    %4971 = vmatprep.subr.mxu0 0.0
    %4972 = vmatpush1.msra.mxu0 0.0
    %4973 = vmatprep.subr.mxu0 0.0
    %4974 = vmatpush1.msra.mxu0 0.0
    %4975 = vmatprep.subr.mxu0 0.0
    %4976 = vmatpush1.msra.mxu0 0.0
    %4977 = vmatprep.subr.mxu0 0.0
    %4978 = vmatpush1.msra.mxu0 0.0
    %4979 = vmatprep.subr.mxu0 0.0
    %4980 = vmatpush1.msra.mxu0 0.0
    %4981 = vmatprep.subr.mxu0 0.0
    %4982 = vmatpush1.msra.mxu0 0.0
    %4983 = vmatprep.subr.mxu0 0.0
    %4984 = vmatpush1.msra.mxu0 0.0
    %4985 = vmatprep.subr.mxu0 0.0
    %4986 = vmatpush1.msra.mxu0 0.0
    %4987 = vmatprep.subr.mxu0 0.0
    %4988 = vmatpush1.msra.mxu0 0.0
    %4989 = vmatprep.subr.mxu0 0.0
    %4990 = vmatpush1.msra.mxu0 0.0
    %4991 = vmatprep.subr.mxu0 0.0
    %4992 = vmatpush1.msra.mxu0 0.0
    %4993 = vmatprep.subr.mxu0 0.0
    %4994 = vmatpush1.msra.mxu0 0.0
    %4995 = vmatprep.subr.mxu0 0.0
    %4996 = vmatpush1.msra.mxu0 0.0
    %4997 = vmatprep.subr.mxu0 0.0
    %4998 = vmatpush1.msra.mxu0 0.0
    %4999 = vmatprep.subr.mxu0 0.0
    %5000 = vmatpush1.msra.mxu0 0.0
    %5001 = vmatprep.subr.mxu0 0.0
    %5002 = vmatpush1.msra.mxu0 0.0
    %5003 = vmatprep.subr.mxu0 0.0
    %5004 = vmatpush1.msra.mxu0 0.0
    %5005 = vmatprep.subr.mxu0 0.0
    %5006 = vmatpush1.msra.mxu0 0.0
    %5007 = vmatprep.mubr.f32.mxu0 0.0
    %5008 = vmatmul.mubr.f32.gmra.mrb[0].mxu0 %v3024
    %v5009 = vpop.f32.mrb[0].mxu0
    %v5010 = vadd.f32 %v4939, %v5009
    %v5011 = vpop.f32.mrb[0].mxu0
    %v5012 = vadd.f32 %v4941, %v5011
    %5013 = vdwg.mxu0
    %5014 = vmatprep.subr.mxu0 %v145
    %5015 = vmatpush1.msra.mxu0 %v144
    %5016 = vmatprep.subr.mxu0 %v173
    %5017 = vmatpush1.msra.mxu0 %v172
    %5018 = vmatprep.subr.mxu0 %v201
    %5019 = vmatpush1.msra.mxu0 %v200
    %5020 = vmatprep.subr.mxu0 %v229
    %5021 = vmatpush1.msra.mxu0 %v228
    %5022 = vmatprep.subr.mxu0 %v257
    %5023 = vmatpush1.msra.mxu0 %v256
    %5024 = vmatprep.subr.mxu0 %v285
    %5025 = vmatpush1.msra.mxu0 %v284
    %5026 = vmatprep.subr.mxu0 %v313
    %5027 = vmatpush1.msra.mxu0 %v312
    %5028 = vmatprep.subr.mxu0 %v341
    %5029 = vmatpush1.msra.mxu0 %v340
    %5030 = vmatprep.subr.mxu0 %v369
    %5031 = vmatpush1.msra.mxu0 %v368
    %5032 = vmatprep.subr.mxu0 %v397
    %5033 = vmatpush1.msra.mxu0 %v396
    %5034 = vmatprep.subr.mxu0 %v425
    %5035 = vmatpush1.msra.mxu0 %v424
    %5036 = vmatprep.subr.mxu0 %v453
    %5037 = vmatpush1.msra.mxu0 %v452
    %5038 = vmatprep.subr.mxu0 %v481
    %5039 = vmatpush1.msra.mxu0 %v480
    %5040 = vmatprep.subr.mxu0 %v509
    %5041 = vmatpush1.msra.mxu0 %v508
    %5042 = vmatprep.subr.mxu0 %v537
    %5043 = vmatpush1.msra.mxu0 %v536
    %5044 = vmatprep.subr.mxu0 %v565
    %5045 = vmatpush1.msra.mxu0 %v564
    %5046 = vmatprep.subr.mxu0 %v593
    %5047 = vmatpush1.msra.mxu0 %v592
    %5048 = vmatprep.subr.mxu0 %v621
    %5049 = vmatpush1.msra.mxu0 %v620
    %5050 = vmatprep.subr.mxu0 %v649
    %5051 = vmatpush1.msra.mxu0 %v648
    %5052 = vmatprep.subr.mxu0 %v677
    %5053 = vmatpush1.msra.mxu0 %v676
    %5054 = vmatprep.subr.mxu0 %v705
    %5055 = vmatpush1.msra.mxu0 %v704
    %5056 = vmatprep.subr.mxu0 %v733
    %5057 = vmatpush1.msra.mxu0 %v732
    %5058 = vmatprep.subr.mxu0 %v761
    %5059 = vmatpush1.msra.mxu0 %v760
    %5060 = vmatprep.subr.mxu0 %v789
    %5061 = vmatpush1.msra.mxu0 %v788
    %5062 = vmatprep.subr.mxu0 %v817
    %5063 = vmatpush1.msra.mxu0 %v816
    %5064 = vmatprep.subr.mxu0 %v845
    %5065 = vmatpush1.msra.mxu0 %v844
    %5066 = vmatprep.subr.mxu0 %v873
    %5067 = vmatpush1.msra.mxu0 %v872
    %5068 = vmatprep.subr.mxu0 %v901
    %5069 = vmatpush1.msra.mxu0 %v900
    %5070 = vmatprep.subr.mxu0 %v929
    %5071 = vmatpush1.msra.mxu0 %v928
    %5072 = vmatprep.subr.mxu0 %v957
    %5073 = vmatpush1.msra.mxu0 %v956
    %5074 = vmatprep.subr.mxu0 %v985
    %5075 = vmatpush1.msra.mxu0 %v984
    %5076 = vmatprep.subr.mxu0 %v1013
    %5077 = vmatpush1.msra.mxu0 %v1012
    %5078 = vmatprep.mubr.f32.mxu0 %v124
    %5079 = vmatmul.mubr.f32.gmra.mrb[0].mxu0 %v123
    %v5080 = vpop.f32.mrb[0].mxu0
    %v5081 = vadd.f32 %v2941, %v5080
    %v5082 = vpop.f32.mrb[0].mxu0
    %v5083 = vadd.f32 %v2945, %v5082
    %5084 = vdwg.mxu0
    %5085 = vmatprep.subr.mxu0 %v1041
    %5086 = vmatpush1.msra.mxu0 %v1040
    %5087 = vmatprep.subr.mxu0 %v1069
    %5088 = vmatpush1.msra.mxu0 %v1068
    %5089 = vmatprep.subr.mxu0 %v1097
    %5090 = vmatpush1.msra.mxu0 %v1096
    %5091 = vmatprep.subr.mxu0 %v1125
    %5092 = vmatpush1.msra.mxu0 %v1124
    %5093 = vmatprep.subr.mxu0 %v1153
    %5094 = vmatpush1.msra.mxu0 %v1152
    %5095 = vmatprep.subr.mxu0 %v1181
    %5096 = vmatpush1.msra.mxu0 %v1180
    %5097 = vmatprep.subr.mxu0 %v1209
    %5098 = vmatpush1.msra.mxu0 %v1208
    %5099 = vmatprep.subr.mxu0 %v1237
    %5100 = vmatpush1.msra.mxu0 %v1236
    %5101 = vmatprep.subr.mxu0 %v1265
    %5102 = vmatpush1.msra.mxu0 %v1264
    %5103 = vmatprep.subr.mxu0 %v1293
    %5104 = vmatpush1.msra.mxu0 %v1292
    %5105 = vmatprep.subr.mxu0 %v1321
    %5106 = vmatpush1.msra.mxu0 %v1320
    %5107 = vmatprep.subr.mxu0 %v1349
    %5108 = vmatpush1.msra.mxu0 %v1348
    %5109 = vmatprep.subr.mxu0 %v1377
    %5110 = vmatpush1.msra.mxu0 %v1376
    %5111 = vmatprep.subr.mxu0 %v1405
    %5112 = vmatpush1.msra.mxu0 %v1404
    %5113 = vmatprep.subr.mxu0 %v1433
    %5114 = vmatpush1.msra.mxu0 %v1432
    %5115 = vmatprep.subr.mxu0 %v1461
    %5116 = vmatpush1.msra.mxu0 %v1460
    %5117 = vmatprep.subr.mxu0 %v1489
    %5118 = vmatpush1.msra.mxu0 %v1488
    %5119 = vmatprep.subr.mxu0 %v1517
    %5120 = vmatpush1.msra.mxu0 %v1516
    %5121 = vmatprep.subr.mxu0 %v1545
    %5122 = vmatpush1.msra.mxu0 %v1544
    %5123 = vmatprep.subr.mxu0 %v1573
    %5124 = vmatpush1.msra.mxu0 %v1572
    %5125 = vmatprep.subr.mxu0 %v1601
    %5126 = vmatpush1.msra.mxu0 %v1600
    %5127 = vmatprep.subr.mxu0 %v1629
    %5128 = vmatpush1.msra.mxu0 %v1628
    %5129 = vmatprep.subr.mxu0 %v1657
    %5130 = vmatpush1.msra.mxu0 %v1656
    %5131 = vmatprep.subr.mxu0 %v1685
    %5132 = vmatpush1.msra.mxu0 %v1684
    %5133 = vmatprep.subr.mxu0 %v1713
    %5134 = vmatpush1.msra.mxu0 %v1712
    %5135 = vmatprep.subr.mxu0 %v1741
    %5136 = vmatpush1.msra.mxu0 %v1740
    %5137 = vmatprep.subr.mxu0 %v1769
    %5138 = vmatpush1.msra.mxu0 %v1768
    %5139 = vmatprep.subr.mxu0 %v1797
    %5140 = vmatpush1.msra.mxu0 %v1796
    %5141 = vmatprep.subr.mxu0 %v1825
    %5142 = vmatpush1.msra.mxu0 %v1824
    %5143 = vmatprep.subr.mxu0 %v1853
    %5144 = vmatpush1.msra.mxu0 %v1852
    %5145 = vmatprep.subr.mxu0 %v1881
    %5146 = vmatpush1.msra.mxu0 %v1880
    %5147 = vmatprep.subr.mxu0 %v1909
    %5148 = vmatpush1.msra.mxu0 %v1908
    %5149 = vmatprep.mubr.f32.mxu0 %v126
    %5150 = vmatmul.mubr.f32.gmra.mrb[0].mxu0 %v125
    %v5151 = vpop.f32.mrb[0].mxu0
    %v5152 = vadd.f32 %v5081, %v5151
    %v5153 = vpop.f32.mrb[0].mxu0
    %v5154 = vadd.f32 %v5083, %v5153
    %5155 = vdwg.mxu0
    %5156 = vmatprep.subr.mxu0 %v1937
    %5157 = vmatpush1.msra.mxu0 %v1936
    %5158 = vmatprep.subr.mxu0 %v1965
    %5159 = vmatpush1.msra.mxu0 %v1964
    %5160 = vmatprep.subr.mxu0 %v1993
    %5161 = vmatpush1.msra.mxu0 %v1992
    %5162 = vmatprep.subr.mxu0 %v2021
    %5163 = vmatpush1.msra.mxu0 %v2020
    %5164 = vmatprep.subr.mxu0 %v2049
    %5165 = vmatpush1.msra.mxu0 %v2048
    %5166 = vmatprep.subr.mxu0 %v2077
    %5167 = vmatpush1.msra.mxu0 %v2076
    %5168 = vmatprep.subr.mxu0 %v2105
    %5169 = vmatpush1.msra.mxu0 %v2104
    %5170 = vmatprep.subr.mxu0 %v2133
    %5171 = vmatpush1.msra.mxu0 %v2132
    %5172 = vmatprep.subr.mxu0 %v2161
    %5173 = vmatpush1.msra.mxu0 %v2160
    %5174 = vmatprep.subr.mxu0 %v2189
    %5175 = vmatpush1.msra.mxu0 %v2188
    %5176 = vmatprep.subr.mxu0 %v2217
    %5177 = vmatpush1.msra.mxu0 %v2216
    %5178 = vmatprep.subr.mxu0 %v2245
    %5179 = vmatpush1.msra.mxu0 %v2244
    %5180 = vmatprep.subr.mxu0 %v2273
    %5181 = vmatpush1.msra.mxu0 %v2272
    %5182 = vmatprep.subr.mxu0 %v2301
    %5183 = vmatpush1.msra.mxu0 %v2300
    %5184 = vmatprep.subr.mxu0 %v2329
    %5185 = vmatpush1.msra.mxu0 %v2328
    %5186 = vmatprep.subr.mxu0 %v2357
    %5187 = vmatpush1.msra.mxu0 %v2356
    %5188 = vmatprep.subr.mxu0 %v2385
    %5189 = vmatpush1.msra.mxu0 %v2384
    %5190 = vmatprep.subr.mxu0 %v2413
    %5191 = vmatpush1.msra.mxu0 %v2412
    %5192 = vmatprep.subr.mxu0 %v2441
    %5193 = vmatpush1.msra.mxu0 %v2440
    %5194 = vmatprep.subr.mxu0 %v2469
    %5195 = vmatpush1.msra.mxu0 %v2468
    %5196 = vmatprep.subr.mxu0 %v2497
    %5197 = vmatpush1.msra.mxu0 %v2496
    %5198 = vmatprep.subr.mxu0 %v2525
    %5199 = vmatpush1.msra.mxu0 %v2524
    %5200 = vmatprep.subr.mxu0 %v2553
    %5201 = vmatpush1.msra.mxu0 %v2552
    %5202 = vmatprep.subr.mxu0 %v2581
    %5203 = vmatpush1.msra.mxu0 %v2580
    %5204 = vmatprep.subr.mxu0 %v2609
    %5205 = vmatpush1.msra.mxu0 %v2608
    %5206 = vmatprep.subr.mxu0 %v2637
    %5207 = vmatpush1.msra.mxu0 %v2636
    %5208 = vmatprep.subr.mxu0 %v2665
    %5209 = vmatpush1.msra.mxu0 %v2664
    %5210 = vmatprep.subr.mxu0 %v2693
    %5211 = vmatpush1.msra.mxu0 %v2692
    %5212 = vmatprep.subr.mxu0 %v2721
    %5213 = vmatpush1.msra.mxu0 %v2720
    %5214 = vmatprep.subr.mxu0 %v2749
    %5215 = vmatpush1.msra.mxu0 %v2748
    %5216 = vmatprep.subr.mxu0 %v2777
    %5217 = vmatpush1.msra.mxu0 %v2776
    %5218 = vmatprep.subr.mxu0 %v2805
    %5219 = vmatpush1.msra.mxu0 %v2804
    %5220 = vmatprep.mubr.f32.mxu0 %v128
    %5221 = vmatmul.mubr.f32.gmra.mrb[0].mxu0 %v127
    %v5222 = vpop.f32.mrb[0].mxu0
    %v5223 = vadd.f32 %v5152, %v5222
    %v5224 = vpop.f32.mrb[0].mxu0
    %v5225 = vadd.f32 %v5154, %v5224
    %5226 = vdwg.mxu0
    %5227 = vmatprep.subr.mxu0 %v2833
    %5228 = vmatpush1.msra.mxu0 %v2832
    %5229 = vmatprep.subr.mxu0 %v2861
    %5230 = vmatpush1.msra.mxu0 %v2860
    %5231 = vmatprep.subr.mxu0 0.0
    %5232 = vmatpush1.msra.mxu0 0.0
    %5233 = vmatprep.subr.mxu0 0.0
    %5234 = vmatpush1.msra.mxu0 0.0
    %5235 = vmatprep.subr.mxu0 0.0
    %5236 = vmatpush1.msra.mxu0 0.0
    %5237 = vmatprep.subr.mxu0 0.0
    %5238 = vmatpush1.msra.mxu0 0.0
    %5239 = vmatprep.subr.mxu0 0.0
    %5240 = vmatpush1.msra.mxu0 0.0
    %5241 = vmatprep.subr.mxu0 0.0
    %5242 = vmatpush1.msra.mxu0 0.0
    %5243 = vmatprep.subr.mxu0 0.0
    %5244 = vmatpush1.msra.mxu0 0.0
    %5245 = vmatprep.subr.mxu0 0.0
    %5246 = vmatpush1.msra.mxu0 0.0
    %5247 = vmatprep.subr.mxu0 0.0
    %5248 = vmatpush1.msra.mxu0 0.0
    %5249 = vmatprep.subr.mxu0 0.0
    %5250 = vmatpush1.msra.mxu0 0.0
    %5251 = vmatprep.subr.mxu0 0.0
    %5252 = vmatpush1.msra.mxu0 0.0
    %5253 = vmatprep.subr.mxu0 0.0
    %5254 = vmatpush1.msra.mxu0 0.0
    %5255 = vmatprep.subr.mxu0 0.0
    %5256 = vmatpush1.msra.mxu0 0.0
    %5257 = vmatprep.subr.mxu0 0.0
    %5258 = vmatpush1.msra.mxu0 0.0
    %5259 = vmatprep.subr.mxu0 0.0
    %5260 = vmatpush1.msra.mxu0 0.0
    %5261 = vmatprep.subr.mxu0 0.0
    %5262 = vmatpush1.msra.mxu0 0.0
    %5263 = vmatprep.subr.mxu0 0.0
    %5264 = vmatpush1.msra.mxu0 0.0
    %5265 = vmatprep.subr.mxu0 0.0
    %5266 = vmatpush1.msra.mxu0 0.0
    %5267 = vmatprep.subr.mxu0 0.0
    %5268 = vmatpush1.msra.mxu0 0.0
    %5269 = vmatprep.subr.mxu0 0.0
    %5270 = vmatpush1.msra.mxu0 0.0
    %5271 = vmatprep.subr.mxu0 0.0
    %5272 = vmatpush1.msra.mxu0 0.0
    %5273 = vmatprep.subr.mxu0 0.0
    %5274 = vmatpush1.msra.mxu0 0.0
    %5275 = vmatprep.subr.mxu0 0.0
    %5276 = vmatpush1.msra.mxu0 0.0
    %5277 = vmatprep.subr.mxu0 0.0
    %5278 = vmatpush1.msra.mxu0 0.0
    %5279 = vmatprep.subr.mxu0 0.0
    %5280 = vmatpush1.msra.mxu0 0.0
    %5281 = vmatprep.subr.mxu0 0.0
    %5282 = vmatpush1.msra.mxu0 0.0
    %5283 = vmatprep.subr.mxu0 0.0
    %5284 = vmatpush1.msra.mxu0 0.0
    %5285 = vmatprep.subr.mxu0 0.0
    %5286 = vmatpush1.msra.mxu0 0.0
    %5287 = vmatprep.subr.mxu0 0.0
    %5288 = vmatpush1.msra.mxu0 0.0
    %5289 = vmatprep.subr.mxu0 0.0
    %5290 = vmatpush1.msra.mxu0 0.0
    %5291 = vmatprep.mubr.f32.mxu0 0.0
    %5292 = vmatmul.mubr.f32.gmra.mrb[0].mxu0 %v3024
    %v5293 = vpop.f32.mrb[0].mxu0
    %v5294 = vadd.f32 %v5223, %v5293
    %v5295 = vpop.f32.mrb[0].mxu0
    %v5296 = vadd.f32 %v5225, %v5295
    %5297 = vdwg.mxu0
    %5298 = vmatprep.subr.mxu0 %v147
    %5299 = vmatpush1.msra.mxu0 %v146
    %5300 = vmatprep.subr.mxu0 %v175
    %5301 = vmatpush1.msra.mxu0 %v174
    %5302 = vmatprep.subr.mxu0 %v203
    %5303 = vmatpush1.msra.mxu0 %v202
    %5304 = vmatprep.subr.mxu0 %v231
    %5305 = vmatpush1.msra.mxu0 %v230
    %5306 = vmatprep.subr.mxu0 %v259
    %5307 = vmatpush1.msra.mxu0 %v258
    %5308 = vmatprep.subr.mxu0 %v287
    %5309 = vmatpush1.msra.mxu0 %v286
    %5310 = vmatprep.subr.mxu0 %v315
    %5311 = vmatpush1.msra.mxu0 %v314
    %5312 = vmatprep.subr.mxu0 %v343
    %5313 = vmatpush1.msra.mxu0 %v342
    %5314 = vmatprep.subr.mxu0 %v371
    %5315 = vmatpush1.msra.mxu0 %v370
    %5316 = vmatprep.subr.mxu0 %v399
    %5317 = vmatpush1.msra.mxu0 %v398
    %5318 = vmatprep.subr.mxu0 %v427
    %5319 = vmatpush1.msra.mxu0 %v426
    %5320 = vmatprep.subr.mxu0 %v455
    %5321 = vmatpush1.msra.mxu0 %v454
    %5322 = vmatprep.subr.mxu0 %v483
    %5323 = vmatpush1.msra.mxu0 %v482
    %5324 = vmatprep.subr.mxu0 %v511
    %5325 = vmatpush1.msra.mxu0 %v510
    %5326 = vmatprep.subr.mxu0 %v539
    %5327 = vmatpush1.msra.mxu0 %v538
    %5328 = vmatprep.subr.mxu0 %v567
    %5329 = vmatpush1.msra.mxu0 %v566
    %5330 = vmatprep.subr.mxu0 %v595
    %5331 = vmatpush1.msra.mxu0 %v594
    %5332 = vmatprep.subr.mxu0 %v623
    %5333 = vmatpush1.msra.mxu0 %v622
    %5334 = vmatprep.subr.mxu0 %v651
    %5335 = vmatpush1.msra.mxu0 %v650
    %5336 = vmatprep.subr.mxu0 %v679
    %5337 = vmatpush1.msra.mxu0 %v678
    %5338 = vmatprep.subr.mxu0 %v707
    %5339 = vmatpush1.msra.mxu0 %v706
    %5340 = vmatprep.subr.mxu0 %v735
    %5341 = vmatpush1.msra.mxu0 %v734
    %5342 = vmatprep.subr.mxu0 %v763
    %5343 = vmatpush1.msra.mxu0 %v762
    %5344 = vmatprep.subr.mxu0 %v791
    %5345 = vmatpush1.msra.mxu0 %v790
    %5346 = vmatprep.subr.mxu0 %v819
    %5347 = vmatpush1.msra.mxu0 %v818
    %5348 = vmatprep.subr.mxu0 %v847
    %5349 = vmatpush1.msra.mxu0 %v846
    %5350 = vmatprep.subr.mxu0 %v875
    %5351 = vmatpush1.msra.mxu0 %v874
    %5352 = vmatprep.subr.mxu0 %v903
    %5353 = vmatpush1.msra.mxu0 %v902
    %5354 = vmatprep.subr.mxu0 %v931
    %5355 = vmatpush1.msra.mxu0 %v930
    %5356 = vmatprep.subr.mxu0 %v959
    %5357 = vmatpush1.msra.mxu0 %v958
    %5358 = vmatprep.subr.mxu0 %v987
    %5359 = vmatpush1.msra.mxu0 %v986
    %5360 = vmatprep.subr.mxu0 %v1015
    %5361 = vmatpush1.msra.mxu0 %v1014
    %5362 = vmatprep.mubr.f32.mxu0 %v124
    %5363 = vmatmul.mubr.f32.gmra.mrb[0].mxu0 %v123
    %v5364 = vpop.f32.mrb[0].mxu0
    %v5365 = vadd.f32 %v2949, %v5364
    %v5366 = vpop.f32.mrb[0].mxu0
    %v5367 = vadd.f32 %v2953, %v5366
    %5368 = vdwg.mxu0
    %5369 = vmatprep.subr.mxu0 %v1043
    %5370 = vmatpush1.msra.mxu0 %v1042
    %5371 = vmatprep.subr.mxu0 %v1071
    %5372 = vmatpush1.msra.mxu0 %v1070
    %5373 = vmatprep.subr.mxu0 %v1099
    %5374 = vmatpush1.msra.mxu0 %v1098
    %5375 = vmatprep.subr.mxu0 %v1127
    %5376 = vmatpush1.msra.mxu0 %v1126
    %5377 = vmatprep.subr.mxu0 %v1155
    %5378 = vmatpush1.msra.mxu0 %v1154
    %5379 = vmatprep.subr.mxu0 %v1183
    %5380 = vmatpush1.msra.mxu0 %v1182
    %5381 = vmatprep.subr.mxu0 %v1211
    %5382 = vmatpush1.msra.mxu0 %v1210
    %5383 = vmatprep.subr.mxu0 %v1239
    %5384 = vmatpush1.msra.mxu0 %v1238
    %5385 = vmatprep.subr.mxu0 %v1267
    %5386 = vmatpush1.msra.mxu0 %v1266
    %5387 = vmatprep.subr.mxu0 %v1295
    %5388 = vmatpush1.msra.mxu0 %v1294
    %5389 = vmatprep.subr.mxu0 %v1323
    %5390 = vmatpush1.msra.mxu0 %v1322
    %5391 = vmatprep.subr.mxu0 %v1351
    %5392 = vmatpush1.msra.mxu0 %v1350
    %5393 = vmatprep.subr.mxu0 %v1379
    %5394 = vmatpush1.msra.mxu0 %v1378
    %5395 = vmatprep.subr.mxu0 %v1407
    %5396 = vmatpush1.msra.mxu0 %v1406
    %5397 = vmatprep.subr.mxu0 %v1435
    %5398 = vmatpush1.msra.mxu0 %v1434
    %5399 = vmatprep.subr.mxu0 %v1463
    %5400 = vmatpush1.msra.mxu0 %v1462
    %5401 = vmatprep.subr.mxu0 %v1491
    %5402 = vmatpush1.msra.mxu0 %v1490
    %5403 = vmatprep.subr.mxu0 %v1519
    %5404 = vmatpush1.msra.mxu0 %v1518
    %5405 = vmatprep.subr.mxu0 %v1547
    %5406 = vmatpush1.msra.mxu0 %v1546
    %5407 = vmatprep.subr.mxu0 %v1575
    %5408 = vmatpush1.msra.mxu0 %v1574
    %5409 = vmatprep.subr.mxu0 %v1603
    %5410 = vmatpush1.msra.mxu0 %v1602
    %5411 = vmatprep.subr.mxu0 %v1631
    %5412 = vmatpush1.msra.mxu0 %v1630
    %5413 = vmatprep.subr.mxu0 %v1659
    %5414 = vmatpush1.msra.mxu0 %v1658
    %5415 = vmatprep.subr.mxu0 %v1687
    %5416 = vmatpush1.msra.mxu0 %v1686
    %5417 = vmatprep.subr.mxu0 %v1715
    %5418 = vmatpush1.msra.mxu0 %v1714
    %5419 = vmatprep.subr.mxu0 %v1743
    %5420 = vmatpush1.msra.mxu0 %v1742
    %5421 = vmatprep.subr.mxu0 %v1771
    %5422 = vmatpush1.msra.mxu0 %v1770
    %5423 = vmatprep.subr.mxu0 %v1799
    %5424 = vmatpush1.msra.mxu0 %v1798
    %5425 = vmatprep.subr.mxu0 %v1827
    %5426 = vmatpush1.msra.mxu0 %v1826
    %5427 = vmatprep.subr.mxu0 %v1855
    %5428 = vmatpush1.msra.mxu0 %v1854
    %5429 = vmatprep.subr.mxu0 %v1883
    %5430 = vmatpush1.msra.mxu0 %v1882
    %5431 = vmatprep.subr.mxu0 %v1911
    %5432 = vmatpush1.msra.mxu0 %v1910
    %5433 = vmatprep.mubr.f32.mxu0 %v126
    %5434 = vmatmul.mubr.f32.gmra.mrb[0].mxu0 %v125
    %v5435 = vpop.f32.mrb[0].mxu0
    %v5436 = vadd.f32 %v5365, %v5435
    %v5437 = vpop.f32.mrb[0].mxu0
    %v5438 = vadd.f32 %v5367, %v5437
    %5439 = vdwg.mxu0
    %5440 = vmatprep.subr.mxu0 %v1939
    %5441 = vmatpush1.msra.mxu0 %v1938
    %5442 = vmatprep.subr.mxu0 %v1967
    %5443 = vmatpush1.msra.mxu0 %v1966
    %5444 = vmatprep.subr.mxu0 %v1995
    %5445 = vmatpush1.msra.mxu0 %v1994
    %5446 = vmatprep.subr.mxu0 %v2023
    %5447 = vmatpush1.msra.mxu0 %v2022
    %5448 = vmatprep.subr.mxu0 %v2051
    %5449 = vmatpush1.msra.mxu0 %v2050
    %5450 = vmatprep.subr.mxu0 %v2079
    %5451 = vmatpush1.msra.mxu0 %v2078
    %5452 = vmatprep.subr.mxu0 %v2107
    %5453 = vmatpush1.msra.mxu0 %v2106
    %5454 = vmatprep.subr.mxu0 %v2135
    %5455 = vmatpush1.msra.mxu0 %v2134
    %5456 = vmatprep.subr.mxu0 %v2163
    %5457 = vmatpush1.msra.mxu0 %v2162
    %5458 = vmatprep.subr.mxu0 %v2191
    %5459 = vmatpush1.msra.mxu0 %v2190
    %5460 = vmatprep.subr.mxu0 %v2219
    %5461 = vmatpush1.msra.mxu0 %v2218
    %5462 = vmatprep.subr.mxu0 %v2247
    %5463 = vmatpush1.msra.mxu0 %v2246
    %5464 = vmatprep.subr.mxu0 %v2275
    %5465 = vmatpush1.msra.mxu0 %v2274
    %5466 = vmatprep.subr.mxu0 %v2303
    %5467 = vmatpush1.msra.mxu0 %v2302
    %5468 = vmatprep.subr.mxu0 %v2331
    %5469 = vmatpush1.msra.mxu0 %v2330
    %5470 = vmatprep.subr.mxu0 %v2359
    %5471 = vmatpush1.msra.mxu0 %v2358
    %5472 = vmatprep.subr.mxu0 %v2387
    %5473 = vmatpush1.msra.mxu0 %v2386
    %5474 = vmatprep.subr.mxu0 %v2415
    %5475 = vmatpush1.msra.mxu0 %v2414
    %5476 = vmatprep.subr.mxu0 %v2443
    %5477 = vmatpush1.msra.mxu0 %v2442
    %5478 = vmatprep.subr.mxu0 %v2471
    %5479 = vmatpush1.msra.mxu0 %v2470
    %5480 = vmatprep.subr.mxu0 %v2499
    %5481 = vmatpush1.msra.mxu0 %v2498
    %5482 = vmatprep.subr.mxu0 %v2527
    %5483 = vmatpush1.msra.mxu0 %v2526
    %5484 = vmatprep.subr.mxu0 %v2555
    %5485 = vmatpush1.msra.mxu0 %v2554
    %5486 = vmatprep.subr.mxu0 %v2583
    %5487 = vmatpush1.msra.mxu0 %v2582
    %5488 = vmatprep.subr.mxu0 %v2611
    %5489 = vmatpush1.msra.mxu0 %v2610
    %5490 = vmatprep.subr.mxu0 %v2639
    %5491 = vmatpush1.msra.mxu0 %v2638
    %5492 = vmatprep.subr.mxu0 %v2667
    %5493 = vmatpush1.msra.mxu0 %v2666
    %5494 = vmatprep.subr.mxu0 %v2695
    %5495 = vmatpush1.msra.mxu0 %v2694
    %5496 = vmatprep.subr.mxu0 %v2723
    %5497 = vmatpush1.msra.mxu0 %v2722
    %5498 = vmatprep.subr.mxu0 %v2751
    %5499 = vmatpush1.msra.mxu0 %v2750
    %5500 = vmatprep.subr.mxu0 %v2779
    %5501 = vmatpush1.msra.mxu0 %v2778
    %5502 = vmatprep.subr.mxu0 %v2807
    %5503 = vmatpush1.msra.mxu0 %v2806
    %5504 = vmatprep.mubr.f32.mxu0 %v128
    %5505 = vmatmul.mubr.f32.gmra.mrb[0].mxu0 %v127
    %v5506 = vpop.f32.mrb[0].mxu0
    %v5507 = vadd.f32 %v5436, %v5506
    %v5508 = vpop.f32.mrb[0].mxu0
    %v5509 = vadd.f32 %v5438, %v5508
    %5510 = vdwg.mxu0
    %5511 = vmatprep.subr.mxu0 %v2835
    %5512 = vmatpush1.msra.mxu0 %v2834
    %5513 = vmatprep.subr.mxu0 %v2863
    %5514 = vmatpush1.msra.mxu0 %v2862
    %5515 = vmatprep.subr.mxu0 0.0
    %5516 = vmatpush1.msra.mxu0 0.0
    %5517 = vmatprep.subr.mxu0 0.0
    %5518 = vmatpush1.msra.mxu0 0.0
    %5519 = vmatprep.subr.mxu0 0.0
    %5520 = vmatpush1.msra.mxu0 0.0
    %5521 = vmatprep.subr.mxu0 0.0
    %5522 = vmatpush1.msra.mxu0 0.0
    %5523 = vmatprep.subr.mxu0 0.0
    %5524 = vmatpush1.msra.mxu0 0.0
    %5525 = vmatprep.subr.mxu0 0.0
    %5526 = vmatpush1.msra.mxu0 0.0
    %5527 = vmatprep.subr.mxu0 0.0
    %5528 = vmatpush1.msra.mxu0 0.0
    %5529 = vmatprep.subr.mxu0 0.0
    %5530 = vmatpush1.msra.mxu0 0.0
    %5531 = vmatprep.subr.mxu0 0.0
    %5532 = vmatpush1.msra.mxu0 0.0
    %5533 = vmatprep.subr.mxu0 0.0
    %5534 = vmatpush1.msra.mxu0 0.0
    %5535 = vmatprep.subr.mxu0 0.0
    %5536 = vmatpush1.msra.mxu0 0.0
    %5537 = vmatprep.subr.mxu0 0.0
    %5538 = vmatpush1.msra.mxu0 0.0
    %5539 = vmatprep.subr.mxu0 0.0
    %5540 = vmatpush1.msra.mxu0 0.0
    %5541 = vmatprep.subr.mxu0 0.0
    %5542 = vmatpush1.msra.mxu0 0.0
    %5543 = vmatprep.subr.mxu0 0.0
    %5544 = vmatpush1.msra.mxu0 0.0
    %5545 = vmatprep.subr.mxu0 0.0
    %5546 = vmatpush1.msra.mxu0 0.0
    %5547 = vmatprep.subr.mxu0 0.0
    %5548 = vmatpush1.msra.mxu0 0.0
    %5549 = vmatprep.subr.mxu0 0.0
    %5550 = vmatpush1.msra.mxu0 0.0
    %5551 = vmatprep.subr.mxu0 0.0
    %5552 = vmatpush1.msra.mxu0 0.0
    %5553 = vmatprep.subr.mxu0 0.0
    %5554 = vmatpush1.msra.mxu0 0.0
    %5555 = vmatprep.subr.mxu0 0.0
    %5556 = vmatpush1.msra.mxu0 0.0
    %5557 = vmatprep.subr.mxu0 0.0
    %5558 = vmatpush1.msra.mxu0 0.0
    %5559 = vmatprep.subr.mxu0 0.0
    %5560 = vmatpush1.msra.mxu0 0.0
    %5561 = vmatprep.subr.mxu0 0.0
    %5562 = vmatpush1.msra.mxu0 0.0
    %5563 = vmatprep.subr.mxu0 0.0
    %5564 = vmatpush1.msra.mxu0 0.0
    %5565 = vmatprep.subr.mxu0 0.0
    %5566 = vmatpush1.msra.mxu0 0.0
    %5567 = vmatprep.subr.mxu0 0.0
    %5568 = vmatpush1.msra.mxu0 0.0
    %5569 = vmatprep.subr.mxu0 0.0
    %5570 = vmatpush1.msra.mxu0 0.0
    %5571 = vmatprep.subr.mxu0 0.0
    %5572 = vmatpush1.msra.mxu0 0.0
    %5573 = vmatprep.subr.mxu0 0.0
    %5574 = vmatpush1.msra.mxu0 0.0
    %5575 = vmatprep.mubr.f32.mxu0 0.0
    %5576 = vmatmul.mubr.f32.gmra.mrb[0].mxu0 %v3024
    %v5577 = vpop.f32.mrb[0].mxu0
    %v5578 = vadd.f32 %v5507, %v5577
    %v5579 = vpop.f32.mrb[0].mxu0
    %v5580 = vadd.f32 %v5509, %v5579
    %5581 = vdwg.mxu0
    %5582 = vmatprep.subr.mxu0 %v149
    %5583 = vmatpush1.msra.mxu0 %v148
    %5584 = vmatprep.subr.mxu0 %v177
    %5585 = vmatpush1.msra.mxu0 %v176
    %5586 = vmatprep.subr.mxu0 %v205
    %5587 = vmatpush1.msra.mxu0 %v204
    %5588 = vmatprep.subr.mxu0 %v233
    %5589 = vmatpush1.msra.mxu0 %v232
    %5590 = vmatprep.subr.mxu0 %v261
    %5591 = vmatpush1.msra.mxu0 %v260
    %5592 = vmatprep.subr.mxu0 %v289
    %5593 = vmatpush1.msra.mxu0 %v288
    %5594 = vmatprep.subr.mxu0 %v317
    %5595 = vmatpush1.msra.mxu0 %v316
    %5596 = vmatprep.subr.mxu0 %v345
    %5597 = vmatpush1.msra.mxu0 %v344
    %5598 = vmatprep.subr.mxu0 %v373
    %5599 = vmatpush1.msra.mxu0 %v372
    %5600 = vmatprep.subr.mxu0 %v401
    %5601 = vmatpush1.msra.mxu0 %v400
    %5602 = vmatprep.subr.mxu0 %v429
    %5603 = vmatpush1.msra.mxu0 %v428
    %5604 = vmatprep.subr.mxu0 %v457
    %5605 = vmatpush1.msra.mxu0 %v456
    %5606 = vmatprep.subr.mxu0 %v485
    %5607 = vmatpush1.msra.mxu0 %v484
    %5608 = vmatprep.subr.mxu0 %v513
    %5609 = vmatpush1.msra.mxu0 %v512
    %5610 = vmatprep.subr.mxu0 %v541
    %5611 = vmatpush1.msra.mxu0 %v540
    %5612 = vmatprep.subr.mxu0 %v569
    %5613 = vmatpush1.msra.mxu0 %v568
    %5614 = vmatprep.subr.mxu0 %v597
    %5615 = vmatpush1.msra.mxu0 %v596
    %5616 = vmatprep.subr.mxu0 %v625
    %5617 = vmatpush1.msra.mxu0 %v624
    %5618 = vmatprep.subr.mxu0 %v653
    %5619 = vmatpush1.msra.mxu0 %v652
    %5620 = vmatprep.subr.mxu0 %v681
    %5621 = vmatpush1.msra.mxu0 %v680
    %5622 = vmatprep.subr.mxu0 %v709
    %5623 = vmatpush1.msra.mxu0 %v708
    %5624 = vmatprep.subr.mxu0 %v737
    %5625 = vmatpush1.msra.mxu0 %v736
    %5626 = vmatprep.subr.mxu0 %v765
    %5627 = vmatpush1.msra.mxu0 %v764
    %5628 = vmatprep.subr.mxu0 %v793
    %5629 = vmatpush1.msra.mxu0 %v792
    %5630 = vmatprep.subr.mxu0 %v821
    %5631 = vmatpush1.msra.mxu0 %v820
    %5632 = vmatprep.subr.mxu0 %v849
    %5633 = vmatpush1.msra.mxu0 %v848
    %5634 = vmatprep.subr.mxu0 %v877
    %5635 = vmatpush1.msra.mxu0 %v876
    %5636 = vmatprep.subr.mxu0 %v905
    %5637 = vmatpush1.msra.mxu0 %v904
    %5638 = vmatprep.subr.mxu0 %v933
    %5639 = vmatpush1.msra.mxu0 %v932
    %5640 = vmatprep.subr.mxu0 %v961
    %5641 = vmatpush1.msra.mxu0 %v960
    %5642 = vmatprep.subr.mxu0 %v989
    %5643 = vmatpush1.msra.mxu0 %v988
    %5644 = vmatprep.subr.mxu0 %v1017
    %5645 = vmatpush1.msra.mxu0 %v1016
    %5646 = vmatprep.mubr.f32.mxu0 %v124
    %5647 = vmatmul.mubr.f32.gmra.mrb[0].mxu0 %v123
    %v5648 = vpop.f32.mrb[0].mxu0
    %v5649 = vadd.f32 %v2957, %v5648
    %v5650 = vpop.f32.mrb[0].mxu0
    %v5651 = vadd.f32 %v2961, %v5650
    %5652 = vdwg.mxu0
    %5653 = vmatprep.subr.mxu0 %v1045
    %5654 = vmatpush1.msra.mxu0 %v1044
    %5655 = vmatprep.subr.mxu0 %v1073
    %5656 = vmatpush1.msra.mxu0 %v1072
    %5657 = vmatprep.subr.mxu0 %v1101
    %5658 = vmatpush1.msra.mxu0 %v1100
    %5659 = vmatprep.subr.mxu0 %v1129
    %5660 = vmatpush1.msra.mxu0 %v1128
    %5661 = vmatprep.subr.mxu0 %v1157
    %5662 = vmatpush1.msra.mxu0 %v1156
    %5663 = vmatprep.subr.mxu0 %v1185
    %5664 = vmatpush1.msra.mxu0 %v1184
    %5665 = vmatprep.subr.mxu0 %v1213
    %5666 = vmatpush1.msra.mxu0 %v1212
    %5667 = vmatprep.subr.mxu0 %v1241
    %5668 = vmatpush1.msra.mxu0 %v1240
    %5669 = vmatprep.subr.mxu0 %v1269
    %5670 = vmatpush1.msra.mxu0 %v1268
    %5671 = vmatprep.subr.mxu0 %v1297
    %5672 = vmatpush1.msra.mxu0 %v1296
    %5673 = vmatprep.subr.mxu0 %v1325
    %5674 = vmatpush1.msra.mxu0 %v1324
    %5675 = vmatprep.subr.mxu0 %v1353
    %5676 = vmatpush1.msra.mxu0 %v1352
    %5677 = vmatprep.subr.mxu0 %v1381
    %5678 = vmatpush1.msra.mxu0 %v1380
    %5679 = vmatprep.subr.mxu0 %v1409
    %5680 = vmatpush1.msra.mxu0 %v1408
    %5681 = vmatprep.subr.mxu0 %v1437
    %5682 = vmatpush1.msra.mxu0 %v1436
    %5683 = vmatprep.subr.mxu0 %v1465
    %5684 = vmatpush1.msra.mxu0 %v1464
    %5685 = vmatprep.subr.mxu0 %v1493
    %5686 = vmatpush1.msra.mxu0 %v1492
    %5687 = vmatprep.subr.mxu0 %v1521
    %5688 = vmatpush1.msra.mxu0 %v1520
    %5689 = vmatprep.subr.mxu0 %v1549
    %5690 = vmatpush1.msra.mxu0 %v1548
    %5691 = vmatprep.subr.mxu0 %v1577
    %5692 = vmatpush1.msra.mxu0 %v1576
    %5693 = vmatprep.subr.mxu0 %v1605
    %5694 = vmatpush1.msra.mxu0 %v1604
    %5695 = vmatprep.subr.mxu0 %v1633
    %5696 = vmatpush1.msra.mxu0 %v1632
    %5697 = vmatprep.subr.mxu0 %v1661
    %5698 = vmatpush1.msra.mxu0 %v1660
    %5699 = vmatprep.subr.mxu0 %v1689
    %5700 = vmatpush1.msra.mxu0 %v1688
    %5701 = vmatprep.subr.mxu0 %v1717
    %5702 = vmatpush1.msra.mxu0 %v1716
    %5703 = vmatprep.subr.mxu0 %v1745
    %5704 = vmatpush1.msra.mxu0 %v1744
    %5705 = vmatprep.subr.mxu0 %v1773
    %5706 = vmatpush1.msra.mxu0 %v1772
    %5707 = vmatprep.subr.mxu0 %v1801
    %5708 = vmatpush1.msra.mxu0 %v1800
    %5709 = vmatprep.subr.mxu0 %v1829
    %5710 = vmatpush1.msra.mxu0 %v1828
    %5711 = vmatprep.subr.mxu0 %v1857
    %5712 = vmatpush1.msra.mxu0 %v1856
    %5713 = vmatprep.subr.mxu0 %v1885
    %5714 = vmatpush1.msra.mxu0 %v1884
    %5715 = vmatprep.subr.mxu0 %v1913
    %5716 = vmatpush1.msra.mxu0 %v1912
    %5717 = vmatprep.mubr.f32.mxu0 %v126
    %5718 = vmatmul.mubr.f32.gmra.mrb[0].mxu0 %v125
    %v5719 = vpop.f32.mrb[0].mxu0
    %v5720 = vadd.f32 %v5649, %v5719
    %v5721 = vpop.f32.mrb[0].mxu0
    %v5722 = vadd.f32 %v5651, %v5721
    %5723 = vdwg.mxu0
    %5724 = vmatprep.subr.mxu0 %v1941
    %5725 = vmatpush1.msra.mxu0 %v1940
    %5726 = vmatprep.subr.mxu0 %v1969
    %5727 = vmatpush1.msra.mxu0 %v1968
    %5728 = vmatprep.subr.mxu0 %v1997
    %5729 = vmatpush1.msra.mxu0 %v1996
    %5730 = vmatprep.subr.mxu0 %v2025
    %5731 = vmatpush1.msra.mxu0 %v2024
    %5732 = vmatprep.subr.mxu0 %v2053
    %5733 = vmatpush1.msra.mxu0 %v2052
    %5734 = vmatprep.subr.mxu0 %v2081
    %5735 = vmatpush1.msra.mxu0 %v2080
    %5736 = vmatprep.subr.mxu0 %v2109
    %5737 = vmatpush1.msra.mxu0 %v2108
    %5738 = vmatprep.subr.mxu0 %v2137
    %5739 = vmatpush1.msra.mxu0 %v2136
    %5740 = vmatprep.subr.mxu0 %v2165
    %5741 = vmatpush1.msra.mxu0 %v2164
    %5742 = vmatprep.subr.mxu0 %v2193
    %5743 = vmatpush1.msra.mxu0 %v2192
    %5744 = vmatprep.subr.mxu0 %v2221
    %5745 = vmatpush1.msra.mxu0 %v2220
    %5746 = vmatprep.subr.mxu0 %v2249
    %5747 = vmatpush1.msra.mxu0 %v2248
    %5748 = vmatprep.subr.mxu0 %v2277
    %5749 = vmatpush1.msra.mxu0 %v2276
    %5750 = vmatprep.subr.mxu0 %v2305
    %5751 = vmatpush1.msra.mxu0 %v2304
    %5752 = vmatprep.subr.mxu0 %v2333
    %5753 = vmatpush1.msra.mxu0 %v2332
    %5754 = vmatprep.subr.mxu0 %v2361
    %5755 = vmatpush1.msra.mxu0 %v2360
    %5756 = vmatprep.subr.mxu0 %v2389
    %5757 = vmatpush1.msra.mxu0 %v2388
    %5758 = vmatprep.subr.mxu0 %v2417
    %5759 = vmatpush1.msra.mxu0 %v2416
    %5760 = vmatprep.subr.mxu0 %v2445
    %5761 = vmatpush1.msra.mxu0 %v2444
    %5762 = vmatprep.subr.mxu0 %v2473
    %5763 = vmatpush1.msra.mxu0 %v2472
    %5764 = vmatprep.subr.mxu0 %v2501
    %5765 = vmatpush1.msra.mxu0 %v2500
    %5766 = vmatprep.subr.mxu0 %v2529
    %5767 = vmatpush1.msra.mxu0 %v2528
    %5768 = vmatprep.subr.mxu0 %v2557
    %5769 = vmatpush1.msra.mxu0 %v2556
    %5770 = vmatprep.subr.mxu0 %v2585
    %5771 = vmatpush1.msra.mxu0 %v2584
    %5772 = vmatprep.subr.mxu0 %v2613
    %5773 = vmatpush1.msra.mxu0 %v2612
    %5774 = vmatprep.subr.mxu0 %v2641
    %5775 = vmatpush1.msra.mxu0 %v2640
    %5776 = vmatprep.subr.mxu0 %v2669
    %5777 = vmatpush1.msra.mxu0 %v2668
    %5778 = vmatprep.subr.mxu0 %v2697
    %5779 = vmatpush1.msra.mxu0 %v2696
    %5780 = vmatprep.subr.mxu0 %v2725
    %5781 = vmatpush1.msra.mxu0 %v2724
    %5782 = vmatprep.subr.mxu0 %v2753
    %5783 = vmatpush1.msra.mxu0 %v2752
    %5784 = vmatprep.subr.mxu0 %v2781
    %5785 = vmatpush1.msra.mxu0 %v2780
    %5786 = vmatprep.subr.mxu0 %v2809
    %5787 = vmatpush1.msra.mxu0 %v2808
    %5788 = vmatprep.mubr.f32.mxu0 %v128
    %5789 = vmatmul.mubr.f32.gmra.mrb[0].mxu0 %v127
    %v5790 = vpop.f32.mrb[0].mxu0
    %v5791 = vadd.f32 %v5720, %v5790
    %v5792 = vpop.f32.mrb[0].mxu0
    %v5793 = vadd.f32 %v5722, %v5792
    %5794 = vdwg.mxu0
    %5795 = vmatprep.subr.mxu0 %v2837
    %5796 = vmatpush1.msra.mxu0 %v2836
    %5797 = vmatprep.subr.mxu0 %v2865
    %5798 = vmatpush1.msra.mxu0 %v2864
    %5799 = vmatprep.subr.mxu0 0.0
    %5800 = vmatpush1.msra.mxu0 0.0
    %5801 = vmatprep.subr.mxu0 0.0
    %5802 = vmatpush1.msra.mxu0 0.0
    %5803 = vmatprep.subr.mxu0 0.0
    %5804 = vmatpush1.msra.mxu0 0.0
    %5805 = vmatprep.subr.mxu0 0.0
    %5806 = vmatpush1.msra.mxu0 0.0
    %5807 = vmatprep.subr.mxu0 0.0
    %5808 = vmatpush1.msra.mxu0 0.0
    %5809 = vmatprep.subr.mxu0 0.0
    %5810 = vmatpush1.msra.mxu0 0.0
    %5811 = vmatprep.subr.mxu0 0.0
    %5812 = vmatpush1.msra.mxu0 0.0
    %5813 = vmatprep.subr.mxu0 0.0
    %5814 = vmatpush1.msra.mxu0 0.0
    %5815 = vmatprep.subr.mxu0 0.0
    %5816 = vmatpush1.msra.mxu0 0.0
    %5817 = vmatprep.subr.mxu0 0.0
    %5818 = vmatpush1.msra.mxu0 0.0
    %5819 = vmatprep.subr.mxu0 0.0
    %5820 = vmatpush1.msra.mxu0 0.0
    %5821 = vmatprep.subr.mxu0 0.0
    %5822 = vmatpush1.msra.mxu0 0.0
    %5823 = vmatprep.subr.mxu0 0.0
    %5824 = vmatpush1.msra.mxu0 0.0
    %5825 = vmatprep.subr.mxu0 0.0
    %5826 = vmatpush1.msra.mxu0 0.0
    %5827 = vmatprep.subr.mxu0 0.0
    %5828 = vmatpush1.msra.mxu0 0.0
    %5829 = vmatprep.subr.mxu0 0.0
    %5830 = vmatpush1.msra.mxu0 0.0
    %5831 = vmatprep.subr.mxu0 0.0
    %5832 = vmatpush1.msra.mxu0 0.0
    %5833 = vmatprep.subr.mxu0 0.0
    %5834 = vmatpush1.msra.mxu0 0.0
    %5835 = vmatprep.subr.mxu0 0.0
    %5836 = vmatpush1.msra.mxu0 0.0
    %5837 = vmatprep.subr.mxu0 0.0
    %5838 = vmatpush1.msra.mxu0 0.0
    %5839 = vmatprep.subr.mxu0 0.0
    %5840 = vmatpush1.msra.mxu0 0.0
    %5841 = vmatprep.subr.mxu0 0.0
    %5842 = vmatpush1.msra.mxu0 0.0
    %5843 = vmatprep.subr.mxu0 0.0
    %5844 = vmatpush1.msra.mxu0 0.0
    %5845 = vmatprep.subr.mxu0 0.0
    %5846 = vmatpush1.msra.mxu0 0.0
    %5847 = vmatprep.subr.mxu0 0.0
    %5848 = vmatpush1.msra.mxu0 0.0
    %5849 = vmatprep.subr.mxu0 0.0
    %5850 = vmatpush1.msra.mxu0 0.0
    %5851 = vmatprep.subr.mxu0 0.0
    %5852 = vmatpush1.msra.mxu0 0.0
    %5853 = vmatprep.subr.mxu0 0.0
    %5854 = vmatpush1.msra.mxu0 0.0
    %5855 = vmatprep.subr.mxu0 0.0
    %5856 = vmatpush1.msra.mxu0 0.0
    %5857 = vmatprep.subr.mxu0 0.0
    %5858 = vmatpush1.msra.mxu0 0.0
    %5859 = vmatprep.mubr.f32.mxu0 0.0
    %5860 = vmatmul.mubr.f32.gmra.mrb[0].mxu0 %v3024
    %v5861 = vpop.f32.mrb[0].mxu0
    %v5862 = vadd.f32 %v5791, %v5861
    %v5863 = vpop.f32.mrb[0].mxu0
    %v5864 = vadd.f32 %v5793, %v5863
    %5865 = vdwg.mxu0
    %5866 = vmatprep.subr.mxu0 %v151
    %5867 = vmatpush1.msra.mxu0 %v150
    %5868 = vmatprep.subr.mxu0 %v179
    %5869 = vmatpush1.msra.mxu0 %v178
    %5870 = vmatprep.subr.mxu0 %v207
    %5871 = vmatpush1.msra.mxu0 %v206
    %5872 = vmatprep.subr.mxu0 %v235
    %5873 = vmatpush1.msra.mxu0 %v234
    %5874 = vmatprep.subr.mxu0 %v263
    %5875 = vmatpush1.msra.mxu0 %v262
    %5876 = vmatprep.subr.mxu0 %v291
    %5877 = vmatpush1.msra.mxu0 %v290
    %5878 = vmatprep.subr.mxu0 %v319
    %5879 = vmatpush1.msra.mxu0 %v318
    %5880 = vmatprep.subr.mxu0 %v347
    %5881 = vmatpush1.msra.mxu0 %v346
    %5882 = vmatprep.subr.mxu0 %v375
    %5883 = vmatpush1.msra.mxu0 %v374
    %5884 = vmatprep.subr.mxu0 %v403
    %5885 = vmatpush1.msra.mxu0 %v402
    %5886 = vmatprep.subr.mxu0 %v431
    %5887 = vmatpush1.msra.mxu0 %v430
    %5888 = vmatprep.subr.mxu0 %v459
    %5889 = vmatpush1.msra.mxu0 %v458
    %5890 = vmatprep.subr.mxu0 %v487
    %5891 = vmatpush1.msra.mxu0 %v486
    %5892 = vmatprep.subr.mxu0 %v515
    %5893 = vmatpush1.msra.mxu0 %v514
    %5894 = vmatprep.subr.mxu0 %v543
    %5895 = vmatpush1.msra.mxu0 %v542
    %5896 = vmatprep.subr.mxu0 %v571
    %5897 = vmatpush1.msra.mxu0 %v570
    %5898 = vmatprep.subr.mxu0 %v599
    %5899 = vmatpush1.msra.mxu0 %v598
    %5900 = vmatprep.subr.mxu0 %v627
    %5901 = vmatpush1.msra.mxu0 %v626
    %5902 = vmatprep.subr.mxu0 %v655
    %5903 = vmatpush1.msra.mxu0 %v654
    %5904 = vmatprep.subr.mxu0 %v683
    %5905 = vmatpush1.msra.mxu0 %v682
    %5906 = vmatprep.subr.mxu0 %v711
    %5907 = vmatpush1.msra.mxu0 %v710
    %5908 = vmatprep.subr.mxu0 %v739
    %5909 = vmatpush1.msra.mxu0 %v738
    %5910 = vmatprep.subr.mxu0 %v767
    %5911 = vmatpush1.msra.mxu0 %v766
    %5912 = vmatprep.subr.mxu0 %v795
    %5913 = vmatpush1.msra.mxu0 %v794
    %5914 = vmatprep.subr.mxu0 %v823
    %5915 = vmatpush1.msra.mxu0 %v822
    %5916 = vmatprep.subr.mxu0 %v851
    %5917 = vmatpush1.msra.mxu0 %v850
    %5918 = vmatprep.subr.mxu0 %v879
    %5919 = vmatpush1.msra.mxu0 %v878
    %5920 = vmatprep.subr.mxu0 %v907
    %5921 = vmatpush1.msra.mxu0 %v906
    %5922 = vmatprep.subr.mxu0 %v935
    %5923 = vmatpush1.msra.mxu0 %v934
    %5924 = vmatprep.subr.mxu0 %v963
    %5925 = vmatpush1.msra.mxu0 %v962
    %5926 = vmatprep.subr.mxu0 %v991
    %5927 = vmatpush1.msra.mxu0 %v990
    %5928 = vmatprep.subr.mxu0 %v1019
    %5929 = vmatpush1.msra.mxu0 %v1018
    %5930 = vmatprep.mubr.f32.mxu0 %v124
    %5931 = vmatmul.mubr.f32.gmra.mrb[0].mxu0 %v123
    %v5932 = vpop.f32.mrb[0].mxu0
    %v5933 = vadd.f32 %v2965, %v5932
    %v5934 = vpop.f32.mrb[0].mxu0
    %v5935 = vadd.f32 %v2969, %v5934
    %5936 = vdwg.mxu0
    %5937 = vmatprep.subr.mxu0 %v1047
    %5938 = vmatpush1.msra.mxu0 %v1046
    %5939 = vmatprep.subr.mxu0 %v1075
    %5940 = vmatpush1.msra.mxu0 %v1074
    %5941 = vmatprep.subr.mxu0 %v1103
    %5942 = vmatpush1.msra.mxu0 %v1102
    %5943 = vmatprep.subr.mxu0 %v1131
    %5944 = vmatpush1.msra.mxu0 %v1130
    %5945 = vmatprep.subr.mxu0 %v1159
    %5946 = vmatpush1.msra.mxu0 %v1158
    %5947 = vmatprep.subr.mxu0 %v1187
    %5948 = vmatpush1.msra.mxu0 %v1186
    %5949 = vmatprep.subr.mxu0 %v1215
    %5950 = vmatpush1.msra.mxu0 %v1214
    %5951 = vmatprep.subr.mxu0 %v1243
    %5952 = vmatpush1.msra.mxu0 %v1242
    %5953 = vmatprep.subr.mxu0 %v1271
    %5954 = vmatpush1.msra.mxu0 %v1270
    %5955 = vmatprep.subr.mxu0 %v1299
    %5956 = vmatpush1.msra.mxu0 %v1298
    %5957 = vmatprep.subr.mxu0 %v1327
    %5958 = vmatpush1.msra.mxu0 %v1326
    %5959 = vmatprep.subr.mxu0 %v1355
    %5960 = vmatpush1.msra.mxu0 %v1354
    %5961 = vmatprep.subr.mxu0 %v1383
    %5962 = vmatpush1.msra.mxu0 %v1382
    %5963 = vmatprep.subr.mxu0 %v1411
    %5964 = vmatpush1.msra.mxu0 %v1410
    %5965 = vmatprep.subr.mxu0 %v1439
    %5966 = vmatpush1.msra.mxu0 %v1438
    %5967 = vmatprep.subr.mxu0 %v1467
    %5968 = vmatpush1.msra.mxu0 %v1466
    %5969 = vmatprep.subr.mxu0 %v1495
    %5970 = vmatpush1.msra.mxu0 %v1494
    %5971 = vmatprep.subr.mxu0 %v1523
    %5972 = vmatpush1.msra.mxu0 %v1522
    %5973 = vmatprep.subr.mxu0 %v1551
    %5974 = vmatpush1.msra.mxu0 %v1550
    %5975 = vmatprep.subr.mxu0 %v1579
    %5976 = vmatpush1.msra.mxu0 %v1578
    %5977 = vmatprep.subr.mxu0 %v1607
    %5978 = vmatpush1.msra.mxu0 %v1606
    %5979 = vmatprep.subr.mxu0 %v1635
    %5980 = vmatpush1.msra.mxu0 %v1634
    %5981 = vmatprep.subr.mxu0 %v1663
    %5982 = vmatpush1.msra.mxu0 %v1662
    %5983 = vmatprep.subr.mxu0 %v1691
    %5984 = vmatpush1.msra.mxu0 %v1690
    %5985 = vmatprep.subr.mxu0 %v1719
    %5986 = vmatpush1.msra.mxu0 %v1718
    %5987 = vmatprep.subr.mxu0 %v1747
    %5988 = vmatpush1.msra.mxu0 %v1746
    %5989 = vmatprep.subr.mxu0 %v1775
    %5990 = vmatpush1.msra.mxu0 %v1774
    %5991 = vmatprep.subr.mxu0 %v1803
    %5992 = vmatpush1.msra.mxu0 %v1802
    %5993 = vmatprep.subr.mxu0 %v1831
    %5994 = vmatpush1.msra.mxu0 %v1830
    %5995 = vmatprep.subr.mxu0 %v1859
    %5996 = vmatpush1.msra.mxu0 %v1858
    %5997 = vmatprep.subr.mxu0 %v1887
    %5998 = vmatpush1.msra.mxu0 %v1886
    %5999 = vmatprep.subr.mxu0 %v1915
    %6000 = vmatpush1.msra.mxu0 %v1914
    %6001 = vmatprep.mubr.f32.mxu0 %v126
    %6002 = vmatmul.mubr.f32.gmra.mrb[0].mxu0 %v125
    %v6003 = vpop.f32.mrb[0].mxu0
    %v6004 = vadd.f32 %v5933, %v6003
    %v6005 = vpop.f32.mrb[0].mxu0
    %v6006 = vadd.f32 %v5935, %v6005
    %6007 = vdwg.mxu0
    %6008 = vmatprep.subr.mxu0 %v1943
    %6009 = vmatpush1.msra.mxu0 %v1942
    %6010 = vmatprep.subr.mxu0 %v1971
    %6011 = vmatpush1.msra.mxu0 %v1970
    %6012 = vmatprep.subr.mxu0 %v1999
    %6013 = vmatpush1.msra.mxu0 %v1998
    %6014 = vmatprep.subr.mxu0 %v2027
    %6015 = vmatpush1.msra.mxu0 %v2026
    %6016 = vmatprep.subr.mxu0 %v2055
    %6017 = vmatpush1.msra.mxu0 %v2054
    %6018 = vmatprep.subr.mxu0 %v2083
    %6019 = vmatpush1.msra.mxu0 %v2082
    %6020 = vmatprep.subr.mxu0 %v2111
    %6021 = vmatpush1.msra.mxu0 %v2110
    %6022 = vmatprep.subr.mxu0 %v2139
    %6023 = vmatpush1.msra.mxu0 %v2138
    %6024 = vmatprep.subr.mxu0 %v2167
    %6025 = vmatpush1.msra.mxu0 %v2166
    %6026 = vmatprep.subr.mxu0 %v2195
    %6027 = vmatpush1.msra.mxu0 %v2194
    %6028 = vmatprep.subr.mxu0 %v2223
    %6029 = vmatpush1.msra.mxu0 %v2222
    %6030 = vmatprep.subr.mxu0 %v2251
    %6031 = vmatpush1.msra.mxu0 %v2250
    %6032 = vmatprep.subr.mxu0 %v2279
    %6033 = vmatpush1.msra.mxu0 %v2278
    %6034 = vmatprep.subr.mxu0 %v2307
    %6035 = vmatpush1.msra.mxu0 %v2306
    %6036 = vmatprep.subr.mxu0 %v2335
    %6037 = vmatpush1.msra.mxu0 %v2334
    %6038 = vmatprep.subr.mxu0 %v2363
    %6039 = vmatpush1.msra.mxu0 %v2362
    %6040 = vmatprep.subr.mxu0 %v2391
    %6041 = vmatpush1.msra.mxu0 %v2390
    %6042 = vmatprep.subr.mxu0 %v2419
    %6043 = vmatpush1.msra.mxu0 %v2418
    %6044 = vmatprep.subr.mxu0 %v2447
    %6045 = vmatpush1.msra.mxu0 %v2446
    %6046 = vmatprep.subr.mxu0 %v2475
    %6047 = vmatpush1.msra.mxu0 %v2474
    %6048 = vmatprep.subr.mxu0 %v2503
    %6049 = vmatpush1.msra.mxu0 %v2502
    %6050 = vmatprep.subr.mxu0 %v2531
    %6051 = vmatpush1.msra.mxu0 %v2530
    %6052 = vmatprep.subr.mxu0 %v2559
    %6053 = vmatpush1.msra.mxu0 %v2558
    %6054 = vmatprep.subr.mxu0 %v2587
    %6055 = vmatpush1.msra.mxu0 %v2586
    %6056 = vmatprep.subr.mxu0 %v2615
    %6057 = vmatpush1.msra.mxu0 %v2614
    %6058 = vmatprep.subr.mxu0 %v2643
    %6059 = vmatpush1.msra.mxu0 %v2642
    %6060 = vmatprep.subr.mxu0 %v2671
    %6061 = vmatpush1.msra.mxu0 %v2670
    %6062 = vmatprep.subr.mxu0 %v2699
    %6063 = vmatpush1.msra.mxu0 %v2698
    %6064 = vmatprep.subr.mxu0 %v2727
    %6065 = vmatpush1.msra.mxu0 %v2726
    %6066 = vmatprep.subr.mxu0 %v2755
    %6067 = vmatpush1.msra.mxu0 %v2754
    %6068 = vmatprep.subr.mxu0 %v2783
    %6069 = vmatpush1.msra.mxu0 %v2782
    %6070 = vmatprep.subr.mxu0 %v2811
    %6071 = vmatpush1.msra.mxu0 %v2810
    %6072 = vmatprep.mubr.f32.mxu0 %v128
    %6073 = vmatmul.mubr.f32.gmra.mrb[0].mxu0 %v127
    %v6074 = vpop.f32.mrb[0].mxu0
    %v6075 = vadd.f32 %v6004, %v6074
    %v6076 = vpop.f32.mrb[0].mxu0
    %v6077 = vadd.f32 %v6006, %v6076
    %6078 = vdwg.mxu0
    %6079 = vmatprep.subr.mxu0 %v2839
    %6080 = vmatpush1.msra.mxu0 %v2838
    %6081 = vmatprep.subr.mxu0 %v2867
    %6082 = vmatpush1.msra.mxu0 %v2866
    %6083 = vmatprep.subr.mxu0 0.0
    %6084 = vmatpush1.msra.mxu0 0.0
    %6085 = vmatprep.subr.mxu0 0.0
    %6086 = vmatpush1.msra.mxu0 0.0
    %6087 = vmatprep.subr.mxu0 0.0
    %6088 = vmatpush1.msra.mxu0 0.0
    %6089 = vmatprep.subr.mxu0 0.0
    %6090 = vmatpush1.msra.mxu0 0.0
    %6091 = vmatprep.subr.mxu0 0.0
    %6092 = vmatpush1.msra.mxu0 0.0
    %6093 = vmatprep.subr.mxu0 0.0
    %6094 = vmatpush1.msra.mxu0 0.0
    %6095 = vmatprep.subr.mxu0 0.0
    %6096 = vmatpush1.msra.mxu0 0.0
    %6097 = vmatprep.subr.mxu0 0.0
    %6098 = vmatpush1.msra.mxu0 0.0
    %6099 = vmatprep.subr.mxu0 0.0
    %6100 = vmatpush1.msra.mxu0 0.0
    %6101 = vmatprep.subr.mxu0 0.0
    %6102 = vmatpush1.msra.mxu0 0.0
    %6103 = vmatprep.subr.mxu0 0.0
    %6104 = vmatpush1.msra.mxu0 0.0
    %6105 = vmatprep.subr.mxu0 0.0
    %6106 = vmatpush1.msra.mxu0 0.0
    %6107 = vmatprep.subr.mxu0 0.0
    %6108 = vmatpush1.msra.mxu0 0.0
    %6109 = vmatprep.subr.mxu0 0.0
    %6110 = vmatpush1.msra.mxu0 0.0
    %6111 = vmatprep.subr.mxu0 0.0
    %6112 = vmatpush1.msra.mxu0 0.0
    %6113 = vmatprep.subr.mxu0 0.0
    %6114 = vmatpush1.msra.mxu0 0.0
    %6115 = vmatprep.subr.mxu0 0.0
    %6116 = vmatpush1.msra.mxu0 0.0
    %6117 = vmatprep.subr.mxu0 0.0
    %6118 = vmatpush1.msra.mxu0 0.0
    %6119 = vmatprep.subr.mxu0 0.0
    %6120 = vmatpush1.msra.mxu0 0.0
    %6121 = vmatprep.subr.mxu0 0.0
    %6122 = vmatpush1.msra.mxu0 0.0
    %6123 = vmatprep.subr.mxu0 0.0
    %6124 = vmatpush1.msra.mxu0 0.0
    %6125 = vmatprep.subr.mxu0 0.0
    %6126 = vmatpush1.msra.mxu0 0.0
    %6127 = vmatprep.subr.mxu0 0.0
    %6128 = vmatpush1.msra.mxu0 0.0
    %6129 = vmatprep.subr.mxu0 0.0
    %6130 = vmatpush1.msra.mxu0 0.0
    %6131 = vmatprep.subr.mxu0 0.0
    %6132 = vmatpush1.msra.mxu0 0.0
    %6133 = vmatprep.subr.mxu0 0.0
    %6134 = vmatpush1.msra.mxu0 0.0
    %6135 = vmatprep.subr.mxu0 0.0
    %6136 = vmatpush1.msra.mxu0 0.0
    %6137 = vmatprep.subr.mxu0 0.0
    %6138 = vmatpush1.msra.mxu0 0.0
    %6139 = vmatprep.subr.mxu0 0.0
    %6140 = vmatpush1.msra.mxu0 0.0
    %6141 = vmatprep.subr.mxu0 0.0
    %6142 = vmatpush1.msra.mxu0 0.0
    %6143 = vmatprep.mubr.f32.mxu0 0.0
    %6144 = vmatmul.mubr.f32.gmra.mrb[0].mxu0 %v3024
    %v6145 = vpop.f32.mrb[0].mxu0
    %v6146 = vadd.f32 %v6075, %v6145
    %v6147 = vpop.f32.mrb[0].mxu0
    %v6148 = vadd.f32 %v6077, %v6147
    %6149 = vdwg.mxu0
    %6150 = vmatprep.subr.mxu0 %v153
    %6151 = vmatpush1.msra.mxu0 %v152
    %6152 = vmatprep.subr.mxu0 %v181
    %6153 = vmatpush1.msra.mxu0 %v180
    %6154 = vmatprep.subr.mxu0 %v209
    %6155 = vmatpush1.msra.mxu0 %v208
    %6156 = vmatprep.subr.mxu0 %v237
    %6157 = vmatpush1.msra.mxu0 %v236
    %6158 = vmatprep.subr.mxu0 %v265
    %6159 = vmatpush1.msra.mxu0 %v264
    %6160 = vmatprep.subr.mxu0 %v293
    %6161 = vmatpush1.msra.mxu0 %v292
    %6162 = vmatprep.subr.mxu0 %v321
    %6163 = vmatpush1.msra.mxu0 %v320
    %6164 = vmatprep.subr.mxu0 %v349
    %6165 = vmatpush1.msra.mxu0 %v348
    %6166 = vmatprep.subr.mxu0 %v377
    %6167 = vmatpush1.msra.mxu0 %v376
    %6168 = vmatprep.subr.mxu0 %v405
    %6169 = vmatpush1.msra.mxu0 %v404
    %6170 = vmatprep.subr.mxu0 %v433
    %6171 = vmatpush1.msra.mxu0 %v432
    %6172 = vmatprep.subr.mxu0 %v461
    %6173 = vmatpush1.msra.mxu0 %v460
    %6174 = vmatprep.subr.mxu0 %v489
    %6175 = vmatpush1.msra.mxu0 %v488
    %6176 = vmatprep.subr.mxu0 %v517
    %6177 = vmatpush1.msra.mxu0 %v516
    %6178 = vmatprep.subr.mxu0 %v545
    %6179 = vmatpush1.msra.mxu0 %v544
    %6180 = vmatprep.subr.mxu0 %v573
    %6181 = vmatpush1.msra.mxu0 %v572
    %6182 = vmatprep.subr.mxu0 %v601
    %6183 = vmatpush1.msra.mxu0 %v600
    %6184 = vmatprep.subr.mxu0 %v629
    %6185 = vmatpush1.msra.mxu0 %v628
    %6186 = vmatprep.subr.mxu0 %v657
    %6187 = vmatpush1.msra.mxu0 %v656
    %6188 = vmatprep.subr.mxu0 %v685
    %6189 = vmatpush1.msra.mxu0 %v684
    %6190 = vmatprep.subr.mxu0 %v713
    %6191 = vmatpush1.msra.mxu0 %v712
    %6192 = vmatprep.subr.mxu0 %v741
    %6193 = vmatpush1.msra.mxu0 %v740
    %6194 = vmatprep.subr.mxu0 %v769
    %6195 = vmatpush1.msra.mxu0 %v768
    %6196 = vmatprep.subr.mxu0 %v797
    %6197 = vmatpush1.msra.mxu0 %v796
    %6198 = vmatprep.subr.mxu0 %v825
    %6199 = vmatpush1.msra.mxu0 %v824
    %6200 = vmatprep.subr.mxu0 %v853
    %6201 = vmatpush1.msra.mxu0 %v852
    %6202 = vmatprep.subr.mxu0 %v881
    %6203 = vmatpush1.msra.mxu0 %v880
    %6204 = vmatprep.subr.mxu0 %v909
    %6205 = vmatpush1.msra.mxu0 %v908
    %6206 = vmatprep.subr.mxu0 %v937
    %6207 = vmatpush1.msra.mxu0 %v936
    %6208 = vmatprep.subr.mxu0 %v965
    %6209 = vmatpush1.msra.mxu0 %v964
    %6210 = vmatprep.subr.mxu0 %v993
    %6211 = vmatpush1.msra.mxu0 %v992
    %6212 = vmatprep.subr.mxu0 %v1021
    %6213 = vmatpush1.msra.mxu0 %v1020
    %6214 = vmatprep.mubr.f32.mxu0 %v124
    %6215 = vmatmul.mubr.f32.gmra.mrb[0].mxu0 %v123
    %v6216 = vpop.f32.mrb[0].mxu0
    %v6217 = vadd.f32 %v2973, %v6216
    %v6218 = vpop.f32.mrb[0].mxu0
    %v6219 = vadd.f32 %v2977, %v6218
    %6220 = vdwg.mxu0
    %6221 = vmatprep.subr.mxu0 %v1049
    %6222 = vmatpush1.msra.mxu0 %v1048
    %6223 = vmatprep.subr.mxu0 %v1077
    %6224 = vmatpush1.msra.mxu0 %v1076
    %6225 = vmatprep.subr.mxu0 %v1105
    %6226 = vmatpush1.msra.mxu0 %v1104
    %6227 = vmatprep.subr.mxu0 %v1133
    %6228 = vmatpush1.msra.mxu0 %v1132
    %6229 = vmatprep.subr.mxu0 %v1161
    %6230 = vmatpush1.msra.mxu0 %v1160
    %6231 = vmatprep.subr.mxu0 %v1189
    %6232 = vmatpush1.msra.mxu0 %v1188
    %6233 = vmatprep.subr.mxu0 %v1217
    %6234 = vmatpush1.msra.mxu0 %v1216
    %6235 = vmatprep.subr.mxu0 %v1245
    %6236 = vmatpush1.msra.mxu0 %v1244
    %6237 = vmatprep.subr.mxu0 %v1273
    %6238 = vmatpush1.msra.mxu0 %v1272
    %6239 = vmatprep.subr.mxu0 %v1301
    %6240 = vmatpush1.msra.mxu0 %v1300
    %6241 = vmatprep.subr.mxu0 %v1329
    %6242 = vmatpush1.msra.mxu0 %v1328
    %6243 = vmatprep.subr.mxu0 %v1357
    %6244 = vmatpush1.msra.mxu0 %v1356
    %6245 = vmatprep.subr.mxu0 %v1385
    %6246 = vmatpush1.msra.mxu0 %v1384
    %6247 = vmatprep.subr.mxu0 %v1413
    %6248 = vmatpush1.msra.mxu0 %v1412
    %6249 = vmatprep.subr.mxu0 %v1441
    %6250 = vmatpush1.msra.mxu0 %v1440
    %6251 = vmatprep.subr.mxu0 %v1469
    %6252 = vmatpush1.msra.mxu0 %v1468
    %6253 = vmatprep.subr.mxu0 %v1497
    %6254 = vmatpush1.msra.mxu0 %v1496
    %6255 = vmatprep.subr.mxu0 %v1525
    %6256 = vmatpush1.msra.mxu0 %v1524
    %6257 = vmatprep.subr.mxu0 %v1553
    %6258 = vmatpush1.msra.mxu0 %v1552
    %6259 = vmatprep.subr.mxu0 %v1581
    %6260 = vmatpush1.msra.mxu0 %v1580
    %6261 = vmatprep.subr.mxu0 %v1609
    %6262 = vmatpush1.msra.mxu0 %v1608
    %6263 = vmatprep.subr.mxu0 %v1637
    %6264 = vmatpush1.msra.mxu0 %v1636
    %6265 = vmatprep.subr.mxu0 %v1665
    %6266 = vmatpush1.msra.mxu0 %v1664
    %6267 = vmatprep.subr.mxu0 %v1693
    %6268 = vmatpush1.msra.mxu0 %v1692
    %6269 = vmatprep.subr.mxu0 %v1721
    %6270 = vmatpush1.msra.mxu0 %v1720
    %6271 = vmatprep.subr.mxu0 %v1749
    %6272 = vmatpush1.msra.mxu0 %v1748
    %6273 = vmatprep.subr.mxu0 %v1777
    %6274 = vmatpush1.msra.mxu0 %v1776
    %6275 = vmatprep.subr.mxu0 %v1805
    %6276 = vmatpush1.msra.mxu0 %v1804
    %6277 = vmatprep.subr.mxu0 %v1833
    %6278 = vmatpush1.msra.mxu0 %v1832
    %6279 = vmatprep.subr.mxu0 %v1861
    %6280 = vmatpush1.msra.mxu0 %v1860
    %6281 = vmatprep.subr.mxu0 %v1889
    %6282 = vmatpush1.msra.mxu0 %v1888
    %6283 = vmatprep.subr.mxu0 %v1917
    %6284 = vmatpush1.msra.mxu0 %v1916
    %6285 = vmatprep.mubr.f32.mxu0 %v126
    %6286 = vmatmul.mubr.f32.gmra.mrb[0].mxu0 %v125
    %v6287 = vpop.f32.mrb[0].mxu0
    %v6288 = vadd.f32 %v6217, %v6287
    %v6289 = vpop.f32.mrb[0].mxu0
    %v6290 = vadd.f32 %v6219, %v6289
    %6291 = vdwg.mxu0
    %6292 = vmatprep.subr.mxu0 %v1945
    %6293 = vmatpush1.msra.mxu0 %v1944
    %6294 = vmatprep.subr.mxu0 %v1973
    %6295 = vmatpush1.msra.mxu0 %v1972
    %6296 = vmatprep.subr.mxu0 %v2001
    %6297 = vmatpush1.msra.mxu0 %v2000
    %6298 = vmatprep.subr.mxu0 %v2029
    %6299 = vmatpush1.msra.mxu0 %v2028
    %6300 = vmatprep.subr.mxu0 %v2057
    %6301 = vmatpush1.msra.mxu0 %v2056
    %6302 = vmatprep.subr.mxu0 %v2085
    %6303 = vmatpush1.msra.mxu0 %v2084
    %6304 = vmatprep.subr.mxu0 %v2113
    %6305 = vmatpush1.msra.mxu0 %v2112
    %6306 = vmatprep.subr.mxu0 %v2141
    %6307 = vmatpush1.msra.mxu0 %v2140
    %6308 = vmatprep.subr.mxu0 %v2169
    %6309 = vmatpush1.msra.mxu0 %v2168
    %6310 = vmatprep.subr.mxu0 %v2197
    %6311 = vmatpush1.msra.mxu0 %v2196
    %6312 = vmatprep.subr.mxu0 %v2225
    %6313 = vmatpush1.msra.mxu0 %v2224
    %6314 = vmatprep.subr.mxu0 %v2253
    %6315 = vmatpush1.msra.mxu0 %v2252
    %6316 = vmatprep.subr.mxu0 %v2281
    %6317 = vmatpush1.msra.mxu0 %v2280
    %6318 = vmatprep.subr.mxu0 %v2309
    %6319 = vmatpush1.msra.mxu0 %v2308
    %6320 = vmatprep.subr.mxu0 %v2337
    %6321 = vmatpush1.msra.mxu0 %v2336
    %6322 = vmatprep.subr.mxu0 %v2365
    %6323 = vmatpush1.msra.mxu0 %v2364
    %6324 = vmatprep.subr.mxu0 %v2393
    %6325 = vmatpush1.msra.mxu0 %v2392
    %6326 = vmatprep.subr.mxu0 %v2421
    %6327 = vmatpush1.msra.mxu0 %v2420
    %6328 = vmatprep.subr.mxu0 %v2449
    %6329 = vmatpush1.msra.mxu0 %v2448
    %6330 = vmatprep.subr.mxu0 %v2477
    %6331 = vmatpush1.msra.mxu0 %v2476
    %6332 = vmatprep.subr.mxu0 %v2505
    %6333 = vmatpush1.msra.mxu0 %v2504
    %6334 = vmatprep.subr.mxu0 %v2533
    %6335 = vmatpush1.msra.mxu0 %v2532
    %6336 = vmatprep.subr.mxu0 %v2561
    %6337 = vmatpush1.msra.mxu0 %v2560
    %6338 = vmatprep.subr.mxu0 %v2589
    %6339 = vmatpush1.msra.mxu0 %v2588
    %6340 = vmatprep.subr.mxu0 %v2617
    %6341 = vmatpush1.msra.mxu0 %v2616
    %6342 = vmatprep.subr.mxu0 %v2645
    %6343 = vmatpush1.msra.mxu0 %v2644
    %6344 = vmatprep.subr.mxu0 %v2673
    %6345 = vmatpush1.msra.mxu0 %v2672
    %6346 = vmatprep.subr.mxu0 %v2701
    %6347 = vmatpush1.msra.mxu0 %v2700
    %6348 = vmatprep.subr.mxu0 %v2729
    %6349 = vmatpush1.msra.mxu0 %v2728
    %6350 = vmatprep.subr.mxu0 %v2757
    %6351 = vmatpush1.msra.mxu0 %v2756
    %6352 = vmatprep.subr.mxu0 %v2785
    %6353 = vmatpush1.msra.mxu0 %v2784
    %6354 = vmatprep.subr.mxu0 %v2813
    %6355 = vmatpush1.msra.mxu0 %v2812
    %6356 = vmatprep.mubr.f32.mxu0 %v128
    %6357 = vmatmul.mubr.f32.gmra.mrb[0].mxu0 %v127
    %v6358 = vpop.f32.mrb[0].mxu0
    %v6359 = vadd.f32 %v6288, %v6358
    %v6360 = vpop.f32.mrb[0].mxu0
    %v6361 = vadd.f32 %v6290, %v6360
    %6362 = vdwg.mxu0
    %6363 = vmatprep.subr.mxu0 %v2841
    %6364 = vmatpush1.msra.mxu0 %v2840
    %6365 = vmatprep.subr.mxu0 %v2869
    %6366 = vmatpush1.msra.mxu0 %v2868
    %6367 = vmatprep.subr.mxu0 0.0
    %6368 = vmatpush1.msra.mxu0 0.0
    %6369 = vmatprep.subr.mxu0 0.0
    %6370 = vmatpush1.msra.mxu0 0.0
    %6371 = vmatprep.subr.mxu0 0.0
    %6372 = vmatpush1.msra.mxu0 0.0
    %6373 = vmatprep.subr.mxu0 0.0
    %6374 = vmatpush1.msra.mxu0 0.0
    %6375 = vmatprep.subr.mxu0 0.0
    %6376 = vmatpush1.msra.mxu0 0.0
    %6377 = vmatprep.subr.mxu0 0.0
    %6378 = vmatpush1.msra.mxu0 0.0
    %6379 = vmatprep.subr.mxu0 0.0
    %6380 = vmatpush1.msra.mxu0 0.0
    %6381 = vmatprep.subr.mxu0 0.0
    %6382 = vmatpush1.msra.mxu0 0.0
    %6383 = vmatprep.subr.mxu0 0.0
    %6384 = vmatpush1.msra.mxu0 0.0
    %6385 = vmatprep.subr.mxu0 0.0
    %6386 = vmatpush1.msra.mxu0 0.0
    %6387 = vmatprep.subr.mxu0 0.0
    %6388 = vmatpush1.msra.mxu0 0.0
    %6389 = vmatprep.subr.mxu0 0.0
    %6390 = vmatpush1.msra.mxu0 0.0
    %6391 = vmatprep.subr.mxu0 0.0
    %6392 = vmatpush1.msra.mxu0 0.0
    %6393 = vmatprep.subr.mxu0 0.0
    %6394 = vmatpush1.msra.mxu0 0.0
    %6395 = vmatprep.subr.mxu0 0.0
    %6396 = vmatpush1.msra.mxu0 0.0
    %6397 = vmatprep.subr.mxu0 0.0
    %6398 = vmatpush1.msra.mxu0 0.0
    %6399 = vmatprep.subr.mxu0 0.0
    %6400 = vmatpush1.msra.mxu0 0.0
    %6401 = vmatprep.subr.mxu0 0.0
    %6402 = vmatpush1.msra.mxu0 0.0
    %6403 = vmatprep.subr.mxu0 0.0
    %6404 = vmatpush1.msra.mxu0 0.0
    %6405 = vmatprep.subr.mxu0 0.0
    %6406 = vmatpush1.msra.mxu0 0.0
    %6407 = vmatprep.subr.mxu0 0.0
    %6408 = vmatpush1.msra.mxu0 0.0
    %6409 = vmatprep.subr.mxu0 0.0
    %6410 = vmatpush1.msra.mxu0 0.0
    %6411 = vmatprep.subr.mxu0 0.0
    %6412 = vmatpush1.msra.mxu0 0.0
    %6413 = vmatprep.subr.mxu0 0.0
    %6414 = vmatpush1.msra.mxu0 0.0
    %6415 = vmatprep.subr.mxu0 0.0
    %6416 = vmatpush1.msra.mxu0 0.0
    %6417 = vmatprep.subr.mxu0 0.0
    %6418 = vmatpush1.msra.mxu0 0.0
    %6419 = vmatprep.subr.mxu0 0.0
    %6420 = vmatpush1.msra.mxu0 0.0
    %6421 = vmatprep.subr.mxu0 0.0
    %6422 = vmatpush1.msra.mxu0 0.0
    %6423 = vmatprep.subr.mxu0 0.0
    %6424 = vmatpush1.msra.mxu0 0.0
    %6425 = vmatprep.subr.mxu0 0.0
    %6426 = vmatpush1.msra.mxu0 0.0
    %6427 = vmatprep.mubr.f32.mxu0 0.0
    %6428 = vmatmul.mubr.f32.gmra.mrb[0].mxu0 %v3024
    %v6429 = vpop.f32.mrb[0].mxu0
    %v6430 = vadd.f32 %v6359, %v6429
    %v6431 = vpop.f32.mrb[0].mxu0
    %v6432 = vadd.f32 %v6361, %v6431
    %6433 = vdwg.mxu0
    %6434 = vmatprep.subr.mxu0 %v155
    %6435 = vmatpush1.msra.mxu0 %v154
    %6436 = vmatprep.subr.mxu0 %v183
    %6437 = vmatpush1.msra.mxu0 %v182
    %6438 = vmatprep.subr.mxu0 %v211
    %6439 = vmatpush1.msra.mxu0 %v210
    %6440 = vmatprep.subr.mxu0 %v239
    %6441 = vmatpush1.msra.mxu0 %v238
    %6442 = vmatprep.subr.mxu0 %v267
    %6443 = vmatpush1.msra.mxu0 %v266
    %6444 = vmatprep.subr.mxu0 %v295
    %6445 = vmatpush1.msra.mxu0 %v294
    %6446 = vmatprep.subr.mxu0 %v323
    %6447 = vmatpush1.msra.mxu0 %v322
    %6448 = vmatprep.subr.mxu0 %v351
    %6449 = vmatpush1.msra.mxu0 %v350
    %6450 = vmatprep.subr.mxu0 %v379
    %6451 = vmatpush1.msra.mxu0 %v378
    %6452 = vmatprep.subr.mxu0 %v407
    %6453 = vmatpush1.msra.mxu0 %v406
    %6454 = vmatprep.subr.mxu0 %v435
    %6455 = vmatpush1.msra.mxu0 %v434
    %6456 = vmatprep.subr.mxu0 %v463
    %6457 = vmatpush1.msra.mxu0 %v462
    %6458 = vmatprep.subr.mxu0 %v491
    %6459 = vmatpush1.msra.mxu0 %v490
    %6460 = vmatprep.subr.mxu0 %v519
    %6461 = vmatpush1.msra.mxu0 %v518
    %6462 = vmatprep.subr.mxu0 %v547
    %6463 = vmatpush1.msra.mxu0 %v546
    %6464 = vmatprep.subr.mxu0 %v575
    %6465 = vmatpush1.msra.mxu0 %v574
    %6466 = vmatprep.subr.mxu0 %v603
    %6467 = vmatpush1.msra.mxu0 %v602
    %6468 = vmatprep.subr.mxu0 %v631
    %6469 = vmatpush1.msra.mxu0 %v630
    %6470 = vmatprep.subr.mxu0 %v659
    %6471 = vmatpush1.msra.mxu0 %v658
    %6472 = vmatprep.subr.mxu0 %v687
    %6473 = vmatpush1.msra.mxu0 %v686
    %6474 = vmatprep.subr.mxu0 %v715
    %6475 = vmatpush1.msra.mxu0 %v714
    %6476 = vmatprep.subr.mxu0 %v743
    %6477 = vmatpush1.msra.mxu0 %v742
    %6478 = vmatprep.subr.mxu0 %v771
    %6479 = vmatpush1.msra.mxu0 %v770
    %6480 = vmatprep.subr.mxu0 %v799
    %6481 = vmatpush1.msra.mxu0 %v798
    %6482 = vmatprep.subr.mxu0 %v827
    %6483 = vmatpush1.msra.mxu0 %v826
    %6484 = vmatprep.subr.mxu0 %v855
    %6485 = vmatpush1.msra.mxu0 %v854
    %6486 = vmatprep.subr.mxu0 %v883
    %6487 = vmatpush1.msra.mxu0 %v882
    %6488 = vmatprep.subr.mxu0 %v911
    %6489 = vmatpush1.msra.mxu0 %v910
    %6490 = vmatprep.subr.mxu0 %v939
    %6491 = vmatpush1.msra.mxu0 %v938
    %6492 = vmatprep.subr.mxu0 %v967
    %6493 = vmatpush1.msra.mxu0 %v966
    %6494 = vmatprep.subr.mxu0 %v995
    %6495 = vmatpush1.msra.mxu0 %v994
    %6496 = vmatprep.subr.mxu0 %v1023
    %6497 = vmatpush1.msra.mxu0 %v1022
    %6498 = vmatprep.mubr.f32.mxu0 %v124
    %6499 = vmatmul.mubr.f32.gmra.mrb[0].mxu0 %v123
    %v6500 = vpop.f32.mrb[0].mxu0
    %v6501 = vadd.f32 %v2981, %v6500
    %v6502 = vpop.f32.mrb[0].mxu0
    %v6503 = vadd.f32 %v2985, %v6502
    %6504 = vdwg.mxu0
    %6505 = vmatprep.subr.mxu0 %v1051
    %6506 = vmatpush1.msra.mxu0 %v1050
    %6507 = vmatprep.subr.mxu0 %v1079
    %6508 = vmatpush1.msra.mxu0 %v1078
    %6509 = vmatprep.subr.mxu0 %v1107
    %6510 = vmatpush1.msra.mxu0 %v1106
    %6511 = vmatprep.subr.mxu0 %v1135
    %6512 = vmatpush1.msra.mxu0 %v1134
    %6513 = vmatprep.subr.mxu0 %v1163
    %6514 = vmatpush1.msra.mxu0 %v1162
    %6515 = vmatprep.subr.mxu0 %v1191
    %6516 = vmatpush1.msra.mxu0 %v1190
    %6517 = vmatprep.subr.mxu0 %v1219
    %6518 = vmatpush1.msra.mxu0 %v1218
    %6519 = vmatprep.subr.mxu0 %v1247
    %6520 = vmatpush1.msra.mxu0 %v1246
    %6521 = vmatprep.subr.mxu0 %v1275
    %6522 = vmatpush1.msra.mxu0 %v1274
    %6523 = vmatprep.subr.mxu0 %v1303
    %6524 = vmatpush1.msra.mxu0 %v1302
    %6525 = vmatprep.subr.mxu0 %v1331
    %6526 = vmatpush1.msra.mxu0 %v1330
    %6527 = vmatprep.subr.mxu0 %v1359
    %6528 = vmatpush1.msra.mxu0 %v1358
    %6529 = vmatprep.subr.mxu0 %v1387
    %6530 = vmatpush1.msra.mxu0 %v1386
    %6531 = vmatprep.subr.mxu0 %v1415
    %6532 = vmatpush1.msra.mxu0 %v1414
    %6533 = vmatprep.subr.mxu0 %v1443
    %6534 = vmatpush1.msra.mxu0 %v1442
    %6535 = vmatprep.subr.mxu0 %v1471
    %6536 = vmatpush1.msra.mxu0 %v1470
    %6537 = vmatprep.subr.mxu0 %v1499
    %6538 = vmatpush1.msra.mxu0 %v1498
    %6539 = vmatprep.subr.mxu0 %v1527
    %6540 = vmatpush1.msra.mxu0 %v1526
    %6541 = vmatprep.subr.mxu0 %v1555
    %6542 = vmatpush1.msra.mxu0 %v1554
    %6543 = vmatprep.subr.mxu0 %v1583
    %6544 = vmatpush1.msra.mxu0 %v1582
    %6545 = vmatprep.subr.mxu0 %v1611
    %6546 = vmatpush1.msra.mxu0 %v1610
    %6547 = vmatprep.subr.mxu0 %v1639
    %6548 = vmatpush1.msra.mxu0 %v1638
    %6549 = vmatprep.subr.mxu0 %v1667
    %6550 = vmatpush1.msra.mxu0 %v1666
    %6551 = vmatprep.subr.mxu0 %v1695
    %6552 = vmatpush1.msra.mxu0 %v1694
    %6553 = vmatprep.subr.mxu0 %v1723
    %6554 = vmatpush1.msra.mxu0 %v1722
    %6555 = vmatprep.subr.mxu0 %v1751
    %6556 = vmatpush1.msra.mxu0 %v1750
    %6557 = vmatprep.subr.mxu0 %v1779
    %6558 = vmatpush1.msra.mxu0 %v1778
    %6559 = vmatprep.subr.mxu0 %v1807
    %6560 = vmatpush1.msra.mxu0 %v1806
    %6561 = vmatprep.subr.mxu0 %v1835
    %6562 = vmatpush1.msra.mxu0 %v1834
    %6563 = vmatprep.subr.mxu0 %v1863
    %6564 = vmatpush1.msra.mxu0 %v1862
    %6565 = vmatprep.subr.mxu0 %v1891
    %6566 = vmatpush1.msra.mxu0 %v1890
    %6567 = vmatprep.subr.mxu0 %v1919
    %6568 = vmatpush1.msra.mxu0 %v1918
    %6569 = vmatprep.mubr.f32.mxu0 %v126
    %6570 = vmatmul.mubr.f32.gmra.mrb[0].mxu0 %v125
    %v6571 = vpop.f32.mrb[0].mxu0
    %v6572 = vadd.f32 %v6501, %v6571
    %v6573 = vpop.f32.mrb[0].mxu0
    %v6574 = vadd.f32 %v6503, %v6573
    %6575 = vdwg.mxu0
    %6576 = vmatprep.subr.mxu0 %v1947
    %6577 = vmatpush1.msra.mxu0 %v1946
    %6578 = vmatprep.subr.mxu0 %v1975
    %6579 = vmatpush1.msra.mxu0 %v1974
    %6580 = vmatprep.subr.mxu0 %v2003
    %6581 = vmatpush1.msra.mxu0 %v2002
    %6582 = vmatprep.subr.mxu0 %v2031
    %6583 = vmatpush1.msra.mxu0 %v2030
    %6584 = vmatprep.subr.mxu0 %v2059
    %6585 = vmatpush1.msra.mxu0 %v2058
    %6586 = vmatprep.subr.mxu0 %v2087
    %6587 = vmatpush1.msra.mxu0 %v2086
    %6588 = vmatprep.subr.mxu0 %v2115
    %6589 = vmatpush1.msra.mxu0 %v2114
    %6590 = vmatprep.subr.mxu0 %v2143
    %6591 = vmatpush1.msra.mxu0 %v2142
    %6592 = vmatprep.subr.mxu0 %v2171
    %6593 = vmatpush1.msra.mxu0 %v2170
    %6594 = vmatprep.subr.mxu0 %v2199
    %6595 = vmatpush1.msra.mxu0 %v2198
    %6596 = vmatprep.subr.mxu0 %v2227
    %6597 = vmatpush1.msra.mxu0 %v2226
    %6598 = vmatprep.subr.mxu0 %v2255
    %6599 = vmatpush1.msra.mxu0 %v2254
    %6600 = vmatprep.subr.mxu0 %v2283
    %6601 = vmatpush1.msra.mxu0 %v2282
    %6602 = vmatprep.subr.mxu0 %v2311
    %6603 = vmatpush1.msra.mxu0 %v2310
    %6604 = vmatprep.subr.mxu0 %v2339
    %6605 = vmatpush1.msra.mxu0 %v2338
    %6606 = vmatprep.subr.mxu0 %v2367
    %6607 = vmatpush1.msra.mxu0 %v2366
    %6608 = vmatprep.subr.mxu0 %v2395
    %6609 = vmatpush1.msra.mxu0 %v2394
    %6610 = vmatprep.subr.mxu0 %v2423
    %6611 = vmatpush1.msra.mxu0 %v2422
    %6612 = vmatprep.subr.mxu0 %v2451
    %6613 = vmatpush1.msra.mxu0 %v2450
    %6614 = vmatprep.subr.mxu0 %v2479
    %6615 = vmatpush1.msra.mxu0 %v2478
    %6616 = vmatprep.subr.mxu0 %v2507
    %6617 = vmatpush1.msra.mxu0 %v2506
    %6618 = vmatprep.subr.mxu0 %v2535
    %6619 = vmatpush1.msra.mxu0 %v2534
    %6620 = vmatprep.subr.mxu0 %v2563
    %6621 = vmatpush1.msra.mxu0 %v2562
    %6622 = vmatprep.subr.mxu0 %v2591
    %6623 = vmatpush1.msra.mxu0 %v2590
    %6624 = vmatprep.subr.mxu0 %v2619
    %6625 = vmatpush1.msra.mxu0 %v2618
    %6626 = vmatprep.subr.mxu0 %v2647
    %6627 = vmatpush1.msra.mxu0 %v2646
    %6628 = vmatprep.subr.mxu0 %v2675
    %6629 = vmatpush1.msra.mxu0 %v2674
    %6630 = vmatprep.subr.mxu0 %v2703
    %6631 = vmatpush1.msra.mxu0 %v2702
    %6632 = vmatprep.subr.mxu0 %v2731
    %6633 = vmatpush1.msra.mxu0 %v2730
    %6634 = vmatprep.subr.mxu0 %v2759
    %6635 = vmatpush1.msra.mxu0 %v2758
    %6636 = vmatprep.subr.mxu0 %v2787
    %6637 = vmatpush1.msra.mxu0 %v2786
    %6638 = vmatprep.subr.mxu0 %v2815
    %6639 = vmatpush1.msra.mxu0 %v2814
    %6640 = vmatprep.mubr.f32.mxu0 %v128
    %6641 = vmatmul.mubr.f32.gmra.mrb[0].mxu0 %v127
    %v6642 = vpop.f32.mrb[0].mxu0
    %v6643 = vadd.f32 %v6572, %v6642
    %v6644 = vpop.f32.mrb[0].mxu0
    %v6645 = vadd.f32 %v6574, %v6644
    %6646 = vdwg.mxu0
    %6647 = vmatprep.subr.mxu0 %v2843
    %6648 = vmatpush1.msra.mxu0 %v2842
    %6649 = vmatprep.subr.mxu0 %v2871
    %6650 = vmatpush1.msra.mxu0 %v2870
    %6651 = vmatprep.subr.mxu0 0.0
    %6652 = vmatpush1.msra.mxu0 0.0
    %6653 = vmatprep.subr.mxu0 0.0
    %6654 = vmatpush1.msra.mxu0 0.0
    %6655 = vmatprep.subr.mxu0 0.0
    %6656 = vmatpush1.msra.mxu0 0.0
    %6657 = vmatprep.subr.mxu0 0.0
    %6658 = vmatpush1.msra.mxu0 0.0
    %6659 = vmatprep.subr.mxu0 0.0
    %6660 = vmatpush1.msra.mxu0 0.0
    %6661 = vmatprep.subr.mxu0 0.0
    %6662 = vmatpush1.msra.mxu0 0.0
    %6663 = vmatprep.subr.mxu0 0.0
    %6664 = vmatpush1.msra.mxu0 0.0
    %6665 = vmatprep.subr.mxu0 0.0
    %6666 = vmatpush1.msra.mxu0 0.0
    %6667 = vmatprep.subr.mxu0 0.0
    %6668 = vmatpush1.msra.mxu0 0.0
    %6669 = vmatprep.subr.mxu0 0.0
    %6670 = vmatpush1.msra.mxu0 0.0
    %6671 = vmatprep.subr.mxu0 0.0
    %6672 = vmatpush1.msra.mxu0 0.0
    %6673 = vmatprep.subr.mxu0 0.0
    %6674 = vmatpush1.msra.mxu0 0.0
    %6675 = vmatprep.subr.mxu0 0.0
    %6676 = vmatpush1.msra.mxu0 0.0
    %6677 = vmatprep.subr.mxu0 0.0
    %6678 = vmatpush1.msra.mxu0 0.0
    %6679 = vmatprep.subr.mxu0 0.0
    %6680 = vmatpush1.msra.mxu0 0.0
    %6681 = vmatprep.subr.mxu0 0.0
    %6682 = vmatpush1.msra.mxu0 0.0
    %6683 = vmatprep.subr.mxu0 0.0
    %6684 = vmatpush1.msra.mxu0 0.0
    %6685 = vmatprep.subr.mxu0 0.0
    %6686 = vmatpush1.msra.mxu0 0.0
    %6687 = vmatprep.subr.mxu0 0.0
    %6688 = vmatpush1.msra.mxu0 0.0
    %6689 = vmatprep.subr.mxu0 0.0
    %6690 = vmatpush1.msra.mxu0 0.0
    %6691 = vmatprep.subr.mxu0 0.0
    %6692 = vmatpush1.msra.mxu0 0.0
    %6693 = vmatprep.subr.mxu0 0.0
    %6694 = vmatpush1.msra.mxu0 0.0
    %6695 = vmatprep.subr.mxu0 0.0
    %6696 = vmatpush1.msra.mxu0 0.0
    %6697 = vmatprep.subr.mxu0 0.0
    %6698 = vmatpush1.msra.mxu0 0.0
    %6699 = vmatprep.subr.mxu0 0.0
    %6700 = vmatpush1.msra.mxu0 0.0
    %6701 = vmatprep.subr.mxu0 0.0
    %6702 = vmatpush1.msra.mxu0 0.0
    %6703 = vmatprep.subr.mxu0 0.0
    %6704 = vmatpush1.msra.mxu0 0.0
    %6705 = vmatprep.subr.mxu0 0.0
    %6706 = vmatpush1.msra.mxu0 0.0
    %6707 = vmatprep.subr.mxu0 0.0
    %6708 = vmatpush1.msra.mxu0 0.0
    %6709 = vmatprep.subr.mxu0 0.0
    %6710 = vmatpush1.msra.mxu0 0.0
    %6711 = vmatprep.mubr.f32.mxu0 0.0
    %6712 = vmatmul.mubr.f32.gmra.mrb[0].mxu0 %v3024
    %v6713 = vpop.f32.mrb[0].mxu0
    %v6714 = vadd.f32 %v6643, %v6713
    %v6715 = vpop.f32.mrb[0].mxu0
    %v6716 = vadd.f32 %v6645, %v6715
    %6717 = vdwg.mxu0
    %6718 = vmatprep.subr.mxu0 %v157
    %6719 = vmatpush1.msra.mxu0 %v156
    %6720 = vmatprep.subr.mxu0 %v185
    %6721 = vmatpush1.msra.mxu0 %v184
    %6722 = vmatprep.subr.mxu0 %v213
    %6723 = vmatpush1.msra.mxu0 %v212
    %6724 = vmatprep.subr.mxu0 %v241
    %6725 = vmatpush1.msra.mxu0 %v240
    %6726 = vmatprep.subr.mxu0 %v269
    %6727 = vmatpush1.msra.mxu0 %v268
    %6728 = vmatprep.subr.mxu0 %v297
    %6729 = vmatpush1.msra.mxu0 %v296
    %6730 = vmatprep.subr.mxu0 %v325
    %6731 = vmatpush1.msra.mxu0 %v324
    %6732 = vmatprep.subr.mxu0 %v353
    %6733 = vmatpush1.msra.mxu0 %v352
    %6734 = vmatprep.subr.mxu0 %v381
    %6735 = vmatpush1.msra.mxu0 %v380
    %6736 = vmatprep.subr.mxu0 %v409
    %6737 = vmatpush1.msra.mxu0 %v408
    %6738 = vmatprep.subr.mxu0 %v437
    %6739 = vmatpush1.msra.mxu0 %v436
    %6740 = vmatprep.subr.mxu0 %v465
    %6741 = vmatpush1.msra.mxu0 %v464
    %6742 = vmatprep.subr.mxu0 %v493
    %6743 = vmatpush1.msra.mxu0 %v492
    %6744 = vmatprep.subr.mxu0 %v521
    %6745 = vmatpush1.msra.mxu0 %v520
    %6746 = vmatprep.subr.mxu0 %v549
    %6747 = vmatpush1.msra.mxu0 %v548
    %6748 = vmatprep.subr.mxu0 %v577
    %6749 = vmatpush1.msra.mxu0 %v576
    %6750 = vmatprep.subr.mxu0 %v605
    %6751 = vmatpush1.msra.mxu0 %v604
    %6752 = vmatprep.subr.mxu0 %v633
    %6753 = vmatpush1.msra.mxu0 %v632
    %6754 = vmatprep.subr.mxu0 %v661
    %6755 = vmatpush1.msra.mxu0 %v660
    %6756 = vmatprep.subr.mxu0 %v689
    %6757 = vmatpush1.msra.mxu0 %v688
    %6758 = vmatprep.subr.mxu0 %v717
    %6759 = vmatpush1.msra.mxu0 %v716
    %6760 = vmatprep.subr.mxu0 %v745
    %6761 = vmatpush1.msra.mxu0 %v744
    %6762 = vmatprep.subr.mxu0 %v773
    %6763 = vmatpush1.msra.mxu0 %v772
    %6764 = vmatprep.subr.mxu0 %v801
    %6765 = vmatpush1.msra.mxu0 %v800
    %6766 = vmatprep.subr.mxu0 %v829
    %6767 = vmatpush1.msra.mxu0 %v828
    %6768 = vmatprep.subr.mxu0 %v857
    %6769 = vmatpush1.msra.mxu0 %v856
    %6770 = vmatprep.subr.mxu0 %v885
    %6771 = vmatpush1.msra.mxu0 %v884
    %6772 = vmatprep.subr.mxu0 %v913
    %6773 = vmatpush1.msra.mxu0 %v912
    %6774 = vmatprep.subr.mxu0 %v941
    %6775 = vmatpush1.msra.mxu0 %v940
    %6776 = vmatprep.subr.mxu0 %v969
    %6777 = vmatpush1.msra.mxu0 %v968
    %6778 = vmatprep.subr.mxu0 %v997
    %6779 = vmatpush1.msra.mxu0 %v996
    %6780 = vmatprep.subr.mxu0 %v1025
    %6781 = vmatpush1.msra.mxu0 %v1024
    %6782 = vmatprep.mubr.f32.mxu0 %v124
    %6783 = vmatmul.mubr.f32.gmra.mrb[0].mxu0 %v123
    %v6784 = vpop.f32.mrb[0].mxu0
    %v6785 = vadd.f32 %v2989, %v6784
    %v6786 = vpop.f32.mrb[0].mxu0
    %v6787 = vadd.f32 %v2993, %v6786
    %6788 = vdwg.mxu0
    %6789 = vmatprep.subr.mxu0 %v1053
    %6790 = vmatpush1.msra.mxu0 %v1052
    %6791 = vmatprep.subr.mxu0 %v1081
    %6792 = vmatpush1.msra.mxu0 %v1080
    %6793 = vmatprep.subr.mxu0 %v1109
    %6794 = vmatpush1.msra.mxu0 %v1108
    %6795 = vmatprep.subr.mxu0 %v1137
    %6796 = vmatpush1.msra.mxu0 %v1136
    %6797 = vmatprep.subr.mxu0 %v1165
    %6798 = vmatpush1.msra.mxu0 %v1164
    %6799 = vmatprep.subr.mxu0 %v1193
    %6800 = vmatpush1.msra.mxu0 %v1192
    %6801 = vmatprep.subr.mxu0 %v1221
    %6802 = vmatpush1.msra.mxu0 %v1220
    %6803 = vmatprep.subr.mxu0 %v1249
    %6804 = vmatpush1.msra.mxu0 %v1248
    %6805 = vmatprep.subr.mxu0 %v1277
    %6806 = vmatpush1.msra.mxu0 %v1276
    %6807 = vmatprep.subr.mxu0 %v1305
    %6808 = vmatpush1.msra.mxu0 %v1304
    %6809 = vmatprep.subr.mxu0 %v1333
    %6810 = vmatpush1.msra.mxu0 %v1332
    %6811 = vmatprep.subr.mxu0 %v1361
    %6812 = vmatpush1.msra.mxu0 %v1360
    %6813 = vmatprep.subr.mxu0 %v1389
    %6814 = vmatpush1.msra.mxu0 %v1388
    %6815 = vmatprep.subr.mxu0 %v1417
    %6816 = vmatpush1.msra.mxu0 %v1416
    %6817 = vmatprep.subr.mxu0 %v1445
    %6818 = vmatpush1.msra.mxu0 %v1444
    %6819 = vmatprep.subr.mxu0 %v1473
    %6820 = vmatpush1.msra.mxu0 %v1472
    %6821 = vmatprep.subr.mxu0 %v1501
    %6822 = vmatpush1.msra.mxu0 %v1500
    %6823 = vmatprep.subr.mxu0 %v1529
    %6824 = vmatpush1.msra.mxu0 %v1528
    %6825 = vmatprep.subr.mxu0 %v1557
    %6826 = vmatpush1.msra.mxu0 %v1556
    %6827 = vmatprep.subr.mxu0 %v1585
    %6828 = vmatpush1.msra.mxu0 %v1584
    %6829 = vmatprep.subr.mxu0 %v1613
    %6830 = vmatpush1.msra.mxu0 %v1612
    %6831 = vmatprep.subr.mxu0 %v1641
    %6832 = vmatpush1.msra.mxu0 %v1640
    %6833 = vmatprep.subr.mxu0 %v1669
    %6834 = vmatpush1.msra.mxu0 %v1668
    %6835 = vmatprep.subr.mxu0 %v1697
    %6836 = vmatpush1.msra.mxu0 %v1696
    %6837 = vmatprep.subr.mxu0 %v1725
    %6838 = vmatpush1.msra.mxu0 %v1724
    %6839 = vmatprep.subr.mxu0 %v1753
    %6840 = vmatpush1.msra.mxu0 %v1752
    %6841 = vmatprep.subr.mxu0 %v1781
    %6842 = vmatpush1.msra.mxu0 %v1780
    %6843 = vmatprep.subr.mxu0 %v1809
    %6844 = vmatpush1.msra.mxu0 %v1808
    %6845 = vmatprep.subr.mxu0 %v1837
    %6846 = vmatpush1.msra.mxu0 %v1836
    %6847 = vmatprep.subr.mxu0 %v1865
    %6848 = vmatpush1.msra.mxu0 %v1864
    %6849 = vmatprep.subr.mxu0 %v1893
    %6850 = vmatpush1.msra.mxu0 %v1892
    %6851 = vmatprep.subr.mxu0 %v1921
    %6852 = vmatpush1.msra.mxu0 %v1920
    %6853 = vmatprep.mubr.f32.mxu0 %v126
    %6854 = vmatmul.mubr.f32.gmra.mrb[0].mxu0 %v125
    %v6855 = vpop.f32.mrb[0].mxu0
    %v6856 = vadd.f32 %v6785, %v6855
    %v6857 = vpop.f32.mrb[0].mxu0
    %v6858 = vadd.f32 %v6787, %v6857
    %6859 = vdwg.mxu0
    %6860 = vmatprep.subr.mxu0 %v1949
    %6861 = vmatpush1.msra.mxu0 %v1948
    %6862 = vmatprep.subr.mxu0 %v1977
    %6863 = vmatpush1.msra.mxu0 %v1976
    %6864 = vmatprep.subr.mxu0 %v2005
    %6865 = vmatpush1.msra.mxu0 %v2004
    %6866 = vmatprep.subr.mxu0 %v2033
    %6867 = vmatpush1.msra.mxu0 %v2032
    %6868 = vmatprep.subr.mxu0 %v2061
    %6869 = vmatpush1.msra.mxu0 %v2060
    %6870 = vmatprep.subr.mxu0 %v2089
    %6871 = vmatpush1.msra.mxu0 %v2088
    %6872 = vmatprep.subr.mxu0 %v2117
    %6873 = vmatpush1.msra.mxu0 %v2116
    %6874 = vmatprep.subr.mxu0 %v2145
    %6875 = vmatpush1.msra.mxu0 %v2144
    %6876 = vmatprep.subr.mxu0 %v2173
    %6877 = vmatpush1.msra.mxu0 %v2172
    %6878 = vmatprep.subr.mxu0 %v2201
    %6879 = vmatpush1.msra.mxu0 %v2200
    %6880 = vmatprep.subr.mxu0 %v2229
    %6881 = vmatpush1.msra.mxu0 %v2228
    %6882 = vmatprep.subr.mxu0 %v2257
    %6883 = vmatpush1.msra.mxu0 %v2256
    %6884 = vmatprep.subr.mxu0 %v2285
    %6885 = vmatpush1.msra.mxu0 %v2284
    %6886 = vmatprep.subr.mxu0 %v2313
    %6887 = vmatpush1.msra.mxu0 %v2312
    %6888 = vmatprep.subr.mxu0 %v2341
    %6889 = vmatpush1.msra.mxu0 %v2340
    %6890 = vmatprep.subr.mxu0 %v2369
    %6891 = vmatpush1.msra.mxu0 %v2368
    %6892 = vmatprep.subr.mxu0 %v2397
    %6893 = vmatpush1.msra.mxu0 %v2396
    %6894 = vmatprep.subr.mxu0 %v2425
    %6895 = vmatpush1.msra.mxu0 %v2424
    %6896 = vmatprep.subr.mxu0 %v2453
    %6897 = vmatpush1.msra.mxu0 %v2452
    %6898 = vmatprep.subr.mxu0 %v2481
    %6899 = vmatpush1.msra.mxu0 %v2480
    %6900 = vmatprep.subr.mxu0 %v2509
    %6901 = vmatpush1.msra.mxu0 %v2508
    %6902 = vmatprep.subr.mxu0 %v2537
    %6903 = vmatpush1.msra.mxu0 %v2536
    %6904 = vmatprep.subr.mxu0 %v2565
    %6905 = vmatpush1.msra.mxu0 %v2564
    %6906 = vmatprep.subr.mxu0 %v2593
    %6907 = vmatpush1.msra.mxu0 %v2592
    %6908 = vmatprep.subr.mxu0 %v2621
    %6909 = vmatpush1.msra.mxu0 %v2620
    %6910 = vmatprep.subr.mxu0 %v2649
    %6911 = vmatpush1.msra.mxu0 %v2648
    %6912 = vmatprep.subr.mxu0 %v2677
    %6913 = vmatpush1.msra.mxu0 %v2676
    %6914 = vmatprep.subr.mxu0 %v2705
    %6915 = vmatpush1.msra.mxu0 %v2704
    %6916 = vmatprep.subr.mxu0 %v2733
    %6917 = vmatpush1.msra.mxu0 %v2732
    %6918 = vmatprep.subr.mxu0 %v2761
    %6919 = vmatpush1.msra.mxu0 %v2760
    %6920 = vmatprep.subr.mxu0 %v2789
    %6921 = vmatpush1.msra.mxu0 %v2788
    %6922 = vmatprep.subr.mxu0 %v2817
    %6923 = vmatpush1.msra.mxu0 %v2816
    %6924 = vmatprep.mubr.f32.mxu0 %v128
    %6925 = vmatmul.mubr.f32.gmra.mrb[0].mxu0 %v127
    %v6926 = vpop.f32.mrb[0].mxu0
    %v6927 = vadd.f32 %v6856, %v6926
    %v6928 = vpop.f32.mrb[0].mxu0
    %v6929 = vadd.f32 %v6858, %v6928
    %6930 = vdwg.mxu0
    %6931 = vmatprep.subr.mxu0 %v2845
    %6932 = vmatpush1.msra.mxu0 %v2844
    %6933 = vmatprep.subr.mxu0 %v2873
    %6934 = vmatpush1.msra.mxu0 %v2872
    %6935 = vmatprep.subr.mxu0 0.0
    %6936 = vmatpush1.msra.mxu0 0.0
    %6937 = vmatprep.subr.mxu0 0.0
    %6938 = vmatpush1.msra.mxu0 0.0
    %6939 = vmatprep.subr.mxu0 0.0
    %6940 = vmatpush1.msra.mxu0 0.0
    %6941 = vmatprep.subr.mxu0 0.0
    %6942 = vmatpush1.msra.mxu0 0.0
    %6943 = vmatprep.subr.mxu0 0.0
    %6944 = vmatpush1.msra.mxu0 0.0
    %6945 = vmatprep.subr.mxu0 0.0
    %6946 = vmatpush1.msra.mxu0 0.0
    %6947 = vmatprep.subr.mxu0 0.0
    %6948 = vmatpush1.msra.mxu0 0.0
    %6949 = vmatprep.subr.mxu0 0.0
    %6950 = vmatpush1.msra.mxu0 0.0
    %6951 = vmatprep.subr.mxu0 0.0
    %6952 = vmatpush1.msra.mxu0 0.0
    %6953 = vmatprep.subr.mxu0 0.0
    %6954 = vmatpush1.msra.mxu0 0.0
    %6955 = vmatprep.subr.mxu0 0.0
    %6956 = vmatpush1.msra.mxu0 0.0
    %6957 = vmatprep.subr.mxu0 0.0
    %6958 = vmatpush1.msra.mxu0 0.0
    %6959 = vmatprep.subr.mxu0 0.0
    %6960 = vmatpush1.msra.mxu0 0.0
    %6961 = vmatprep.subr.mxu0 0.0
    %6962 = vmatpush1.msra.mxu0 0.0
    %6963 = vmatprep.subr.mxu0 0.0
    %6964 = vmatpush1.msra.mxu0 0.0
    %6965 = vmatprep.subr.mxu0 0.0
    %6966 = vmatpush1.msra.mxu0 0.0
    %6967 = vmatprep.subr.mxu0 0.0
    %6968 = vmatpush1.msra.mxu0 0.0
    %6969 = vmatprep.subr.mxu0 0.0
    %6970 = vmatpush1.msra.mxu0 0.0
    %6971 = vmatprep.subr.mxu0 0.0
    %6972 = vmatpush1.msra.mxu0 0.0
    %6973 = vmatprep.subr.mxu0 0.0
    %6974 = vmatpush1.msra.mxu0 0.0
    %6975 = vmatprep.subr.mxu0 0.0
    %6976 = vmatpush1.msra.mxu0 0.0
    %6977 = vmatprep.subr.mxu0 0.0
    %6978 = vmatpush1.msra.mxu0 0.0
    %6979 = vmatprep.subr.mxu0 0.0
    %6980 = vmatpush1.msra.mxu0 0.0
    %6981 = vmatprep.subr.mxu0 0.0
    %6982 = vmatpush1.msra.mxu0 0.0
    %6983 = vmatprep.subr.mxu0 0.0
    %6984 = vmatpush1.msra.mxu0 0.0
    %6985 = vmatprep.subr.mxu0 0.0
    %6986 = vmatpush1.msra.mxu0 0.0
    %6987 = vmatprep.subr.mxu0 0.0
    %6988 = vmatpush1.msra.mxu0 0.0
    %6989 = vmatprep.subr.mxu0 0.0
    %6990 = vmatpush1.msra.mxu0 0.0
    %6991 = vmatprep.subr.mxu0 0.0
    %6992 = vmatpush1.msra.mxu0 0.0
    %6993 = vmatprep.subr.mxu0 0.0
    %6994 = vmatpush1.msra.mxu0 0.0
    %6995 = vmatprep.mubr.f32.mxu0 0.0
    %6996 = vmatmul.mubr.f32.gmra.mrb[0].mxu0 %v3024
    %v6997 = vpop.f32.mrb[0].mxu0
    %v6998 = vadd.f32 %v6927, %v6997
    %v6999 = vpop.f32.mrb[0].mxu0
    %v7000 = vadd.f32 %v6929, %v6999
    %7001 = vdwg.mxu0
    %v7002 = vmax.f32 %v3306, 0.0
    %v7003 = vmax.f32 %v3308, 0.0
    %v7004 = vmax.f32 %v3590, 0.0
    %v7005 = vmax.f32 %v3592, 0.0
    %v7006 = vmax.f32 %v3874, 0.0
    %v7007 = vmax.f32 %v3876, 0.0
    %v7008 = vmax.f32 %v4158, 0.0
    %v7009 = vmax.f32 %v4160, 0.0
    %v7010 = vmax.f32 %v4442, 0.0
    %v7011 = vmax.f32 %v4444, 0.0
    %v7012 = vmax.f32 %v4726, 0.0
    %v7013 = vmax.f32 %v4728, 0.0
    %v7014 = vmax.f32 %v5010, 0.0
    %v7015 = vmax.f32 %v5012, 0.0
    %v7016 = vmax.f32 %v5294, 0.0
    %v7017 = vmax.f32 %v5296, 0.0
    %v7018 = vmax.f32 %v5578, 0.0
    %v7019 = vmax.f32 %v5580, 0.0
    %v7020 = vmax.f32 %v5862, 0.0
    %v7021 = vmax.f32 %v5864, 0.0
    %v7022 = vmax.f32 %v6146, 0.0
    %v7023 = vmax.f32 %v6148, 0.0
    %v7024 = vmax.f32 %v6430, 0.0
    %v7025 = vmax.f32 %v6432, 0.0
    %v7026 = vmax.f32 %v6714, 0.0
    %v7027 = vmax.f32 %v6716, 0.0
    %v7028 = vmax.f32 %v6998, 0.0
    %v7029 = vmax.f32 %v7000, 0.0
    %7030 = vst [vmem:[#allocation2] sm:$0xff] %v7002
    %7031 = vst [vmem:[#allocation2 + $0x8] sm:$0xff] %v7003
    %7032 = vst [vmem:[#allocation2 + $0x10] sm:$0xff] %v7004
    %7033 = vst [vmem:[#allocation2 + $0x18] sm:$0xff] %v7005
    %7034 = vst [vmem:[#allocation2 + $0x20] sm:$0xff] %v7006
    %7035 = vst [vmem:[#allocation2 + $0x28] sm:$0xff] %v7007
    %7036 = vst [vmem:[#allocation2 + $0x30] sm:$0xff] %v7008
    %7037 = vst [vmem:[#allocation2 + $0x38] sm:$0xff] %v7009
    %7038 = vst [vmem:[#allocation2 + $0x40] sm:$0xff] %v7010
    %7039 = vst [vmem:[#allocation2 + $0x48] sm:$0xff] %v7011
    %7040 = vst [vmem:[#allocation2 + $0x50] sm:$0xff] %v7012
    %7041 = vst [vmem:[#allocation2 + $0x58] sm:$0xff] %v7013
    %7042 = vst [vmem:[#allocation2 + $0x60] sm:$0xff] %v7014
    %7043 = vst [vmem:[#allocation2 + $0x68] sm:$0xff] %v7015
    %7044 = vst [vmem:[#allocation2 + $0x70] sm:$0xff] %v7016
    %7045 = vst [vmem:[#allocation2 + $0x78] sm:$0xff] %v7017
    %7046 = vst [vmem:[#allocation2 + $0x80] sm:$0xff] %v7018
    %7047 = vst [vmem:[#allocation2 + $0x88] sm:$0xff] %v7019
    %7048 = vst [vmem:[#allocation2 + $0x90] sm:$0xff] %v7020
    %7049 = vst [vmem:[#allocation2 + $0x98] sm:$0xff] %v7021
    %7050 = vst [vmem:[#allocation2 + $0xa0] sm:$0xff] %v7022
    %7051 = vst [vmem:[#allocation2 + $0xa8] sm:$0xff] %v7023
    %7052 = vst [vmem:[#allocation2 + $0xb0] sm:$0xff] %v7024
    %7053 = vst [vmem:[#allocation2 + $0xb8] sm:$0xff] %v7025
    %7054 = vst [vmem:[#allocation2 + $0xc0] sm:$0xff] %v7026
    %7055 = vst [vmem:[#allocation2 + $0xc8] sm:$0xff] %v7027
    %7056 = vst [vmem:[#allocation2 + $0xd0] sm:$0xff] %v7028
    %7057 = vst [vmem:[#allocation2 + $0xd8] sm:$0xff] %v7029
    %v7058 = vld [vmem:[#allocation2] sm:$0xff]
    %v7059 = vld [vmem:[#allocation2 + $0x8] sm:$0xff]
    %v7060 = vld [vmem:[#allocation2 + $0x10] sm:$0xff]
    %v7061 = vld [vmem:[#allocation2 + $0x18] sm:$0xff]
    %v7062 = vld [vmem:[#allocation2 + $0x20] sm:$0xff]
    %v7063 = vld [vmem:[#allocation2 + $0x28] sm:$0xff]
    %v7064 = vld [vmem:[#allocation2 + $0x30] sm:$0xff]
    %v7065 = vld [vmem:[#allocation2 + $0x38] sm:$0xff]
    %v7066 = vld [vmem:[#allocation2 + $0x40] sm:$0xff]
    %v7067 = vld [vmem:[#allocation2 + $0x48] sm:$0xff]
    %v7068 = vld [vmem:[#allocation2 + $0x50] sm:$0xff]
    %v7069 = vld [vmem:[#allocation2 + $0x58] sm:$0xff]
    %v7070 = vld [vmem:[#allocation2 + $0x60] sm:$0xff]
    %v7071 = vld [vmem:[#allocation2 + $0x68] sm:$0xff]
    %v7072 = vmax.f32 %v7058, %v7065
    %v7073 = vmax.f32 %v7059, %v7066
    %v7074 = vmax.f32 %v7060, %v7067
    %v7075 = vmax.f32 %v7061, %v7068
    %v7076 = vmax.f32 %v7062, %v7069
    %v7077 = vmax.f32 %v7063, %v7070
    %v7078 = vmax.f32 %v7064, %v7071
    %v7079 = vld [vmem:[#allocation2 + $0x70] sm:$0xff]
    %v7080 = vld [vmem:[#allocation2 + $0x78] sm:$0xff]
    %v7081 = vld [vmem:[#allocation2 + $0x80] sm:$0xff]
    %v7082 = vld [vmem:[#allocation2 + $0x88] sm:$0xff]
    %v7083 = vld [vmem:[#allocation2 + $0x90] sm:$0xff]
    %v7084 = vld [vmem:[#allocation2 + $0x98] sm:$0xff]
    %v7085 = vld [vmem:[#allocation2 + $0xa0] sm:$0xff]
    %v7086 = vld [vmem:[#allocation2 + $0xa8] sm:$0xff]
    %v7087 = vld [vmem:[#allocation2 + $0xb0] sm:$0xff]
    %v7088 = vld [vmem:[#allocation2 + $0xb8] sm:$0xff]
    %v7089 = vld [vmem:[#allocation2 + $0xc0] sm:$0xff]
    %v7090 = vld [vmem:[#allocation2 + $0xc8] sm:$0xff]
    %v7091 = vld [vmem:[#allocation2 + $0xd0] sm:$0xff]
    %v7092 = vld [vmem:[#allocation2 + $0xd8] sm:$0xff]
    %v7093 = vmax.f32 %v7079, %v7086
    %v7094 = vmax.f32 %v7080, %v7087
    %v7095 = vmax.f32 %v7081, %v7088
    %v7096 = vmax.f32 %v7082, %v7089
    %v7097 = vmax.f32 %v7083, %v7090
    %v7098 = vmax.f32 %v7084, %v7091
    %v7099 = vmax.f32 %v7085, %v7092
    %v7100 = vmax.f32 %v7072, %v7093
    %v7101 = vmax.f32 %v7073, %v7094
    %v7102 = vmax.f32 %v7074, %v7095
    %v7103 = vmax.f32 %v7075, %v7096
    %v7104 = vmax.f32 %v7076, %v7097
    %v7105 = vmax.f32 %v7077, %v7098
    %v7106 = vmax.f32 %v7078, %v7099
    %v7107 = vld [vmem:[#allocation8] sm:$0xff]
    %v7108 = vld [vmem:[#allocation8 + $0x8] sm:$0xff]
    %v7109 = vld [vmem:[#allocation8 + $0x10] sm:$0xff]
    %v7110 = vld [vmem:[#allocation8 + $0x18] sm:$0xff]
    %v7111 = vld [vmem:[#allocation8 + $0x20] sm:$0xff]
    %v7112 = vld [vmem:[#allocation8 + $0x28] sm:$0xff]
    %v7113 = vld [vmem:[#allocation8 + $0x30] sm:$0xff]
    %v7114 = vld [vmem:[#allocation8 + $0x38] sm:$0xff]
    %v7115 = vld [vmem:[#allocation8 + $0x40] sm:$0xff]
    %v7116 = vld [vmem:[#allocation8 + $0x48] sm:$0xff]
    %v7117 = vld [vmem:[#allocation8 + $0x50] sm:$0xff]
    %v7118 = vld [vmem:[#allocation8 + $0x58] sm:$0xff]
    %v7119 = vld [vmem:[#allocation8 + $0x60] sm:$0xff]
    %v7120 = vld [vmem:[#allocation8 + $0x68] sm:$0xff]
    %v7121 = vld [vmem:[#allocation8 + $0x70] sm:$0xff]
    %v7122 = vld [vmem:[#allocation8 + $0x78] sm:$0xff]
    %v7123 = vld [vmem:[#allocation8 + $0x80] sm:$0xff]
    %v7124 = vld [vmem:[#allocation8 + $0x88] sm:$0xff]
    %v7125 = vld [vmem:[#allocation8 + $0x90] sm:$0xff]
    %v7126 = vld [vmem:[#allocation8 + $0x98] sm:$0xff]
    %v7127 = vld [vmem:[#allocation8 + $0xa0] sm:$0xff]
    %v7128 = vld [vmem:[#allocation8 + $0xa8] sm:$0xff]
    %v7129 = vld [vmem:[#allocation8 + $0xb0] sm:$0xff]
    %v7130 = vld [vmem:[#allocation8 + $0xb8] sm:$0xff]
    %v7131 = vld [vmem:[#allocation8 + $0xc0] sm:$0xff]
    %v7132 = vld [vmem:[#allocation8 + $0xc8] sm:$0xff]
    %v7133 = vld [vmem:[#allocation8 + $0xd0] sm:$0xff]
    %v7134 = vld [vmem:[#allocation8 + $0xd8] sm:$0xff]
    %v7135 = vld [vmem:[#allocation8 + $0xe0] sm:$0xff]
    %v7136 = vld [vmem:[#allocation8 + $0xe8] sm:$0xff]
    %v7137 = vld [vmem:[#allocation8 + $0xf0] sm:$0xff]
    %v7138 = vld [vmem:[#allocation8 + $0xf8] sm:$0xff]
    %v7139 = vld [vmem:[#allocation8 + $0x100] sm:$0xff]
    %v7140 = vld [vmem:[#allocation8 + $0x108] sm:$0xff]
    %v7141 = vld [vmem:[#allocation8 + $0x110] sm:$0xff]
    %v7142 = vld [vmem:[#allocation8 + $0x118] sm:$0xff]
    %v7143 = vld [vmem:[#allocation8 + $0x120] sm:$0xff]
    %v7144 = vld [vmem:[#allocation8 + $0x128] sm:$0xff]
    %v7145 = vld [vmem:[#allocation8 + $0x130] sm:$0xff]
    %v7146 = vld [vmem:[#allocation8 + $0x138] sm:$0xff]
    %v7147 = vld [vmem:[#allocation8 + $0x140] sm:$0xff]
    %v7148 = vld [vmem:[#allocation8 + $0x148] sm:$0xff]
    %v7149 = vld [vmem:[#allocation8 + $0x150] sm:$0xff]
    %v7150 = vld [vmem:[#allocation8 + $0x158] sm:$0xff]
    %v7151 = vld [vmem:[#allocation8 + $0x160] sm:$0xff]
    %v7152 = vld [vmem:[#allocation8 + $0x168] sm:$0xff]
    %v7153 = vld [vmem:[#allocation8 + $0x170] sm:$0xff]
    %v7154 = vld [vmem:[#allocation8 + $0x178] sm:$0xff]
    %v7155 = vld [vmem:[#allocation8 + $0x180] sm:$0xff]
    %v7156 = vld [vmem:[#allocation8 + $0x188] sm:$0xff]
    %v7157 = vld [vmem:[#allocation8 + $0x190] sm:$0xff]
    %v7158 = vld [vmem:[#allocation8 + $0x198] sm:$0xff]
    %v7159 = vld [vmem:[#allocation8 + $0x1a0] sm:$0xff]
    %v7160 = vld [vmem:[#allocation8 + $0x1a8] sm:$0xff]
    %v7161 = vld [vmem:[#allocation8 + $0x1b0] sm:$0xff]
    %v7162 = vld [vmem:[#allocation8 + $0x1b8] sm:$0xff]
    %v7163 = vld [vmem:[#allocation8 + $0x1c0] sm:$0xff]
    %v7164 = vld [vmem:[#allocation8 + $0x1c8] sm:$0xff]
    %v7165 = vld [vmem:[#allocation8 + $0x1d0] sm:$0xff]
    %v7166 = vld [vmem:[#allocation8 + $0x1d8] sm:$0xff]
    %v7167 = vld [vmem:[#allocation8 + $0x1e0] sm:$0xff]
    %v7168 = vld [vmem:[#allocation8 + $0x1e8] sm:$0xff]
    %v7169 = vld [vmem:[#allocation8 + $0x1f0] sm:$0xff]
    %v7170 = vld [vmem:[#allocation8 + $0x1f8] sm:$0xff]
    %v7171 = vld [vmem:[#allocation8 + $0x200] sm:$0xff]
    %v7172 = vld [vmem:[#allocation8 + $0x208] sm:$0xff]
    %v7173 = vld [vmem:[#allocation8 + $0x210] sm:$0xff]
    %v7174 = vld [vmem:[#allocation8 + $0x218] sm:$0xff]
    %v7175 = vld [vmem:[#allocation8 + $0x220] sm:$0xff]
    %v7176 = vld [vmem:[#allocation8 + $0x228] sm:$0xff]
    %v7177 = vld [vmem:[#allocation8 + $0x230] sm:$0xff]
    %v7178 = vld [vmem:[#allocation8 + $0x238] sm:$0xff]
    %v7179 = vld [vmem:[#allocation8 + $0x240] sm:$0xff]
    %v7180 = vld [vmem:[#allocation8 + $0x248] sm:$0xff]
    %v7181 = vld [vmem:[#allocation8 + $0x250] sm:$0xff]
    %v7182 = vld [vmem:[#allocation8 + $0x258] sm:$0xff]
    %v7183 = vld [vmem:[#allocation8 + $0x260] sm:$0xff]
    %v7184 = vld [vmem:[#allocation8 + $0x268] sm:$0xff]
    %v7185 = vld [vmem:[#allocation8 + $0x270] sm:$0xff]
    %v7186 = vld [vmem:[#allocation8 + $0x278] sm:$0xff]
    %v7187 = vld [vmem:[#allocation8 + $0x280] sm:$0xff]
    %v7188 = vld [vmem:[#allocation8 + $0x288] sm:$0xff]
    %v7189 = vld [vmem:[#allocation8 + $0x290] sm:$0xff]
    %v7190 = vld [vmem:[#allocation8 + $0x298] sm:$0xff]
    %v7191 = vld [vmem:[#allocation8 + $0x2a0] sm:$0xff]
    %v7192 = vld [vmem:[#allocation8 + $0x2a8] sm:$0xff]
    %v7193 = vld [vmem:[#allocation8 + $0x2b0] sm:$0xff]
    %v7194 = vld [vmem:[#allocation8 + $0x2b8] sm:$0xff]
    %v7195 = vld [vmem:[#allocation8 + $0x2c0] sm:$0xff]
    %v7196 = vld [vmem:[#allocation8 + $0x2c8] sm:$0xff]
    %v7197 = vld [vmem:[#allocation8 + $0x2d0] sm:$0xff]
    %v7198 = vld [vmem:[#allocation8 + $0x2d8] sm:$0xff]
    %v7199 = vld [vmem:[#allocation8 + $0x2e0] sm:$0xff]
    %v7200 = vld [vmem:[#allocation8 + $0x2e8] sm:$0xff]
    %v7201 = vld [vmem:[#allocation8 + $0x2f0] sm:$0xff]
    %v7202 = vld [vmem:[#allocation8 + $0x2f8] sm:$0xff]
    %v7203 = vld [vmem:[#allocation8 + $0x300] sm:$0xff]
    %v7204 = vld [vmem:[#allocation8 + $0x308] sm:$0xff]
    %v7205 = vld [vmem:[#allocation8 + $0x310] sm:$0xff]
    %v7206 = vld [vmem:[#allocation8 + $0x318] sm:$0xff]
    %v7207 = vld [vmem:[#allocation8 + $0x320] sm:$0xff]
    %v7208 = vld [vmem:[#allocation8 + $0x328] sm:$0xff]
    %v7209 = vld [vmem:[#allocation8 + $0x330] sm:$0xff]
    %v7210 = vld [vmem:[#allocation8 + $0x338] sm:$0xff]
    %v7211 = vld [vmem:[#allocation8 + $0x340] sm:$0xff]
    %v7212 = vld [vmem:[#allocation8 + $0x348] sm:$0xff]
    %v7213 = vld [vmem:[#allocation8 + $0x350] sm:$0xff]
    %v7214 = vld [vmem:[#allocation8 + $0x358] sm:$0xff]
    %v7215 = vld [vmem:[#allocation8 + $0x360] sm:$0xff]
    %v7216 = vld [vmem:[#allocation8 + $0x368] sm:$0xff]
    %v7217 = vld [vmem:[#allocation8 + $0x370] sm:$0xff]
    %v7218 = vld [vmem:[#allocation8 + $0x378] sm:$0xff]
    %v7219 = vld [vmem:[#allocation8 + $0x380] sm:$0xff]
    %v7220 = vld [vmem:[#allocation8 + $0x388] sm:$0xff]
    %v7221 = vld [vmem:[#allocation8 + $0x390] sm:$0xff]
    %v7222 = vld [vmem:[#allocation8 + $0x398] sm:$0xff]
    %v7223 = vld [vmem:[#allocation8 + $0x3a0] sm:$0xff]
    %v7224 = vld [vmem:[#allocation8 + $0x3a8] sm:$0xff]
    %v7225 = vld [vmem:[#allocation8 + $0x3b0] sm:$0xff]
    %v7226 = vld [vmem:[#allocation8 + $0x3b8] sm:$0xff]
    %v7227 = vld [vmem:[#allocation8 + $0x3c0] sm:$0xff]
    %v7228 = vld [vmem:[#allocation8 + $0x3c8] sm:$0xff]
    %v7229 = vld [vmem:[#allocation8 + $0x3d0] sm:$0xff]
    %v7230 = vld [vmem:[#allocation8 + $0x3d8] sm:$0xff]
    %v7231 = vld [vmem:[#allocation8 + $0x3e0] sm:$0xff]
    %v7232 = vld [vmem:[#allocation8 + $0x3e8] sm:$0xff]
    %v7233 = vld [vmem:[#allocation8 + $0x3f0] sm:$0xff]
    %v7234 = vld [vmem:[#allocation8 + $0x3f8] sm:$0xff]
    %v7235 = vld [vmem:[#allocation8 + $0x400] sm:$0xff]
    %v7236 = vld [vmem:[#allocation8 + $0x408] sm:$0xff]
    %v7237 = vld [vmem:[#allocation8 + $0x410] sm:$0xff]
    %v7238 = vld [vmem:[#allocation8 + $0x418] sm:$0xff]
    %v7239 = vld [vmem:[#allocation8 + $0x420] sm:$0xff]
    %v7240 = vld [vmem:[#allocation8 + $0x428] sm:$0xff]
    %v7241 = vld [vmem:[#allocation8 + $0x430] sm:$0xff]
    %v7242 = vld [vmem:[#allocation8 + $0x438] sm:$0xff]
    %v7243 = vld [vmem:[#allocation8 + $0x440] sm:$0xff]
    %v7244 = vld [vmem:[#allocation8 + $0x448] sm:$0xff]
    %v7245 = vld [vmem:[#allocation8 + $0x450] sm:$0xff]
    %v7246 = vld [vmem:[#allocation8 + $0x458] sm:$0xff]
    %v7247 = vld [vmem:[#allocation8 + $0x460] sm:$0xff]
    %v7248 = vld [vmem:[#allocation8 + $0x468] sm:$0xff]
    %v7249 = vld [vmem:[#allocation8 + $0x470] sm:$0xff]
    %v7250 = vld [vmem:[#allocation8 + $0x478] sm:$0xff]
    %v7251 = vld [vmem:[#allocation8 + $0x480] sm:$0xff]
    %v7252 = vld [vmem:[#allocation8 + $0x488] sm:$0xff]
    %v7253 = vld [vmem:[#allocation8 + $0x490] sm:$0xff]
    %v7254 = vld [vmem:[#allocation8 + $0x498] sm:$0xff]
    %v7255 = vld [vmem:[#allocation8 + $0x4a0] sm:$0xff]
    %v7256 = vld [vmem:[#allocation8 + $0x4a8] sm:$0xff]
    %v7257 = vld [vmem:[#allocation8 + $0x4b0] sm:$0xff]
    %v7258 = vld [vmem:[#allocation8 + $0x4b8] sm:$0xff]
    %v7259 = vld [vmem:[#allocation8 + $0x4c0] sm:$0xff]
    %v7260 = vld [vmem:[#allocation8 + $0x4c8] sm:$0xff]
    %v7261 = vld [vmem:[#allocation8 + $0x4d0] sm:$0xff]
    %v7262 = vld [vmem:[#allocation8 + $0x4d8] sm:$0xff]
    %v7263 = vld [vmem:[#allocation8 + $0x4e0] sm:$0xff]
    %v7264 = vld [vmem:[#allocation8 + $0x4e8] sm:$0xff]
    %v7265 = vld [vmem:[#allocation8 + $0x4f0] sm:$0xff]
    %v7266 = vld [vmem:[#allocation8 + $0x4f8] sm:$0xff]
    %v7267 = vld [vmem:[#allocation8 + $0x500] sm:$0xff]
    %v7268 = vld [vmem:[#allocation8 + $0x508] sm:$0xff]
    %v7269 = vld [vmem:[#allocation8 + $0x510] sm:$0xff]
    %v7270 = vld [vmem:[#allocation8 + $0x518] sm:$0xff]
    %v7271 = vld [vmem:[#allocation8 + $0x520] sm:$0xff]
    %v7272 = vld [vmem:[#allocation8 + $0x528] sm:$0xff]
    %v7273 = vld [vmem:[#allocation8 + $0x530] sm:$0xff]
    %v7274 = vld [vmem:[#allocation8 + $0x538] sm:$0xff]
    %v7275 = vld [vmem:[#allocation8 + $0x540] sm:$0xff]
    %v7276 = vld [vmem:[#allocation8 + $0x548] sm:$0xff]
    %v7277 = vld [vmem:[#allocation8 + $0x550] sm:$0xff]
    %v7278 = vld [vmem:[#allocation8 + $0x558] sm:$0xff]
    %v7279 = vld [vmem:[#allocation8 + $0x560] sm:$0xff]
    %v7280 = vld [vmem:[#allocation8 + $0x568] sm:$0xff]
    %v7281 = vld [vmem:[#allocation8 + $0x570] sm:$0xff]
    %v7282 = vld [vmem:[#allocation8 + $0x578] sm:$0xff]
    %v7283 = vld [vmem:[#allocation8 + $0x580] sm:$0xff]
    %v7284 = vld [vmem:[#allocation8 + $0x588] sm:$0xff]
    %v7285 = vld [vmem:[#allocation8 + $0x590] sm:$0xff]
    %v7286 = vld [vmem:[#allocation8 + $0x598] sm:$0xff]
    %v7287 = vld [vmem:[#allocation8 + $0x5a0] sm:$0xff]
    %v7288 = vld [vmem:[#allocation8 + $0x5a8] sm:$0xff]
    %v7289 = vld [vmem:[#allocation8 + $0x5b0] sm:$0xff]
    %v7290 = vld [vmem:[#allocation8 + $0x5b8] sm:$0xff]
    %v7291 = vld [vmem:[#allocation8 + $0x5c0] sm:$0xff]
    %v7292 = vld [vmem:[#allocation8 + $0x5c8] sm:$0xff]
    %v7293 = vld [vmem:[#allocation8 + $0x5d0] sm:$0xff]
    %v7294 = vld [vmem:[#allocation8 + $0x5d8] sm:$0xff]
    %v7295 = vld [vmem:[#allocation8 + $0x5e0] sm:$0xff]
    %v7296 = vld [vmem:[#allocation8 + $0x5e8] sm:$0xff]
    %v7297 = vld [vmem:[#allocation8 + $0x5f0] sm:$0xff]
    %v7298 = vld [vmem:[#allocation8 + $0x5f8] sm:$0xff]
    %v7299 = vld [vmem:[#allocation8 + $0x600] sm:$0xff]
    %v7300 = vld [vmem:[#allocation8 + $0x608] sm:$0xff]
    %v7301 = vld [vmem:[#allocation8 + $0x610] sm:$0xff]
    %v7302 = vld [vmem:[#allocation8 + $0x618] sm:$0xff]
    %v7303 = vld [vmem:[#allocation8 + $0x620] sm:$0xff]
    %v7304 = vld [vmem:[#allocation8 + $0x628] sm:$0xff]
    %v7305 = vld [vmem:[#allocation8 + $0x630] sm:$0xff]
    %v7306 = vld [vmem:[#allocation8 + $0x638] sm:$0xff]
    %v7307 = vld [vmem:[#allocation8 + $0x640] sm:$0xff]
    %v7308 = vld [vmem:[#allocation8 + $0x648] sm:$0xff]
    %v7309 = vld [vmem:[#allocation8 + $0x650] sm:$0xff]
    %v7310 = vld [vmem:[#allocation8 + $0x658] sm:$0xff]
    %v7311 = vld [vmem:[#allocation8 + $0x660] sm:$0xff]
    %v7312 = vld [vmem:[#allocation8 + $0x668] sm:$0xff]
    %v7313 = vld [vmem:[#allocation8 + $0x670] sm:$0xff]
    %v7314 = vld [vmem:[#allocation8 + $0x678] sm:$0xff]
    %v7315 = vld [vmem:[#allocation8 + $0x680] sm:$0xff]
    %v7316 = vld [vmem:[#allocation8 + $0x688] sm:$0xff]
    %v7317 = vld [vmem:[#allocation8 + $0x690] sm:$0xff]
    %v7318 = vld [vmem:[#allocation8 + $0x698] sm:$0xff]
    %v7319 = vld [vmem:[#allocation8 + $0x6a0] sm:$0xff]
    %v7320 = vld [vmem:[#allocation8 + $0x6a8] sm:$0xff]
    %v7321 = vld [vmem:[#allocation8 + $0x6b0] sm:$0xff]
    %v7322 = vld [vmem:[#allocation8 + $0x6b8] sm:$0xff]
    %v7323 = vld [vmem:[#allocation8 + $0x6c0] sm:$0xff]
    %v7324 = vld [vmem:[#allocation8 + $0x6c8] sm:$0xff]
    %v7325 = vld [vmem:[#allocation8 + $0x6d0] sm:$0xff]
    %v7326 = vld [vmem:[#allocation8 + $0x6d8] sm:$0xff]
    %v7327 = vld [vmem:[#allocation8 + $0x6e0] sm:$0xff]
    %v7328 = vld [vmem:[#allocation8 + $0x6e8] sm:$0xff]
    %v7329 = vld [vmem:[#allocation8 + $0x6f0] sm:$0xff]
    %v7330 = vld [vmem:[#allocation8 + $0x6f8] sm:$0xff]
    %v7331 = vld [vmem:[#allocation8 + $0x700] sm:$0xff]
    %v7332 = vld [vmem:[#allocation8 + $0x708] sm:$0xff]
    %v7333 = vld [vmem:[#allocation8 + $0x710] sm:$0xff]
    %v7334 = vld [vmem:[#allocation8 + $0x718] sm:$0xff]
    %v7335 = vld [vmem:[#allocation8 + $0x720] sm:$0xff]
    %v7336 = vld [vmem:[#allocation8 + $0x728] sm:$0xff]
    %v7337 = vld [vmem:[#allocation8 + $0x730] sm:$0xff]
    %v7338 = vld [vmem:[#allocation8 + $0x738] sm:$0xff]
    %v7339 = vld [vmem:[#allocation8 + $0x740] sm:$0xff]
    %v7340 = vld [vmem:[#allocation8 + $0x748] sm:$0xff]
    %v7341 = vld [vmem:[#allocation8 + $0x750] sm:$0xff]
    %v7342 = vld [vmem:[#allocation8 + $0x758] sm:$0xff]
    %v7343 = vld [vmem:[#allocation8 + $0x760] sm:$0xff]
    %v7344 = vld [vmem:[#allocation8 + $0x768] sm:$0xff]
    %v7345 = vld [vmem:[#allocation8 + $0x770] sm:$0xff]
    %v7346 = vld [vmem:[#allocation8 + $0x778] sm:$0xff]
    %v7347 = vld [vmem:[#allocation8 + $0x780] sm:$0xff]
    %v7348 = vld [vmem:[#allocation8 + $0x788] sm:$0xff]
    %v7349 = vld [vmem:[#allocation8 + $0x790] sm:$0xff]
    %v7350 = vld [vmem:[#allocation8 + $0x798] sm:$0xff]
    %v7351 = vld [vmem:[#allocation8 + $0x7a0] sm:$0xff]
    %v7352 = vld [vmem:[#allocation8 + $0x7a8] sm:$0xff]
    %v7353 = vld [vmem:[#allocation8 + $0x7b0] sm:$0xff]
    %v7354 = vld [vmem:[#allocation8 + $0x7b8] sm:$0xff]
    %v7355 = vld [vmem:[#allocation8 + $0x7c0] sm:$0xff]
    %v7356 = vld [vmem:[#allocation8 + $0x7c8] sm:$0xff]
    %v7357 = vld [vmem:[#allocation8 + $0x7d0] sm:$0xff]
    %v7358 = vld [vmem:[#allocation8 + $0x7d8] sm:$0xff]
    %v7359 = vld [vmem:[#allocation8 + $0x7e0] sm:$0xff]
    %v7360 = vld [vmem:[#allocation8 + $0x7e8] sm:$0xff]
    %v7361 = vld [vmem:[#allocation8 + $0x7f0] sm:$0xff]
    %v7362 = vld [vmem:[#allocation8 + $0x7f8] sm:$0xff]
    %v7363 = vld [vmem:[#allocation8 + $0x800] sm:$0xff]
    %v7364 = vld [vmem:[#allocation8 + $0x808] sm:$0xff]
    %v7365 = vld [vmem:[#allocation8 + $0x810] sm:$0xff]
    %v7366 = vld [vmem:[#allocation8 + $0x818] sm:$0xff]
    %v7367 = vld [vmem:[#allocation8 + $0x820] sm:$0xff]
    %v7368 = vld [vmem:[#allocation8 + $0x828] sm:$0xff]
    %v7369 = vld [vmem:[#allocation8 + $0x830] sm:$0xff]
    %v7370 = vld [vmem:[#allocation8 + $0x838] sm:$0xff]
    %v7371 = vld [vmem:[#allocation8 + $0x840] sm:$0xff]
    %v7372 = vld [vmem:[#allocation8 + $0x848] sm:$0xff]
    %v7373 = vld [vmem:[#allocation8 + $0x850] sm:$0xff]
    %v7374 = vld [vmem:[#allocation8 + $0x858] sm:$0xff]
    %v7375 = vld [vmem:[#allocation8 + $0x860] sm:$0xff]
    %v7376 = vld [vmem:[#allocation8 + $0x868] sm:$0xff]
    %v7377 = vld [vmem:[#allocation8 + $0x870] sm:$0xff]
    %v7378 = vld [vmem:[#allocation8 + $0x878] sm:$0xff]
    %v7379 = vld [vmem:[#allocation8 + $0x880] sm:$0xff]
    %v7380 = vld [vmem:[#allocation8 + $0x888] sm:$0xff]
    %v7381 = vld [vmem:[#allocation8 + $0x890] sm:$0xff]
    %v7382 = vld [vmem:[#allocation8 + $0x898] sm:$0xff]
    %v7383 = vld [vmem:[#allocation8 + $0x8a0] sm:$0xff]
    %v7384 = vld [vmem:[#allocation8 + $0x8a8] sm:$0xff]
    %v7385 = vld [vmem:[#allocation8 + $0x8b0] sm:$0xff]
    %v7386 = vld [vmem:[#allocation8 + $0x8b8] sm:$0xff]
    %v7387 = vld [vmem:[#allocation8 + $0x8c0] sm:$0xff]
    %v7388 = vld [vmem:[#allocation8 + $0x8c8] sm:$0xff]
    %v7389 = vld [vmem:[#allocation8 + $0x8d0] sm:$0xff]
    %v7390 = vld [vmem:[#allocation8 + $0x8d8] sm:$0xff]
    %v7391 = vld [vmem:[#allocation8 + $0x8e0] sm:$0xff]
    %v7392 = vld [vmem:[#allocation8 + $0x8e8] sm:$0xff]
    %v7393 = vld [vmem:[#allocation8 + $0x8f0] sm:$0xff]
    %v7394 = vld [vmem:[#allocation8 + $0x8f8] sm:$0xff]
    %v7395 = vld [vmem:[#allocation8 + $0x900] sm:$0xff]
    %v7396 = vld [vmem:[#allocation8 + $0x908] sm:$0xff]
    %v7397 = vld [vmem:[#allocation8 + $0x910] sm:$0xff]
    %v7398 = vld [vmem:[#allocation8 + $0x918] sm:$0xff]
    %v7399 = vld [vmem:[#allocation8 + $0x920] sm:$0xff]
    %v7400 = vld [vmem:[#allocation8 + $0x928] sm:$0xff]
    %v7401 = vld [vmem:[#allocation8 + $0x930] sm:$0xff]
    %v7402 = vld [vmem:[#allocation8 + $0x938] sm:$0xff]
    %v7403 = vld [vmem:[#allocation8 + $0x940] sm:$0xff]
    %v7404 = vld [vmem:[#allocation8 + $0x948] sm:$0xff]
    %v7405 = vld [vmem:[#allocation8 + $0x950] sm:$0xff]
    %v7406 = vld [vmem:[#allocation8 + $0x958] sm:$0xff]
    %v7407 = vld [vmem:[#allocation8 + $0x960] sm:$0xff]
    %v7408 = vld [vmem:[#allocation8 + $0x968] sm:$0xff]
    %v7409 = vld [vmem:[#allocation8 + $0x970] sm:$0xff]
    %v7410 = vld [vmem:[#allocation8 + $0x978] sm:$0xff]
    %v7411 = vld [vmem:[#allocation8 + $0x980] sm:$0xff]
    %v7412 = vld [vmem:[#allocation8 + $0x988] sm:$0xff]
    %v7413 = vld [vmem:[#allocation8 + $0x990] sm:$0xff]
    %v7414 = vld [vmem:[#allocation8 + $0x998] sm:$0xff]
    %v7415 = vld [vmem:[#allocation8 + $0x9a0] sm:$0xff]
    %v7416 = vld [vmem:[#allocation8 + $0x9a8] sm:$0xff]
    %v7417 = vld [vmem:[#allocation8 + $0x9b0] sm:$0xff]
    %v7418 = vld [vmem:[#allocation8 + $0x9b8] sm:$0xff]
    %v7419 = vld [vmem:[#allocation8 + $0x9c0] sm:$0xff]
    %v7420 = vld [vmem:[#allocation8 + $0x9c8] sm:$0xff]
    %v7421 = vld [vmem:[#allocation8 + $0x9d0] sm:$0xff]
    %v7422 = vld [vmem:[#allocation8 + $0x9d8] sm:$0xff]
    %v7423 = vld [vmem:[#allocation8 + $0x9e0] sm:$0xff]
    %v7424 = vld [vmem:[#allocation8 + $0x9e8] sm:$0xff]
    %v7425 = vld [vmem:[#allocation8 + $0x9f0] sm:$0xff]
    %v7426 = vld [vmem:[#allocation8 + $0x9f8] sm:$0xff]
    %v7427 = vld [vmem:[#allocation8 + $0xa00] sm:$0xff]
    %v7428 = vld [vmem:[#allocation8 + $0xa08] sm:$0xff]
    %v7429 = vld [vmem:[#allocation8 + $0xa10] sm:$0xff]
    %v7430 = vld [vmem:[#allocation8 + $0xa18] sm:$0xff]
    %v7431 = vld [vmem:[#allocation8 + $0xa20] sm:$0xff]
    %v7432 = vld [vmem:[#allocation8 + $0xa28] sm:$0xff]
    %v7433 = vld [vmem:[#allocation8 + $0xa30] sm:$0xff]
    %v7434 = vld [vmem:[#allocation8 + $0xa38] sm:$0xff]
    %v7435 = vld [vmem:[#allocation8 + $0xa40] sm:$0xff]
    %v7436 = vld [vmem:[#allocation8 + $0xa48] sm:$0xff]
    %v7437 = vld [vmem:[#allocation8 + $0xa50] sm:$0xff]
    %v7438 = vld [vmem:[#allocation8 + $0xa58] sm:$0xff]
    %v7439 = vld [vmem:[#allocation8 + $0xa60] sm:$0xff]
    %v7440 = vld [vmem:[#allocation8 + $0xa68] sm:$0xff]
    %v7441 = vld [vmem:[#allocation8 + $0xa70] sm:$0xff]
    %v7442 = vld [vmem:[#allocation8 + $0xa78] sm:$0xff]
    %v7443 = vld [vmem:[#allocation8 + $0xa80] sm:$0xff]
    %v7444 = vld [vmem:[#allocation8 + $0xa88] sm:$0xff]
    %v7445 = vld [vmem:[#allocation8 + $0xa90] sm:$0xff]
    %v7446 = vld [vmem:[#allocation8 + $0xa98] sm:$0xff]
    %v7447 = vld [vmem:[#allocation8 + $0xaa0] sm:$0xff]
    %v7448 = vld [vmem:[#allocation8 + $0xaa8] sm:$0xff]
    %v7449 = vld [vmem:[#allocation8 + $0xab0] sm:$0xff]
    %v7450 = vld [vmem:[#allocation8 + $0xab8] sm:$0xff]
    %v7451 = vld [vmem:[#allocation8 + $0xac0] sm:$0xff]
    %v7452 = vld [vmem:[#allocation8 + $0xac8] sm:$0xff]
    %v7453 = vld [vmem:[#allocation8 + $0xad0] sm:$0xff]
    %v7454 = vld [vmem:[#allocation8 + $0xad8] sm:$0xff]
    %v7455 = vld [vmem:[#allocation8 + $0xae0] sm:$0xff]
    %v7456 = vld [vmem:[#allocation8 + $0xae8] sm:$0xff]
    %v7457 = vld [vmem:[#allocation8 + $0xaf0] sm:$0xff]
    %v7458 = vld [vmem:[#allocation8 + $0xaf8] sm:$0xff]
    %v7459 = vld [vmem:[#allocation8 + $0xb00] sm:$0xff]
    %v7460 = vld [vmem:[#allocation8 + $0xb08] sm:$0xff]
    %v7461 = vld [vmem:[#allocation8 + $0xb10] sm:$0xff]
    %v7462 = vld [vmem:[#allocation8 + $0xb18] sm:$0xff]
    %v7463 = vld [vmem:[#allocation8 + $0xb20] sm:$0xff]
    %v7464 = vld [vmem:[#allocation8 + $0xb28] sm:$0xff]
    %v7465 = vld [vmem:[#allocation8 + $0xb30] sm:$0xff]
    %v7466 = vld [vmem:[#allocation8 + $0xb38] sm:$0xff]
    %v7467 = vld [vmem:[#allocation8 + $0xb40] sm:$0xff]
    %v7468 = vld [vmem:[#allocation8 + $0xb48] sm:$0xff]
    %v7469 = vld [vmem:[#allocation8 + $0xb50] sm:$0xff]
    %v7470 = vld [vmem:[#allocation8 + $0xb58] sm:$0xff]
    %v7471 = vld [vmem:[#allocation8 + $0xb60] sm:$0xff]
    %v7472 = vld [vmem:[#allocation8 + $0xb68] sm:$0xff]
    %v7473 = vld [vmem:[#allocation8 + $0xb70] sm:$0xff]
    %v7474 = vld [vmem:[#allocation8 + $0xb78] sm:$0xff]
    %v7475 = vld [vmem:[#allocation8 + $0xb80] sm:$0xff]
    %v7476 = vld [vmem:[#allocation8 + $0xb88] sm:$0xff]
    %v7477 = vld [vmem:[#allocation8 + $0xb90] sm:$0xff]
    %v7478 = vld [vmem:[#allocation8 + $0xb98] sm:$0xff]
    %v7479 = vld [vmem:[#allocation8 + $0xba0] sm:$0xff]
    %v7480 = vld [vmem:[#allocation8 + $0xba8] sm:$0xff]
    %v7481 = vld [vmem:[#allocation8 + $0xbb0] sm:$0xff]
    %v7482 = vld [vmem:[#allocation8 + $0xbb8] sm:$0xff]
    %v7483 = vld [vmem:[#allocation8 + $0xbc0] sm:$0xff]
    %v7484 = vld [vmem:[#allocation8 + $0xbc8] sm:$0xff]
    %v7485 = vld [vmem:[#allocation8 + $0xbd0] sm:$0xff]
    %v7486 = vld [vmem:[#allocation8 + $0xbd8] sm:$0xff]
    %v7487 = vld [vmem:[#allocation8 + $0xbe0] sm:$0xff]
    %v7488 = vld [vmem:[#allocation8 + $0xbe8] sm:$0xff]
    %v7489 = vld [vmem:[#allocation8 + $0xbf0] sm:$0xff]
    %v7490 = vld [vmem:[#allocation8 + $0xbf8] sm:$0xff]
    %v7491 = vld [vmem:[#allocation8 + $0xc00] sm:$0xff]
    %v7492 = vld [vmem:[#allocation8 + $0xc08] sm:$0xff]
    %v7493 = vld [vmem:[#allocation8 + $0xc10] sm:$0xff]
    %v7494 = vld [vmem:[#allocation8 + $0xc18] sm:$0xff]
    %v7495 = vld [vmem:[#allocation8 + $0xc20] sm:$0xff]
    %v7496 = vld [vmem:[#allocation8 + $0xc28] sm:$0xff]
    %v7497 = vld [vmem:[#allocation8 + $0xc30] sm:$0xff]
    %v7498 = vld [vmem:[#allocation8 + $0xc38] sm:$0xff]
    %v7499 = vld [vmem:[#allocation8 + $0xc40] sm:$0xff]
    %v7500 = vld [vmem:[#allocation8 + $0xc48] sm:$0xff]
    %v7501 = vld [vmem:[#allocation8 + $0xc50] sm:$0xff]
    %v7502 = vld [vmem:[#allocation8 + $0xc58] sm:$0xff]
    %v7503 = vld [vmem:[#allocation8 + $0xc60] sm:$0xff]
    %v7504 = vld [vmem:[#allocation8 + $0xc68] sm:$0xff]
    %v7505 = vld [vmem:[#allocation8 + $0xc70] sm:$0xff]
    %v7506 = vld [vmem:[#allocation8 + $0xc78] sm:$0xff]
    %v7507 = vld [vmem:[#allocation8 + $0xc80] sm:$0xff]
    %v7508 = vld [vmem:[#allocation8 + $0xc88] sm:$0xff]
    %v7509 = vld [vmem:[#allocation8 + $0xc90] sm:$0xff]
    %v7510 = vld [vmem:[#allocation8 + $0xc98] sm:$0xff]
    %v7511 = vld [vmem:[#allocation8 + $0xca0] sm:$0xff]
    %v7512 = vld [vmem:[#allocation8 + $0xca8] sm:$0xff]
    %v7513 = vld [vmem:[#allocation8 + $0xcb0] sm:$0xff]
    %v7514 = vld [vmem:[#allocation8 + $0xcb8] sm:$0xff]
    %v7515 = vld [vmem:[#allocation8 + $0xcc0] sm:$0xff]
    %v7516 = vld [vmem:[#allocation8 + $0xcc8] sm:$0xff]
    %v7517 = vld [vmem:[#allocation8 + $0xcd0] sm:$0xff]
    %v7518 = vld [vmem:[#allocation8 + $0xcd8] sm:$0xff]
    %v7519 = vld [vmem:[#allocation8 + $0xce0] sm:$0xff]
    %v7520 = vld [vmem:[#allocation8 + $0xce8] sm:$0xff]
    %v7521 = vld [vmem:[#allocation8 + $0xcf0] sm:$0xff]
    %v7522 = vld [vmem:[#allocation8 + $0xcf8] sm:$0xff]
    %v7523 = vld [vmem:[#allocation8 + $0xd00] sm:$0xff]
    %v7524 = vld [vmem:[#allocation8 + $0xd08] sm:$0xff]
    %v7525 = vld [vmem:[#allocation8 + $0xd10] sm:$0xff]
    %v7526 = vld [vmem:[#allocation8 + $0xd18] sm:$0xff]
    %v7527 = vld [vmem:[#allocation8 + $0xd20] sm:$0xff]
    %v7528 = vld [vmem:[#allocation8 + $0xd28] sm:$0xff]
    %v7529 = vld [vmem:[#allocation8 + $0xd30] sm:$0xff]
    %v7530 = vld [vmem:[#allocation8 + $0xd38] sm:$0xff]
    %v7531 = vld [vmem:[#allocation8 + $0xd40] sm:$0xff]
    %v7532 = vld [vmem:[#allocation8 + $0xd48] sm:$0xff]
    %v7533 = vld [vmem:[#allocation8 + $0xd50] sm:$0xff]
    %v7534 = vld [vmem:[#allocation8 + $0xd58] sm:$0xff]
    %v7535 = vld [vmem:[#allocation8 + $0xd60] sm:$0xff]
    %v7536 = vld [vmem:[#allocation8 + $0xd68] sm:$0xff]
    %v7537 = vld [vmem:[#allocation8 + $0xd70] sm:$0xff]
    %v7538 = vld [vmem:[#allocation8 + $0xd78] sm:$0xff]
    %v7539 = vld [vmem:[#allocation8 + $0xd80] sm:$0xff]
    %v7540 = vld [vmem:[#allocation8 + $0xd88] sm:$0xff]
    %v7541 = vld [vmem:[#allocation8 + $0xd90] sm:$0xff]
    %v7542 = vld [vmem:[#allocation8 + $0xd98] sm:$0xff]
    %v7543 = vld [vmem:[#allocation8 + $0xda0] sm:$0xff]
    %v7544 = vld [vmem:[#allocation8 + $0xda8] sm:$0xff]
    %v7545 = vld [vmem:[#allocation8 + $0xdb0] sm:$0xff]
    %v7546 = vld [vmem:[#allocation8 + $0xdb8] sm:$0xff]
    %v7547 = vld [vmem:[#allocation8 + $0xdc0] sm:$0xff]
    %v7548 = vld [vmem:[#allocation8 + $0xdc8] sm:$0xff]
    %v7549 = vld [vmem:[#allocation8 + $0xdd0] sm:$0xff]
    %v7550 = vld [vmem:[#allocation8 + $0xdd8] sm:$0xff]
    %v7551 = vld [vmem:[#allocation8 + $0xde0] sm:$0xff]
    %v7552 = vld [vmem:[#allocation8 + $0xde8] sm:$0xff]
    %v7553 = vld [vmem:[#allocation8 + $0xdf0] sm:$0xff]
    %v7554 = vld [vmem:[#allocation8 + $0xdf8] sm:$0xff]
    %v7555 = vld [vmem:[#allocation8 + $0xe00] sm:$0xff]
    %v7556 = vld [vmem:[#allocation8 + $0xe08] sm:$0xff]
    %v7557 = vld [vmem:[#allocation8 + $0xe10] sm:$0xff]
    %v7558 = vld [vmem:[#allocation8 + $0xe18] sm:$0xff]
    %v7559 = vld [vmem:[#allocation8 + $0xe20] sm:$0xff]
    %v7560 = vld [vmem:[#allocation8 + $0xe28] sm:$0xff]
    %v7561 = vld [vmem:[#allocation8 + $0xe30] sm:$0xff]
    %v7562 = vld [vmem:[#allocation8 + $0xe38] sm:$0xff]
    %v7563 = vld [vmem:[#allocation8 + $0xe40] sm:$0xff]
    %v7564 = vld [vmem:[#allocation8 + $0xe48] sm:$0xff]
    %v7565 = vld [vmem:[#allocation8 + $0xe50] sm:$0xff]
    %v7566 = vld [vmem:[#allocation8 + $0xe58] sm:$0xff]
    %v7567 = vld [vmem:[#allocation8 + $0xe60] sm:$0xff]
    %v7568 = vld [vmem:[#allocation8 + $0xe68] sm:$0xff]
    %v7569 = vld [vmem:[#allocation8 + $0xe70] sm:$0xff]
    %v7570 = vld [vmem:[#allocation8 + $0xe78] sm:$0xff]
    %v7571 = vld [vmem:[#allocation8 + $0xe80] sm:$0xff]
    %v7572 = vld [vmem:[#allocation8 + $0xe88] sm:$0xff]
    %v7573 = vld [vmem:[#allocation8 + $0xe90] sm:$0xff]
    %v7574 = vld [vmem:[#allocation8 + $0xe98] sm:$0xff]
    %v7575 = vld [vmem:[#allocation8 + $0xea0] sm:$0xff]
    %v7576 = vld [vmem:[#allocation8 + $0xea8] sm:$0xff]
    %v7577 = vld [vmem:[#allocation8 + $0xeb0] sm:$0xff]
    %v7578 = vld [vmem:[#allocation8 + $0xeb8] sm:$0xff]
    %v7579 = vld [vmem:[#allocation8 + $0xec0] sm:$0xff]
    %v7580 = vld [vmem:[#allocation8 + $0xec8] sm:$0xff]
    %v7581 = vld [vmem:[#allocation8 + $0xed0] sm:$0xff]
    %v7582 = vld [vmem:[#allocation8 + $0xed8] sm:$0xff]
    %v7583 = vld [vmem:[#allocation8 + $0xee0] sm:$0xff]
    %v7584 = vld [vmem:[#allocation8 + $0xee8] sm:$0xff]
    %v7585 = vld [vmem:[#allocation8 + $0xef0] sm:$0xff]
    %v7586 = vld [vmem:[#allocation8 + $0xef8] sm:$0xff]
    %v7587 = vld [vmem:[#allocation8 + $0xf00] sm:$0xff]
    %v7588 = vld [vmem:[#allocation8 + $0xf08] sm:$0xff]
    %v7589 = vld [vmem:[#allocation8 + $0xf10] sm:$0xff]
    %v7590 = vld [vmem:[#allocation8 + $0xf18] sm:$0xff]
    %v7591 = vld [vmem:[#allocation8 + $0xf20] sm:$0xff]
    %v7592 = vld [vmem:[#allocation8 + $0xf28] sm:$0xff]
    %v7593 = vld [vmem:[#allocation8 + $0xf30] sm:$0xff]
    %v7594 = vld [vmem:[#allocation8 + $0xf38] sm:$0xff]
    %v7595 = vld [vmem:[#allocation8 + $0xf40] sm:$0xff]
    %v7596 = vld [vmem:[#allocation8 + $0xf48] sm:$0xff]
    %v7597 = vld [vmem:[#allocation8 + $0xf50] sm:$0xff]
    %v7598 = vld [vmem:[#allocation8 + $0xf58] sm:$0xff]
    %v7599 = vld [vmem:[#allocation8 + $0xf60] sm:$0xff]
    %v7600 = vld [vmem:[#allocation8 + $0xf68] sm:$0xff]
    %v7601 = vld [vmem:[#allocation8 + $0xf70] sm:$0xff]
    %v7602 = vld [vmem:[#allocation8 + $0xf78] sm:$0xff]
    %v7603 = vld [vmem:[#allocation8 + $0xf80] sm:$0xff]
    %v7604 = vld [vmem:[#allocation8 + $0xf88] sm:$0xff]
    %v7605 = vld [vmem:[#allocation8 + $0xf90] sm:$0xff]
    %v7606 = vld [vmem:[#allocation8 + $0xf98] sm:$0xff]
    %v7607 = vld [vmem:[#allocation8 + $0xfa0] sm:$0xff]
    %v7608 = vld [vmem:[#allocation8 + $0xfa8] sm:$0xff]
    %v7609 = vld [vmem:[#allocation8 + $0xfb0] sm:$0xff]
    %v7610 = vld [vmem:[#allocation8 + $0xfb8] sm:$0xff]
    %v7611 = vld [vmem:[#allocation8 + $0xfc0] sm:$0xff]
    %v7612 = vld [vmem:[#allocation8 + $0xfc8] sm:$0xff]
    %v7613 = vld [vmem:[#allocation8 + $0xfd0] sm:$0xff]
    %v7614 = vld [vmem:[#allocation8 + $0xfd8] sm:$0xff]
    %v7615 = vld [vmem:[#allocation8 + $0xfe0] sm:$0xff]
    %v7616 = vld [vmem:[#allocation8 + $0xfe8] sm:$0xff]
    %v7617 = vld [vmem:[#allocation8 + $0xff0] sm:$0xff]
    %v7618 = vld [vmem:[#allocation8 + $0xff8] sm:$0xff]
    %v7619 = vld [vmem:[#allocation8 + $0x1000] sm:$0xff]
    %v7620 = vld [vmem:[#allocation8 + $0x1008] sm:$0xff]
    %v7621 = vld [vmem:[#allocation8 + $0x1010] sm:$0xff]
    %v7622 = vld [vmem:[#allocation8 + $0x1018] sm:$0xff]
    %v7623 = vld [vmem:[#allocation8 + $0x1020] sm:$0xff]
    %v7624 = vld [vmem:[#allocation8 + $0x1028] sm:$0xff]
    %v7625 = vld [vmem:[#allocation8 + $0x1030] sm:$0xff]
    %v7626 = vld [vmem:[#allocation8 + $0x1038] sm:$0xff]
    %v7627 = vld [vmem:[#allocation8 + $0x1040] sm:$0xff]
    %v7628 = vld [vmem:[#allocation8 + $0x1048] sm:$0xff]
    %v7629 = vld [vmem:[#allocation8 + $0x1050] sm:$0xff]
    %v7630 = vld [vmem:[#allocation8 + $0x1058] sm:$0xff]
    %v7631 = vld [vmem:[#allocation8 + $0x1060] sm:$0xff]
    %v7632 = vld [vmem:[#allocation8 + $0x1068] sm:$0xff]
    %v7633 = vld [vmem:[#allocation8 + $0x1070] sm:$0xff]
    %v7634 = vld [vmem:[#allocation8 + $0x1078] sm:$0xff]
    %v7635 = vld [vmem:[#allocation8 + $0x1080] sm:$0xff]
    %v7636 = vld [vmem:[#allocation8 + $0x1088] sm:$0xff]
    %v7637 = vld [vmem:[#allocation8 + $0x1090] sm:$0xff]
    %v7638 = vld [vmem:[#allocation8 + $0x1098] sm:$0xff]
    %v7639 = vld [vmem:[#allocation8 + $0x10a0] sm:$0xff]
    %v7640 = vld [vmem:[#allocation8 + $0x10a8] sm:$0xff]
    %v7641 = vld [vmem:[#allocation8 + $0x10b0] sm:$0xff]
    %v7642 = vld [vmem:[#allocation8 + $0x10b8] sm:$0xff]
    %v7643 = vld [vmem:[#allocation8 + $0x10c0] sm:$0xff]
    %v7644 = vld [vmem:[#allocation8 + $0x10c8] sm:$0xff]
    %v7645 = vld [vmem:[#allocation8 + $0x10d0] sm:$0xff]
    %v7646 = vld [vmem:[#allocation8 + $0x10d8] sm:$0xff]
    %v7647 = vld [vmem:[#allocation8 + $0x10e0] sm:$0xff]
    %v7648 = vld [vmem:[#allocation8 + $0x10e8] sm:$0xff]
    %v7649 = vld [vmem:[#allocation8 + $0x10f0] sm:$0xff]
    %v7650 = vld [vmem:[#allocation8 + $0x10f8] sm:$0xff]
    %v7651 = vld [vmem:[#allocation8 + $0x1100] sm:$0xff]
    %v7652 = vld [vmem:[#allocation8 + $0x1108] sm:$0xff]
    %v7653 = vld [vmem:[#allocation8 + $0x1110] sm:$0xff]
    %v7654 = vld [vmem:[#allocation8 + $0x1118] sm:$0xff]
    %v7655 = vld [vmem:[#allocation8 + $0x1120] sm:$0xff]
    %v7656 = vld [vmem:[#allocation8 + $0x1128] sm:$0xff]
    %v7657 = vld [vmem:[#allocation8 + $0x1130] sm:$0xff]
    %v7658 = vld [vmem:[#allocation8 + $0x1138] sm:$0xff]
    %v7659 = vld [vmem:[#allocation8 + $0x1140] sm:$0xff]
    %v7660 = vld [vmem:[#allocation8 + $0x1148] sm:$0xff]
    %v7661 = vld [vmem:[#allocation8 + $0x1150] sm:$0xff]
    %v7662 = vld [vmem:[#allocation8 + $0x1158] sm:$0xff]
    %v7663 = vld [vmem:[#allocation8 + $0x1160] sm:$0xff]
    %v7664 = vld [vmem:[#allocation8 + $0x1168] sm:$0xff]
    %v7665 = vld [vmem:[#allocation8 + $0x1170] sm:$0xff]
    %v7666 = vld [vmem:[#allocation8 + $0x1178] sm:$0xff]
    %v7667 = vld [vmem:[#allocation8 + $0x1180] sm:$0xff]
    %v7668 = vld [vmem:[#allocation8 + $0x1188] sm:$0xff]
    %v7669 = vld [vmem:[#allocation8 + $0x1190] sm:$0xff]
    %v7670 = vld [vmem:[#allocation8 + $0x1198] sm:$0xff]
    %v7671 = vld [vmem:[#allocation8 + $0x11a0] sm:$0xff]
    %v7672 = vld [vmem:[#allocation8 + $0x11a8] sm:$0xff]
    %v7673 = vld [vmem:[#allocation8 + $0x11b0] sm:$0xff]
    %v7674 = vld [vmem:[#allocation8 + $0x11b8] sm:$0xff]
    %v7675 = vld [vmem:[#allocation8 + $0x11c0] sm:$0xff]
    %v7676 = vld [vmem:[#allocation8 + $0x11c8] sm:$0xff]
    %v7677 = vld [vmem:[#allocation8 + $0x11d0] sm:$0xff]
    %v7678 = vld [vmem:[#allocation8 + $0x11d8] sm:$0xff]
    %v7679 = vld [vmem:[#allocation8 + $0x11e0] sm:$0xff]
    %v7680 = vld [vmem:[#allocation8 + $0x11e8] sm:$0xff]
    %v7681 = vld [vmem:[#allocation8 + $0x11f0] sm:$0xff]
    %v7682 = vld [vmem:[#allocation8 + $0x11f8] sm:$0xff]
    %v7683 = vld [vmem:[#allocation8 + $0x1200] sm:$0xff]
    %v7684 = vld [vmem:[#allocation8 + $0x1208] sm:$0xff]
    %v7685 = vld [vmem:[#allocation8 + $0x1210] sm:$0xff]
    %v7686 = vld [vmem:[#allocation8 + $0x1218] sm:$0xff]
    %v7687 = vld [vmem:[#allocation8 + $0x1220] sm:$0xff]
    %v7688 = vld [vmem:[#allocation8 + $0x1228] sm:$0xff]
    %v7689 = vld [vmem:[#allocation8 + $0x1230] sm:$0xff]
    %v7690 = vld [vmem:[#allocation8 + $0x1238] sm:$0xff]
    %v7691 = vld [vmem:[#allocation8 + $0x1240] sm:$0xff]
    %v7692 = vld [vmem:[#allocation8 + $0x1248] sm:$0xff]
    %v7693 = vld [vmem:[#allocation8 + $0x1250] sm:$0xff]
    %v7694 = vld [vmem:[#allocation8 + $0x1258] sm:$0xff]
    %v7695 = vld [vmem:[#allocation8 + $0x1260] sm:$0xff]
    %v7696 = vld [vmem:[#allocation8 + $0x1268] sm:$0xff]
    %v7697 = vld [vmem:[#allocation8 + $0x1270] sm:$0xff]
    %v7698 = vld [vmem:[#allocation8 + $0x1278] sm:$0xff]
    %v7699 = vld [vmem:[#allocation8 + $0x1280] sm:$0xff]
    %v7700 = vld [vmem:[#allocation8 + $0x1288] sm:$0xff]
    %v7701 = vld [vmem:[#allocation8 + $0x1290] sm:$0xff]
    %v7702 = vld [vmem:[#allocation8 + $0x1298] sm:$0xff]
    %v7703 = vld [vmem:[#allocation8 + $0x12a0] sm:$0xff]
    %v7704 = vld [vmem:[#allocation8 + $0x12a8] sm:$0xff]
    %v7705 = vld [vmem:[#allocation8 + $0x12b0] sm:$0xff]
    %v7706 = vld [vmem:[#allocation8 + $0x12b8] sm:$0xff]
    %v7707 = vld [vmem:[#allocation8 + $0x12c0] sm:$0xff]
    %v7708 = vld [vmem:[#allocation8 + $0x12c8] sm:$0xff]
    %v7709 = vld [vmem:[#allocation8 + $0x12d0] sm:$0xff]
    %v7710 = vld [vmem:[#allocation8 + $0x12d8] sm:$0xff]
    %v7711 = vld [vmem:[#allocation8 + $0x12e0] sm:$0xff]
    %v7712 = vld [vmem:[#allocation8 + $0x12e8] sm:$0xff]
    %v7713 = vld [vmem:[#allocation8 + $0x12f0] sm:$0xff]
    %v7714 = vld [vmem:[#allocation8 + $0x12f8] sm:$0xff]
    %v7715 = vld [vmem:[#allocation8 + $0x1300] sm:$0xff]
    %v7716 = vld [vmem:[#allocation8 + $0x1308] sm:$0xff]
    %v7717 = vld [vmem:[#allocation8 + $0x1310] sm:$0xff]
    %v7718 = vld [vmem:[#allocation8 + $0x1318] sm:$0xff]
    %v7719 = vld [vmem:[#allocation8 + $0x1320] sm:$0xff]
    %v7720 = vld [vmem:[#allocation8 + $0x1328] sm:$0xff]
    %v7721 = vld [vmem:[#allocation8 + $0x1330] sm:$0xff]
    %v7722 = vld [vmem:[#allocation8 + $0x1338] sm:$0xff]
    %v7723 = vld [vmem:[#allocation8 + $0x1340] sm:$0xff]
    %v7724 = vld [vmem:[#allocation8 + $0x1348] sm:$0xff]
    %v7725 = vld [vmem:[#allocation8 + $0x1350] sm:$0xff]
    %v7726 = vld [vmem:[#allocation8 + $0x1358] sm:$0xff]
    %v7727 = vld [vmem:[#allocation8 + $0x1360] sm:$0xff]
    %v7728 = vld [vmem:[#allocation8 + $0x1368] sm:$0xff]
    %v7729 = vld [vmem:[#allocation8 + $0x1370] sm:$0xff]
    %v7730 = vld [vmem:[#allocation8 + $0x1378] sm:$0xff]
    %v7731 = vld [vmem:[#allocation8 + $0x1380] sm:$0xff]
    %v7732 = vld [vmem:[#allocation8 + $0x1388] sm:$0xff]
    %v7733 = vld [vmem:[#allocation8 + $0x1390] sm:$0xff]
    %v7734 = vld [vmem:[#allocation8 + $0x1398] sm:$0xff]
    %v7735 = vld [vmem:[#allocation8 + $0x13a0] sm:$0xff]
    %v7736 = vld [vmem:[#allocation8 + $0x13a8] sm:$0xff]
    %v7737 = vld [vmem:[#allocation8 + $0x13b0] sm:$0xff]
    %v7738 = vld [vmem:[#allocation8 + $0x13b8] sm:$0xff]
    %v7739 = vld [vmem:[#allocation8 + $0x13c0] sm:$0xff]
    %v7740 = vld [vmem:[#allocation8 + $0x13c8] sm:$0xff]
    %v7741 = vld [vmem:[#allocation8 + $0x13d0] sm:$0xff]
    %v7742 = vld [vmem:[#allocation8 + $0x13d8] sm:$0xff]
    %v7743 = vld [vmem:[#allocation8 + $0x13e0] sm:$0xff]
    %v7744 = vld [vmem:[#allocation8 + $0x13e8] sm:$0xff]
    %v7745 = vld [vmem:[#allocation8 + $0x13f0] sm:$0xff]
    %v7746 = vld [vmem:[#allocation8 + $0x13f8] sm:$0xff]
    %v7747 = vld [vmem:[#allocation8 + $0x1400] sm:$0xff]
    %v7748 = vld [vmem:[#allocation8 + $0x1408] sm:$0xff]
    %v7749 = vld [vmem:[#allocation8 + $0x1410] sm:$0xff]
    %v7750 = vld [vmem:[#allocation8 + $0x1418] sm:$0xff]
    %v7751 = vld [vmem:[#allocation8 + $0x1420] sm:$0xff]
    %v7752 = vld [vmem:[#allocation8 + $0x1428] sm:$0xff]
    %v7753 = vld [vmem:[#allocation8 + $0x1430] sm:$0xff]
    %v7754 = vld [vmem:[#allocation8 + $0x1438] sm:$0xff]
    %v7755 = vld [vmem:[#allocation8 + $0x1440] sm:$0xff]
    %v7756 = vld [vmem:[#allocation8 + $0x1448] sm:$0xff]
    %v7757 = vld [vmem:[#allocation8 + $0x1450] sm:$0xff]
    %v7758 = vld [vmem:[#allocation8 + $0x1458] sm:$0xff]
    %v7759 = vld [vmem:[#allocation8 + $0x1460] sm:$0xff]
    %v7760 = vld [vmem:[#allocation8 + $0x1468] sm:$0xff]
    %v7761 = vld [vmem:[#allocation8 + $0x1470] sm:$0xff]
    %v7762 = vld [vmem:[#allocation8 + $0x1478] sm:$0xff]
    %v7763 = vld [vmem:[#allocation8 + $0x1480] sm:$0xff]
    %v7764 = vld [vmem:[#allocation8 + $0x1488] sm:$0xff]
    %v7765 = vld [vmem:[#allocation8 + $0x1490] sm:$0xff]
    %v7766 = vld [vmem:[#allocation8 + $0x1498] sm:$0xff]
    %v7767 = vld [vmem:[#allocation8 + $0x14a0] sm:$0xff]
    %v7768 = vld [vmem:[#allocation8 + $0x14a8] sm:$0xff]
    %v7769 = vld [vmem:[#allocation8 + $0x14b0] sm:$0xff]
    %v7770 = vld [vmem:[#allocation8 + $0x14b8] sm:$0xff]
    %v7771 = vld [vmem:[#allocation8 + $0x14c0] sm:$0xff]
    %v7772 = vld [vmem:[#allocation8 + $0x14c8] sm:$0xff]
    %v7773 = vld [vmem:[#allocation8 + $0x14d0] sm:$0xff]
    %v7774 = vld [vmem:[#allocation8 + $0x14d8] sm:$0xff]
    %v7775 = vld [vmem:[#allocation8 + $0x14e0] sm:$0xff]
    %v7776 = vld [vmem:[#allocation8 + $0x14e8] sm:$0xff]
    %v7777 = vld [vmem:[#allocation8 + $0x14f0] sm:$0xff]
    %v7778 = vld [vmem:[#allocation8 + $0x14f8] sm:$0xff]
    %v7779 = vld [vmem:[#allocation8 + $0x1500] sm:$0xff]
    %v7780 = vld [vmem:[#allocation8 + $0x1508] sm:$0xff]
    %v7781 = vld [vmem:[#allocation8 + $0x1510] sm:$0xff]
    %v7782 = vld [vmem:[#allocation8 + $0x1518] sm:$0xff]
    %v7783 = vld [vmem:[#allocation8 + $0x1520] sm:$0xff]
    %v7784 = vld [vmem:[#allocation8 + $0x1528] sm:$0xff]
    %v7785 = vld [vmem:[#allocation8 + $0x1530] sm:$0xff]
    %v7786 = vld [vmem:[#allocation8 + $0x1538] sm:$0xff]
    %v7787 = vld [vmem:[#allocation8 + $0x1540] sm:$0xff]
    %v7788 = vld [vmem:[#allocation8 + $0x1548] sm:$0xff]
    %v7789 = vld [vmem:[#allocation8 + $0x1550] sm:$0xff]
    %v7790 = vld [vmem:[#allocation8 + $0x1558] sm:$0xff]
    %v7791 = vld [vmem:[#allocation8 + $0x1560] sm:$0xff]
    %v7792 = vld [vmem:[#allocation8 + $0x1568] sm:$0xff]
    %v7793 = vld [vmem:[#allocation8 + $0x1570] sm:$0xff]
    %v7794 = vld [vmem:[#allocation8 + $0x1578] sm:$0xff]
    %v7795 = vld [vmem:[#allocation8 + $0x1580] sm:$0xff]
    %v7796 = vld [vmem:[#allocation8 + $0x1588] sm:$0xff]
    %v7797 = vld [vmem:[#allocation8 + $0x1590] sm:$0xff]
    %v7798 = vld [vmem:[#allocation8 + $0x1598] sm:$0xff]
    %v7799 = vld [vmem:[#allocation8 + $0x15a0] sm:$0xff]
    %v7800 = vld [vmem:[#allocation8 + $0x15a8] sm:$0xff]
    %v7801 = vld [vmem:[#allocation8 + $0x15b0] sm:$0xff]
    %v7802 = vld [vmem:[#allocation8 + $0x15b8] sm:$0xff]
    %v7803 = vld [vmem:[#allocation8 + $0x15c0] sm:$0xff]
    %v7804 = vld [vmem:[#allocation8 + $0x15c8] sm:$0xff]
    %v7805 = vld [vmem:[#allocation8 + $0x15d0] sm:$0xff]
    %v7806 = vld [vmem:[#allocation8 + $0x15d8] sm:$0xff]
    %v7807 = vld [vmem:[#allocation8 + $0x15e0] sm:$0xff]
    %v7808 = vld [vmem:[#allocation8 + $0x15e8] sm:$0xff]
    %v7809 = vld [vmem:[#allocation8 + $0x15f0] sm:$0xff]
    %v7810 = vld [vmem:[#allocation8 + $0x15f8] sm:$0xff]
    %v7811 = vld [vmem:[#allocation8 + $0x1600] sm:$0xff]
    %v7812 = vld [vmem:[#allocation8 + $0x1608] sm:$0xff]
    %v7813 = vld [vmem:[#allocation8 + $0x1610] sm:$0xff]
    %v7814 = vld [vmem:[#allocation8 + $0x1618] sm:$0xff]
    %v7815 = vld [vmem:[#allocation8 + $0x1620] sm:$0xff]
    %v7816 = vld [vmem:[#allocation8 + $0x1628] sm:$0xff]
    %v7817 = vld [vmem:[#allocation8 + $0x1630] sm:$0xff]
    %v7818 = vld [vmem:[#allocation8 + $0x1638] sm:$0xff]
    %v7819 = vld [vmem:[#allocation8 + $0x1640] sm:$0xff]
    %v7820 = vld [vmem:[#allocation8 + $0x1648] sm:$0xff]
    %v7821 = vld [vmem:[#allocation8 + $0x1650] sm:$0xff]
    %v7822 = vld [vmem:[#allocation8 + $0x1658] sm:$0xff]
    %v7823 = vld [vmem:[#allocation8 + $0x1660] sm:$0xff]
    %v7824 = vld [vmem:[#allocation8 + $0x1668] sm:$0xff]
    %v7825 = vld [vmem:[#allocation8 + $0x1670] sm:$0xff]
    %v7826 = vld [vmem:[#allocation8 + $0x1678] sm:$0xff]
    %v7827 = vld [vmem:[#allocation8 + $0x1680] sm:$0xff]
    %v7828 = vld [vmem:[#allocation8 + $0x1688] sm:$0xff]
    %v7829 = vld [vmem:[#allocation8 + $0x1690] sm:$0xff]
    %v7830 = vld [vmem:[#allocation8 + $0x1698] sm:$0xff]
    %v7831 = vld [vmem:[#allocation8 + $0x16a0] sm:$0xff]
    %v7832 = vld [vmem:[#allocation8 + $0x16a8] sm:$0xff]
    %v7833 = vld [vmem:[#allocation8 + $0x16b0] sm:$0xff]
    %v7834 = vld [vmem:[#allocation8 + $0x16b8] sm:$0xff]
    %v7835 = vld [vmem:[#allocation8 + $0x16c0] sm:$0xff]
    %v7836 = vld [vmem:[#allocation8 + $0x16c8] sm:$0xff]
    %v7837 = vld [vmem:[#allocation8 + $0x16d0] sm:$0xff]
    %v7838 = vld [vmem:[#allocation8 + $0x16d8] sm:$0xff]
    %v7839 = vld [vmem:[#allocation8 + $0x16e0] sm:$0xff]
    %v7840 = vld [vmem:[#allocation8 + $0x16e8] sm:$0xff]
    %v7841 = vld [vmem:[#allocation8 + $0x16f0] sm:$0xff]
    %v7842 = vld [vmem:[#allocation8 + $0x16f8] sm:$0xff]
    %v7843 = vld [vmem:[#allocation8 + $0x1700] sm:$0xff]
    %v7844 = vld [vmem:[#allocation8 + $0x1708] sm:$0xff]
    %v7845 = vld [vmem:[#allocation8 + $0x1710] sm:$0xff]
    %v7846 = vld [vmem:[#allocation8 + $0x1718] sm:$0xff]
    %v7847 = vld [vmem:[#allocation8 + $0x1720] sm:$0xff]
    %v7848 = vld [vmem:[#allocation8 + $0x1728] sm:$0xff]
    %v7849 = vld [vmem:[#allocation8 + $0x1730] sm:$0xff]
    %v7850 = vld [vmem:[#allocation8 + $0x1738] sm:$0xff]
    %v7851 = vld [vmem:[#allocation8 + $0x1740] sm:$0xff]
    %v7852 = vld [vmem:[#allocation8 + $0x1748] sm:$0xff]
    %v7853 = vld [vmem:[#allocation8 + $0x1750] sm:$0xff]
    %v7854 = vld [vmem:[#allocation8 + $0x1758] sm:$0xff]
    %v7855 = vld [vmem:[#allocation8 + $0x1760] sm:$0xff]
    %v7856 = vld [vmem:[#allocation8 + $0x1768] sm:$0xff]
    %v7857 = vld [vmem:[#allocation8 + $0x1770] sm:$0xff]
    %v7858 = vld [vmem:[#allocation8 + $0x1778] sm:$0xff]
    %v7859 = vld [vmem:[#allocation8 + $0x1780] sm:$0xff]
    %v7860 = vld [vmem:[#allocation8 + $0x1788] sm:$0xff]
    %v7861 = vld [vmem:[#allocation8 + $0x1790] sm:$0xff]
    %v7862 = vld [vmem:[#allocation8 + $0x1798] sm:$0xff]
    %v7863 = vld [vmem:[#allocation8 + $0x17a0] sm:$0xff]
    %v7864 = vld [vmem:[#allocation8 + $0x17a8] sm:$0xff]
    %v7865 = vld [vmem:[#allocation8 + $0x17b0] sm:$0xff]
    %v7866 = vld [vmem:[#allocation8 + $0x17b8] sm:$0xff]
    %v7867 = vld [vmem:[#allocation8 + $0x17c0] sm:$0xff]
    %v7868 = vld [vmem:[#allocation8 + $0x17c8] sm:$0xff]
    %v7869 = vld [vmem:[#allocation8 + $0x17d0] sm:$0xff]
    %v7870 = vld [vmem:[#allocation8 + $0x17d8] sm:$0xff]
    %v7871 = vld [vmem:[#allocation8 + $0x17e0] sm:$0xff]
    %v7872 = vld [vmem:[#allocation8 + $0x17e8] sm:$0xff]
    %v7873 = vld [vmem:[#allocation8 + $0x17f0] sm:$0xff]
    %v7874 = vld [vmem:[#allocation8 + $0x17f8] sm:$0xff]
    %v7875 = vld [vmem:[#allocation8 + $0x1800] sm:$0xff]
    %v7876 = vld [vmem:[#allocation8 + $0x1808] sm:$0xff]
    %v7877 = vld [vmem:[#allocation8 + $0x1810] sm:$0xff]
    %v7878 = vld [vmem:[#allocation8 + $0x1818] sm:$0xff]
    %v7879 = vld [vmem:[#allocation8 + $0x1820] sm:$0xff]
    %v7880 = vld [vmem:[#allocation8 + $0x1828] sm:$0xff]
    %v7881 = vld [vmem:[#allocation8 + $0x1830] sm:$0xff]
    %v7882 = vld [vmem:[#allocation8 + $0x1838] sm:$0xff]
    %v7883 = vld [vmem:[#allocation8 + $0x1840] sm:$0xff]
    %v7884 = vld [vmem:[#allocation8 + $0x1848] sm:$0xff]
    %v7885 = vld [vmem:[#allocation8 + $0x1850] sm:$0xff]
    %v7886 = vld [vmem:[#allocation8 + $0x1858] sm:$0xff]
    %v7887 = vld [vmem:[#allocation8 + $0x1860] sm:$0xff]
    %v7888 = vld [vmem:[#allocation8 + $0x1868] sm:$0xff]
    %v7889 = vld [vmem:[#allocation8 + $0x1870] sm:$0xff]
    %v7890 = vld [vmem:[#allocation8 + $0x1878] sm:$0xff]
    %v7891 = vld [vmem:[#allocation8 + $0x1880] sm:$0xff]
    %v7892 = vld [vmem:[#allocation8 + $0x1888] sm:$0xff]
    %v7893 = vld [vmem:[#allocation8 + $0x1890] sm:$0xff]
    %v7894 = vld [vmem:[#allocation8 + $0x1898] sm:$0xff]
    %v7895 = vld [vmem:[#allocation8 + $0x18a0] sm:$0xff]
    %v7896 = vld [vmem:[#allocation8 + $0x18a8] sm:$0xff]
    %v7897 = vld [vmem:[#allocation8 + $0x18b0] sm:$0xff]
    %v7898 = vld [vmem:[#allocation8 + $0x18b8] sm:$0xff]
    %v7899 = vld [vmem:[#allocation8 + $0x18c0] sm:$0xff]
    %v7900 = vld [vmem:[#allocation8 + $0x18c8] sm:$0xff]
    %v7901 = vld [vmem:[#allocation8 + $0x18d0] sm:$0xff]
    %v7902 = vld [vmem:[#allocation8 + $0x18d8] sm:$0xff]
    %v7903 = vld [vmem:[#allocation8 + $0x18e0] sm:$0xff]
    %v7904 = vld [vmem:[#allocation8 + $0x18e8] sm:$0xff]
    %v7905 = vld [vmem:[#allocation8 + $0x18f0] sm:$0xff]
    %v7906 = vld [vmem:[#allocation8 + $0x18f8] sm:$0xff]
    %v7907 = vld [vmem:[#allocation8 + $0x1900] sm:$0xff]
    %v7908 = vld [vmem:[#allocation8 + $0x1908] sm:$0xff]
    %v7909 = vld [vmem:[#allocation8 + $0x1910] sm:$0xff]
    %v7910 = vld [vmem:[#allocation8 + $0x1918] sm:$0xff]
    %v7911 = vld [vmem:[#allocation8 + $0x1920] sm:$0xff]
    %v7912 = vld [vmem:[#allocation8 + $0x1928] sm:$0xff]
    %v7913 = vld [vmem:[#allocation8 + $0x1930] sm:$0xff]
    %v7914 = vld [vmem:[#allocation8 + $0x1938] sm:$0xff]
    %v7915 = vld [vmem:[#allocation8 + $0x1940] sm:$0xff]
    %v7916 = vld [vmem:[#allocation8 + $0x1948] sm:$0xff]
    %v7917 = vld [vmem:[#allocation8 + $0x1950] sm:$0xff]
    %v7918 = vld [vmem:[#allocation8 + $0x1958] sm:$0xff]
    %v7919 = vld [vmem:[#allocation8 + $0x1960] sm:$0xff]
    %v7920 = vld [vmem:[#allocation8 + $0x1968] sm:$0xff]
    %v7921 = vld [vmem:[#allocation8 + $0x1970] sm:$0xff]
    %v7922 = vld [vmem:[#allocation8 + $0x1978] sm:$0xff]
    %v7923 = vld [vmem:[#allocation8 + $0x1980] sm:$0xff]
    %v7924 = vld [vmem:[#allocation8 + $0x1988] sm:$0xff]
    %v7925 = vld [vmem:[#allocation8 + $0x1990] sm:$0xff]
    %v7926 = vld [vmem:[#allocation8 + $0x1998] sm:$0xff]
    %v7927 = vld [vmem:[#allocation8 + $0x19a0] sm:$0xff]
    %v7928 = vld [vmem:[#allocation8 + $0x19a8] sm:$0xff]
    %v7929 = vld [vmem:[#allocation8 + $0x19b0] sm:$0xff]
    %v7930 = vld [vmem:[#allocation8 + $0x19b8] sm:$0xff]
    %v7931 = vld [vmem:[#allocation8 + $0x19c0] sm:$0xff]
    %v7932 = vld [vmem:[#allocation8 + $0x19c8] sm:$0xff]
    %v7933 = vld [vmem:[#allocation8 + $0x19d0] sm:$0xff]
    %v7934 = vld [vmem:[#allocation8 + $0x19d8] sm:$0xff]
    %v7935 = vld [vmem:[#allocation8 + $0x19e0] sm:$0xff]
    %v7936 = vld [vmem:[#allocation8 + $0x19e8] sm:$0xff]
    %v7937 = vld [vmem:[#allocation8 + $0x19f0] sm:$0xff]
    %v7938 = vld [vmem:[#allocation8 + $0x19f8] sm:$0xff]
    %v7939 = vld [vmem:[#allocation8 + $0x1a00] sm:$0xff]
    %v7940 = vld [vmem:[#allocation8 + $0x1a08] sm:$0xff]
    %v7941 = vld [vmem:[#allocation8 + $0x1a10] sm:$0xff]
    %v7942 = vld [vmem:[#allocation8 + $0x1a18] sm:$0xff]
    %v7943 = vld [vmem:[#allocation8 + $0x1a20] sm:$0xff]
    %v7944 = vld [vmem:[#allocation8 + $0x1a28] sm:$0xff]
    %v7945 = vld [vmem:[#allocation8 + $0x1a30] sm:$0xff]
    %v7946 = vld [vmem:[#allocation8 + $0x1a38] sm:$0xff]
    %v7947 = vld [vmem:[#allocation8 + $0x1a40] sm:$0xff]
    %v7948 = vld [vmem:[#allocation8 + $0x1a48] sm:$0xff]
    %v7949 = vld [vmem:[#allocation8 + $0x1a50] sm:$0xff]
    %v7950 = vld [vmem:[#allocation8 + $0x1a58] sm:$0xff]
    %v7951 = vld [vmem:[#allocation8 + $0x1a60] sm:$0xff]
    %v7952 = vld [vmem:[#allocation8 + $0x1a68] sm:$0xff]
    %v7953 = vld [vmem:[#allocation8 + $0x1a70] sm:$0xff]
    %v7954 = vld [vmem:[#allocation8 + $0x1a78] sm:$0xff]
    %v7955 = vld [vmem:[#allocation8 + $0x1a80] sm:$0xff]
    %v7956 = vld [vmem:[#allocation8 + $0x1a88] sm:$0xff]
    %v7957 = vld [vmem:[#allocation8 + $0x1a90] sm:$0xff]
    %v7958 = vld [vmem:[#allocation8 + $0x1a98] sm:$0xff]
    %v7959 = vld [vmem:[#allocation8 + $0x1aa0] sm:$0xff]
    %v7960 = vld [vmem:[#allocation8 + $0x1aa8] sm:$0xff]
    %v7961 = vld [vmem:[#allocation8 + $0x1ab0] sm:$0xff]
    %v7962 = vld [vmem:[#allocation8 + $0x1ab8] sm:$0xff]
    %v7963 = vld [vmem:[#allocation8 + $0x1ac0] sm:$0xff]
    %v7964 = vld [vmem:[#allocation8 + $0x1ac8] sm:$0xff]
    %v7965 = vld [vmem:[#allocation8 + $0x1ad0] sm:$0xff]
    %v7966 = vld [vmem:[#allocation8 + $0x1ad8] sm:$0xff]
    %v7967 = vld [vmem:[#allocation8 + $0x1ae0] sm:$0xff]
    %v7968 = vld [vmem:[#allocation8 + $0x1ae8] sm:$0xff]
    %v7969 = vld [vmem:[#allocation8 + $0x1af0] sm:$0xff]
    %v7970 = vld [vmem:[#allocation8 + $0x1af8] sm:$0xff]
    %v7971 = vld [vmem:[#allocation8 + $0x1b00] sm:$0xff]
    %v7972 = vld [vmem:[#allocation8 + $0x1b08] sm:$0xff]
    %v7973 = vld [vmem:[#allocation8 + $0x1b10] sm:$0xff]
    %v7974 = vld [vmem:[#allocation8 + $0x1b18] sm:$0xff]
    %v7975 = vld [vmem:[#allocation8 + $0x1b20] sm:$0xff]
    %v7976 = vld [vmem:[#allocation8 + $0x1b28] sm:$0xff]
    %v7977 = vld [vmem:[#allocation8 + $0x1b30] sm:$0xff]
    %v7978 = vld [vmem:[#allocation8 + $0x1b38] sm:$0xff]
    %v7979 = vld [vmem:[#allocation8 + $0x1b40] sm:$0xff]
    %v7980 = vld [vmem:[#allocation8 + $0x1b48] sm:$0xff]
    %v7981 = vld [vmem:[#allocation8 + $0x1b50] sm:$0xff]
    %v7982 = vld [vmem:[#allocation8 + $0x1b58] sm:$0xff]
    %v7983 = vld [vmem:[#allocation8 + $0x1b60] sm:$0xff]
    %v7984 = vld [vmem:[#allocation8 + $0x1b68] sm:$0xff]
    %v7985 = vld [vmem:[#allocation8 + $0x1b70] sm:$0xff]
    %v7986 = vld [vmem:[#allocation8 + $0x1b78] sm:$0xff]
    %v7987 = vld [vmem:[#allocation8 + $0x1b80] sm:$0xff]
    %v7988 = vld [vmem:[#allocation8 + $0x1b88] sm:$0xff]
    %v7989 = vld [vmem:[#allocation8 + $0x1b90] sm:$0xff]
    %v7990 = vld [vmem:[#allocation8 + $0x1b98] sm:$0xff]
    %v7991 = vld [vmem:[#allocation8 + $0x1ba0] sm:$0xff]
    %v7992 = vld [vmem:[#allocation8 + $0x1ba8] sm:$0xff]
    %v7993 = vld [vmem:[#allocation8 + $0x1bb0] sm:$0xff]
    %v7994 = vld [vmem:[#allocation8 + $0x1bb8] sm:$0xff]
    %v7995 = vld [vmem:[#allocation8 + $0x1bc0] sm:$0xff]
    %v7996 = vld [vmem:[#allocation8 + $0x1bc8] sm:$0xff]
    %v7997 = vld [vmem:[#allocation8 + $0x1bd0] sm:$0xff]
    %v7998 = vld [vmem:[#allocation8 + $0x1bd8] sm:$0xff]
    %v7999 = vld [vmem:[#allocation8 + $0x1be0] sm:$0xff]
    %v8000 = vld [vmem:[#allocation8 + $0x1be8] sm:$0xff]
    %v8001 = vld [vmem:[#allocation8 + $0x1bf0] sm:$0xff]
    %v8002 = vld [vmem:[#allocation8 + $0x1bf8] sm:$0xff]
    %v8003 = vld [vmem:[#allocation9] sm:$0xff]
    %v8005 = vlaneseq
    %v8006 = vshrl.u32 %v8005, 7
    %v8007 = vsub.s32 0, %v8006
    %v8008 = vrot.slane %v8003, %v8007
    %v8009 = vlaneseq
    %v8010 = vshrl.u32 %v8009, 7
    %v8011 = vsub.s32 1, %v8010
    %v8012 = vrot.slane %v8003, %v8011
    %v8013 = vlaneseq
    %v8014 = vshrl.u32 %v8013, 7
    %v8015 = vsub.s32 2, %v8014
    %v8016 = vrot.slane %v8003, %v8015
    %v8017 = vlaneseq
    %v8018 = vshrl.u32 %v8017, 7
    %v8019 = vsub.s32 3, %v8018
    %v8020 = vrot.slane %v8003, %v8019
    %v8021 = vlaneseq
    %v8022 = vshrl.u32 %v8021, 7
    %v8023 = vsub.s32 4, %v8022
    %v8024 = vrot.slane %v8003, %v8023
    %v8025 = vlaneseq
    %v8026 = vshrl.u32 %v8025, 7
    %v8027 = vsub.s32 5, %v8026
    %v8028 = vrot.slane %v8003, %v8027
    %v8029 = vlaneseq
    %v8030 = vshrl.u32 %v8029, 7
    %v8031 = vsub.s32 6, %v8030
    %v8032 = vrot.slane %v8003, %v8031
    %v8033 = vlaneseq
    %v8034 = vshrl.u32 %v8033, 7
    %v8035 = vsub.s32 7, %v8034
    %v8036 = vrot.slane %v8003, %v8035
    %8045 = vmatprep.subr.mxu0 %v7108
    %8046 = vmatpush1.msra.mxu0 %v7107
    %8047 = vmatprep.subr.mxu0 %v7116
    %8048 = vmatpush1.msra.mxu0 %v7115
    %8049 = vmatprep.subr.mxu0 %v7124
    %8050 = vmatpush1.msra.mxu0 %v7123
    %8051 = vmatprep.subr.mxu0 %v7132
    %8052 = vmatpush1.msra.mxu0 %v7131
    %8053 = vmatprep.subr.mxu0 %v7140
    %8054 = vmatpush1.msra.mxu0 %v7139
    %8055 = vmatprep.subr.mxu0 %v7148
    %8056 = vmatpush1.msra.mxu0 %v7147
    %8057 = vmatprep.subr.mxu0 %v7156
    %8058 = vmatpush1.msra.mxu0 %v7155
    %8059 = vmatprep.subr.mxu0 %v7164
    %8060 = vmatpush1.msra.mxu0 %v7163
    %8061 = vmatprep.subr.mxu0 %v7172
    %8062 = vmatpush1.msra.mxu0 %v7171
    %8063 = vmatprep.subr.mxu0 %v7180
    %8064 = vmatpush1.msra.mxu0 %v7179
    %8065 = vmatprep.subr.mxu0 %v7188
    %8066 = vmatpush1.msra.mxu0 %v7187
    %8067 = vmatprep.subr.mxu0 %v7196
    %8068 = vmatpush1.msra.mxu0 %v7195
    %8069 = vmatprep.subr.mxu0 %v7204
    %8070 = vmatpush1.msra.mxu0 %v7203
    %8071 = vmatprep.subr.mxu0 %v7212
    %8072 = vmatpush1.msra.mxu0 %v7211
    %8073 = vmatprep.subr.mxu0 %v7220
    %8074 = vmatpush1.msra.mxu0 %v7219
    %8075 = vmatprep.subr.mxu0 %v7228
    %8076 = vmatpush1.msra.mxu0 %v7227
    %8077 = vmatprep.subr.mxu0 %v7236
    %8078 = vmatpush1.msra.mxu0 %v7235
    %8079 = vmatprep.subr.mxu0 %v7244
    %8080 = vmatpush1.msra.mxu0 %v7243
    %8081 = vmatprep.subr.mxu0 %v7252
    %8082 = vmatpush1.msra.mxu0 %v7251
    %8083 = vmatprep.subr.mxu0 %v7260
    %8084 = vmatpush1.msra.mxu0 %v7259
    %8085 = vmatprep.subr.mxu0 %v7268
    %8086 = vmatpush1.msra.mxu0 %v7267
    %8087 = vmatprep.subr.mxu0 %v7276
    %8088 = vmatpush1.msra.mxu0 %v7275
    %8089 = vmatprep.subr.mxu0 %v7284
    %8090 = vmatpush1.msra.mxu0 %v7283
    %8091 = vmatprep.subr.mxu0 %v7292
    %8092 = vmatpush1.msra.mxu0 %v7291
    %8093 = vmatprep.subr.mxu0 %v7300
    %8094 = vmatpush1.msra.mxu0 %v7299
    %8095 = vmatprep.subr.mxu0 %v7308
    %8096 = vmatpush1.msra.mxu0 %v7307
    %8097 = vmatprep.subr.mxu0 %v7316
    %8098 = vmatpush1.msra.mxu0 %v7315
    %8099 = vmatprep.subr.mxu0 %v7324
    %8100 = vmatpush1.msra.mxu0 %v7323
    %8101 = vmatprep.subr.mxu0 %v7332
    %8102 = vmatpush1.msra.mxu0 %v7331
    %8103 = vmatprep.subr.mxu0 %v7340
    %8104 = vmatpush1.msra.mxu0 %v7339
    %8105 = vmatprep.subr.mxu0 %v7348
    %8106 = vmatpush1.msra.mxu0 %v7347
    %8107 = vmatprep.subr.mxu0 %v7356
    %8108 = vmatpush1.msra.mxu0 %v7355
    %8109 = vmatprep.mubr.f32.mxu0 %v7101
    %8110 = vmatmul.mubr.f32.gmra.mrb[0].mxu0 %v7100
    %v8111 = vpop.f32.mrb[0].mxu0
    %v8112 = vadd.f32 %v8008, %v8111
    %v8113 = vpop.f32.mrb[0].mxu0
    %v8114 = vadd.f32 %v8012, %v8113
    %8115 = vdwg.mxu0
    %8116 = vmatprep.subr.mxu0 %v7364
    %8117 = vmatpush1.msra.mxu0 %v7363
    %8118 = vmatprep.subr.mxu0 %v7372
    %8119 = vmatpush1.msra.mxu0 %v7371
    %8120 = vmatprep.subr.mxu0 %v7380
    %8121 = vmatpush1.msra.mxu0 %v7379
    %8122 = vmatprep.subr.mxu0 %v7388
    %8123 = vmatpush1.msra.mxu0 %v7387
    %8124 = vmatprep.subr.mxu0 %v7396
    %8125 = vmatpush1.msra.mxu0 %v7395
    %8126 = vmatprep.subr.mxu0 %v7404
    %8127 = vmatpush1.msra.mxu0 %v7403
    %8128 = vmatprep.subr.mxu0 %v7412
    %8129 = vmatpush1.msra.mxu0 %v7411
    %8130 = vmatprep.subr.mxu0 %v7420
    %8131 = vmatpush1.msra.mxu0 %v7419
    %8132 = vmatprep.subr.mxu0 %v7428
    %8133 = vmatpush1.msra.mxu0 %v7427
    %8134 = vmatprep.subr.mxu0 %v7436
    %8135 = vmatpush1.msra.mxu0 %v7435
    %8136 = vmatprep.subr.mxu0 %v7444
    %8137 = vmatpush1.msra.mxu0 %v7443
    %8138 = vmatprep.subr.mxu0 %v7452
    %8139 = vmatpush1.msra.mxu0 %v7451
    %8140 = vmatprep.subr.mxu0 %v7460
    %8141 = vmatpush1.msra.mxu0 %v7459
    %8142 = vmatprep.subr.mxu0 %v7468
    %8143 = vmatpush1.msra.mxu0 %v7467
    %8144 = vmatprep.subr.mxu0 %v7476
    %8145 = vmatpush1.msra.mxu0 %v7475
    %8146 = vmatprep.subr.mxu0 %v7484
    %8147 = vmatpush1.msra.mxu0 %v7483
    %8148 = vmatprep.subr.mxu0 %v7492
    %8149 = vmatpush1.msra.mxu0 %v7491
    %8150 = vmatprep.subr.mxu0 %v7500
    %8151 = vmatpush1.msra.mxu0 %v7499
    %8152 = vmatprep.subr.mxu0 %v7508
    %8153 = vmatpush1.msra.mxu0 %v7507
    %8154 = vmatprep.subr.mxu0 %v7516
    %8155 = vmatpush1.msra.mxu0 %v7515
    %8156 = vmatprep.subr.mxu0 %v7524
    %8157 = vmatpush1.msra.mxu0 %v7523
    %8158 = vmatprep.subr.mxu0 %v7532
    %8159 = vmatpush1.msra.mxu0 %v7531
    %8160 = vmatprep.subr.mxu0 %v7540
    %8161 = vmatpush1.msra.mxu0 %v7539
    %8162 = vmatprep.subr.mxu0 %v7548
    %8163 = vmatpush1.msra.mxu0 %v7547
    %8164 = vmatprep.subr.mxu0 %v7556
    %8165 = vmatpush1.msra.mxu0 %v7555
    %8166 = vmatprep.subr.mxu0 %v7564
    %8167 = vmatpush1.msra.mxu0 %v7563
    %8168 = vmatprep.subr.mxu0 %v7572
    %8169 = vmatpush1.msra.mxu0 %v7571
    %8170 = vmatprep.subr.mxu0 %v7580
    %8171 = vmatpush1.msra.mxu0 %v7579
    %8172 = vmatprep.subr.mxu0 %v7588
    %8173 = vmatpush1.msra.mxu0 %v7587
    %8174 = vmatprep.subr.mxu0 %v7596
    %8175 = vmatpush1.msra.mxu0 %v7595
    %8176 = vmatprep.subr.mxu0 %v7604
    %8177 = vmatpush1.msra.mxu0 %v7603
    %8178 = vmatprep.subr.mxu0 %v7612
    %8179 = vmatpush1.msra.mxu0 %v7611
    %8180 = vmatprep.mubr.f32.mxu0 %v7103
    %8181 = vmatmul.mubr.f32.gmra.mrb[0].mxu0 %v7102
    %v8182 = vpop.f32.mrb[0].mxu0
    %v8183 = vadd.f32 %v8112, %v8182
    %v8184 = vpop.f32.mrb[0].mxu0
    %v8185 = vadd.f32 %v8114, %v8184
    %8186 = vdwg.mxu0
    %8187 = vmatprep.subr.mxu0 %v7620
    %8188 = vmatpush1.msra.mxu0 %v7619
    %8189 = vmatprep.subr.mxu0 %v7628
    %8190 = vmatpush1.msra.mxu0 %v7627
    %8191 = vmatprep.subr.mxu0 %v7636
    %8192 = vmatpush1.msra.mxu0 %v7635
    %8193 = vmatprep.subr.mxu0 %v7644
    %8194 = vmatpush1.msra.mxu0 %v7643
    %8195 = vmatprep.subr.mxu0 %v7652
    %8196 = vmatpush1.msra.mxu0 %v7651
    %8197 = vmatprep.subr.mxu0 %v7660
    %8198 = vmatpush1.msra.mxu0 %v7659
    %8199 = vmatprep.subr.mxu0 %v7668
    %8200 = vmatpush1.msra.mxu0 %v7667
    %8201 = vmatprep.subr.mxu0 %v7676
    %8202 = vmatpush1.msra.mxu0 %v7675
    %8203 = vmatprep.subr.mxu0 %v7684
    %8204 = vmatpush1.msra.mxu0 %v7683
    %8205 = vmatprep.subr.mxu0 %v7692
    %8206 = vmatpush1.msra.mxu0 %v7691
    %8207 = vmatprep.subr.mxu0 %v7700
    %8208 = vmatpush1.msra.mxu0 %v7699
    %8209 = vmatprep.subr.mxu0 %v7708
    %8210 = vmatpush1.msra.mxu0 %v7707
    %8211 = vmatprep.subr.mxu0 %v7716
    %8212 = vmatpush1.msra.mxu0 %v7715
    %8213 = vmatprep.subr.mxu0 %v7724
    %8214 = vmatpush1.msra.mxu0 %v7723
    %8215 = vmatprep.subr.mxu0 %v7732
    %8216 = vmatpush1.msra.mxu0 %v7731
    %8217 = vmatprep.subr.mxu0 %v7740
    %8218 = vmatpush1.msra.mxu0 %v7739
    %8219 = vmatprep.subr.mxu0 %v7748
    %8220 = vmatpush1.msra.mxu0 %v7747
    %8221 = vmatprep.subr.mxu0 %v7756
    %8222 = vmatpush1.msra.mxu0 %v7755
    %8223 = vmatprep.subr.mxu0 %v7764
    %8224 = vmatpush1.msra.mxu0 %v7763
    %8225 = vmatprep.subr.mxu0 %v7772
    %8226 = vmatpush1.msra.mxu0 %v7771
    %8227 = vmatprep.subr.mxu0 %v7780
    %8228 = vmatpush1.msra.mxu0 %v7779
    %8229 = vmatprep.subr.mxu0 %v7788
    %8230 = vmatpush1.msra.mxu0 %v7787
    %8231 = vmatprep.subr.mxu0 %v7796
    %8232 = vmatpush1.msra.mxu0 %v7795
    %8233 = vmatprep.subr.mxu0 %v7804
    %8234 = vmatpush1.msra.mxu0 %v7803
    %8235 = vmatprep.subr.mxu0 %v7812
    %8236 = vmatpush1.msra.mxu0 %v7811
    %8237 = vmatprep.subr.mxu0 %v7820
    %8238 = vmatpush1.msra.mxu0 %v7819
    %8239 = vmatprep.subr.mxu0 %v7828
    %8240 = vmatpush1.msra.mxu0 %v7827
    %8241 = vmatprep.subr.mxu0 %v7836
    %8242 = vmatpush1.msra.mxu0 %v7835
    %8243 = vmatprep.subr.mxu0 %v7844
    %8244 = vmatpush1.msra.mxu0 %v7843
    %8245 = vmatprep.subr.mxu0 %v7852
    %8246 = vmatpush1.msra.mxu0 %v7851
    %8247 = vmatprep.subr.mxu0 %v7860
    %8248 = vmatpush1.msra.mxu0 %v7859
    %8249 = vmatprep.subr.mxu0 %v7868
    %8250 = vmatpush1.msra.mxu0 %v7867
    %8251 = vmatprep.mubr.f32.mxu0 %v7105
    %8252 = vmatmul.mubr.f32.gmra.mrb[0].mxu0 %v7104
    %v8253 = vpop.f32.mrb[0].mxu0
    %v8254 = vadd.f32 %v8183, %v8253
    %v8255 = vpop.f32.mrb[0].mxu0
    %v8256 = vadd.f32 %v8185, %v8255
    %8257 = vdwg.mxu0
    %8258 = vmatprep.subr.mxu0 %v7876
    %8259 = vmatpush1.msra.mxu0 %v7875
    %8260 = vmatprep.subr.mxu0 %v7884
    %8261 = vmatpush1.msra.mxu0 %v7883
    %8262 = vmatprep.subr.mxu0 %v7892
    %8263 = vmatpush1.msra.mxu0 %v7891
    %8264 = vmatprep.subr.mxu0 %v7900
    %8265 = vmatpush1.msra.mxu0 %v7899
    %8266 = vmatprep.subr.mxu0 %v7908
    %8267 = vmatpush1.msra.mxu0 %v7907
    %8268 = vmatprep.subr.mxu0 %v7916
    %8269 = vmatpush1.msra.mxu0 %v7915
    %8270 = vmatprep.subr.mxu0 %v7924
    %8271 = vmatpush1.msra.mxu0 %v7923
    %8272 = vmatprep.subr.mxu0 %v7932
    %8273 = vmatpush1.msra.mxu0 %v7931
    %8274 = vmatprep.subr.mxu0 %v7940
    %8275 = vmatpush1.msra.mxu0 %v7939
    %8276 = vmatprep.subr.mxu0 %v7948
    %8277 = vmatpush1.msra.mxu0 %v7947
    %8278 = vmatprep.subr.mxu0 %v7956
    %8279 = vmatpush1.msra.mxu0 %v7955
    %8280 = vmatprep.subr.mxu0 %v7964
    %8281 = vmatpush1.msra.mxu0 %v7963
    %8282 = vmatprep.subr.mxu0 %v7972
    %8283 = vmatpush1.msra.mxu0 %v7971
    %8284 = vmatprep.subr.mxu0 %v7980
    %8285 = vmatpush1.msra.mxu0 %v7979
    %8286 = vmatprep.subr.mxu0 %v7988
    %8287 = vmatpush1.msra.mxu0 %v7987
    %8288 = vmatprep.subr.mxu0 %v7996
    %8289 = vmatpush1.msra.mxu0 %v7995
    %8290 = vmatprep.subr.mxu0 0.0
    %8291 = vmatpush1.msra.mxu0 0.0
    %8292 = vmatprep.subr.mxu0 0.0
    %8293 = vmatpush1.msra.mxu0 0.0
    %8294 = vmatprep.subr.mxu0 0.0
    %8295 = vmatpush1.msra.mxu0 0.0
    %8296 = vmatprep.subr.mxu0 0.0
    %8297 = vmatpush1.msra.mxu0 0.0
    %8298 = vmatprep.subr.mxu0 0.0
    %8299 = vmatpush1.msra.mxu0 0.0
    %8300 = vmatprep.subr.mxu0 0.0
    %8301 = vmatpush1.msra.mxu0 0.0
    %8302 = vmatprep.subr.mxu0 0.0
    %8303 = vmatpush1.msra.mxu0 0.0
    %8304 = vmatprep.subr.mxu0 0.0
    %8305 = vmatpush1.msra.mxu0 0.0
    %8306 = vmatprep.subr.mxu0 0.0
    %8307 = vmatpush1.msra.mxu0 0.0
    %8308 = vmatprep.subr.mxu0 0.0
    %8309 = vmatpush1.msra.mxu0 0.0
    %8310 = vmatprep.subr.mxu0 0.0
    %8311 = vmatpush1.msra.mxu0 0.0
    %8312 = vmatprep.subr.mxu0 0.0
    %8313 = vmatpush1.msra.mxu0 0.0
    %8314 = vmatprep.subr.mxu0 0.0
    %8315 = vmatpush1.msra.mxu0 0.0
    %8316 = vmatprep.subr.mxu0 0.0
    %8317 = vmatpush1.msra.mxu0 0.0
    %8318 = vmatprep.subr.mxu0 0.0
    %8319 = vmatpush1.msra.mxu0 0.0
    %8320 = vmatprep.subr.mxu0 0.0
    %8321 = vmatpush1.msra.mxu0 0.0
    %8322 = vmatprep.mubr.f32.mxu0 0.0
    %8323 = vmatmul.mubr.f32.gmra.mrb[0].mxu0 %v7106
    %v8324 = vpop.f32.mrb[0].mxu0
    %v8325 = vadd.f32 %v8254, %v8324
    %v8326 = vpop.f32.mrb[0].mxu0
    %v8327 = vadd.f32 %v8256, %v8326
    %8328 = vdwg.mxu0
    %8329 = vmatprep.subr.mxu0 %v7110
    %8330 = vmatpush1.msra.mxu0 %v7109
    %8331 = vmatprep.subr.mxu0 %v7118
    %8332 = vmatpush1.msra.mxu0 %v7117
    %8333 = vmatprep.subr.mxu0 %v7126
    %8334 = vmatpush1.msra.mxu0 %v7125
    %8335 = vmatprep.subr.mxu0 %v7134
    %8336 = vmatpush1.msra.mxu0 %v7133
    %8337 = vmatprep.subr.mxu0 %v7142
    %8338 = vmatpush1.msra.mxu0 %v7141
    %8339 = vmatprep.subr.mxu0 %v7150
    %8340 = vmatpush1.msra.mxu0 %v7149
    %8341 = vmatprep.subr.mxu0 %v7158
    %8342 = vmatpush1.msra.mxu0 %v7157
    %8343 = vmatprep.subr.mxu0 %v7166
    %8344 = vmatpush1.msra.mxu0 %v7165
    %8345 = vmatprep.subr.mxu0 %v7174
    %8346 = vmatpush1.msra.mxu0 %v7173
    %8347 = vmatprep.subr.mxu0 %v7182
    %8348 = vmatpush1.msra.mxu0 %v7181
    %8349 = vmatprep.subr.mxu0 %v7190
    %8350 = vmatpush1.msra.mxu0 %v7189
    %8351 = vmatprep.subr.mxu0 %v7198
    %8352 = vmatpush1.msra.mxu0 %v7197
    %8353 = vmatprep.subr.mxu0 %v7206
    %8354 = vmatpush1.msra.mxu0 %v7205
    %8355 = vmatprep.subr.mxu0 %v7214
    %8356 = vmatpush1.msra.mxu0 %v7213
    %8357 = vmatprep.subr.mxu0 %v7222
    %8358 = vmatpush1.msra.mxu0 %v7221
    %8359 = vmatprep.subr.mxu0 %v7230
    %8360 = vmatpush1.msra.mxu0 %v7229
    %8361 = vmatprep.subr.mxu0 %v7238
    %8362 = vmatpush1.msra.mxu0 %v7237
    %8363 = vmatprep.subr.mxu0 %v7246
    %8364 = vmatpush1.msra.mxu0 %v7245
    %8365 = vmatprep.subr.mxu0 %v7254
    %8366 = vmatpush1.msra.mxu0 %v7253
    %8367 = vmatprep.subr.mxu0 %v7262
    %8368 = vmatpush1.msra.mxu0 %v7261
    %8369 = vmatprep.subr.mxu0 %v7270
    %8370 = vmatpush1.msra.mxu0 %v7269
    %8371 = vmatprep.subr.mxu0 %v7278
    %8372 = vmatpush1.msra.mxu0 %v7277
    %8373 = vmatprep.subr.mxu0 %v7286
    %8374 = vmatpush1.msra.mxu0 %v7285
    %8375 = vmatprep.subr.mxu0 %v7294
    %8376 = vmatpush1.msra.mxu0 %v7293
    %8377 = vmatprep.subr.mxu0 %v7302
    %8378 = vmatpush1.msra.mxu0 %v7301
    %8379 = vmatprep.subr.mxu0 %v7310
    %8380 = vmatpush1.msra.mxu0 %v7309
    %8381 = vmatprep.subr.mxu0 %v7318
    %8382 = vmatpush1.msra.mxu0 %v7317
    %8383 = vmatprep.subr.mxu0 %v7326
    %8384 = vmatpush1.msra.mxu0 %v7325
    %8385 = vmatprep.subr.mxu0 %v7334
    %8386 = vmatpush1.msra.mxu0 %v7333
    %8387 = vmatprep.subr.mxu0 %v7342
    %8388 = vmatpush1.msra.mxu0 %v7341
    %8389 = vmatprep.subr.mxu0 %v7350
    %8390 = vmatpush1.msra.mxu0 %v7349
    %8391 = vmatprep.subr.mxu0 %v7358
    %8392 = vmatpush1.msra.mxu0 %v7357
    %8393 = vmatprep.mubr.f32.mxu0 %v7101
    %8394 = vmatmul.mubr.f32.gmra.mrb[0].mxu0 %v7100
    %v8395 = vpop.f32.mrb[0].mxu0
    %v8396 = vadd.f32 %v8016, %v8395
    %v8397 = vpop.f32.mrb[0].mxu0
    %v8398 = vadd.f32 %v8020, %v8397
    %8399 = vdwg.mxu0
    %8400 = vmatprep.subr.mxu0 %v7366
    %8401 = vmatpush1.msra.mxu0 %v7365
    %8402 = vmatprep.subr.mxu0 %v7374
    %8403 = vmatpush1.msra.mxu0 %v7373
    %8404 = vmatprep.subr.mxu0 %v7382
    %8405 = vmatpush1.msra.mxu0 %v7381
    %8406 = vmatprep.subr.mxu0 %v7390
    %8407 = vmatpush1.msra.mxu0 %v7389
    %8408 = vmatprep.subr.mxu0 %v7398
    %8409 = vmatpush1.msra.mxu0 %v7397
    %8410 = vmatprep.subr.mxu0 %v7406
    %8411 = vmatpush1.msra.mxu0 %v7405
    %8412 = vmatprep.subr.mxu0 %v7414
    %8413 = vmatpush1.msra.mxu0 %v7413
    %8414 = vmatprep.subr.mxu0 %v7422
    %8415 = vmatpush1.msra.mxu0 %v7421
    %8416 = vmatprep.subr.mxu0 %v7430
    %8417 = vmatpush1.msra.mxu0 %v7429
    %8418 = vmatprep.subr.mxu0 %v7438
    %8419 = vmatpush1.msra.mxu0 %v7437
    %8420 = vmatprep.subr.mxu0 %v7446
    %8421 = vmatpush1.msra.mxu0 %v7445
    %8422 = vmatprep.subr.mxu0 %v7454
    %8423 = vmatpush1.msra.mxu0 %v7453
    %8424 = vmatprep.subr.mxu0 %v7462
    %8425 = vmatpush1.msra.mxu0 %v7461
    %8426 = vmatprep.subr.mxu0 %v7470
    %8427 = vmatpush1.msra.mxu0 %v7469
    %8428 = vmatprep.subr.mxu0 %v7478
    %8429 = vmatpush1.msra.mxu0 %v7477
    %8430 = vmatprep.subr.mxu0 %v7486
    %8431 = vmatpush1.msra.mxu0 %v7485
    %8432 = vmatprep.subr.mxu0 %v7494
    %8433 = vmatpush1.msra.mxu0 %v7493
    %8434 = vmatprep.subr.mxu0 %v7502
    %8435 = vmatpush1.msra.mxu0 %v7501
    %8436 = vmatprep.subr.mxu0 %v7510
    %8437 = vmatpush1.msra.mxu0 %v7509
    %8438 = vmatprep.subr.mxu0 %v7518
    %8439 = vmatpush1.msra.mxu0 %v7517
    %8440 = vmatprep.subr.mxu0 %v7526
    %8441 = vmatpush1.msra.mxu0 %v7525
    %8442 = vmatprep.subr.mxu0 %v7534
    %8443 = vmatpush1.msra.mxu0 %v7533
    %8444 = vmatprep.subr.mxu0 %v7542
    %8445 = vmatpush1.msra.mxu0 %v7541
    %8446 = vmatprep.subr.mxu0 %v7550
    %8447 = vmatpush1.msra.mxu0 %v7549
    %8448 = vmatprep.subr.mxu0 %v7558
    %8449 = vmatpush1.msra.mxu0 %v7557
    %8450 = vmatprep.subr.mxu0 %v7566
    %8451 = vmatpush1.msra.mxu0 %v7565
    %8452 = vmatprep.subr.mxu0 %v7574
    %8453 = vmatpush1.msra.mxu0 %v7573
    %8454 = vmatprep.subr.mxu0 %v7582
    %8455 = vmatpush1.msra.mxu0 %v7581
    %8456 = vmatprep.subr.mxu0 %v7590
    %8457 = vmatpush1.msra.mxu0 %v7589
    %8458 = vmatprep.subr.mxu0 %v7598
    %8459 = vmatpush1.msra.mxu0 %v7597
    %8460 = vmatprep.subr.mxu0 %v7606
    %8461 = vmatpush1.msra.mxu0 %v7605
    %8462 = vmatprep.subr.mxu0 %v7614
    %8463 = vmatpush1.msra.mxu0 %v7613
    %8464 = vmatprep.mubr.f32.mxu0 %v7103
    %8465 = vmatmul.mubr.f32.gmra.mrb[0].mxu0 %v7102
    %v8466 = vpop.f32.mrb[0].mxu0
    %v8467 = vadd.f32 %v8396, %v8466
    %v8468 = vpop.f32.mrb[0].mxu0
    %v8469 = vadd.f32 %v8398, %v8468
    %8470 = vdwg.mxu0
    %8471 = vmatprep.subr.mxu0 %v7622
    %8472 = vmatpush1.msra.mxu0 %v7621
    %8473 = vmatprep.subr.mxu0 %v7630
    %8474 = vmatpush1.msra.mxu0 %v7629
    %8475 = vmatprep.subr.mxu0 %v7638
    %8476 = vmatpush1.msra.mxu0 %v7637
    %8477 = vmatprep.subr.mxu0 %v7646
    %8478 = vmatpush1.msra.mxu0 %v7645
    %8479 = vmatprep.subr.mxu0 %v7654
    %8480 = vmatpush1.msra.mxu0 %v7653
    %8481 = vmatprep.subr.mxu0 %v7662
    %8482 = vmatpush1.msra.mxu0 %v7661
    %8483 = vmatprep.subr.mxu0 %v7670
    %8484 = vmatpush1.msra.mxu0 %v7669
    %8485 = vmatprep.subr.mxu0 %v7678
    %8486 = vmatpush1.msra.mxu0 %v7677
    %8487 = vmatprep.subr.mxu0 %v7686
    %8488 = vmatpush1.msra.mxu0 %v7685
    %8489 = vmatprep.subr.mxu0 %v7694
    %8490 = vmatpush1.msra.mxu0 %v7693
    %8491 = vmatprep.subr.mxu0 %v7702
    %8492 = vmatpush1.msra.mxu0 %v7701
    %8493 = vmatprep.subr.mxu0 %v7710
    %8494 = vmatpush1.msra.mxu0 %v7709
    %8495 = vmatprep.subr.mxu0 %v7718
    %8496 = vmatpush1.msra.mxu0 %v7717
    %8497 = vmatprep.subr.mxu0 %v7726
    %8498 = vmatpush1.msra.mxu0 %v7725
    %8499 = vmatprep.subr.mxu0 %v7734
    %8500 = vmatpush1.msra.mxu0 %v7733
    %8501 = vmatprep.subr.mxu0 %v7742
    %8502 = vmatpush1.msra.mxu0 %v7741
    %8503 = vmatprep.subr.mxu0 %v7750
    %8504 = vmatpush1.msra.mxu0 %v7749
    %8505 = vmatprep.subr.mxu0 %v7758
    %8506 = vmatpush1.msra.mxu0 %v7757
    %8507 = vmatprep.subr.mxu0 %v7766
    %8508 = vmatpush1.msra.mxu0 %v7765
    %8509 = vmatprep.subr.mxu0 %v7774
    %8510 = vmatpush1.msra.mxu0 %v7773
    %8511 = vmatprep.subr.mxu0 %v7782
    %8512 = vmatpush1.msra.mxu0 %v7781
    %8513 = vmatprep.subr.mxu0 %v7790
    %8514 = vmatpush1.msra.mxu0 %v7789
    %8515 = vmatprep.subr.mxu0 %v7798
    %8516 = vmatpush1.msra.mxu0 %v7797
    %8517 = vmatprep.subr.mxu0 %v7806
    %8518 = vmatpush1.msra.mxu0 %v7805
    %8519 = vmatprep.subr.mxu0 %v7814
    %8520 = vmatpush1.msra.mxu0 %v7813
    %8521 = vmatprep.subr.mxu0 %v7822
    %8522 = vmatpush1.msra.mxu0 %v7821
    %8523 = vmatprep.subr.mxu0 %v7830
    %8524 = vmatpush1.msra.mxu0 %v7829
    %8525 = vmatprep.subr.mxu0 %v7838
    %8526 = vmatpush1.msra.mxu0 %v7837
    %8527 = vmatprep.subr.mxu0 %v7846
    %8528 = vmatpush1.msra.mxu0 %v7845
    %8529 = vmatprep.subr.mxu0 %v7854
    %8530 = vmatpush1.msra.mxu0 %v7853
    %8531 = vmatprep.subr.mxu0 %v7862
    %8532 = vmatpush1.msra.mxu0 %v7861
    %8533 = vmatprep.subr.mxu0 %v7870
    %8534 = vmatpush1.msra.mxu0 %v7869
    %8535 = vmatprep.mubr.f32.mxu0 %v7105
    %8536 = vmatmul.mubr.f32.gmra.mrb[0].mxu0 %v7104
    %v8537 = vpop.f32.mrb[0].mxu0
    %v8538 = vadd.f32 %v8467, %v8537
    %v8539 = vpop.f32.mrb[0].mxu0
    %v8540 = vadd.f32 %v8469, %v8539
    %8541 = vdwg.mxu0
    %8542 = vmatprep.subr.mxu0 %v7878
    %8543 = vmatpush1.msra.mxu0 %v7877
    %8544 = vmatprep.subr.mxu0 %v7886
    %8545 = vmatpush1.msra.mxu0 %v7885
    %8546 = vmatprep.subr.mxu0 %v7894
    %8547 = vmatpush1.msra.mxu0 %v7893
    %8548 = vmatprep.subr.mxu0 %v7902
    %8549 = vmatpush1.msra.mxu0 %v7901
    %8550 = vmatprep.subr.mxu0 %v7910
    %8551 = vmatpush1.msra.mxu0 %v7909
    %8552 = vmatprep.subr.mxu0 %v7918
    %8553 = vmatpush1.msra.mxu0 %v7917
    %8554 = vmatprep.subr.mxu0 %v7926
    %8555 = vmatpush1.msra.mxu0 %v7925
    %8556 = vmatprep.subr.mxu0 %v7934
    %8557 = vmatpush1.msra.mxu0 %v7933
    %8558 = vmatprep.subr.mxu0 %v7942
    %8559 = vmatpush1.msra.mxu0 %v7941
    %8560 = vmatprep.subr.mxu0 %v7950
    %8561 = vmatpush1.msra.mxu0 %v7949
    %8562 = vmatprep.subr.mxu0 %v7958
    %8563 = vmatpush1.msra.mxu0 %v7957
    %8564 = vmatprep.subr.mxu0 %v7966
    %8565 = vmatpush1.msra.mxu0 %v7965
    %8566 = vmatprep.subr.mxu0 %v7974
    %8567 = vmatpush1.msra.mxu0 %v7973
    %8568 = vmatprep.subr.mxu0 %v7982
    %8569 = vmatpush1.msra.mxu0 %v7981
    %8570 = vmatprep.subr.mxu0 %v7990
    %8571 = vmatpush1.msra.mxu0 %v7989
    %8572 = vmatprep.subr.mxu0 %v7998
    %8573 = vmatpush1.msra.mxu0 %v7997
    %8574 = vmatprep.subr.mxu0 0.0
    %8575 = vmatpush1.msra.mxu0 0.0
    %8576 = vmatprep.subr.mxu0 0.0
    %8577 = vmatpush1.msra.mxu0 0.0
    %8578 = vmatprep.subr.mxu0 0.0
    %8579 = vmatpush1.msra.mxu0 0.0
    %8580 = vmatprep.subr.mxu0 0.0
    %8581 = vmatpush1.msra.mxu0 0.0
    %8582 = vmatprep.subr.mxu0 0.0
    %8583 = vmatpush1.msra.mxu0 0.0
    %8584 = vmatprep.subr.mxu0 0.0
    %8585 = vmatpush1.msra.mxu0 0.0
    %8586 = vmatprep.subr.mxu0 0.0
    %8587 = vmatpush1.msra.mxu0 0.0
    %8588 = vmatprep.subr.mxu0 0.0
    %8589 = vmatpush1.msra.mxu0 0.0
    %8590 = vmatprep.subr.mxu0 0.0
    %8591 = vmatpush1.msra.mxu0 0.0
    %8592 = vmatprep.subr.mxu0 0.0
    %8593 = vmatpush1.msra.mxu0 0.0
    %8594 = vmatprep.subr.mxu0 0.0
    %8595 = vmatpush1.msra.mxu0 0.0
    %8596 = vmatprep.subr.mxu0 0.0
    %8597 = vmatpush1.msra.mxu0 0.0
    %8598 = vmatprep.subr.mxu0 0.0
    %8599 = vmatpush1.msra.mxu0 0.0
    %8600 = vmatprep.subr.mxu0 0.0
    %8601 = vmatpush1.msra.mxu0 0.0
    %8602 = vmatprep.subr.mxu0 0.0
    %8603 = vmatpush1.msra.mxu0 0.0
    %8604 = vmatprep.subr.mxu0 0.0
    %8605 = vmatpush1.msra.mxu0 0.0
    %8606 = vmatprep.mubr.f32.mxu0 0.0
    %8607 = vmatmul.mubr.f32.gmra.mrb[0].mxu0 %v7106
    %v8608 = vpop.f32.mrb[0].mxu0
    %v8609 = vadd.f32 %v8538, %v8608
    %v8610 = vpop.f32.mrb[0].mxu0
    %v8611 = vadd.f32 %v8540, %v8610
    %8612 = vdwg.mxu0
    %8613 = vmatprep.subr.mxu0 %v7112
    %8614 = vmatpush1.msra.mxu0 %v7111
    %8615 = vmatprep.subr.mxu0 %v7120
    %8616 = vmatpush1.msra.mxu0 %v7119
    %8617 = vmatprep.subr.mxu0 %v7128
    %8618 = vmatpush1.msra.mxu0 %v7127
    %8619 = vmatprep.subr.mxu0 %v7136
    %8620 = vmatpush1.msra.mxu0 %v7135
    %8621 = vmatprep.subr.mxu0 %v7144
    %8622 = vmatpush1.msra.mxu0 %v7143
    %8623 = vmatprep.subr.mxu0 %v7152
    %8624 = vmatpush1.msra.mxu0 %v7151
    %8625 = vmatprep.subr.mxu0 %v7160
    %8626 = vmatpush1.msra.mxu0 %v7159
    %8627 = vmatprep.subr.mxu0 %v7168
    %8628 = vmatpush1.msra.mxu0 %v7167
    %8629 = vmatprep.subr.mxu0 %v7176
    %8630 = vmatpush1.msra.mxu0 %v7175
    %8631 = vmatprep.subr.mxu0 %v7184
    %8632 = vmatpush1.msra.mxu0 %v7183
    %8633 = vmatprep.subr.mxu0 %v7192
    %8634 = vmatpush1.msra.mxu0 %v7191
    %8635 = vmatprep.subr.mxu0 %v7200
    %8636 = vmatpush1.msra.mxu0 %v7199
    %8637 = vmatprep.subr.mxu0 %v7208
    %8638 = vmatpush1.msra.mxu0 %v7207
    %8639 = vmatprep.subr.mxu0 %v7216
    %8640 = vmatpush1.msra.mxu0 %v7215
    %8641 = vmatprep.subr.mxu0 %v7224
    %8642 = vmatpush1.msra.mxu0 %v7223
    %8643 = vmatprep.subr.mxu0 %v7232
    %8644 = vmatpush1.msra.mxu0 %v7231
    %8645 = vmatprep.subr.mxu0 %v7240
    %8646 = vmatpush1.msra.mxu0 %v7239
    %8647 = vmatprep.subr.mxu0 %v7248
    %8648 = vmatpush1.msra.mxu0 %v7247
    %8649 = vmatprep.subr.mxu0 %v7256
    %8650 = vmatpush1.msra.mxu0 %v7255
    %8651 = vmatprep.subr.mxu0 %v7264
    %8652 = vmatpush1.msra.mxu0 %v7263
    %8653 = vmatprep.subr.mxu0 %v7272
    %8654 = vmatpush1.msra.mxu0 %v7271
    %8655 = vmatprep.subr.mxu0 %v7280
    %8656 = vmatpush1.msra.mxu0 %v7279
    %8657 = vmatprep.subr.mxu0 %v7288
    %8658 = vmatpush1.msra.mxu0 %v7287
    %8659 = vmatprep.subr.mxu0 %v7296
    %8660 = vmatpush1.msra.mxu0 %v7295
    %8661 = vmatprep.subr.mxu0 %v7304
    %8662 = vmatpush1.msra.mxu0 %v7303
    %8663 = vmatprep.subr.mxu0 %v7312
    %8664 = vmatpush1.msra.mxu0 %v7311
    %8665 = vmatprep.subr.mxu0 %v7320
    %8666 = vmatpush1.msra.mxu0 %v7319
    %8667 = vmatprep.subr.mxu0 %v7328
    %8668 = vmatpush1.msra.mxu0 %v7327
    %8669 = vmatprep.subr.mxu0 %v7336
    %8670 = vmatpush1.msra.mxu0 %v7335
    %8671 = vmatprep.subr.mxu0 %v7344
    %8672 = vmatpush1.msra.mxu0 %v7343
    %8673 = vmatprep.subr.mxu0 %v7352
    %8674 = vmatpush1.msra.mxu0 %v7351
    %8675 = vmatprep.subr.mxu0 %v7360
    %8676 = vmatpush1.msra.mxu0 %v7359
    %8677 = vmatprep.mubr.f32.mxu0 %v7101
    %8678 = vmatmul.mubr.f32.gmra.mrb[0].mxu0 %v7100
    %v8679 = vpop.f32.mrb[0].mxu0
    %v8680 = vadd.f32 %v8024, %v8679
    %v8681 = vpop.f32.mrb[0].mxu0
    %v8682 = vadd.f32 %v8028, %v8681
    %8683 = vdwg.mxu0
    %8684 = vmatprep.subr.mxu0 %v7368
    %8685 = vmatpush1.msra.mxu0 %v7367
    %8686 = vmatprep.subr.mxu0 %v7376
    %8687 = vmatpush1.msra.mxu0 %v7375
    %8688 = vmatprep.subr.mxu0 %v7384
    %8689 = vmatpush1.msra.mxu0 %v7383
    %8690 = vmatprep.subr.mxu0 %v7392
    %8691 = vmatpush1.msra.mxu0 %v7391
    %8692 = vmatprep.subr.mxu0 %v7400
    %8693 = vmatpush1.msra.mxu0 %v7399
    %8694 = vmatprep.subr.mxu0 %v7408
    %8695 = vmatpush1.msra.mxu0 %v7407
    %8696 = vmatprep.subr.mxu0 %v7416
    %8697 = vmatpush1.msra.mxu0 %v7415
    %8698 = vmatprep.subr.mxu0 %v7424
    %8699 = vmatpush1.msra.mxu0 %v7423
    %8700 = vmatprep.subr.mxu0 %v7432
    %8701 = vmatpush1.msra.mxu0 %v7431
    %8702 = vmatprep.subr.mxu0 %v7440
    %8703 = vmatpush1.msra.mxu0 %v7439
    %8704 = vmatprep.subr.mxu0 %v7448
    %8705 = vmatpush1.msra.mxu0 %v7447
    %8706 = vmatprep.subr.mxu0 %v7456
    %8707 = vmatpush1.msra.mxu0 %v7455
    %8708 = vmatprep.subr.mxu0 %v7464
    %8709 = vmatpush1.msra.mxu0 %v7463
    %8710 = vmatprep.subr.mxu0 %v7472
    %8711 = vmatpush1.msra.mxu0 %v7471
    %8712 = vmatprep.subr.mxu0 %v7480
    %8713 = vmatpush1.msra.mxu0 %v7479
    %8714 = vmatprep.subr.mxu0 %v7488
    %8715 = vmatpush1.msra.mxu0 %v7487
    %8716 = vmatprep.subr.mxu0 %v7496
    %8717 = vmatpush1.msra.mxu0 %v7495
    %8718 = vmatprep.subr.mxu0 %v7504
    %8719 = vmatpush1.msra.mxu0 %v7503
    %8720 = vmatprep.subr.mxu0 %v7512
    %8721 = vmatpush1.msra.mxu0 %v7511
    %8722 = vmatprep.subr.mxu0 %v7520
    %8723 = vmatpush1.msra.mxu0 %v7519
    %8724 = vmatprep.subr.mxu0 %v7528
    %8725 = vmatpush1.msra.mxu0 %v7527
    %8726 = vmatprep.subr.mxu0 %v7536
    %8727 = vmatpush1.msra.mxu0 %v7535
    %8728 = vmatprep.subr.mxu0 %v7544
    %8729 = vmatpush1.msra.mxu0 %v7543
    %8730 = vmatprep.subr.mxu0 %v7552
    %8731 = vmatpush1.msra.mxu0 %v7551
    %8732 = vmatprep.subr.mxu0 %v7560
    %8733 = vmatpush1.msra.mxu0 %v7559
    %8734 = vmatprep.subr.mxu0 %v7568
    %8735 = vmatpush1.msra.mxu0 %v7567
    %8736 = vmatprep.subr.mxu0 %v7576
    %8737 = vmatpush1.msra.mxu0 %v7575
    %8738 = vmatprep.subr.mxu0 %v7584
    %8739 = vmatpush1.msra.mxu0 %v7583
    %8740 = vmatprep.subr.mxu0 %v7592
    %8741 = vmatpush1.msra.mxu0 %v7591
    %8742 = vmatprep.subr.mxu0 %v7600
    %8743 = vmatpush1.msra.mxu0 %v7599
    %8744 = vmatprep.subr.mxu0 %v7608
    %8745 = vmatpush1.msra.mxu0 %v7607
    %8746 = vmatprep.subr.mxu0 %v7616
    %8747 = vmatpush1.msra.mxu0 %v7615
    %8748 = vmatprep.mubr.f32.mxu0 %v7103
    %8749 = vmatmul.mubr.f32.gmra.mrb[0].mxu0 %v7102
    %v8750 = vpop.f32.mrb[0].mxu0
    %v8751 = vadd.f32 %v8680, %v8750
    %v8752 = vpop.f32.mrb[0].mxu0
    %v8753 = vadd.f32 %v8682, %v8752
    %8754 = vdwg.mxu0
    %8755 = vmatprep.subr.mxu0 %v7624
    %8756 = vmatpush1.msra.mxu0 %v7623
    %8757 = vmatprep.subr.mxu0 %v7632
    %8758 = vmatpush1.msra.mxu0 %v7631
    %8759 = vmatprep.subr.mxu0 %v7640
    %8760 = vmatpush1.msra.mxu0 %v7639
    %8761 = vmatprep.subr.mxu0 %v7648
    %8762 = vmatpush1.msra.mxu0 %v7647
    %8763 = vmatprep.subr.mxu0 %v7656
    %8764 = vmatpush1.msra.mxu0 %v7655
    %8765 = vmatprep.subr.mxu0 %v7664
    %8766 = vmatpush1.msra.mxu0 %v7663
    %8767 = vmatprep.subr.mxu0 %v7672
    %8768 = vmatpush1.msra.mxu0 %v7671
    %8769 = vmatprep.subr.mxu0 %v7680
    %8770 = vmatpush1.msra.mxu0 %v7679
    %8771 = vmatprep.subr.mxu0 %v7688
    %8772 = vmatpush1.msra.mxu0 %v7687
    %8773 = vmatprep.subr.mxu0 %v7696
    %8774 = vmatpush1.msra.mxu0 %v7695
    %8775 = vmatprep.subr.mxu0 %v7704
    %8776 = vmatpush1.msra.mxu0 %v7703
    %8777 = vmatprep.subr.mxu0 %v7712
    %8778 = vmatpush1.msra.mxu0 %v7711
    %8779 = vmatprep.subr.mxu0 %v7720
    %8780 = vmatpush1.msra.mxu0 %v7719
    %8781 = vmatprep.subr.mxu0 %v7728
    %8782 = vmatpush1.msra.mxu0 %v7727
    %8783 = vmatprep.subr.mxu0 %v7736
    %8784 = vmatpush1.msra.mxu0 %v7735
    %8785 = vmatprep.subr.mxu0 %v7744
    %8786 = vmatpush1.msra.mxu0 %v7743
    %8787 = vmatprep.subr.mxu0 %v7752
    %8788 = vmatpush1.msra.mxu0 %v7751
    %8789 = vmatprep.subr.mxu0 %v7760
    %8790 = vmatpush1.msra.mxu0 %v7759
    %8791 = vmatprep.subr.mxu0 %v7768
    %8792 = vmatpush1.msra.mxu0 %v7767
    %8793 = vmatprep.subr.mxu0 %v7776
    %8794 = vmatpush1.msra.mxu0 %v7775
    %8795 = vmatprep.subr.mxu0 %v7784
    %8796 = vmatpush1.msra.mxu0 %v7783
    %8797 = vmatprep.subr.mxu0 %v7792
    %8798 = vmatpush1.msra.mxu0 %v7791
    %8799 = vmatprep.subr.mxu0 %v7800
    %8800 = vmatpush1.msra.mxu0 %v7799
    %8801 = vmatprep.subr.mxu0 %v7808
    %8802 = vmatpush1.msra.mxu0 %v7807
    %8803 = vmatprep.subr.mxu0 %v7816
    %8804 = vmatpush1.msra.mxu0 %v7815
    %8805 = vmatprep.subr.mxu0 %v7824
    %8806 = vmatpush1.msra.mxu0 %v7823
    %8807 = vmatprep.subr.mxu0 %v7832
    %8808 = vmatpush1.msra.mxu0 %v7831
    %8809 = vmatprep.subr.mxu0 %v7840
    %8810 = vmatpush1.msra.mxu0 %v7839
    %8811 = vmatprep.subr.mxu0 %v7848
    %8812 = vmatpush1.msra.mxu0 %v7847
    %8813 = vmatprep.subr.mxu0 %v7856
    %8814 = vmatpush1.msra.mxu0 %v7855
    %8815 = vmatprep.subr.mxu0 %v7864
    %8816 = vmatpush1.msra.mxu0 %v7863
    %8817 = vmatprep.subr.mxu0 %v7872
    %8818 = vmatpush1.msra.mxu0 %v7871
    %8819 = vmatprep.mubr.f32.mxu0 %v7105
    %8820 = vmatmul.mubr.f32.gmra.mrb[0].mxu0 %v7104
    %v8821 = vpop.f32.mrb[0].mxu0
    %v8822 = vadd.f32 %v8751, %v8821
    %v8823 = vpop.f32.mrb[0].mxu0
    %v8824 = vadd.f32 %v8753, %v8823
    %8825 = vdwg.mxu0
    %8826 = vmatprep.subr.mxu0 %v7880
    %8827 = vmatpush1.msra.mxu0 %v7879
    %8828 = vmatprep.subr.mxu0 %v7888
    %8829 = vmatpush1.msra.mxu0 %v7887
    %8830 = vmatprep.subr.mxu0 %v7896
    %8831 = vmatpush1.msra.mxu0 %v7895
    %8832 = vmatprep.subr.mxu0 %v7904
    %8833 = vmatpush1.msra.mxu0 %v7903
    %8834 = vmatprep.subr.mxu0 %v7912
    %8835 = vmatpush1.msra.mxu0 %v7911
    %8836 = vmatprep.subr.mxu0 %v7920
    %8837 = vmatpush1.msra.mxu0 %v7919
    %8838 = vmatprep.subr.mxu0 %v7928
    %8839 = vmatpush1.msra.mxu0 %v7927
    %8840 = vmatprep.subr.mxu0 %v7936
    %8841 = vmatpush1.msra.mxu0 %v7935
    %8842 = vmatprep.subr.mxu0 %v7944
    %8843 = vmatpush1.msra.mxu0 %v7943
    %8844 = vmatprep.subr.mxu0 %v7952
    %8845 = vmatpush1.msra.mxu0 %v7951
    %8846 = vmatprep.subr.mxu0 %v7960
    %8847 = vmatpush1.msra.mxu0 %v7959
    %8848 = vmatprep.subr.mxu0 %v7968
    %8849 = vmatpush1.msra.mxu0 %v7967
    %8850 = vmatprep.subr.mxu0 %v7976
    %8851 = vmatpush1.msra.mxu0 %v7975
    %8852 = vmatprep.subr.mxu0 %v7984
    %8853 = vmatpush1.msra.mxu0 %v7983
    %8854 = vmatprep.subr.mxu0 %v7992
    %8855 = vmatpush1.msra.mxu0 %v7991
    %8856 = vmatprep.subr.mxu0 %v8000
    %8857 = vmatpush1.msra.mxu0 %v7999
    %8858 = vmatprep.subr.mxu0 0.0
    %8859 = vmatpush1.msra.mxu0 0.0
    %8860 = vmatprep.subr.mxu0 0.0
    %8861 = vmatpush1.msra.mxu0 0.0
    %8862 = vmatprep.subr.mxu0 0.0
    %8863 = vmatpush1.msra.mxu0 0.0
    %8864 = vmatprep.subr.mxu0 0.0
    %8865 = vmatpush1.msra.mxu0 0.0
    %8866 = vmatprep.subr.mxu0 0.0
    %8867 = vmatpush1.msra.mxu0 0.0
    %8868 = vmatprep.subr.mxu0 0.0
    %8869 = vmatpush1.msra.mxu0 0.0
    %8870 = vmatprep.subr.mxu0 0.0
    %8871 = vmatpush1.msra.mxu0 0.0
    %8872 = vmatprep.subr.mxu0 0.0
    %8873 = vmatpush1.msra.mxu0 0.0
    %8874 = vmatprep.subr.mxu0 0.0
    %8875 = vmatpush1.msra.mxu0 0.0
    %8876 = vmatprep.subr.mxu0 0.0
    %8877 = vmatpush1.msra.mxu0 0.0
    %8878 = vmatprep.subr.mxu0 0.0
    %8879 = vmatpush1.msra.mxu0 0.0
    %8880 = vmatprep.subr.mxu0 0.0
    %8881 = vmatpush1.msra.mxu0 0.0
    %8882 = vmatprep.subr.mxu0 0.0
    %8883 = vmatpush1.msra.mxu0 0.0
    %8884 = vmatprep.subr.mxu0 0.0
    %8885 = vmatpush1.msra.mxu0 0.0
    %8886 = vmatprep.subr.mxu0 0.0
    %8887 = vmatpush1.msra.mxu0 0.0
    %8888 = vmatprep.subr.mxu0 0.0
    %8889 = vmatpush1.msra.mxu0 0.0
    %8890 = vmatprep.mubr.f32.mxu0 0.0
    %8891 = vmatmul.mubr.f32.gmra.mrb[0].mxu0 %v7106
    %v8892 = vpop.f32.mrb[0].mxu0
    %v8893 = vadd.f32 %v8822, %v8892
    %v8894 = vpop.f32.mrb[0].mxu0
    %v8895 = vadd.f32 %v8824, %v8894
    %8896 = vdwg.mxu0
    %8897 = vmatprep.subr.mxu0 %v7114
    %8898 = vmatpush1.msra.mxu0 %v7113
    %8899 = vmatprep.subr.mxu0 %v7122
    %8900 = vmatpush1.msra.mxu0 %v7121
    %8901 = vmatprep.subr.mxu0 %v7130
    %8902 = vmatpush1.msra.mxu0 %v7129
    %8903 = vmatprep.subr.mxu0 %v7138
    %8904 = vmatpush1.msra.mxu0 %v7137
    %8905 = vmatprep.subr.mxu0 %v7146
    %8906 = vmatpush1.msra.mxu0 %v7145
    %8907 = vmatprep.subr.mxu0 %v7154
    %8908 = vmatpush1.msra.mxu0 %v7153
    %8909 = vmatprep.subr.mxu0 %v7162
    %8910 = vmatpush1.msra.mxu0 %v7161
    %8911 = vmatprep.subr.mxu0 %v7170
    %8912 = vmatpush1.msra.mxu0 %v7169
    %8913 = vmatprep.subr.mxu0 %v7178
    %8914 = vmatpush1.msra.mxu0 %v7177
    %8915 = vmatprep.subr.mxu0 %v7186
    %8916 = vmatpush1.msra.mxu0 %v7185
    %8917 = vmatprep.subr.mxu0 %v7194
    %8918 = vmatpush1.msra.mxu0 %v7193
    %8919 = vmatprep.subr.mxu0 %v7202
    %8920 = vmatpush1.msra.mxu0 %v7201
    %8921 = vmatprep.subr.mxu0 %v7210
    %8922 = vmatpush1.msra.mxu0 %v7209
    %8923 = vmatprep.subr.mxu0 %v7218
    %8924 = vmatpush1.msra.mxu0 %v7217
    %8925 = vmatprep.subr.mxu0 %v7226
    %8926 = vmatpush1.msra.mxu0 %v7225
    %8927 = vmatprep.subr.mxu0 %v7234
    %8928 = vmatpush1.msra.mxu0 %v7233
    %8929 = vmatprep.subr.mxu0 %v7242
    %8930 = vmatpush1.msra.mxu0 %v7241
    %8931 = vmatprep.subr.mxu0 %v7250
    %8932 = vmatpush1.msra.mxu0 %v7249
    %8933 = vmatprep.subr.mxu0 %v7258
    %8934 = vmatpush1.msra.mxu0 %v7257
    %8935 = vmatprep.subr.mxu0 %v7266
    %8936 = vmatpush1.msra.mxu0 %v7265
    %8937 = vmatprep.subr.mxu0 %v7274
    %8938 = vmatpush1.msra.mxu0 %v7273
    %8939 = vmatprep.subr.mxu0 %v7282
    %8940 = vmatpush1.msra.mxu0 %v7281
    %8941 = vmatprep.subr.mxu0 %v7290
    %8942 = vmatpush1.msra.mxu0 %v7289
    %8943 = vmatprep.subr.mxu0 %v7298
    %8944 = vmatpush1.msra.mxu0 %v7297
    %8945 = vmatprep.subr.mxu0 %v7306
    %8946 = vmatpush1.msra.mxu0 %v7305
    %8947 = vmatprep.subr.mxu0 %v7314
    %8948 = vmatpush1.msra.mxu0 %v7313
    %8949 = vmatprep.subr.mxu0 %v7322
    %8950 = vmatpush1.msra.mxu0 %v7321
    %8951 = vmatprep.subr.mxu0 %v7330
    %8952 = vmatpush1.msra.mxu0 %v7329
    %8953 = vmatprep.subr.mxu0 %v7338
    %8954 = vmatpush1.msra.mxu0 %v7337
    %8955 = vmatprep.subr.mxu0 %v7346
    %8956 = vmatpush1.msra.mxu0 %v7345
    %8957 = vmatprep.subr.mxu0 %v7354
    %8958 = vmatpush1.msra.mxu0 %v7353
    %8959 = vmatprep.subr.mxu0 %v7362
    %8960 = vmatpush1.msra.mxu0 %v7361
    %8961 = vmatprep.mubr.f32.mxu0 %v7101
    %8962 = vmatmul.mubr.f32.gmra.mrb[0].mxu0 %v7100
    %v8963 = vpop.f32.mrb[0].mxu0
    %v8964 = vadd.f32 %v8032, %v8963
    %v8965 = vpop.f32.mrb[0].mxu0
    %v8966 = vadd.f32 %v8036, %v8965
    %8967 = vdwg.mxu0
    %8968 = vmatprep.subr.mxu0 %v7370
    %8969 = vmatpush1.msra.mxu0 %v7369
    %8970 = vmatprep.subr.mxu0 %v7378
    %8971 = vmatpush1.msra.mxu0 %v7377
    %8972 = vmatprep.subr.mxu0 %v7386
    %8973 = vmatpush1.msra.mxu0 %v7385
    %8974 = vmatprep.subr.mxu0 %v7394
    %8975 = vmatpush1.msra.mxu0 %v7393
    %8976 = vmatprep.subr.mxu0 %v7402
    %8977 = vmatpush1.msra.mxu0 %v7401
    %8978 = vmatprep.subr.mxu0 %v7410
    %8979 = vmatpush1.msra.mxu0 %v7409
    %8980 = vmatprep.subr.mxu0 %v7418
    %8981 = vmatpush1.msra.mxu0 %v7417
    %8982 = vmatprep.subr.mxu0 %v7426
    %8983 = vmatpush1.msra.mxu0 %v7425
    %8984 = vmatprep.subr.mxu0 %v7434
    %8985 = vmatpush1.msra.mxu0 %v7433
    %8986 = vmatprep.subr.mxu0 %v7442
    %8987 = vmatpush1.msra.mxu0 %v7441
    %8988 = vmatprep.subr.mxu0 %v7450
    %8989 = vmatpush1.msra.mxu0 %v7449
    %8990 = vmatprep.subr.mxu0 %v7458
    %8991 = vmatpush1.msra.mxu0 %v7457
    %8992 = vmatprep.subr.mxu0 %v7466
    %8993 = vmatpush1.msra.mxu0 %v7465
    %8994 = vmatprep.subr.mxu0 %v7474
    %8995 = vmatpush1.msra.mxu0 %v7473
    %8996 = vmatprep.subr.mxu0 %v7482
    %8997 = vmatpush1.msra.mxu0 %v7481
    %8998 = vmatprep.subr.mxu0 %v7490
    %8999 = vmatpush1.msra.mxu0 %v7489
    %9000 = vmatprep.subr.mxu0 %v7498
    %9001 = vmatpush1.msra.mxu0 %v7497
    %9002 = vmatprep.subr.mxu0 %v7506
    %9003 = vmatpush1.msra.mxu0 %v7505
    %9004 = vmatprep.subr.mxu0 %v7514
    %9005 = vmatpush1.msra.mxu0 %v7513
    %9006 = vmatprep.subr.mxu0 %v7522
    %9007 = vmatpush1.msra.mxu0 %v7521
    %9008 = vmatprep.subr.mxu0 %v7530
    %9009 = vmatpush1.msra.mxu0 %v7529
    %9010 = vmatprep.subr.mxu0 %v7538
    %9011 = vmatpush1.msra.mxu0 %v7537
    %9012 = vmatprep.subr.mxu0 %v7546
    %9013 = vmatpush1.msra.mxu0 %v7545
    %9014 = vmatprep.subr.mxu0 %v7554
    %9015 = vmatpush1.msra.mxu0 %v7553
    %9016 = vmatprep.subr.mxu0 %v7562
    %9017 = vmatpush1.msra.mxu0 %v7561
    %9018 = vmatprep.subr.mxu0 %v7570
    %9019 = vmatpush1.msra.mxu0 %v7569
    %9020 = vmatprep.subr.mxu0 %v7578
    %9021 = vmatpush1.msra.mxu0 %v7577
    %9022 = vmatprep.subr.mxu0 %v7586
    %9023 = vmatpush1.msra.mxu0 %v7585
    %9024 = vmatprep.subr.mxu0 %v7594
    %9025 = vmatpush1.msra.mxu0 %v7593
    %9026 = vmatprep.subr.mxu0 %v7602
    %9027 = vmatpush1.msra.mxu0 %v7601
    %9028 = vmatprep.subr.mxu0 %v7610
    %9029 = vmatpush1.msra.mxu0 %v7609
    %9030 = vmatprep.subr.mxu0 %v7618
    %9031 = vmatpush1.msra.mxu0 %v7617
    %9032 = vmatprep.mubr.f32.mxu0 %v7103
    %9033 = vmatmul.mubr.f32.gmra.mrb[0].mxu0 %v7102
    %v9034 = vpop.f32.mrb[0].mxu0
    %v9035 = vadd.f32 %v8964, %v9034
    %v9036 = vpop.f32.mrb[0].mxu0
    %v9037 = vadd.f32 %v8966, %v9036
    %9038 = vdwg.mxu0
    %9039 = vmatprep.subr.mxu0 %v7626
    %9040 = vmatpush1.msra.mxu0 %v7625
    %9041 = vmatprep.subr.mxu0 %v7634
    %9042 = vmatpush1.msra.mxu0 %v7633
    %9043 = vmatprep.subr.mxu0 %v7642
    %9044 = vmatpush1.msra.mxu0 %v7641
    %9045 = vmatprep.subr.mxu0 %v7650
    %9046 = vmatpush1.msra.mxu0 %v7649
    %9047 = vmatprep.subr.mxu0 %v7658
    %9048 = vmatpush1.msra.mxu0 %v7657
    %9049 = vmatprep.subr.mxu0 %v7666
    %9050 = vmatpush1.msra.mxu0 %v7665
    %9051 = vmatprep.subr.mxu0 %v7674
    %9052 = vmatpush1.msra.mxu0 %v7673
    %9053 = vmatprep.subr.mxu0 %v7682
    %9054 = vmatpush1.msra.mxu0 %v7681
    %9055 = vmatprep.subr.mxu0 %v7690
    %9056 = vmatpush1.msra.mxu0 %v7689
    %9057 = vmatprep.subr.mxu0 %v7698
    %9058 = vmatpush1.msra.mxu0 %v7697
    %9059 = vmatprep.subr.mxu0 %v7706
    %9060 = vmatpush1.msra.mxu0 %v7705
    %9061 = vmatprep.subr.mxu0 %v7714
    %9062 = vmatpush1.msra.mxu0 %v7713
    %9063 = vmatprep.subr.mxu0 %v7722
    %9064 = vmatpush1.msra.mxu0 %v7721
    %9065 = vmatprep.subr.mxu0 %v7730
    %9066 = vmatpush1.msra.mxu0 %v7729
    %9067 = vmatprep.subr.mxu0 %v7738
    %9068 = vmatpush1.msra.mxu0 %v7737
    %9069 = vmatprep.subr.mxu0 %v7746
    %9070 = vmatpush1.msra.mxu0 %v7745
    %9071 = vmatprep.subr.mxu0 %v7754
    %9072 = vmatpush1.msra.mxu0 %v7753
    %9073 = vmatprep.subr.mxu0 %v7762
    %9074 = vmatpush1.msra.mxu0 %v7761
    %9075 = vmatprep.subr.mxu0 %v7770
    %9076 = vmatpush1.msra.mxu0 %v7769
    %9077 = vmatprep.subr.mxu0 %v7778
    %9078 = vmatpush1.msra.mxu0 %v7777
    %9079 = vmatprep.subr.mxu0 %v7786
    %9080 = vmatpush1.msra.mxu0 %v7785
    %9081 = vmatprep.subr.mxu0 %v7794
    %9082 = vmatpush1.msra.mxu0 %v7793
    %9083 = vmatprep.subr.mxu0 %v7802
    %9084 = vmatpush1.msra.mxu0 %v7801
    %9085 = vmatprep.subr.mxu0 %v7810
    %9086 = vmatpush1.msra.mxu0 %v7809
    %9087 = vmatprep.subr.mxu0 %v7818
    %9088 = vmatpush1.msra.mxu0 %v7817
    %9089 = vmatprep.subr.mxu0 %v7826
    %9090 = vmatpush1.msra.mxu0 %v7825
    %9091 = vmatprep.subr.mxu0 %v7834
    %9092 = vmatpush1.msra.mxu0 %v7833
    %9093 = vmatprep.subr.mxu0 %v7842
    %9094 = vmatpush1.msra.mxu0 %v7841
    %9095 = vmatprep.subr.mxu0 %v7850
    %9096 = vmatpush1.msra.mxu0 %v7849
    %9097 = vmatprep.subr.mxu0 %v7858
    %9098 = vmatpush1.msra.mxu0 %v7857
    %9099 = vmatprep.subr.mxu0 %v7866
    %9100 = vmatpush1.msra.mxu0 %v7865
    %9101 = vmatprep.subr.mxu0 %v7874
    %9102 = vmatpush1.msra.mxu0 %v7873
    %9103 = vmatprep.mubr.f32.mxu0 %v7105
    %9104 = vmatmul.mubr.f32.gmra.mrb[0].mxu0 %v7104
    %v9105 = vpop.f32.mrb[0].mxu0
    %v9106 = vadd.f32 %v9035, %v9105
    %v9107 = vpop.f32.mrb[0].mxu0
    %v9108 = vadd.f32 %v9037, %v9107
    %9109 = vdwg.mxu0
    %9110 = vmatprep.subr.mxu0 %v7882
    %9111 = vmatpush1.msra.mxu0 %v7881
    %9112 = vmatprep.subr.mxu0 %v7890
    %9113 = vmatpush1.msra.mxu0 %v7889
    %9114 = vmatprep.subr.mxu0 %v7898
    %9115 = vmatpush1.msra.mxu0 %v7897
    %9116 = vmatprep.subr.mxu0 %v7906
    %9117 = vmatpush1.msra.mxu0 %v7905
    %9118 = vmatprep.subr.mxu0 %v7914
    %9119 = vmatpush1.msra.mxu0 %v7913
    %9120 = vmatprep.subr.mxu0 %v7922
    %9121 = vmatpush1.msra.mxu0 %v7921
    %9122 = vmatprep.subr.mxu0 %v7930
    %9123 = vmatpush1.msra.mxu0 %v7929
    %9124 = vmatprep.subr.mxu0 %v7938
    %9125 = vmatpush1.msra.mxu0 %v7937
    %9126 = vmatprep.subr.mxu0 %v7946
    %9127 = vmatpush1.msra.mxu0 %v7945
    %9128 = vmatprep.subr.mxu0 %v7954
    %9129 = vmatpush1.msra.mxu0 %v7953
    %9130 = vmatprep.subr.mxu0 %v7962
    %9131 = vmatpush1.msra.mxu0 %v7961
    %9132 = vmatprep.subr.mxu0 %v7970
    %9133 = vmatpush1.msra.mxu0 %v7969
    %9134 = vmatprep.subr.mxu0 %v7978
    %9135 = vmatpush1.msra.mxu0 %v7977
    %9136 = vmatprep.subr.mxu0 %v7986
    %9137 = vmatpush1.msra.mxu0 %v7985
    %9138 = vmatprep.subr.mxu0 %v7994
    %9139 = vmatpush1.msra.mxu0 %v7993
    %9140 = vmatprep.subr.mxu0 %v8002
    %9141 = vmatpush1.msra.mxu0 %v8001
    %9142 = vmatprep.subr.mxu0 0.0
    %9143 = vmatpush1.msra.mxu0 0.0
    %9144 = vmatprep.subr.mxu0 0.0
    %9145 = vmatpush1.msra.mxu0 0.0
    %9146 = vmatprep.subr.mxu0 0.0
    %9147 = vmatpush1.msra.mxu0 0.0
    %9148 = vmatprep.subr.mxu0 0.0
    %9149 = vmatpush1.msra.mxu0 0.0
    %9150 = vmatprep.subr.mxu0 0.0
    %9151 = vmatpush1.msra.mxu0 0.0
    %9152 = vmatprep.subr.mxu0 0.0
    %9153 = vmatpush1.msra.mxu0 0.0
    %9154 = vmatprep.subr.mxu0 0.0
    %9155 = vmatpush1.msra.mxu0 0.0
    %9156 = vmatprep.subr.mxu0 0.0
    %9157 = vmatpush1.msra.mxu0 0.0
    %9158 = vmatprep.subr.mxu0 0.0
    %9159 = vmatpush1.msra.mxu0 0.0
    %9160 = vmatprep.subr.mxu0 0.0
    %9161 = vmatpush1.msra.mxu0 0.0
    %9162 = vmatprep.subr.mxu0 0.0
    %9163 = vmatpush1.msra.mxu0 0.0
    %9164 = vmatprep.subr.mxu0 0.0
    %9165 = vmatpush1.msra.mxu0 0.0
    %9166 = vmatprep.subr.mxu0 0.0
    %9167 = vmatpush1.msra.mxu0 0.0
    %9168 = vmatprep.subr.mxu0 0.0
    %9169 = vmatpush1.msra.mxu0 0.0
    %9170 = vmatprep.subr.mxu0 0.0
    %9171 = vmatpush1.msra.mxu0 0.0
    %9172 = vmatprep.subr.mxu0 0.0
    %9173 = vmatpush1.msra.mxu0 0.0
    %9174 = vmatprep.mubr.f32.mxu0 0.0
    %9175 = vmatmul.mubr.f32.gmra.mrb[0].mxu0 %v7106
    %v9176 = vpop.f32.mrb[0].mxu0
    %v9177 = vadd.f32 %v9106, %v9176
    %v9178 = vpop.f32.mrb[0].mxu0
    %v9179 = vadd.f32 %v9108, %v9178
    %9180 = vdwg.mxu0
    %v9181 = vmax.f32 %v8325, 0.0
    %v9182 = vmax.f32 %v8327, 0.0
    %v9183 = vmax.f32 %v8609, 0.0
    %v9184 = vmax.f32 %v8611, 0.0
    %v9185 = vmax.f32 %v8893, 0.0
    %v9186 = vmax.f32 %v8895, 0.0
    %v9187 = vmax.f32 %v9177, 0.0
    %v9188 = vmax.f32 %v9179, 0.0
    %9189 = vst [vmem:[#allocation3] sm:$0xff] %v9181
    %9190 = vst [vmem:[#allocation3 + $0x8] sm:$0xff] %v9182
    %9191 = vst [vmem:[#allocation3 + $0x10] sm:$0xff] %v9183
    %9192 = vst [vmem:[#allocation3 + $0x18] sm:$0xff] %v9184
    %9193 = vst [vmem:[#allocation3 + $0x20] sm:$0xff] %v9185
    %9194 = vst [vmem:[#allocation3 + $0x28] sm:$0xff] %v9186
    %9195 = vst [vmem:[#allocation3 + $0x30] sm:$0xff] %v9187
    %9196 = vst [vmem:[#allocation3 + $0x38] sm:$0xff] %v9188
    %v9197 = vld [vmem:[#allocation3] sm:$0xff]
    %v9198 = vld [vmem:[#allocation3 + $0x8] sm:$0xff]
    %v9199 = vld [vmem:[#allocation3 + $0x10] sm:$0xff]
    %v9200 = vld [vmem:[#allocation3 + $0x18] sm:$0xff]
    %v9201 = vmax.f32 %v9197, %v9199
    %v9202 = vmax.f32 %v9198, %v9200
    %v9203 = vld [vmem:[#allocation3 + $0x20] sm:$0xff]
    %v9204 = vld [vmem:[#allocation3 + $0x28] sm:$0xff]
    %v9205 = vld [vmem:[#allocation3 + $0x30] sm:$0xff]
    %v9206 = vld [vmem:[#allocation3 + $0x38] sm:$0xff]
    %v9207 = vmax.f32 %v9203, %v9205
    %v9208 = vmax.f32 %v9204, %v9206
    %v9209 = vmax.f32 %v9201, %v9207
    %v9210 = vmax.f32 %v9202, %v9208
    %v9211 = vld [vmem:[%s5] sm:$0xff]
    %v9212 = vld [vmem:[%s5 + $0x8] sm:$0xff]
    %v9213 = vld [vmem:[%s5 + $0x10] sm:$0xff]
    %v9214 = vld [vmem:[%s5 + $0x18] sm:$0xff]
    %v9215 = vld [vmem:[%s5 + $0x20] sm:$0xff]
    %v9216 = vld [vmem:[%s5 + $0x28] sm:$0xff]
    %v9217 = vld [vmem:[%s5 + $0x30] sm:$0xff]
    %v9218 = vld [vmem:[%s5 + $0x38] sm:$0xff]
    %v9219 = vld [vmem:[%s5 + $0x40] sm:$0xff]
    %v9220 = vld [vmem:[%s5 + $0x48] sm:$0xff]
    %v9221 = vld [vmem:[%s5 + $0x50] sm:$0xff]
    %v9222 = vld [vmem:[%s5 + $0x58] sm:$0xff]
    %v9223 = vld [vmem:[%s5 + $0x60] sm:$0xff]
    %v9224 = vld [vmem:[%s5 + $0x68] sm:$0xff]
    %v9225 = vld [vmem:[%s5 + $0x70] sm:$0xff]
    %v9226 = vld [vmem:[%s5 + $0x78] sm:$0xff]
    %v9227 = vld [vmem:[%s5 + $0x80] sm:$0xff]
    %v9228 = vld [vmem:[%s5 + $0x88] sm:$0xff]
    %v9229 = vld [vmem:[%s5 + $0x90] sm:$0xff]
    %v9230 = vld [vmem:[%s5 + $0x98] sm:$0xff]
    %v9231 = vld [vmem:[%s5 + $0xa0] sm:$0xff]
    %v9232 = vld [vmem:[%s5 + $0xa8] sm:$0xff]
    %v9233 = vld [vmem:[%s5 + $0xb0] sm:$0xff]
    %v9234 = vld [vmem:[%s5 + $0xb8] sm:$0xff]
    %v9235 = vld [vmem:[%s5 + $0xc0] sm:$0xff]
    %v9236 = vld [vmem:[%s5 + $0xc8] sm:$0xff]
    %v9237 = vld [vmem:[%s5 + $0xd0] sm:$0xff]
    %v9238 = vld [vmem:[%s5 + $0xd8] sm:$0xff]
    %v9239 = vld [vmem:[%s5 + $0xe0] sm:$0xff]
    %v9240 = vld [vmem:[%s5 + $0xe8] sm:$0xff]
    %v9241 = vld [vmem:[%s5 + $0xf0] sm:$0xff]
    %v9242 = vld [vmem:[%s5 + $0xf8] sm:$0xff]
    %v9243 = vld [vmem:[#allocation11] sm:$0x1]
    %v9245 = vlaneseq
    %v9246 = vshrl.u32 %v9245, 7
    %v9247 = vsub.s32 0, %v9246
    %v9248 = vrot.slane %v9243, %v9247
    %9250 = vmatprep.subr.mxu0 0.0
    %9251 = vmatpush1.msra.mxu0 %v9211
    %9252 = vmatprep.subr.mxu0 0.0
    %9253 = vmatpush1.msra.mxu0 %v9212
    %9254 = vmatprep.subr.mxu0 0.0
    %9255 = vmatpush1.msra.mxu0 %v9213
    %9256 = vmatprep.subr.mxu0 0.0
    %9257 = vmatpush1.msra.mxu0 %v9214
    %9258 = vmatprep.subr.mxu0 0.0
    %9259 = vmatpush1.msra.mxu0 %v9215
    %9260 = vmatprep.subr.mxu0 0.0
    %9261 = vmatpush1.msra.mxu0 %v9216
    %9262 = vmatprep.subr.mxu0 0.0
    %9263 = vmatpush1.msra.mxu0 %v9217
    %9264 = vmatprep.subr.mxu0 0.0
    %9265 = vmatpush1.msra.mxu0 %v9218
    %9266 = vmatprep.subr.mxu0 0.0
    %9267 = vmatpush1.msra.mxu0 %v9219
    %9268 = vmatprep.subr.mxu0 0.0
    %9269 = vmatpush1.msra.mxu0 %v9220
    %9270 = vmatprep.subr.mxu0 0.0
    %9271 = vmatpush1.msra.mxu0 %v9221
    %9272 = vmatprep.subr.mxu0 0.0
    %9273 = vmatpush1.msra.mxu0 %v9222
    %9274 = vmatprep.subr.mxu0 0.0
    %9275 = vmatpush1.msra.mxu0 %v9223
    %9276 = vmatprep.subr.mxu0 0.0
    %9277 = vmatpush1.msra.mxu0 %v9224
    %9278 = vmatprep.subr.mxu0 0.0
    %9279 = vmatpush1.msra.mxu0 %v9225
    %9280 = vmatprep.subr.mxu0 0.0
    %9281 = vmatpush1.msra.mxu0 %v9226
    %9282 = vmatprep.subr.mxu0 0.0
    %9283 = vmatpush1.msra.mxu0 %v9227
    %9284 = vmatprep.subr.mxu0 0.0
    %9285 = vmatpush1.msra.mxu0 %v9228
    %9286 = vmatprep.subr.mxu0 0.0
    %9287 = vmatpush1.msra.mxu0 %v9229
    %9288 = vmatprep.subr.mxu0 0.0
    %9289 = vmatpush1.msra.mxu0 %v9230
    %9290 = vmatprep.subr.mxu0 0.0
    %9291 = vmatpush1.msra.mxu0 %v9231
    %9292 = vmatprep.subr.mxu0 0.0
    %9293 = vmatpush1.msra.mxu0 %v9232
    %9294 = vmatprep.subr.mxu0 0.0
    %9295 = vmatpush1.msra.mxu0 %v9233
    %9296 = vmatprep.subr.mxu0 0.0
    %9297 = vmatpush1.msra.mxu0 %v9234
    %9298 = vmatprep.subr.mxu0 0.0
    %9299 = vmatpush1.msra.mxu0 %v9235
    %9300 = vmatprep.subr.mxu0 0.0
    %9301 = vmatpush1.msra.mxu0 %v9236
    %9302 = vmatprep.subr.mxu0 0.0
    %9303 = vmatpush1.msra.mxu0 %v9237
    %9304 = vmatprep.subr.mxu0 0.0
    %9305 = vmatpush1.msra.mxu0 %v9238
    %9306 = vmatprep.subr.mxu0 0.0
    %9307 = vmatpush1.msra.mxu0 %v9239
    %9308 = vmatprep.subr.mxu0 0.0
    %9309 = vmatpush1.msra.mxu0 %v9240
    %9310 = vmatprep.subr.mxu0 0.0
    %9311 = vmatpush1.msra.mxu0 %v9241
    %9312 = vmatprep.subr.mxu0 0.0
    %9313 = vmatpush1.msra.mxu0 %v9242
    %9314 = vmatprep.mubr.f32.mxu0 %v9210
    %9315 = vmatmul.mubr.f32.gmra.mrb[0].mxu0 %v9209
    %v9316 = vpop.f32.mrb[0].mxu0
    %v9317 = vadd.f32 %v9248, %v9316
    %v9318 = vpop.f32.mrb[0].mxu0
    %9319 = vdwg.mxu0
    %v9320 = vmax.f32 %v9317, 0.0
    %v9321 = vld [vmem:[%s7] sm:$0xff]
    %v9322 = vld [vmem:[%s7 + $0x8] sm:$0xff]
    %v9323 = vld [vmem:[%s7 + $0x10] sm:$0xff]
    %v9324 = vld [vmem:[%s7 + $0x18] sm:$0xff]
    %v9325 = vld [vmem:[%s7 + $0x20] sm:$0xff]
    %v9326 = vld [vmem:[%s7 + $0x28] sm:$0xff]
    %v9327 = vld [vmem:[%s7 + $0x30] sm:$0xff]
    %v9328 = vld [vmem:[%s7 + $0x38] sm:$0xff]
    %v9329 = vld [vmem:[%s7 + $0x40] sm:$0xff]
    %v9330 = vld [vmem:[%s7 + $0x48] sm:$0xff]
    %v9331 = vld [vmem:[%s7 + $0x50] sm:$0xff]
    %v9332 = vld [vmem:[%s7 + $0x58] sm:$0xff]
    %v9333 = vld [vmem:[%s7 + $0x60] sm:$0xff]
    %v9334 = vld [vmem:[%s7 + $0x68] sm:$0xff]
    %v9335 = vld [vmem:[%s7 + $0x70] sm:$0xff]
    %v9336 = vld [vmem:[#allocation12] sm:$0x1]
    %v9338 = vlaneseq
    %v9339 = vshrl.u32 %v9338, 7
    %v9340 = vsub.s32 0, %v9339
    %v9341 = vrot.slane %v9336, %v9340
    %vm9343 = vcmask 982016
    %v9345 = vsel %vm9343, %v9320, 0
    %9347 = vmatprep.subr.mxu0 0.0
    %9348 = vmatpush1.msra.mxu0 %v9321
    %9349 = vmatprep.subr.mxu0 0.0
    %9350 = vmatpush1.msra.mxu0 %v9322
    %9351 = vmatprep.subr.mxu0 0.0
    %9352 = vmatpush1.msra.mxu0 %v9323
    %9353 = vmatprep.subr.mxu0 0.0
    %9354 = vmatpush1.msra.mxu0 %v9324
    %9355 = vmatprep.subr.mxu0 0.0
    %9356 = vmatpush1.msra.mxu0 %v9325
    %9357 = vmatprep.subr.mxu0 0.0
    %9358 = vmatpush1.msra.mxu0 %v9326
    %9359 = vmatprep.subr.mxu0 0.0
    %9360 = vmatpush1.msra.mxu0 %v9327
    %9361 = vmatprep.subr.mxu0 0.0
    %9362 = vmatpush1.msra.mxu0 %v9328
    %9363 = vmatprep.subr.mxu0 0.0
    %9364 = vmatpush1.msra.mxu0 %v9329
    %9365 = vmatprep.subr.mxu0 0.0
    %9366 = vmatpush1.msra.mxu0 %v9330
    %9367 = vmatprep.subr.mxu0 0.0
    %9368 = vmatpush1.msra.mxu0 %v9331
    %9369 = vmatprep.subr.mxu0 0.0
    %9370 = vmatpush1.msra.mxu0 %v9332
    %9371 = vmatprep.subr.mxu0 0.0
    %9372 = vmatpush1.msra.mxu0 %v9333
    %9373 = vmatprep.subr.mxu0 0.0
    %9374 = vmatpush1.msra.mxu0 %v9334
    %9375 = vmatprep.subr.mxu0 0.0
    %9376 = vmatpush1.msra.mxu0 %v9335
    %9377 = vmatprep.subr.mxu0 0.0
    %9378 = vmatpush1.msra.mxu0 0.0
    %9379 = vmatprep.subr.mxu0 0.0
    %9380 = vmatpush1.msra.mxu0 0.0
    %9381 = vmatprep.subr.mxu0 0.0
    %9382 = vmatpush1.msra.mxu0 0.0
    %9383 = vmatprep.subr.mxu0 0.0
    %9384 = vmatpush1.msra.mxu0 0.0
    %9385 = vmatprep.subr.mxu0 0.0
    %9386 = vmatpush1.msra.mxu0 0.0
    %9387 = vmatprep.subr.mxu0 0.0
    %9388 = vmatpush1.msra.mxu0 0.0
    %9389 = vmatprep.subr.mxu0 0.0
    %9390 = vmatpush1.msra.mxu0 0.0
    %9391 = vmatprep.subr.mxu0 0.0
    %9392 = vmatpush1.msra.mxu0 0.0
    %9393 = vmatprep.subr.mxu0 0.0
    %9394 = vmatpush1.msra.mxu0 0.0
    %9395 = vmatprep.subr.mxu0 0.0
    %9396 = vmatpush1.msra.mxu0 0.0
    %9397 = vmatprep.subr.mxu0 0.0
    %9398 = vmatpush1.msra.mxu0 0.0
    %9399 = vmatprep.subr.mxu0 0.0
    %9400 = vmatpush1.msra.mxu0 0.0
    %9401 = vmatprep.subr.mxu0 0.0
    %9402 = vmatpush1.msra.mxu0 0.0
    %9403 = vmatprep.subr.mxu0 0.0
    %9404 = vmatpush1.msra.mxu0 0.0
    %9405 = vmatprep.subr.mxu0 0.0
    %9406 = vmatpush1.msra.mxu0 0.0
    %9407 = vmatprep.subr.mxu0 0.0
    %9408 = vmatpush1.msra.mxu0 0.0
    %9409 = vmatprep.subr.mxu0 0.0
    %9410 = vmatpush1.msra.mxu0 0.0
    %9411 = vmatprep.mubr.f32.mxu0 0.0
    %9412 = vmatmul.mubr.f32.gmra.mrb[0].mxu0 %v9345
    %v9413 = vpop.f32.mrb[0].mxu0
    %v9414 = vadd.f32 %v9341, %v9413
    %v9415 = vpop.f32.mrb[0].mxu0
    %9416 = vdwg.mxu0
    %v9417 = vmax.f32 %v9414, 0.0
    %v9418 = vld [vmem:[%s9] sm:$0xff]
    %v9419 = vld [vmem:[%s9 + $0x8] sm:$0xff]
    %v9420 = vld [vmem:[%s9 + $0x10] sm:$0xff]
    %v9421 = vld [vmem:[%s9 + $0x18] sm:$0xff]
    %v9422 = vld [vmem:[%s9 + $0x20] sm:$0xff]
    %v9423 = vld [vmem:[%s9 + $0x28] sm:$0xff]
    %v9424 = vld [vmem:[%s9 + $0x30] sm:$0xff]
    %v9425 = vld [vmem:[%s9 + $0x38] sm:$0xff]
    %v9426 = vld [vmem:[%s9 + $0x40] sm:$0xff]
    %v9427 = vld [vmem:[%s9 + $0x48] sm:$0xff]
    %v9428 = vld [vmem:[%s9 + $0x50] sm:$0xf]
    %v9429 = vld [vmem:[#allocation14] sm:$0x1]
    %v9431 = vlaneseq
    %v9432 = vshrl.u32 %v9431, 7
    %v9433 = vsub.s32 0, %v9432
    %v9434 = vrot.slane %v9429, %v9433
    %vm9436 = vcmask 687104
    %v9438 = vsel %vm9436, %v9417, 0
    %vm9440 = vcmask 1043456
    %v9442 = vsel %vm9440, %v9428, 0
    %9444 = vmatprep.subr.mxu0 0.0
    %9445 = vmatpush1.msra.mxu0 %v9418
    %9446 = vmatprep.subr.mxu0 0.0
    %9447 = vmatpush1.msra.mxu0 %v9419
    %9448 = vmatprep.subr.mxu0 0.0
    %9449 = vmatpush1.msra.mxu0 %v9420
    %9450 = vmatprep.subr.mxu0 0.0
    %9451 = vmatpush1.msra.mxu0 %v9421
    %9452 = vmatprep.subr.mxu0 0.0
    %9453 = vmatpush1.msra.mxu0 %v9422
    %9454 = vmatprep.subr.mxu0 0.0
    %9455 = vmatpush1.msra.mxu0 %v9423
    %9456 = vmatprep.subr.mxu0 0.0
    %9457 = vmatpush1.msra.mxu0 %v9424
    %9458 = vmatprep.subr.mxu0 0.0
    %9459 = vmatpush1.msra.mxu0 %v9425
    %9460 = vmatprep.subr.mxu0 0.0
    %9461 = vmatpush1.msra.mxu0 %v9426
    %9462 = vmatprep.subr.mxu0 0.0
    %9463 = vmatpush1.msra.mxu0 %v9427
    %9464 = vmatprep.subr.mxu0 0.0
    %9465 = vmatpush1.msra.mxu0 %v9442
    %9466 = vmatprep.subr.mxu0 0.0
    %9467 = vmatpush1.msra.mxu0 0.0
    %9468 = vmatprep.subr.mxu0 0.0
    %9469 = vmatpush1.msra.mxu0 0.0
    %9470 = vmatprep.subr.mxu0 0.0
    %9471 = vmatpush1.msra.mxu0 0.0
    %9472 = vmatprep.subr.mxu0 0.0
    %9473 = vmatpush1.msra.mxu0 0.0
    %9474 = vmatprep.subr.mxu0 0.0
    %9475 = vmatpush1.msra.mxu0 0.0
    %9476 = vmatprep.subr.mxu0 0.0
    %9477 = vmatpush1.msra.mxu0 0.0
    %9478 = vmatprep.subr.mxu0 0.0
    %9479 = vmatpush1.msra.mxu0 0.0
    %9480 = vmatprep.subr.mxu0 0.0
    %9481 = vmatpush1.msra.mxu0 0.0
    %9482 = vmatprep.subr.mxu0 0.0
    %9483 = vmatpush1.msra.mxu0 0.0
    %9484 = vmatprep.subr.mxu0 0.0
    %9485 = vmatpush1.msra.mxu0 0.0
    %9486 = vmatprep.subr.mxu0 0.0
    %9487 = vmatpush1.msra.mxu0 0.0
    %9488 = vmatprep.subr.mxu0 0.0
    %9489 = vmatpush1.msra.mxu0 0.0
    %9490 = vmatprep.subr.mxu0 0.0
    %9491 = vmatpush1.msra.mxu0 0.0
    %9492 = vmatprep.subr.mxu0 0.0
    %9493 = vmatpush1.msra.mxu0 0.0
    %9494 = vmatprep.subr.mxu0 0.0
    %9495 = vmatpush1.msra.mxu0 0.0
    %9496 = vmatprep.subr.mxu0 0.0
    %9497 = vmatpush1.msra.mxu0 0.0
    %9498 = vmatprep.subr.mxu0 0.0
    %9499 = vmatpush1.msra.mxu0 0.0
    %9500 = vmatprep.subr.mxu0 0.0
    %9501 = vmatpush1.msra.mxu0 0.0
    %9502 = vmatprep.subr.mxu0 0.0
    %9503 = vmatpush1.msra.mxu0 0.0
    %9504 = vmatprep.subr.mxu0 0.0
    %9505 = vmatpush1.msra.mxu0 0.0
    %9506 = vmatprep.subr.mxu0 0.0
    %9507 = vmatpush1.msra.mxu0 0.0
    %9508 = vmatprep.mubr.f32.mxu0 0.0
    %9509 = vmatmul.mubr.f32.gmra.mrb[0].mxu0 %v9438
    %v9510 = vpop.f32.mrb[0].mxu0
    %v9511 = vadd.f32 %v9434, %v9510
    %v9512 = vpop.f32.mrb[0].mxu0
    %9513 = vdwg.mxu0
    %vm9514 = vcmask 80896
    %9515 = vst.msk [vmem:[%s11] sm:$0xff] %vm9514, %v9511
    // Predicated region
    $region74: #{lenet5_forward.1} parent=1 // pred_check
      _
    $region75: #{lenet5_forward.1} parent=1 // pred_check_branch
      %9517 = sbr.rel (0) target = $region77
    $region76: #{lenet5_forward.1} parent=1 // pred_region
      _
    $region77: #{lenet5_forward.1} parent=1 // pred_fallthru
      _
    // Predicated region
    $region78: #{lenet5_forward.1} parent=1 // pred_check
      _
    $region79: #{lenet5_forward.1} parent=1 // pred_check_branch
      %9519 = sbr.rel (0) target = $region81
    $region80: #{lenet5_forward.1} parent=1 // pred_region
      _
    $region81: #{lenet5_forward.1} parent=1 // pred_fallthru
      _
    %9520 = vsyncpa [#allocation5], 1
    %9521 = vsyncpa [#allocation7], 1
    %9522 = vsyncpa [#allocation10], 1
    %9523 = vsyncpa [#allocation13], 1

</llo_original>
